<compile_context>
chip_gen: v6e
topology: v6e:2x2x1
jax: 0.10.0
libtpu: 0.0.40
codegen_flags: <defaults>
</compile_context>

<pallas_src>
import math

import jax
import jax.numpy as jnp
from jax.experimental import pallas as pl
from jax.experimental.pallas import tpu as pltpu

# ----------------------------- configuration (small shapes) -----------------------------
B, S = 2, 8                      # batch, sequence length
VOCAB = 100                      # bert vocab (word_voc_size)
HIDDEN = 32                      # bert hidden == word_emb_size
N_HEADS = 4
HEAD_DIM = HIDDEN // N_HEADS
N_LAYERS = 2                     # distilbert n_layers
FFN = 64                         # distilbert hidden_dim
MAX_POS = 16

ENTPOS_VOC, ENTPOS_EMB = 12, 8
NUMPOS_VOC, NUMPOS_EMB = 12, 8
D_COMB = HIDDEN + ENTPOS_EMB + NUMPOS_EMB   # 48 == rnn_input == cnn D

RNN_HIDDEN = 32
RNN_MLP = 16
CNN_FILTER = 8                   # Co
CNN_KS = (2, 3)                  # cnn_kernel_width
CNN_MLP = D_COMB                 # cnn_mlp_size = word+entpos+numpos emb sizes
LABELS = 5
DEC_PAD = 128                    # lane-dense padded decoder width

_VMEM = pl.BlockSpec(memory_space=pltpu.MemorySpace.VMEM)


# ------------------------------------ fused kernel ---------------------------------------
def fused_ie_kernel(h_ref, en_ref, mask_ref, len_ref,
                    embg_ref, embb_ref,
                    qkvw_ref, qkvb_ref, ow_ref, ob_ref, sag_ref, sab_ref,
                    f1w_ref, f1b_ref, f2w_ref, f2b_ref, olg_ref, olb_ref,
                    c2w_ref, c2b_ref, c3w_ref, c3b_ref, cmw_ref, cmb_ref,
                    wih_ref, blstm_ref, whh_ref,
                    rmw_ref, rmb_ref, decw_ref, decb_ref,
                    out_ref):
    Bx, Sx = mask_ref.shape
    HID = h_ref.shape[1]
    hd = HID // N_HEADS
    scale = jnp.float32(1.0 / math.sqrt(hd))

    def dot(a, b):                        # a @ b
        return jax.lax.dot_general(a, b, (((1,), (0,)), ((), ())),
                                   preferred_element_type=jnp.float32)

    def dot_nt(a, b):                     # a @ b.T without an explicit transpose
        return jax.lax.dot_general(a, b, (((1,), (1,)), ((), ())),
                                   preferred_element_type=jnp.float32)

    def layernorm(x, g, b, eps=1e-12):
        mu = jnp.mean(x, axis=-1, keepdims=True)
        var = jnp.mean(jnp.square(x - mu), axis=-1, keepdims=True)
        return (x - mu) * jax.lax.rsqrt(var + eps) * g + b

    def gelu(x):
        # TODO(synk): HF DistilBERT uses exact erf-GELU; tanh approximation used here.
        c = jnp.float32(0.7978845608028654)
        return 0.5 * x * (1.0 + jnp.tanh(c * (x + 0.044715 * x * x * x)))

    def softmax_last(x):
        m = jnp.max(x, axis=-1, keepdims=True)
        e = jnp.exp(x - m)
        return e / jnp.sum(e, axis=-1, keepdims=True)

    def sigmoid(x):
        return 1.0 / (1.0 + jnp.exp(-x))

    # ----- DistilBERT embeddings LayerNorm -----
    h = layernorm(h_ref[...], embg_ref[...], embb_ref[...])        # (B*S, HID)

    # additive attention mask: 0 where attend, -1e30 where masked
    madd = (mask_ref[...] - 1.0) * jnp.float32(1e30)               # (B, S)

    # ----- encoder layers (static unroll) -----
    n_layers = qkvw_ref.shape[0]
    for l in range(n_layers):
        qkv = dot(h, qkvw_ref[l]) + qkvb_ref[l]                    # (B*S, 3*HID)
        ctx_heads = []
        for hh in range(N_HEADS):
            q_h = qkv[:, hh * hd:(hh + 1) * hd]
            k_h = qkv[:, HID + hh * hd:HID + (hh + 1) * hd]
            v_h = qkv[:, 2 * HID + hh * hd:2 * HID + (hh + 1) * hd]
            rows = []
            for b in range(Bx):
                qb = q_h[b * Sx:(b + 1) * Sx, :]                   # (S, hd)
                kb = k_h[b * Sx:(b + 1) * Sx, :]
                vb = v_h[b * Sx:(b + 1) * Sx, :]
                s = dot_nt(qb, kb) * scale + madd[b:b + 1, :]      # (S, S)
                p = softmax_last(s)
                rows.append(dot(p, vb))                            # (S, hd)
            ctx_heads.append(jnp.concatenate(rows, axis=0))        # (B*S, hd)
        ctx = jnp.concatenate(ctx_heads, axis=1)                   # (B*S, HID)
        attn_out = dot(ctx, ow_ref[l]) + ob_ref[l]
        h = layernorm(h + attn_out, sag_ref[l], sab_ref[l])
        ff = gelu(dot(h, f1w_ref[l]) + f1b_ref[l])
        ff = dot(ff, f2w_ref[l]) + f2b_ref[l]
        h = layernorm(h + ff, olg_ref[l], olb_ref[l])

    # ----- concat with position embeddings -----
    combined = jnp.concatenate([h, en_ref[...]], axis=1)           # (B*S, D_COMB)
    D = combined.shape[1]
    combined3 = combined.reshape(Bx, Sx, D)                        # (B, S, D)

    # ----- CNN branch: accumulated matmuls, ReLU, max over time -----
    co = c2b_ref.shape[1]
    cnn_rows = []
    for b in range(Bx):
        xb = combined3[b]                                          # (S, D)
        feats = []
        for wref, bref in ((c2w_ref, c2b_ref), (c3w_ref, c3b_ref)):
            K = wref.shape[0]
            W = Sx - K + 1
            y = jnp.zeros((W, co), jnp.float32) + bref[...]        # (W, Co)
            for k in range(K):
                y = y + dot(xb[k:k + W, :], wref[k])
            y = jnp.maximum(y, 0.0)                                # ReLU
            feats.append(jnp.max(y, axis=0, keepdims=True))        # (1, Co)
        cnn_rows.append(jnp.concatenate(feats, axis=1))            # (1, len(Ks)*Co)
    cnn_cat = jnp.concatenate(cnn_rows, axis=0)                    # (B, len(Ks)*Co)
    cnn_res = jnp.maximum(dot(cnn_cat, cmw_ref[...]) + cmb_ref[...], 0.0)   # (B, CNN_MLP)

    # ----- LSTM branch: masked recurrence + running max (== pack/LSTM/unpack(-Inf)/max) ---
    Hh = whh_ref.shape[1]
    xproj = dot(combined, wih_ref[...]) + blstm_ref[...]           # (B*S, 4H)
    xproj3 = xproj.reshape(Bx, Sx, 4 * Hh)
    xg = [xproj3[:, :, g * Hh:(g + 1) * Hh] for g in range(4)]     # 4 x (B, S, H), gates i,f,g,o
    lens = len_ref[...]                                            # (B, 1) int32

    hcur = jnp.zeros((Bx, Hh), jnp.float32)
    ccur = jnp.zeros((Bx, Hh), jnp.float32)
    mmax = jnp.full((Bx, Hh), -3.0e38, jnp.float32)
    for t in range(Sx):                                            # static unroll (S=8)
        valid = t < lens                                           # (B, 1) bool
        gi = sigmoid(xg[0][:, t, :] + dot(hcur, whh_ref[0]))
        gf = sigmoid(xg[1][:, t, :] + dot(hcur, whh_ref[1]))
        gc = jnp.tanh(xg[2][:, t, :] + dot(hcur, whh_ref[2]))
        go = sigmoid(xg[3][:, t, :] + dot(hcur, whh_ref[3]))
        c_new = gf * ccur + gi * gc
        h_new = go * jnp.tanh(c_new)
        hcur = jnp.where(valid, h_new, hcur)
        ccur = jnp.where(valid, c_new, ccur)
        mmax = jnp.where(valid, jnp.maximum(mmax, h_new), mmax)

    mem_mlp = jnp.maximum(dot(mmax, rmw_ref[...]) + rmb_ref[...], 0.0)      # (B, RNN_MLP)

    # ----- decoder (padded to 128 lanes; pad columns: zero weight, -1e9 bias) -----
    dec_in = jnp.concatenate([mem_mlp, cnn_res], axis=1)           # (B, RNN_MLP+CNN_MLP)
    logits = dot(dec_in, decw_ref[...]) + decb_ref[...]            # (B, 128)
    out_ref[...] = softmax_last(logits)                            # softmax(dim=1)


# ------------------------------- parameter initialization -------------------------------
def init_params(key):
    keys = iter(jax.random.split(key, 80))

    def w(shape, scale=0.05):
        return jax.random.normal(next(keys), shape, jnp.float32) * scale

    # per-layer encoder params, stacked on a leading layer axis (indexed statically in-kernel)
    qkv_w, qkv_b, o_w, o_b = [], [], [], []
    sa_g, sa_b, f1_w, f1_b, f2_w, f2_b, ol_g, ol_b = [], [], [], [], [], [], [], []
    for _ in range(N_LAYERS):
        qw, kw_, vw = w((HIDDEN, HIDDEN)), w((HIDDEN, HIDDEN)), w((HIDDEN, HIDDEN))
        qb, kb, vb = w((1, HIDDEN)), w((1, HIDDEN)), w((1, HIDDEN))
        qkv_w.append(jnp.concatenate([qw, kw_, vw], axis=1))       # (H, 3H) merged QKV
        qkv_b.append(jnp.concatenate([qb, kb, vb], axis=1))        # (1, 3H)
        o_w.append(w((HIDDEN, HIDDEN))); o_b.append(w((1, HIDDEN)))
        sa_g.append(jnp.ones((1, HIDDEN), jnp.float32))
        sa_b.append(jnp.zeros((1, HIDDEN), jnp.float32))
        f1_w.append(w((HIDDEN, FFN))); f1_b.append(w((1, FFN)))
        f2_w.append(w((FFN, HIDDEN))); f2_b.append(w((1, HIDDEN)))
        ol_g.append(jnp.ones((1, HIDDEN), jnp.float32))
        ol_b.append(jnp.zeros((1, HIDDEN), jnp.float32))
    stack = lambda xs: jnp.stack(xs, axis=0)

    # conv weights: torch layout (Co, 1, K, D) -> per-tap (K, D, Co)
    c2 = w((CNN_FILTER, CNN_KS[0], D_COMB))
    c3 = w((CNN_FILTER, CNN_KS[1], D_COMB))
    c2_w = jnp.transpose(c2, (1, 2, 0))
    c3_w = jnp.transpose(c3, (1, 2, 0))

    # LSTM (PyTorch layout W_ih (4H, D), W_hh (4H, H), gate order i,f,g,o)
    w_ih = w((4 * RNN_HIDDEN, D_COMB))
    w_hh = w((4 * RNN_HIDDEN, RNN_HIDDEN))
    b_ih = w((1, 4 * RNN_HIDDEN))
    b_hh = w((1, 4 * RNN_HIDDEN))
    whh_gates = jnp.stack(
        [w_hh[g * RNN_HIDDEN:(g + 1) * RNN_HIDDEN, :].T for g in range(4)], axis=0)  # (4,H,H)

    # decoder padded to 128 lanes for a lane-dense output store
    dec_w = w((RNN_MLP + CNN_MLP, LABELS))
    dec_b = w((1, LABELS))
    dec_w_pad = jnp.zeros((RNN_MLP + CNN_MLP, DEC_PAD), jnp.float32).at[:, :LABELS].set(dec_w)
    dec_b_pad = jnp.full((1, DEC_PAD), -1e9, jnp.float32).at[:, :LABELS].set(dec_b)

    return dict(
        word_emb=w((VOCAB, HIDDEN)), pos_emb=w((MAX_POS, HIDDEN)),
        emb_g=jnp.ones((1, HIDDEN), jnp.float32), emb_b=jnp.zeros((1, HIDDEN), jnp.float32),
        qkv_w=stack(qkv_w), qkv_b=stack(qkv_b), o_w=stack(o_w), o_b=stack(o_b),
        sa_g=stack(sa_g), sa_b=stack(sa_b),
        f1_w=stack(f1_w), f1_b=stack(f1_b), f2_w=stack(f2_w), f2_b=stack(f2_b),
        ol_g=stack(ol_g), ol_b=stack(ol_b),
        entpos_emb=w((ENTPOS_VOC, ENTPOS_EMB)), numpos_emb=w((NUMPOS_VOC, NUMPOS_EMB)),
        c2_w=c2_w, c2_b=w((1, CNN_FILTER)), c3_w=c3_w, c3_b=w((1, CNN_FILTER)),
        cmlp_w=w((len(CNN_KS) * CNN_FILTER, CNN_MLP)), cmlp_b=w((1, CNN_MLP)),
        wih_t=w_ih.T, b_lstm=b_ih + b_hh, whh=whh_gates,
        rmlp_w=w((RNN_HIDDEN, RNN_MLP)), rmlp_b=w((1, RNN_MLP)),
        dec_w=dec_w_pad, dec_b=dec_b_pad)


# --------------------------------------- forward ----------------------------------------
def ie_forward(params, word_ids, entpos_ids, numpos_ids, lengths, attn_mask):
    Bx, Sx = word_ids.shape

    # embedding-table gathers stay in XLA; everything else is one fused Pallas kernel.
    h_emb = (params["word_emb"][word_ids]
             + params["pos_emb"][jnp.arange(Sx)][None, :, :]).reshape(Bx * Sx, HIDDEN)
    entnum = jnp.concatenate(
        [params["entpos_emb"][entpos_ids], params["numpos_emb"][numpos_ids]],
        axis=-1).reshape(Bx * Sx, ENTPOS_EMB + NUMPOS_EMB)
    mask_f = attn_mask.astype(jnp.float32)
    lens = lengths.reshape(Bx, 1).astype(jnp.int32)

    args = (h_emb, entnum, mask_f, lens,
            params["emb_g"], params["emb_b"],
            params["qkv_w"], params["qkv_b"], params["o_w"], params["o_b"],
            params["sa_g"], params["sa_b"],
            params["f1_w"], params["f1_b"], params["f2_w"], params["f2_b"],
            params["ol_g"], params["ol_b"],
            params["c2_w"], params["c2_b"], params["c3_w"], params["c3_b"],
            params["cmlp_w"], params["cmlp_b"],
            params["wih_t"], params["b_lstm"], params["whh"],
            params["rmlp_w"], params["rmlp_b"],
            params["dec_w"], params["dec_b"])

    out = pl.pallas_call(
        fused_ie_kernel,
        out_shape=jax.ShapeDtypeStruct((Bx, DEC_PAD), jnp.float32),
        in_specs=[_VMEM] * len(args),
        out_specs=_VMEM,
    )(*args)
    return out[:, :LABELS]


# ----------------------------------------- main ------------------------------------------
if __name__ == "__main__":
    key = jax.random.PRNGKey(0)
    kp, kw, ke, kn = jax.random.split(key, 4)
    params = init_params(kp)

    word_ids = jax.random.randint(kw, (B, S), 0, VOCAB)
    entpos_ids = jax.random.randint(ke, (B, S), 0, ENTPOS_VOC)
    numpos_ids = jax.random.randint(kn, (B, S), 0, NUMPOS_VOC)
    lengths = jnp.array([8, 5], dtype=jnp.int32)
    attn_mask = (jnp.arange(S)[None, :] < lengths[:, None]).astype(jnp.int32)

    fwd = jax.jit(ie_forward)
    out = fwd(params, word_ids, entpos_ids, numpos_ids, lengths, attn_mask)
    out = jax.block_until_ready(out)
    assert out.shape == (B, LABELS)
    assert bool(jnp.all(jnp.isfinite(out)))
    print("KERNEL_OK")
</pallas_src>

<mosaic_0001>
module attributes {stable_mosaic.version = 11 : i64} {
  func.func @fused_ie_kernel(%arg0: memref<16x32xf32, #tpu.memory_space<vmem>>, %arg1: memref<16x16xf32, #tpu.memory_space<vmem>>, %arg2: memref<2x8xf32, #tpu.memory_space<vmem>>, %arg3: memref<2x1xi32, #tpu.memory_space<vmem>>, %arg4: memref<1x32xf32, #tpu.memory_space<vmem>>, %arg5: memref<1x32xf32, #tpu.memory_space<vmem>>, %arg6: memref<2x32x96xf32, #tpu.memory_space<vmem>>, %arg7: memref<2x1x96xf32, #tpu.memory_space<vmem>>, %arg8: memref<2x32x32xf32, #tpu.memory_space<vmem>>, %arg9: memref<2x1x32xf32, #tpu.memory_space<vmem>>, %arg10: memref<2x1x32xf32, #tpu.memory_space<vmem>>, %arg11: memref<2x1x32xf32, #tpu.memory_space<vmem>>, %arg12: memref<2x32x64xf32, #tpu.memory_space<vmem>>, %arg13: memref<2x1x64xf32, #tpu.memory_space<vmem>>, %arg14: memref<2x64x32xf32, #tpu.memory_space<vmem>>, %arg15: memref<2x1x32xf32, #tpu.memory_space<vmem>>, %arg16: memref<2x1x32xf32, #tpu.memory_space<vmem>>, %arg17: memref<2x1x32xf32, #tpu.memory_space<vmem>>, %arg18: memref<2x48x8xf32, #tpu.memory_space<vmem>>, %arg19: memref<1x8xf32, #tpu.memory_space<vmem>>, %arg20: memref<3x48x8xf32, #tpu.memory_space<vmem>>, %arg21: memref<1x8xf32, #tpu.memory_space<vmem>>, %arg22: memref<16x48xf32, #tpu.memory_space<vmem>>, %arg23: memref<1x48xf32, #tpu.memory_space<vmem>>, %arg24: memref<48x128xf32, #tpu.memory_space<vmem>>, %arg25: memref<1x128xf32, #tpu.memory_space<vmem>>, %arg26: memref<4x32x32xf32, #tpu.memory_space<vmem>>, %arg27: memref<32x16xf32, #tpu.memory_space<vmem>>, %arg28: memref<1x16xf32, #tpu.memory_space<vmem>>, %arg29: memref<64x128xf32, #tpu.memory_space<vmem>>, %arg30: memref<1x128xf32, #tpu.memory_space<vmem>>, %arg31: memref<2x128xf32, #tpu.memory_space<vmem>>) attributes {dimension_semantics = [], scalar_prefetch = 0 : i64, scratch_operands = 0 : i64, tpu.core_type = #tpu.core_type<tc>} {
    %c0 = arith.constant 0 : index
    %c0_0 = arith.constant 0 : index
    %0 = vector.load %arg0[%c0, %c0_0] : memref<16x32xf32, #tpu.memory_space<vmem>>, vector<16x32xf32>
    %c0_1 = arith.constant 0 : index
    %c0_2 = arith.constant 0 : index
    %1 = vector.load %arg4[%c0_1, %c0_2] : memref<1x32xf32, #tpu.memory_space<vmem>>, vector<1x32xf32>
    %c0_3 = arith.constant 0 : index
    %c0_4 = arith.constant 0 : index
    %2 = vector.load %arg5[%c0_3, %c0_4] : memref<1x32xf32, #tpu.memory_space<vmem>>, vector<1x32xf32>
    %cst = arith.constant dense<0.000000e+00> : vector<16xf32>
    %3 = vector.multi_reduction <add>, %0, %cst [1] : vector<16x32xf32> to vector<16xf32>
    %4 = vector.shape_cast %3 : vector<16xf32> to vector<16x1xf32>
    %cst_5 = arith.constant 3.200000e+01 : f32
    %5 = vector.broadcast %cst_5 : f32 to vector<16x1xf32>
    %6 = arith.divf %4, %5 : vector<16x1xf32>
    %7 = vector.broadcast %6 : vector<16x1xf32> to vector<16x32xf32>
    %8 = arith.subf %0, %7 : vector<16x32xf32>
    %9 = arith.mulf %8, %8 : vector<16x32xf32>
    %cst_6 = arith.constant dense<0.000000e+00> : vector<16xf32>
    %10 = vector.multi_reduction <add>, %9, %cst_6 [1] : vector<16x32xf32> to vector<16xf32>
    %11 = vector.shape_cast %10 : vector<16xf32> to vector<16x1xf32>
    %cst_7 = arith.constant 3.200000e+01 : f32
    %12 = vector.broadcast %cst_7 : f32 to vector<16x1xf32>
    %13 = arith.divf %11, %12 : vector<16x1xf32>
    %14 = vector.broadcast %6 : vector<16x1xf32> to vector<16x32xf32>
    %15 = arith.subf %0, %14 : vector<16x32xf32>
    %cst_8 = arith.constant 9.99999996E-13 : f32
    %16 = vector.broadcast %cst_8 : f32 to vector<16x1xf32>
    %17 = arith.addf %13, %16 : vector<16x1xf32>
    %18 = math.rsqrt %17 : vector<16x1xf32>
    %19 = vector.broadcast %18 : vector<16x1xf32> to vector<16x32xf32>
    %20 = arith.mulf %15, %19 : vector<16x32xf32>
    %21 = vector.broadcast %1 : vector<1x32xf32> to vector<16x32xf32>
    %22 = arith.mulf %20, %21 : vector<16x32xf32>
    %23 = vector.broadcast %2 : vector<1x32xf32> to vector<16x32xf32>
    %24 = arith.addf %22, %23 : vector<16x32xf32>
    %c0_9 = arith.constant 0 : index
    %c0_10 = arith.constant 0 : index
    %25 = vector.load %arg2[%c0_9, %c0_10] : memref<2x8xf32, #tpu.memory_space<vmem>>, vector<2x8xf32>
    %cst_11 = arith.constant 1.000000e+00 : f32
    %26 = vector.broadcast %cst_11 : f32 to vector<2x8xf32>
    %27 = arith.subf %25, %26 : vector<2x8xf32>
    %cst_12 = arith.constant 1.000000e+30 : f32
    %28 = vector.broadcast %cst_12 : f32 to vector<2x8xf32>
    %29 = arith.mulf %27, %28 : vector<2x8xf32>
    %c0_13 = arith.constant 0 : index
    %c0_14 = arith.constant 0 : index
    %c0_15 = arith.constant 0 : index
    %30 = vector.load %arg6[%c0_13, %c0_14, %c0_15] : memref<2x32x96xf32, #tpu.memory_space<vmem>>, vector<1x32x96xf32>
    %31 = vector.shape_cast %30 : vector<1x32x96xf32> to vector<32x96xf32>
    %cst_16 = arith.constant dense<0.000000e+00> : vector<16x96xf32>
    %32 = tpu.matmul %24, %31, %cst_16 {dimension_numbers = #tpu.dot_dimension_numbers<[1], [0], [0], [1], [0, 0, 1, 1], [], []>} : vector<16x32xf32>, vector<32x96xf32>, vector<16x96xf32> -> vector<16x96xf32>
    %c0_17 = arith.constant 0 : index
    %c0_18 = arith.constant 0 : index
    %c0_19 = arith.constant 0 : index
    %33 = vector.load %arg7[%c0_17, %c0_18, %c0_19] : memref<2x1x96xf32, #tpu.memory_space<vmem>>, vector<1x1x96xf32>
    %34 = vector.shape_cast %33 : vector<1x1x96xf32> to vector<1x96xf32>
    %35 = vector.broadcast %34 : vector<1x96xf32> to vector<16x96xf32>
    %36 = arith.addf %32, %35 : vector<16x96xf32>
    %37 = vector.extract_strided_slice %36 {offsets = [0, 0], sizes = [16, 8], strides = [1, 1]} : vector<16x96xf32> to vector<16x8xf32>
    %38 = vector.extract_strided_slice %36 {offsets = [0, 32], sizes = [16, 8], strides = [1, 1]} : vector<16x96xf32> to vector<16x8xf32>
    %39 = vector.extract_strided_slice %36 {offsets = [0, 64], sizes = [16, 8], strides = [1, 1]} : vector<16x96xf32> to vector<16x8xf32>
    %40 = vector.extract_strided_slice %37 {offsets = [0, 0], sizes = [8, 8], strides = [1, 1]} : vector<16x8xf32> to vector<8x8xf32>
    %41 = vector.extract_strided_slice %38 {offsets = [0, 0], sizes = [8, 8], strides = [1, 1]} : vector<16x8xf32> to vector<8x8xf32>
    %42 = vector.extract_strided_slice %39 {offsets = [0, 0], sizes = [8, 8], strides = [1, 1]} : vector<16x8xf32> to vector<8x8xf32>
    %cst_20 = arith.constant dense<0.000000e+00> : vector<8x8xf32>
    %43 = tpu.matmul %40, %41, %cst_20 {dimension_numbers = #tpu.dot_dimension_numbers<[1], [1], [0], [0], [0, 0, 1, 0], [], []>} : vector<8x8xf32>, vector<8x8xf32>, vector<8x8xf32> -> vector<8x8xf32>
    %cst_21 = arith.constant 0.353553385 : f32
    %44 = vector.broadcast %cst_21 : f32 to vector<8x8xf32>
    %45 = arith.mulf %43, %44 : vector<8x8xf32>
    %46 = vector.extract_strided_slice %29 {offsets = [0, 0], sizes = [1, 8], strides = [1, 1]} : vector<2x8xf32> to vector<1x8xf32>
    %47 = vector.broadcast %46 : vector<1x8xf32> to vector<8x8xf32>
    %48 = arith.addf %45, %47 : vector<8x8xf32>
    %cst_22 = arith.constant dense<0xFF800000> : vector<8xf32>
    %49 = vector.multi_reduction <maximumf>, %48, %cst_22 [1] : vector<8x8xf32> to vector<8xf32>
    %50 = vector.shape_cast %49 : vector<8xf32> to vector<8x1xf32>
    %51 = vector.broadcast %50 : vector<8x1xf32> to vector<8x8xf32>
    %52 = arith.subf %48, %51 : vector<8x8xf32>
    %53 = math.exp %52 : vector<8x8xf32>
    %cst_23 = arith.constant dense<0.000000e+00> : vector<8xf32>
    %54 = vector.multi_reduction <add>, %53, %cst_23 [1] : vector<8x8xf32> to vector<8xf32>
    %55 = vector.shape_cast %54 : vector<8xf32> to vector<8x1xf32>
    %56 = vector.broadcast %55 : vector<8x1xf32> to vector<8x8xf32>
    %57 = arith.divf %53, %56 : vector<8x8xf32>
    %cst_24 = arith.constant dense<0.000000e+00> : vector<8x8xf32>
    %58 = tpu.matmul %57, %42, %cst_24 {dimension_numbers = #tpu.dot_dimension_numbers<[1], [0], [0], [1], [0, 0, 1, 1], [], []>} : vector<8x8xf32>, vector<8x8xf32>, vector<8x8xf32> -> vector<8x8xf32>
    %59 = vector.extract_strided_slice %37 {offsets = [8, 0], sizes = [8, 8], strides = [1, 1]} : vector<16x8xf32> to vector<8x8xf32>
    %60 = vector.extract_strided_slice %38 {offsets = [8, 0], sizes = [8, 8], strides = [1, 1]} : vector<16x8xf32> to vector<8x8xf32>
    %61 = vector.extract_strided_slice %39 {offsets = [8, 0], sizes = [8, 8], strides = [1, 1]} : vector<16x8xf32> to vector<8x8xf32>
    %cst_25 = arith.constant dense<0.000000e+00> : vector<8x8xf32>
    %62 = tpu.matmul %59, %60, %cst_25 {dimension_numbers = #tpu.dot_dimension_numbers<[1], [1], [0], [0], [0, 0, 1, 0], [], []>} : vector<8x8xf32>, vector<8x8xf32>, vector<8x8xf32> -> vector<8x8xf32>
    %cst_26 = arith.constant 0.353553385 : f32
    %63 = vector.broadcast %cst_26 : f32 to vector<8x8xf32>
    %64 = arith.mulf %62, %63 : vector<8x8xf32>
    %65 = vector.extract_strided_slice %29 {offsets = [1, 0], sizes = [1, 8], strides = [1, 1]} : vector<2x8xf32> to vector<1x8xf32>
    %66 = vector.broadcast %65 : vector<1x8xf32> to vector<8x8xf32>
    %67 = arith.addf %64, %66 : vector<8x8xf32>
    %cst_27 = arith.constant dense<0xFF800000> : vector<8xf32>
    %68 = vector.multi_reduction <maximumf>, %67, %cst_27 [1] : vector<8x8xf32> to vector<8xf32>
    %69 = vector.shape_cast %68 : vector<8xf32> to vector<8x1xf32>
    %70 = vector.broadcast %69 : vector<8x1xf32> to vector<8x8xf32>
    %71 = arith.subf %67, %70 : vector<8x8xf32>
    %72 = math.exp %71 : vector<8x8xf32>
    %cst_28 = arith.constant dense<0.000000e+00> : vector<8xf32>
    %73 = vector.multi_reduction <add>, %72, %cst_28 [1] : vector<8x8xf32> to vector<8xf32>
    %74 = vector.shape_cast %73 : vector<8xf32> to vector<8x1xf32>
    %75 = vector.broadcast %74 : vector<8x1xf32> to vector<8x8xf32>
    %76 = arith.divf %72, %75 : vector<8x8xf32>
    %cst_29 = arith.constant dense<0.000000e+00> : vector<8x8xf32>
    %77 = tpu.matmul %76, %61, %cst_29 {dimension_numbers = #tpu.dot_dimension_numbers<[1], [0], [0], [1], [0, 0, 1, 1], [], []>} : vector<8x8xf32>, vector<8x8xf32>, vector<8x8xf32> -> vector<8x8xf32>
    %78 = tpu.concatenate %58, %77 in 0 : vector<8x8xf32>, vector<8x8xf32> -> vector<16x8xf32>
    %79 = vector.extract_strided_slice %36 {offsets = [0, 8], sizes = [16, 8], strides = [1, 1]} : vector<16x96xf32> to vector<16x8xf32>
    %80 = vector.extract_strided_slice %36 {offsets = [0, 40], sizes = [16, 8], strides = [1, 1]} : vector<16x96xf32> to vector<16x8xf32>
    %81 = vector.extract_strided_slice %36 {offsets = [0, 72], sizes = [16, 8], strides = [1, 1]} : vector<16x96xf32> to vector<16x8xf32>
    %82 = vector.extract_strided_slice %79 {offsets = [0, 0], sizes = [8, 8], strides = [1, 1]} : vector<16x8xf32> to vector<8x8xf32>
    %83 = vector.extract_strided_slice %80 {offsets = [0, 0], sizes = [8, 8], strides = [1, 1]} : vector<16x8xf32> to vector<8x8xf32>
    %84 = vector.extract_strided_slice %81 {offsets = [0, 0], sizes = [8, 8], strides = [1, 1]} : vector<16x8xf32> to vector<8x8xf32>
    %cst_30 = arith.constant dense<0.000000e+00> : vector<8x8xf32>
    %85 = tpu.matmul %82, %83, %cst_30 {dimension_numbers = #tpu.dot_dimension_numbers<[1], [1], [0], [0], [0, 0, 1, 0], [], []>} : vector<8x8xf32>, vector<8x8xf32>, vector<8x8xf32> -> vector<8x8xf32>
    %cst_31 = arith.constant 0.353553385 : f32
    %86 = vector.broadcast %cst_31 : f32 to vector<8x8xf32>
    %87 = arith.mulf %85, %86 : vector<8x8xf32>
    %88 = vector.extract_strided_slice %29 {offsets = [0, 0], sizes = [1, 8], strides = [1, 1]} : vector<2x8xf32> to vector<1x8xf32>
    %89 = vector.broadcast %88 : vector<1x8xf32> to vector<8x8xf32>
    %90 = arith.addf %87, %89 : vector<8x8xf32>
    %cst_32 = arith.constant dense<0xFF800000> : vector<8xf32>
    %91 = vector.multi_reduction <maximumf>, %90, %cst_32 [1] : vector<8x8xf32> to vector<8xf32>
    %92 = vector.shape_cast %91 : vector<8xf32> to vector<8x1xf32>
    %93 = vector.broadcast %92 : vector<8x1xf32> to vector<8x8xf32>
    %94 = arith.subf %90, %93 : vector<8x8xf32>
    %95 = math.exp %94 : vector<8x8xf32>
    %cst_33 = arith.constant dense<0.000000e+00> : vector<8xf32>
    %96 = vector.multi_reduction <add>, %95, %cst_33 [1] : vector<8x8xf32> to vector<8xf32>
    %97 = vector.shape_cast %96 : vector<8xf32> to vector<8x1xf32>
    %98 = vector.broadcast %97 : vector<8x1xf32> to vector<8x8xf32>
    %99 = arith.divf %95, %98 : vector<8x8xf32>
    %cst_34 = arith.constant dense<0.000000e+00> : vector<8x8xf32>
    %100 = tpu.matmul %99, %84, %cst_34 {dimension_numbers = #tpu.dot_dimension_numbers<[1], [0], [0], [1], [0, 0, 1, 1], [], []>} : vector<8x8xf32>, vector<8x8xf32>, vector<8x8xf32> -> vector<8x8xf32>
    %101 = vector.extract_strided_slice %79 {offsets = [8, 0], sizes = [8, 8], strides = [1, 1]} : vector<16x8xf32> to vector<8x8xf32>
    %102 = vector.extract_strided_slice %80 {offsets = [8, 0], sizes = [8, 8], strides = [1, 1]} : vector<16x8xf32> to vector<8x8xf32>
    %103 = vector.extract_strided_slice %81 {offsets = [8, 0], sizes = [8, 8], strides = [1, 1]} : vector<16x8xf32> to vector<8x8xf32>
    %cst_35 = arith.constant dense<0.000000e+00> : vector<8x8xf32>
    %104 = tpu.matmul %101, %102, %cst_35 {dimension_numbers = #tpu.dot_dimension_numbers<[1], [1], [0], [0], [0, 0, 1, 0], [], []>} : vector<8x8xf32>, vector<8x8xf32>, vector<8x8xf32> -> vector<8x8xf32>
    %cst_36 = arith.constant 0.353553385 : f32
    %105 = vector.broadcast %cst_36 : f32 to vector<8x8xf32>
    %106 = arith.mulf %104, %105 : vector<8x8xf32>
    %107 = vector.extract_strided_slice %29 {offsets = [1, 0], sizes = [1, 8], strides = [1, 1]} : vector<2x8xf32> to vector<1x8xf32>
    %108 = vector.broadcast %107 : vector<1x8xf32> to vector<8x8xf32>
    %109 = arith.addf %106, %108 : vector<8x8xf32>
    %cst_37 = arith.constant dense<0xFF800000> : vector<8xf32>
    %110 = vector.multi_reduction <maximumf>, %109, %cst_37 [1] : vector<8x8xf32> to vector<8xf32>
    %111 = vector.shape_cast %110 : vector<8xf32> to vector<8x1xf32>
    %112 = vector.broadcast %111 : vector<8x1xf32> to vector<8x8xf32>
    %113 = arith.subf %109, %112 : vector<8x8xf32>
    %114 = math.exp %113 : vector<8x8xf32>
    %cst_38 = arith.constant dense<0.000000e+00> : vector<8xf32>
    %115 = vector.multi_reduction <add>, %114, %cst_38 [1] : vector<8x8xf32> to vector<8xf32>
    %116 = vector.shape_cast %115 : vector<8xf32> to vector<8x1xf32>
    %117 = vector.broadcast %116 : vector<8x1xf32> to vector<8x8xf32>
    %118 = arith.divf %114, %117 : vector<8x8xf32>
    %cst_39 = arith.constant dense<0.000000e+00> : vector<8x8xf32>
    %119 = tpu.matmul %118, %103, %cst_39 {dimension_numbers = #tpu.dot_dimension_numbers<[1], [0], [0], [1], [0, 0, 1, 1], [], []>} : vector<8x8xf32>, vector<8x8xf32>, vector<8x8xf32> -> vector<8x8xf32>
    %120 = tpu.concatenate %100, %119 in 0 : vector<8x8xf32>, vector<8x8xf32> -> vector<16x8xf32>
    %121 = vector.extract_strided_slice %36 {offsets = [0, 16], sizes = [16, 8], strides = [1, 1]} : vector<16x96xf32> to vector<16x8xf32>
    %122 = vector.extract_strided_slice %36 {offsets = [0, 48], sizes = [16, 8], strides = [1, 1]} : vector<16x96xf32> to vector<16x8xf32>
    %123 = vector.extract_strided_slice %36 {offsets = [0, 80], sizes = [16, 8], strides = [1, 1]} : vector<16x96xf32> to vector<16x8xf32>
    %124 = vector.extract_strided_slice %121 {offsets = [0, 0], sizes = [8, 8], strides = [1, 1]} : vector<16x8xf32> to vector<8x8xf32>
    %125 = vector.extract_strided_slice %122 {offsets = [0, 0], sizes = [8, 8], strides = [1, 1]} : vector<16x8xf32> to vector<8x8xf32>
    %126 = vector.extract_strided_slice %123 {offsets = [0, 0], sizes = [8, 8], strides = [1, 1]} : vector<16x8xf32> to vector<8x8xf32>
    %cst_40 = arith.constant dense<0.000000e+00> : vector<8x8xf32>
    %127 = tpu.matmul %124, %125, %cst_40 {dimension_numbers = #tpu.dot_dimension_numbers<[1], [1], [0], [0], [0, 0, 1, 0], [], []>} : vector<8x8xf32>, vector<8x8xf32>, vector<8x8xf32> -> vector<8x8xf32>
    %cst_41 = arith.constant 0.353553385 : f32
    %128 = vector.broadcast %cst_41 : f32 to vector<8x8xf32>
    %129 = arith.mulf %127, %128 : vector<8x8xf32>
    %130 = vector.extract_strided_slice %29 {offsets = [0, 0], sizes = [1, 8], strides = [1, 1]} : vector<2x8xf32> to vector<1x8xf32>
    %131 = vector.broadcast %130 : vector<1x8xf32> to vector<8x8xf32>
    %132 = arith.addf %129, %131 : vector<8x8xf32>
    %cst_42 = arith.constant dense<0xFF800000> : vector<8xf32>
    %133 = vector.multi_reduction <maximumf>, %132, %cst_42 [1] : vector<8x8xf32> to vector<8xf32>
    %134 = vector.shape_cast %133 : vector<8xf32> to vector<8x1xf32>
    %135 = vector.broadcast %134 : vector<8x1xf32> to vector<8x8xf32>
    %136 = arith.subf %132, %135 : vector<8x8xf32>
    %137 = math.exp %136 : vector<8x8xf32>
    %cst_43 = arith.constant dense<0.000000e+00> : vector<8xf32>
    %138 = vector.multi_reduction <add>, %137, %cst_43 [1] : vector<8x8xf32> to vector<8xf32>
    %139 = vector.shape_cast %138 : vector<8xf32> to vector<8x1xf32>
    %140 = vector.broadcast %139 : vector<8x1xf32> to vector<8x8xf32>
    %141 = arith.divf %137, %140 : vector<8x8xf32>
    %cst_44 = arith.constant dense<0.000000e+00> : vector<8x8xf32>
    %142 = tpu.matmul %141, %126, %cst_44 {dimension_numbers = #tpu.dot_dimension_numbers<[1], [0], [0], [1], [0, 0, 1, 1], [], []>} : vector<8x8xf32>, vector<8x8xf32>, vector<8x8xf32> -> vector<8x8xf32>
    %143 = vector.extract_strided_slice %121 {offsets = [8, 0], sizes = [8, 8], strides = [1, 1]} : vector<16x8xf32> to vector<8x8xf32>
    %144 = vector.extract_strided_slice %122 {offsets = [8, 0], sizes = [8, 8], strides = [1, 1]} : vector<16x8xf32> to vector<8x8xf32>
    %145 = vector.extract_strided_slice %123 {offsets = [8, 0], sizes = [8, 8], strides = [1, 1]} : vector<16x8xf32> to vector<8x8xf32>
    %cst_45 = arith.constant dense<0.000000e+00> : vector<8x8xf32>
    %146 = tpu.matmul %143, %144, %cst_45 {dimension_numbers = #tpu.dot_dimension_numbers<[1], [1], [0], [0], [0, 0, 1, 0], [], []>} : vector<8x8xf32>, vector<8x8xf32>, vector<8x8xf32> -> vector<8x8xf32>
    %cst_46 = arith.constant 0.353553385 : f32
    %147 = vector.broadcast %cst_46 : f32 to vector<8x8xf32>
    %148 = arith.mulf %146, %147 : vector<8x8xf32>
    %149 = vector.extract_strided_slice %29 {offsets = [1, 0], sizes = [1, 8], strides = [1, 1]} : vector<2x8xf32> to vector<1x8xf32>
    %150 = vector.broadcast %149 : vector<1x8xf32> to vector<8x8xf32>
    %151 = arith.addf %148, %150 : vector<8x8xf32>
    %cst_47 = arith.constant dense<0xFF800000> : vector<8xf32>
    %152 = vector.multi_reduction <maximumf>, %151, %cst_47 [1] : vector<8x8xf32> to vector<8xf32>
    %153 = vector.shape_cast %152 : vector<8xf32> to vector<8x1xf32>
    %154 = vector.broadcast %153 : vector<8x1xf32> to vector<8x8xf32>
    %155 = arith.subf %151, %154 : vector<8x8xf32>
    %156 = math.exp %155 : vector<8x8xf32>
    %cst_48 = arith.constant dense<0.000000e+00> : vector<8xf32>
    %157 = vector.multi_reduction <add>, %156, %cst_48 [1] : vector<8x8xf32> to vector<8xf32>
    %158 = vector.shape_cast %157 : vector<8xf32> to vector<8x1xf32>
    %159 = vector.broadcast %158 : vector<8x1xf32> to vector<8x8xf32>
    %160 = arith.divf %156, %159 : vector<8x8xf32>
    %cst_49 = arith.constant dense<0.000000e+00> : vector<8x8xf32>
    %161 = tpu.matmul %160, %145, %cst_49 {dimension_numbers = #tpu.dot_dimension_numbers<[1], [0], [0], [1], [0, 0, 1, 1], [], []>} : vector<8x8xf32>, vector<8x8xf32>, vector<8x8xf32> -> vector<8x8xf32>
    %162 = tpu.concatenate %142, %161 in 0 : vector<8x8xf32>, vector<8x8xf32> -> vector<16x8xf32>
    %163 = vector.extract_strided_slice %36 {offsets = [0, 24], sizes = [16, 8], strides = [1, 1]} : vector<16x96xf32> to vector<16x8xf32>
    %164 = vector.extract_strided_slice %36 {offsets = [0, 56], sizes = [16, 8], strides = [1, 1]} : vector<16x96xf32> to vector<16x8xf32>
    %165 = vector.extract_strided_slice %36 {offsets = [0, 88], sizes = [16, 8], strides = [1, 1]} : vector<16x96xf32> to vector<16x8xf32>
    %166 = vector.extract_strided_slice %163 {offsets = [0, 0], sizes = [8, 8], strides = [1, 1]} : vector<16x8xf32> to vector<8x8xf32>
    %167 = vector.extract_strided_slice %164 {offsets = [0, 0], sizes = [8, 8], strides = [1, 1]} : vector<16x8xf32> to vector<8x8xf32>
    %168 = vector.extract_strided_slice %165 {offsets = [0, 0], sizes = [8, 8], strides = [1, 1]} : vector<16x8xf32> to vector<8x8xf32>
    %cst_50 = arith.constant dense<0.000000e+00> : vector<8x8xf32>
    %169 = tpu.matmul %166, %167, %cst_50 {dimension_numbers = #tpu.dot_dimension_numbers<[1], [1], [0], [0], [0, 0, 1, 0], [], []>} : vector<8x8xf32>, vector<8x8xf32>, vector<8x8xf32> -> vector<8x8xf32>
    %cst_51 = arith.constant 0.353553385 : f32
    %170 = vector.broadcast %cst_51 : f32 to vector<8x8xf32>
    %171 = arith.mulf %169, %170 : vector<8x8xf32>
    %172 = vector.extract_strided_slice %29 {offsets = [0, 0], sizes = [1, 8], strides = [1, 1]} : vector<2x8xf32> to vector<1x8xf32>
    %173 = vector.broadcast %172 : vector<1x8xf32> to vector<8x8xf32>
    %174 = arith.addf %171, %173 : vector<8x8xf32>
    %cst_52 = arith.constant dense<0xFF800000> : vector<8xf32>
    %175 = vector.multi_reduction <maximumf>, %174, %cst_52 [1] : vector<8x8xf32> to vector<8xf32>
    %176 = vector.shape_cast %175 : vector<8xf32> to vector<8x1xf32>
    %177 = vector.broadcast %176 : vector<8x1xf32> to vector<8x8xf32>
    %178 = arith.subf %174, %177 : vector<8x8xf32>
    %179 = math.exp %178 : vector<8x8xf32>
    %cst_53 = arith.constant dense<0.000000e+00> : vector<8xf32>
    %180 = vector.multi_reduction <add>, %179, %cst_53 [1] : vector<8x8xf32> to vector<8xf32>
    %181 = vector.shape_cast %180 : vector<8xf32> to vector<8x1xf32>
    %182 = vector.broadcast %181 : vector<8x1xf32> to vector<8x8xf32>
    %183 = arith.divf %179, %182 : vector<8x8xf32>
    %cst_54 = arith.constant dense<0.000000e+00> : vector<8x8xf32>
    %184 = tpu.matmul %183, %168, %cst_54 {dimension_numbers = #tpu.dot_dimension_numbers<[1], [0], [0], [1], [0, 0, 1, 1], [], []>} : vector<8x8xf32>, vector<8x8xf32>, vector<8x8xf32> -> vector<8x8xf32>
    %185 = vector.extract_strided_slice %163 {offsets = [8, 0], sizes = [8, 8], strides = [1, 1]} : vector<16x8xf32> to vector<8x8xf32>
    %186 = vector.extract_strided_slice %164 {offsets = [8, 0], sizes = [8, 8], strides = [1, 1]} : vector<16x8xf32> to vector<8x8xf32>
    %187 = vector.extract_strided_slice %165 {offsets = [8, 0], sizes = [8, 8], strides = [1, 1]} : vector<16x8xf32> to vector<8x8xf32>
    %cst_55 = arith.constant dense<0.000000e+00> : vector<8x8xf32>
    %188 = tpu.matmul %185, %186, %cst_55 {dimension_numbers = #tpu.dot_dimension_numbers<[1], [1], [0], [0], [0, 0, 1, 0], [], []>} : vector<8x8xf32>, vector<8x8xf32>, vector<8x8xf32> -> vector<8x8xf32>
    %cst_56 = arith.constant 0.353553385 : f32
    %189 = vector.broadcast %cst_56 : f32 to vector<8x8xf32>
    %190 = arith.mulf %188, %189 : vector<8x8xf32>
    %191 = vector.extract_strided_slice %29 {offsets = [1, 0], sizes = [1, 8], strides = [1, 1]} : vector<2x8xf32> to vector<1x8xf32>
    %192 = vector.broadcast %191 : vector<1x8xf32> to vector<8x8xf32>
    %193 = arith.addf %190, %192 : vector<8x8xf32>
    %cst_57 = arith.constant dense<0xFF800000> : vector<8xf32>
    %194 = vector.multi_reduction <maximumf>, %193, %cst_57 [1] : vector<8x8xf32> to vector<8xf32>
    %195 = vector.shape_cast %194 : vector<8xf32> to vector<8x1xf32>
    %196 = vector.broadcast %195 : vector<8x1xf32> to vector<8x8xf32>
    %197 = arith.subf %193, %196 : vector<8x8xf32>
    %198 = math.exp %197 : vector<8x8xf32>
    %cst_58 = arith.constant dense<0.000000e+00> : vector<8xf32>
    %199 = vector.multi_reduction <add>, %198, %cst_58 [1] : vector<8x8xf32> to vector<8xf32>
    %200 = vector.shape_cast %199 : vector<8xf32> to vector<8x1xf32>
    %201 = vector.broadcast %200 : vector<8x1xf32> to vector<8x8xf32>
    %202 = arith.divf %198, %201 : vector<8x8xf32>
    %cst_59 = arith.constant dense<0.000000e+00> : vector<8x8xf32>
    %203 = tpu.matmul %202, %187, %cst_59 {dimension_numbers = #tpu.dot_dimension_numbers<[1], [0], [0], [1], [0, 0, 1, 1], [], []>} : vector<8x8xf32>, vector<8x8xf32>, vector<8x8xf32> -> vector<8x8xf32>
    %204 = tpu.concatenate %184, %203 in 0 : vector<8x8xf32>, vector<8x8xf32> -> vector<16x8xf32>
    %205 = tpu.concatenate %78, %120, %162, %204 in 1 : vector<16x8xf32>, vector<16x8xf32>, vector<16x8xf32>, vector<16x8xf32> -> vector<16x32xf32>
    %c0_60 = arith.constant 0 : index
    %c0_61 = arith.constant 0 : index
    %c0_62 = arith.constant 0 : index
    %206 = vector.load %arg8[%c0_60, %c0_61, %c0_62] : memref<2x32x32xf32, #tpu.memory_space<vmem>>, vector<1x32x32xf32>
    %207 = vector.shape_cast %206 : vector<1x32x32xf32> to vector<32x32xf32>
    %cst_63 = arith.constant dense<0.000000e+00> : vector<16x32xf32>
    %208 = tpu.matmul %205, %207, %cst_63 {dimension_numbers = #tpu.dot_dimension_numbers<[1], [0], [0], [1], [0, 0, 1, 1], [], []>} : vector<16x32xf32>, vector<32x32xf32>, vector<16x32xf32> -> vector<16x32xf32>
    %c0_64 = arith.constant 0 : index
    %c0_65 = arith.constant 0 : index
    %c0_66 = arith.constant 0 : index
    %209 = vector.load %arg9[%c0_64, %c0_65, %c0_66] : memref<2x1x32xf32, #tpu.memory_space<vmem>>, vector<1x1x32xf32>
    %210 = vector.shape_cast %209 : vector<1x1x32xf32> to vector<1x32xf32>
    %211 = vector.broadcast %210 : vector<1x32xf32> to vector<16x32xf32>
    %212 = arith.addf %208, %211 : vector<16x32xf32>
    %213 = arith.addf %24, %212 : vector<16x32xf32>
    %c0_67 = arith.constant 0 : index
    %c0_68 = arith.constant 0 : index
    %c0_69 = arith.constant 0 : index
    %214 = vector.load %arg10[%c0_67, %c0_68, %c0_69] : memref<2x1x32xf32, #tpu.memory_space<vmem>>, vector<1x1x32xf32>
    %215 = vector.shape_cast %214 : vector<1x1x32xf32> to vector<1x32xf32>
    %c0_70 = arith.constant 0 : index
    %c0_71 = arith.constant 0 : index
    %c0_72 = arith.constant 0 : index
    %216 = vector.load %arg11[%c0_70, %c0_71, %c0_72] : memref<2x1x32xf32, #tpu.memory_space<vmem>>, vector<1x1x32xf32>
    %217 = vector.shape_cast %216 : vector<1x1x32xf32> to vector<1x32xf32>
    %cst_73 = arith.constant dense<0.000000e+00> : vector<16xf32>
    %218 = vector.multi_reduction <add>, %213, %cst_73 [1] : vector<16x32xf32> to vector<16xf32>
    %219 = vector.shape_cast %218 : vector<16xf32> to vector<16x1xf32>
    %cst_74 = arith.constant 3.200000e+01 : f32
    %220 = vector.broadcast %cst_74 : f32 to vector<16x1xf32>
    %221 = arith.divf %219, %220 : vector<16x1xf32>
    %222 = vector.broadcast %221 : vector<16x1xf32> to vector<16x32xf32>
    %223 = arith.subf %213, %222 : vector<16x32xf32>
    %224 = arith.mulf %223, %223 : vector<16x32xf32>
    %cst_75 = arith.constant dense<0.000000e+00> : vector<16xf32>
    %225 = vector.multi_reduction <add>, %224, %cst_75 [1] : vector<16x32xf32> to vector<16xf32>
    %226 = vector.shape_cast %225 : vector<16xf32> to vector<16x1xf32>
    %cst_76 = arith.constant 3.200000e+01 : f32
    %227 = vector.broadcast %cst_76 : f32 to vector<16x1xf32>
    %228 = arith.divf %226, %227 : vector<16x1xf32>
    %229 = vector.broadcast %221 : vector<16x1xf32> to vector<16x32xf32>
    %230 = arith.subf %213, %229 : vector<16x32xf32>
    %cst_77 = arith.constant 9.99999996E-13 : f32
    %231 = vector.broadcast %cst_77 : f32 to vector<16x1xf32>
    %232 = arith.addf %228, %231 : vector<16x1xf32>
    %233 = math.rsqrt %232 : vector<16x1xf32>
    %234 = vector.broadcast %233 : vector<16x1xf32> to vector<16x32xf32>
    %235 = arith.mulf %230, %234 : vector<16x32xf32>
    %236 = vector.broadcast %215 : vector<1x32xf32> to vector<16x32xf32>
    %237 = arith.mulf %235, %236 : vector<16x32xf32>
    %238 = vector.broadcast %217 : vector<1x32xf32> to vector<16x32xf32>
    %239 = arith.addf %237, %238 : vector<16x32xf32>
    %c0_78 = arith.constant 0 : index
    %c0_79 = arith.constant 0 : index
    %c0_80 = arith.constant 0 : index
    %240 = vector.load %arg12[%c0_78, %c0_79, %c0_80] : memref<2x32x64xf32, #tpu.memory_space<vmem>>, vector<1x32x64xf32>
    %241 = vector.shape_cast %240 : vector<1x32x64xf32> to vector<32x64xf32>
    %cst_81 = arith.constant dense<0.000000e+00> : vector<16x64xf32>
    %242 = tpu.matmul %239, %241, %cst_81 {dimension_numbers = #tpu.dot_dimension_numbers<[1], [0], [0], [1], [0, 0, 1, 1], [], []>} : vector<16x32xf32>, vector<32x64xf32>, vector<16x64xf32> -> vector<16x64xf32>
    %c0_82 = arith.constant 0 : index
    %c0_83 = arith.constant 0 : index
    %c0_84 = arith.constant 0 : index
    %243 = vector.load %arg13[%c0_82, %c0_83, %c0_84] : memref<2x1x64xf32, #tpu.memory_space<vmem>>, vector<1x1x64xf32>
    %244 = vector.shape_cast %243 : vector<1x1x64xf32> to vector<1x64xf32>
    %245 = vector.broadcast %244 : vector<1x64xf32> to vector<16x64xf32>
    %246 = arith.addf %242, %245 : vector<16x64xf32>
    %cst_85 = arith.constant 5.000000e-01 : f32
    %247 = vector.broadcast %cst_85 : f32 to vector<16x64xf32>
    %248 = arith.mulf %247, %246 : vector<16x64xf32>
    %cst_86 = arith.constant 4.471500e-02 : f32
    %249 = vector.broadcast %cst_86 : f32 to vector<16x64xf32>
    %250 = arith.mulf %249, %246 : vector<16x64xf32>
    %251 = arith.mulf %250, %246 : vector<16x64xf32>
    %252 = arith.mulf %251, %246 : vector<16x64xf32>
    %253 = arith.addf %246, %252 : vector<16x64xf32>
    %cst_87 = arith.constant 0.797884583 : f32
    %254 = vector.broadcast %cst_87 : f32 to vector<16x64xf32>
    %255 = arith.mulf %254, %253 : vector<16x64xf32>
    %256 = math.tanh %255 : vector<16x64xf32>
    %cst_88 = arith.constant 1.000000e+00 : f32
    %257 = vector.broadcast %cst_88 : f32 to vector<16x64xf32>
    %258 = arith.addf %257, %256 : vector<16x64xf32>
    %259 = arith.mulf %248, %258 : vector<16x64xf32>
    %c0_89 = arith.constant 0 : index
    %c0_90 = arith.constant 0 : index
    %c0_91 = arith.constant 0 : index
    %260 = vector.load %arg14[%c0_89, %c0_90, %c0_91] : memref<2x64x32xf32, #tpu.memory_space<vmem>>, vector<1x64x32xf32>
    %261 = vector.shape_cast %260 : vector<1x64x32xf32> to vector<64x32xf32>
    %cst_92 = arith.constant dense<0.000000e+00> : vector<16x32xf32>
    %262 = tpu.matmul %259, %261, %cst_92 {dimension_numbers = #tpu.dot_dimension_numbers<[1], [0], [0], [1], [0, 0, 1, 1], [], []>} : vector<16x64xf32>, vector<64x32xf32>, vector<16x32xf32> -> vector<16x32xf32>
    %c0_93 = arith.constant 0 : index
    %c0_94 = arith.constant 0 : index
    %c0_95 = arith.constant 0 : index
    %263 = vector.load %arg15[%c0_93, %c0_94, %c0_95] : memref<2x1x32xf32, #tpu.memory_space<vmem>>, vector<1x1x32xf32>
    %264 = vector.shape_cast %263 : vector<1x1x32xf32> to vector<1x32xf32>
    %265 = vector.broadcast %264 : vector<1x32xf32> to vector<16x32xf32>
    %266 = arith.addf %262, %265 : vector<16x32xf32>
    %267 = arith.addf %239, %266 : vector<16x32xf32>
    %c0_96 = arith.constant 0 : index
    %c0_97 = arith.constant 0 : index
    %c0_98 = arith.constant 0 : index
    %268 = vector.load %arg16[%c0_96, %c0_97, %c0_98] : memref<2x1x32xf32, #tpu.memory_space<vmem>>, vector<1x1x32xf32>
    %269 = vector.shape_cast %268 : vector<1x1x32xf32> to vector<1x32xf32>
    %c0_99 = arith.constant 0 : index
    %c0_100 = arith.constant 0 : index
    %c0_101 = arith.constant 0 : index
    %270 = vector.load %arg17[%c0_99, %c0_100, %c0_101] : memref<2x1x32xf32, #tpu.memory_space<vmem>>, vector<1x1x32xf32>
    %271 = vector.shape_cast %270 : vector<1x1x32xf32> to vector<1x32xf32>
    %cst_102 = arith.constant dense<0.000000e+00> : vector<16xf32>
    %272 = vector.multi_reduction <add>, %267, %cst_102 [1] : vector<16x32xf32> to vector<16xf32>
    %273 = vector.shape_cast %272 : vector<16xf32> to vector<16x1xf32>
    %cst_103 = arith.constant 3.200000e+01 : f32
    %274 = vector.broadcast %cst_103 : f32 to vector<16x1xf32>
    %275 = arith.divf %273, %274 : vector<16x1xf32>
    %276 = vector.broadcast %275 : vector<16x1xf32> to vector<16x32xf32>
    %277 = arith.subf %267, %276 : vector<16x32xf32>
    %278 = arith.mulf %277, %277 : vector<16x32xf32>
    %cst_104 = arith.constant dense<0.000000e+00> : vector<16xf32>
    %279 = vector.multi_reduction <add>, %278, %cst_104 [1] : vector<16x32xf32> to vector<16xf32>
    %280 = vector.shape_cast %279 : vector<16xf32> to vector<16x1xf32>
    %cst_105 = arith.constant 3.200000e+01 : f32
    %281 = vector.broadcast %cst_105 : f32 to vector<16x1xf32>
    %282 = arith.divf %280, %281 : vector<16x1xf32>
    %283 = vector.broadcast %275 : vector<16x1xf32> to vector<16x32xf32>
    %284 = arith.subf %267, %283 : vector<16x32xf32>
    %cst_106 = arith.constant 9.99999996E-13 : f32
    %285 = vector.broadcast %cst_106 : f32 to vector<16x1xf32>
    %286 = arith.addf %282, %285 : vector<16x1xf32>
    %287 = math.rsqrt %286 : vector<16x1xf32>
    %288 = vector.broadcast %287 : vector<16x1xf32> to vector<16x32xf32>
    %289 = arith.mulf %284, %288 : vector<16x32xf32>
    %290 = vector.broadcast %269 : vector<1x32xf32> to vector<16x32xf32>
    %291 = arith.mulf %289, %290 : vector<16x32xf32>
    %292 = vector.broadcast %271 : vector<1x32xf32> to vector<16x32xf32>
    %293 = arith.addf %291, %292 : vector<16x32xf32>
    %c1 = arith.constant 1 : index
    %c0_107 = arith.constant 0 : index
    %c0_108 = arith.constant 0 : index
    %294 = vector.load %arg6[%c1, %c0_107, %c0_108] : memref<2x32x96xf32, #tpu.memory_space<vmem>>, vector<1x32x96xf32>
    %295 = vector.shape_cast %294 : vector<1x32x96xf32> to vector<32x96xf32>
    %cst_109 = arith.constant dense<0.000000e+00> : vector<16x96xf32>
    %296 = tpu.matmul %293, %295, %cst_109 {dimension_numbers = #tpu.dot_dimension_numbers<[1], [0], [0], [1], [0, 0, 1, 1], [], []>} : vector<16x32xf32>, vector<32x96xf32>, vector<16x96xf32> -> vector<16x96xf32>
    %c1_110 = arith.constant 1 : index
    %c0_111 = arith.constant 0 : index
    %c0_112 = arith.constant 0 : index
    %297 = vector.load %arg7[%c1_110, %c0_111, %c0_112] : memref<2x1x96xf32, #tpu.memory_space<vmem>>, vector<1x1x96xf32>
    %298 = vector.shape_cast %297 : vector<1x1x96xf32> to vector<1x96xf32>
    %299 = vector.broadcast %298 : vector<1x96xf32> to vector<16x96xf32>
    %300 = arith.addf %296, %299 : vector<16x96xf32>
    %301 = vector.extract_strided_slice %300 {offsets = [0, 0], sizes = [16, 8], strides = [1, 1]} : vector<16x96xf32> to vector<16x8xf32>
    %302 = vector.extract_strided_slice %300 {offsets = [0, 32], sizes = [16, 8], strides = [1, 1]} : vector<16x96xf32> to vector<16x8xf32>
    %303 = vector.extract_strided_slice %300 {offsets = [0, 64], sizes = [16, 8], strides = [1, 1]} : vector<16x96xf32> to vector<16x8xf32>
    %304 = vector.extract_strided_slice %301 {offsets = [0, 0], sizes = [8, 8], strides = [1, 1]} : vector<16x8xf32> to vector<8x8xf32>
    %305 = vector.extract_strided_slice %302 {offsets = [0, 0], sizes = [8, 8], strides = [1, 1]} : vector<16x8xf32> to vector<8x8xf32>
    %306 = vector.extract_strided_slice %303 {offsets = [0, 0], sizes = [8, 8], strides = [1, 1]} : vector<16x8xf32> to vector<8x8xf32>
    %cst_113 = arith.constant dense<0.000000e+00> : vector<8x8xf32>
    %307 = tpu.matmul %304, %305, %cst_113 {dimension_numbers = #tpu.dot_dimension_numbers<[1], [1], [0], [0], [0, 0, 1, 0], [], []>} : vector<8x8xf32>, vector<8x8xf32>, vector<8x8xf32> -> vector<8x8xf32>
    %cst_114 = arith.constant 0.353553385 : f32
    %308 = vector.broadcast %cst_114 : f32 to vector<8x8xf32>
    %309 = arith.mulf %307, %308 : vector<8x8xf32>
    %310 = vector.extract_strided_slice %29 {offsets = [0, 0], sizes = [1, 8], strides = [1, 1]} : vector<2x8xf32> to vector<1x8xf32>
    %311 = vector.broadcast %310 : vector<1x8xf32> to vector<8x8xf32>
    %312 = arith.addf %309, %311 : vector<8x8xf32>
    %cst_115 = arith.constant dense<0xFF800000> : vector<8xf32>
    %313 = vector.multi_reduction <maximumf>, %312, %cst_115 [1] : vector<8x8xf32> to vector<8xf32>
    %314 = vector.shape_cast %313 : vector<8xf32> to vector<8x1xf32>
    %315 = vector.broadcast %314 : vector<8x1xf32> to vector<8x8xf32>
    %316 = arith.subf %312, %315 : vector<8x8xf32>
    %317 = math.exp %316 : vector<8x8xf32>
    %cst_116 = arith.constant dense<0.000000e+00> : vector<8xf32>
    %318 = vector.multi_reduction <add>, %317, %cst_116 [1] : vector<8x8xf32> to vector<8xf32>
    %319 = vector.shape_cast %318 : vector<8xf32> to vector<8x1xf32>
    %320 = vector.broadcast %319 : vector<8x1xf32> to vector<8x8xf32>
    %321 = arith.divf %317, %320 : vector<8x8xf32>
    %cst_117 = arith.constant dense<0.000000e+00> : vector<8x8xf32>
    %322 = tpu.matmul %321, %306, %cst_117 {dimension_numbers = #tpu.dot_dimension_numbers<[1], [0], [0], [1], [0, 0, 1, 1], [], []>} : vector<8x8xf32>, vector<8x8xf32>, vector<8x8xf32> -> vector<8x8xf32>
    %323 = vector.extract_strided_slice %301 {offsets = [8, 0], sizes = [8, 8], strides = [1, 1]} : vector<16x8xf32> to vector<8x8xf32>
    %324 = vector.extract_strided_slice %302 {offsets = [8, 0], sizes = [8, 8], strides = [1, 1]} : vector<16x8xf32> to vector<8x8xf32>
    %325 = vector.extract_strided_slice %303 {offsets = [8, 0], sizes = [8, 8], strides = [1, 1]} : vector<16x8xf32> to vector<8x8xf32>
    %cst_118 = arith.constant dense<0.000000e+00> : vector<8x8xf32>
    %326 = tpu.matmul %323, %324, %cst_118 {dimension_numbers = #tpu.dot_dimension_numbers<[1], [1], [0], [0], [0, 0, 1, 0], [], []>} : vector<8x8xf32>, vector<8x8xf32>, vector<8x8xf32> -> vector<8x8xf32>
    %cst_119 = arith.constant 0.353553385 : f32
    %327 = vector.broadcast %cst_119 : f32 to vector<8x8xf32>
    %328 = arith.mulf %326, %327 : vector<8x8xf32>
    %329 = vector.extract_strided_slice %29 {offsets = [1, 0], sizes = [1, 8], strides = [1, 1]} : vector<2x8xf32> to vector<1x8xf32>
    %330 = vector.broadcast %329 : vector<1x8xf32> to vector<8x8xf32>
    %331 = arith.addf %328, %330 : vector<8x8xf32>
    %cst_120 = arith.constant dense<0xFF800000> : vector<8xf32>
    %332 = vector.multi_reduction <maximumf>, %331, %cst_120 [1] : vector<8x8xf32> to vector<8xf32>
    %333 = vector.shape_cast %332 : vector<8xf32> to vector<8x1xf32>
    %334 = vector.broadcast %333 : vector<8x1xf32> to vector<8x8xf32>
    %335 = arith.subf %331, %334 : vector<8x8xf32>
    %336 = math.exp %335 : vector<8x8xf32>
    %cst_121 = arith.constant dense<0.000000e+00> : vector<8xf32>
    %337 = vector.multi_reduction <add>, %336, %cst_121 [1] : vector<8x8xf32> to vector<8xf32>
    %338 = vector.shape_cast %337 : vector<8xf32> to vector<8x1xf32>
    %339 = vector.broadcast %338 : vector<8x1xf32> to vector<8x8xf32>
    %340 = arith.divf %336, %339 : vector<8x8xf32>
    %cst_122 = arith.constant dense<0.000000e+00> : vector<8x8xf32>
    %341 = tpu.matmul %340, %325, %cst_122 {dimension_numbers = #tpu.dot_dimension_numbers<[1], [0], [0], [1], [0, 0, 1, 1], [], []>} : vector<8x8xf32>, vector<8x8xf32>, vector<8x8xf32> -> vector<8x8xf32>
    %342 = tpu.concatenate %322, %341 in 0 : vector<8x8xf32>, vector<8x8xf32> -> vector<16x8xf32>
    %343 = vector.extract_strided_slice %300 {offsets = [0, 8], sizes = [16, 8], strides = [1, 1]} : vector<16x96xf32> to vector<16x8xf32>
    %344 = vector.extract_strided_slice %300 {offsets = [0, 40], sizes = [16, 8], strides = [1, 1]} : vector<16x96xf32> to vector<16x8xf32>
    %345 = vector.extract_strided_slice %300 {offsets = [0, 72], sizes = [16, 8], strides = [1, 1]} : vector<16x96xf32> to vector<16x8xf32>
    %346 = vector.extract_strided_slice %343 {offsets = [0, 0], sizes = [8, 8], strides = [1, 1]} : vector<16x8xf32> to vector<8x8xf32>
    %347 = vector.extract_strided_slice %344 {offsets = [0, 0], sizes = [8, 8], strides = [1, 1]} : vector<16x8xf32> to vector<8x8xf32>
    %348 = vector.extract_strided_slice %345 {offsets = [0, 0], sizes = [8, 8], strides = [1, 1]} : vector<16x8xf32> to vector<8x8xf32>
    %cst_123 = arith.constant dense<0.000000e+00> : vector<8x8xf32>
    %349 = tpu.matmul %346, %347, %cst_123 {dimension_numbers = #tpu.dot_dimension_numbers<[1], [1], [0], [0], [0, 0, 1, 0], [], []>} : vector<8x8xf32>, vector<8x8xf32>, vector<8x8xf32> -> vector<8x8xf32>
    %cst_124 = arith.constant 0.353553385 : f32
    %350 = vector.broadcast %cst_124 : f32 to vector<8x8xf32>
    %351 = arith.mulf %349, %350 : vector<8x8xf32>
    %352 = vector.extract_strided_slice %29 {offsets = [0, 0], sizes = [1, 8], strides = [1, 1]} : vector<2x8xf32> to vector<1x8xf32>
    %353 = vector.broadcast %352 : vector<1x8xf32> to vector<8x8xf32>
    %354 = arith.addf %351, %353 : vector<8x8xf32>
    %cst_125 = arith.constant dense<0xFF800000> : vector<8xf32>
    %355 = vector.multi_reduction <maximumf>, %354, %cst_125 [1] : vector<8x8xf32> to vector<8xf32>
    %356 = vector.shape_cast %355 : vector<8xf32> to vector<8x1xf32>
    %357 = vector.broadcast %356 : vector<8x1xf32> to vector<8x8xf32>
    %358 = arith.subf %354, %357 : vector<8x8xf32>
    %359 = math.exp %358 : vector<8x8xf32>
    %cst_126 = arith.constant dense<0.000000e+00> : vector<8xf32>
    %360 = vector.multi_reduction <add>, %359, %cst_126 [1] : vector<8x8xf32> to vector<8xf32>
    %361 = vector.shape_cast %360 : vector<8xf32> to vector<8x1xf32>
    %362 = vector.broadcast %361 : vector<8x1xf32> to vector<8x8xf32>
    %363 = arith.divf %359, %362 : vector<8x8xf32>
    %cst_127 = arith.constant dense<0.000000e+00> : vector<8x8xf32>
    %364 = tpu.matmul %363, %348, %cst_127 {dimension_numbers = #tpu.dot_dimension_numbers<[1], [0], [0], [1], [0, 0, 1, 1], [], []>} : vector<8x8xf32>, vector<8x8xf32>, vector<8x8xf32> -> vector<8x8xf32>
    %365 = vector.extract_strided_slice %343 {offsets = [8, 0], sizes = [8, 8], strides = [1, 1]} : vector<16x8xf32> to vector<8x8xf32>
    %366 = vector.extract_strided_slice %344 {offsets = [8, 0], sizes = [8, 8], strides = [1, 1]} : vector<16x8xf32> to vector<8x8xf32>
    %367 = vector.extract_strided_slice %345 {offsets = [8, 0], sizes = [8, 8], strides = [1, 1]} : vector<16x8xf32> to vector<8x8xf32>
    %cst_128 = arith.constant dense<0.000000e+00> : vector<8x8xf32>
    %368 = tpu.matmul %365, %366, %cst_128 {dimension_numbers = #tpu.dot_dimension_numbers<[1], [1], [0], [0], [0, 0, 1, 0], [], []>} : vector<8x8xf32>, vector<8x8xf32>, vector<8x8xf32> -> vector<8x8xf32>
    %cst_129 = arith.constant 0.353553385 : f32
    %369 = vector.broadcast %cst_129 : f32 to vector<8x8xf32>
    %370 = arith.mulf %368, %369 : vector<8x8xf32>
    %371 = vector.extract_strided_slice %29 {offsets = [1, 0], sizes = [1, 8], strides = [1, 1]} : vector<2x8xf32> to vector<1x8xf32>
    %372 = vector.broadcast %371 : vector<1x8xf32> to vector<8x8xf32>
    %373 = arith.addf %370, %372 : vector<8x8xf32>
    %cst_130 = arith.constant dense<0xFF800000> : vector<8xf32>
    %374 = vector.multi_reduction <maximumf>, %373, %cst_130 [1] : vector<8x8xf32> to vector<8xf32>
    %375 = vector.shape_cast %374 : vector<8xf32> to vector<8x1xf32>
    %376 = vector.broadcast %375 : vector<8x1xf32> to vector<8x8xf32>
    %377 = arith.subf %373, %376 : vector<8x8xf32>
    %378 = math.exp %377 : vector<8x8xf32>
    %cst_131 = arith.constant dense<0.000000e+00> : vector<8xf32>
    %379 = vector.multi_reduction <add>, %378, %cst_131 [1] : vector<8x8xf32> to vector<8xf32>
    %380 = vector.shape_cast %379 : vector<8xf32> to vector<8x1xf32>
    %381 = vector.broadcast %380 : vector<8x1xf32> to vector<8x8xf32>
    %382 = arith.divf %378, %381 : vector<8x8xf32>
    %cst_132 = arith.constant dense<0.000000e+00> : vector<8x8xf32>
    %383 = tpu.matmul %382, %367, %cst_132 {dimension_numbers = #tpu.dot_dimension_numbers<[1], [0], [0], [1], [0, 0, 1, 1], [], []>} : vector<8x8xf32>, vector<8x8xf32>, vector<8x8xf32> -> vector<8x8xf32>
    %384 = tpu.concatenate %364, %383 in 0 : vector<8x8xf32>, vector<8x8xf32> -> vector<16x8xf32>
    %385 = vector.extract_strided_slice %300 {offsets = [0, 16], sizes = [16, 8], strides = [1, 1]} : vector<16x96xf32> to vector<16x8xf32>
    %386 = vector.extract_strided_slice %300 {offsets = [0, 48], sizes = [16, 8], strides = [1, 1]} : vector<16x96xf32> to vector<16x8xf32>
    %387 = vector.extract_strided_slice %300 {offsets = [0, 80], sizes = [16, 8], strides = [1, 1]} : vector<16x96xf32> to vector<16x8xf32>
    %388 = vector.extract_strided_slice %385 {offsets = [0, 0], sizes = [8, 8], strides = [1, 1]} : vector<16x8xf32> to vector<8x8xf32>
    %389 = vector.extract_strided_slice %386 {offsets = [0, 0], sizes = [8, 8], strides = [1, 1]} : vector<16x8xf32> to vector<8x8xf32>
    %390 = vector.extract_strided_slice %387 {offsets = [0, 0], sizes = [8, 8], strides = [1, 1]} : vector<16x8xf32> to vector<8x8xf32>
    %cst_133 = arith.constant dense<0.000000e+00> : vector<8x8xf32>
    %391 = tpu.matmul %388, %389, %cst_133 {dimension_numbers = #tpu.dot_dimension_numbers<[1], [1], [0], [0], [0, 0, 1, 0], [], []>} : vector<8x8xf32>, vector<8x8xf32>, vector<8x8xf32> -> vector<8x8xf32>
    %cst_134 = arith.constant 0.353553385 : f32
    %392 = vector.broadcast %cst_134 : f32 to vector<8x8xf32>
    %393 = arith.mulf %391, %392 : vector<8x8xf32>
    %394 = vector.extract_strided_slice %29 {offsets = [0, 0], sizes = [1, 8], strides = [1, 1]} : vector<2x8xf32> to vector<1x8xf32>
    %395 = vector.broadcast %394 : vector<1x8xf32> to vector<8x8xf32>
    %396 = arith.addf %393, %395 : vector<8x8xf32>
    %cst_135 = arith.constant dense<0xFF800000> : vector<8xf32>
    %397 = vector.multi_reduction <maximumf>, %396, %cst_135 [1] : vector<8x8xf32> to vector<8xf32>
    %398 = vector.shape_cast %397 : vector<8xf32> to vector<8x1xf32>
    %399 = vector.broadcast %398 : vector<8x1xf32> to vector<8x8xf32>
    %400 = arith.subf %396, %399 : vector<8x8xf32>
    %401 = math.exp %400 : vector<8x8xf32>
    %cst_136 = arith.constant dense<0.000000e+00> : vector<8xf32>
    %402 = vector.multi_reduction <add>, %401, %cst_136 [1] : vector<8x8xf32> to vector<8xf32>
    %403 = vector.shape_cast %402 : vector<8xf32> to vector<8x1xf32>
    %404 = vector.broadcast %403 : vector<8x1xf32> to vector<8x8xf32>
    %405 = arith.divf %401, %404 : vector<8x8xf32>
    %cst_137 = arith.constant dense<0.000000e+00> : vector<8x8xf32>
    %406 = tpu.matmul %405, %390, %cst_137 {dimension_numbers = #tpu.dot_dimension_numbers<[1], [0], [0], [1], [0, 0, 1, 1], [], []>} : vector<8x8xf32>, vector<8x8xf32>, vector<8x8xf32> -> vector<8x8xf32>
    %407 = vector.extract_strided_slice %385 {offsets = [8, 0], sizes = [8, 8], strides = [1, 1]} : vector<16x8xf32> to vector<8x8xf32>
    %408 = vector.extract_strided_slice %386 {offsets = [8, 0], sizes = [8, 8], strides = [1, 1]} : vector<16x8xf32> to vector<8x8xf32>
    %409 = vector.extract_strided_slice %387 {offsets = [8, 0], sizes = [8, 8], strides = [1, 1]} : vector<16x8xf32> to vector<8x8xf32>
    %cst_138 = arith.constant dense<0.000000e+00> : vector<8x8xf32>
    %410 = tpu.matmul %407, %408, %cst_138 {dimension_numbers = #tpu.dot_dimension_numbers<[1], [1], [0], [0], [0, 0, 1, 0], [], []>} : vector<8x8xf32>, vector<8x8xf32>, vector<8x8xf32> -> vector<8x8xf32>
    %cst_139 = arith.constant 0.353553385 : f32
    %411 = vector.broadcast %cst_139 : f32 to vector<8x8xf32>
    %412 = arith.mulf %410, %411 : vector<8x8xf32>
    %413 = vector.extract_strided_slice %29 {offsets = [1, 0], sizes = [1, 8], strides = [1, 1]} : vector<2x8xf32> to vector<1x8xf32>
    %414 = vector.broadcast %413 : vector<1x8xf32> to vector<8x8xf32>
    %415 = arith.addf %412, %414 : vector<8x8xf32>
    %cst_140 = arith.constant dense<0xFF800000> : vector<8xf32>
    %416 = vector.multi_reduction <maximumf>, %415, %cst_140 [1] : vector<8x8xf32> to vector<8xf32>
    %417 = vector.shape_cast %416 : vector<8xf32> to vector<8x1xf32>
    %418 = vector.broadcast %417 : vector<8x1xf32> to vector<8x8xf32>
    %419 = arith.subf %415, %418 : vector<8x8xf32>
    %420 = math.exp %419 : vector<8x8xf32>
    %cst_141 = arith.constant dense<0.000000e+00> : vector<8xf32>
    %421 = vector.multi_reduction <add>, %420, %cst_141 [1] : vector<8x8xf32> to vector<8xf32>
    %422 = vector.shape_cast %421 : vector<8xf32> to vector<8x1xf32>
    %423 = vector.broadcast %422 : vector<8x1xf32> to vector<8x8xf32>
    %424 = arith.divf %420, %423 : vector<8x8xf32>
    %cst_142 = arith.constant dense<0.000000e+00> : vector<8x8xf32>
    %425 = tpu.matmul %424, %409, %cst_142 {dimension_numbers = #tpu.dot_dimension_numbers<[1], [0], [0], [1], [0, 0, 1, 1], [], []>} : vector<8x8xf32>, vector<8x8xf32>, vector<8x8xf32> -> vector<8x8xf32>
    %426 = tpu.concatenate %406, %425 in 0 : vector<8x8xf32>, vector<8x8xf32> -> vector<16x8xf32>
    %427 = vector.extract_strided_slice %300 {offsets = [0, 24], sizes = [16, 8], strides = [1, 1]} : vector<16x96xf32> to vector<16x8xf32>
    %428 = vector.extract_strided_slice %300 {offsets = [0, 56], sizes = [16, 8], strides = [1, 1]} : vector<16x96xf32> to vector<16x8xf32>
    %429 = vector.extract_strided_slice %300 {offsets = [0, 88], sizes = [16, 8], strides = [1, 1]} : vector<16x96xf32> to vector<16x8xf32>
    %430 = vector.extract_strided_slice %427 {offsets = [0, 0], sizes = [8, 8], strides = [1, 1]} : vector<16x8xf32> to vector<8x8xf32>
    %431 = vector.extract_strided_slice %428 {offsets = [0, 0], sizes = [8, 8], strides = [1, 1]} : vector<16x8xf32> to vector<8x8xf32>
    %432 = vector.extract_strided_slice %429 {offsets = [0, 0], sizes = [8, 8], strides = [1, 1]} : vector<16x8xf32> to vector<8x8xf32>
    %cst_143 = arith.constant dense<0.000000e+00> : vector<8x8xf32>
    %433 = tpu.matmul %430, %431, %cst_143 {dimension_numbers = #tpu.dot_dimension_numbers<[1], [1], [0], [0], [0, 0, 1, 0], [], []>} : vector<8x8xf32>, vector<8x8xf32>, vector<8x8xf32> -> vector<8x8xf32>
    %cst_144 = arith.constant 0.353553385 : f32
    %434 = vector.broadcast %cst_144 : f32 to vector<8x8xf32>
    %435 = arith.mulf %433, %434 : vector<8x8xf32>
    %436 = vector.extract_strided_slice %29 {offsets = [0, 0], sizes = [1, 8], strides = [1, 1]} : vector<2x8xf32> to vector<1x8xf32>
    %437 = vector.broadcast %436 : vector<1x8xf32> to vector<8x8xf32>
    %438 = arith.addf %435, %437 : vector<8x8xf32>
    %cst_145 = arith.constant dense<0xFF800000> : vector<8xf32>
    %439 = vector.multi_reduction <maximumf>, %438, %cst_145 [1] : vector<8x8xf32> to vector<8xf32>
    %440 = vector.shape_cast %439 : vector<8xf32> to vector<8x1xf32>
    %441 = vector.broadcast %440 : vector<8x1xf32> to vector<8x8xf32>
    %442 = arith.subf %438, %441 : vector<8x8xf32>
    %443 = math.exp %442 : vector<8x8xf32>
    %cst_146 = arith.constant dense<0.000000e+00> : vector<8xf32>
    %444 = vector.multi_reduction <add>, %443, %cst_146 [1] : vector<8x8xf32> to vector<8xf32>
    %445 = vector.shape_cast %444 : vector<8xf32> to vector<8x1xf32>
    %446 = vector.broadcast %445 : vector<8x1xf32> to vector<8x8xf32>
    %447 = arith.divf %443, %446 : vector<8x8xf32>
    %cst_147 = arith.constant dense<0.000000e+00> : vector<8x8xf32>
    %448 = tpu.matmul %447, %432, %cst_147 {dimension_numbers = #tpu.dot_dimension_numbers<[1], [0], [0], [1], [0, 0, 1, 1], [], []>} : vector<8x8xf32>, vector<8x8xf32>, vector<8x8xf32> -> vector<8x8xf32>
    %449 = vector.extract_strided_slice %427 {offsets = [8, 0], sizes = [8, 8], strides = [1, 1]} : vector<16x8xf32> to vector<8x8xf32>
    %450 = vector.extract_strided_slice %428 {offsets = [8, 0], sizes = [8, 8], strides = [1, 1]} : vector<16x8xf32> to vector<8x8xf32>
    %451 = vector.extract_strided_slice %429 {offsets = [8, 0], sizes = [8, 8], strides = [1, 1]} : vector<16x8xf32> to vector<8x8xf32>
    %cst_148 = arith.constant dense<0.000000e+00> : vector<8x8xf32>
    %452 = tpu.matmul %449, %450, %cst_148 {dimension_numbers = #tpu.dot_dimension_numbers<[1], [1], [0], [0], [0, 0, 1, 0], [], []>} : vector<8x8xf32>, vector<8x8xf32>, vector<8x8xf32> -> vector<8x8xf32>
    %cst_149 = arith.constant 0.353553385 : f32
    %453 = vector.broadcast %cst_149 : f32 to vector<8x8xf32>
    %454 = arith.mulf %452, %453 : vector<8x8xf32>
    %455 = vector.extract_strided_slice %29 {offsets = [1, 0], sizes = [1, 8], strides = [1, 1]} : vector<2x8xf32> to vector<1x8xf32>
    %456 = vector.broadcast %455 : vector<1x8xf32> to vector<8x8xf32>
    %457 = arith.addf %454, %456 : vector<8x8xf32>
    %cst_150 = arith.constant dense<0xFF800000> : vector<8xf32>
    %458 = vector.multi_reduction <maximumf>, %457, %cst_150 [1] : vector<8x8xf32> to vector<8xf32>
    %459 = vector.shape_cast %458 : vector<8xf32> to vector<8x1xf32>
    %460 = vector.broadcast %459 : vector<8x1xf32> to vector<8x8xf32>
    %461 = arith.subf %457, %460 : vector<8x8xf32>
    %462 = math.exp %461 : vector<8x8xf32>
    %cst_151 = arith.constant dense<0.000000e+00> : vector<8xf32>
    %463 = vector.multi_reduction <add>, %462, %cst_151 [1] : vector<8x8xf32> to vector<8xf32>
    %464 = vector.shape_cast %463 : vector<8xf32> to vector<8x1xf32>
    %465 = vector.broadcast %464 : vector<8x1xf32> to vector<8x8xf32>
    %466 = arith.divf %462, %465 : vector<8x8xf32>
    %cst_152 = arith.constant dense<0.000000e+00> : vector<8x8xf32>
    %467 = tpu.matmul %466, %451, %cst_152 {dimension_numbers = #tpu.dot_dimension_numbers<[1], [0], [0], [1], [0, 0, 1, 1], [], []>} : vector<8x8xf32>, vector<8x8xf32>, vector<8x8xf32> -> vector<8x8xf32>
    %468 = tpu.concatenate %448, %467 in 0 : vector<8x8xf32>, vector<8x8xf32> -> vector<16x8xf32>
    %469 = tpu.concatenate %342, %384, %426, %468 in 1 : vector<16x8xf32>, vector<16x8xf32>, vector<16x8xf32>, vector<16x8xf32> -> vector<16x32xf32>
    %c1_153 = arith.constant 1 : index
    %c0_154 = arith.constant 0 : index
    %c0_155 = arith.constant 0 : index
    %470 = vector.load %arg8[%c1_153, %c0_154, %c0_155] : memref<2x32x32xf32, #tpu.memory_space<vmem>>, vector<1x32x32xf32>
    %471 = vector.shape_cast %470 : vector<1x32x32xf32> to vector<32x32xf32>
    %cst_156 = arith.constant dense<0.000000e+00> : vector<16x32xf32>
    %472 = tpu.matmul %469, %471, %cst_156 {dimension_numbers = #tpu.dot_dimension_numbers<[1], [0], [0], [1], [0, 0, 1, 1], [], []>} : vector<16x32xf32>, vector<32x32xf32>, vector<16x32xf32> -> vector<16x32xf32>
    %c1_157 = arith.constant 1 : index
    %c0_158 = arith.constant 0 : index
    %c0_159 = arith.constant 0 : index
    %473 = vector.load %arg9[%c1_157, %c0_158, %c0_159] : memref<2x1x32xf32, #tpu.memory_space<vmem>>, vector<1x1x32xf32>
    %474 = vector.shape_cast %473 : vector<1x1x32xf32> to vector<1x32xf32>
    %475 = vector.broadcast %474 : vector<1x32xf32> to vector<16x32xf32>
    %476 = arith.addf %472, %475 : vector<16x32xf32>
    %477 = arith.addf %293, %476 : vector<16x32xf32>
    %c1_160 = arith.constant 1 : index
    %c0_161 = arith.constant 0 : index
    %c0_162 = arith.constant 0 : index
    %478 = vector.load %arg10[%c1_160, %c0_161, %c0_162] : memref<2x1x32xf32, #tpu.memory_space<vmem>>, vector<1x1x32xf32>
    %479 = vector.shape_cast %478 : vector<1x1x32xf32> to vector<1x32xf32>
    %c1_163 = arith.constant 1 : index
    %c0_164 = arith.constant 0 : index
    %c0_165 = arith.constant 0 : index
    %480 = vector.load %arg11[%c1_163, %c0_164, %c0_165] : memref<2x1x32xf32, #tpu.memory_space<vmem>>, vector<1x1x32xf32>
    %481 = vector.shape_cast %480 : vector<1x1x32xf32> to vector<1x32xf32>
    %cst_166 = arith.constant dense<0.000000e+00> : vector<16xf32>
    %482 = vector.multi_reduction <add>, %477, %cst_166 [1] : vector<16x32xf32> to vector<16xf32>
    %483 = vector.shape_cast %482 : vector<16xf32> to vector<16x1xf32>
    %cst_167 = arith.constant 3.200000e+01 : f32
    %484 = vector.broadcast %cst_167 : f32 to vector<16x1xf32>
    %485 = arith.divf %483, %484 : vector<16x1xf32>
    %486 = vector.broadcast %485 : vector<16x1xf32> to vector<16x32xf32>
    %487 = arith.subf %477, %486 : vector<16x32xf32>
    %488 = arith.mulf %487, %487 : vector<16x32xf32>
    %cst_168 = arith.constant dense<0.000000e+00> : vector<16xf32>
    %489 = vector.multi_reduction <add>, %488, %cst_168 [1] : vector<16x32xf32> to vector<16xf32>
    %490 = vector.shape_cast %489 : vector<16xf32> to vector<16x1xf32>
    %cst_169 = arith.constant 3.200000e+01 : f32
    %491 = vector.broadcast %cst_169 : f32 to vector<16x1xf32>
    %492 = arith.divf %490, %491 : vector<16x1xf32>
    %493 = vector.broadcast %485 : vector<16x1xf32> to vector<16x32xf32>
    %494 = arith.subf %477, %493 : vector<16x32xf32>
    %cst_170 = arith.constant 9.99999996E-13 : f32
    %495 = vector.broadcast %cst_170 : f32 to vector<16x1xf32>
    %496 = arith.addf %492, %495 : vector<16x1xf32>
    %497 = math.rsqrt %496 : vector<16x1xf32>
    %498 = vector.broadcast %497 : vector<16x1xf32> to vector<16x32xf32>
    %499 = arith.mulf %494, %498 : vector<16x32xf32>
    %500 = vector.broadcast %479 : vector<1x32xf32> to vector<16x32xf32>
    %501 = arith.mulf %499, %500 : vector<16x32xf32>
    %502 = vector.broadcast %481 : vector<1x32xf32> to vector<16x32xf32>
    %503 = arith.addf %501, %502 : vector<16x32xf32>
    %c1_171 = arith.constant 1 : index
    %c0_172 = arith.constant 0 : index
    %c0_173 = arith.constant 0 : index
    %504 = vector.load %arg12[%c1_171, %c0_172, %c0_173] : memref<2x32x64xf32, #tpu.memory_space<vmem>>, vector<1x32x64xf32>
    %505 = vector.shape_cast %504 : vector<1x32x64xf32> to vector<32x64xf32>
    %cst_174 = arith.constant dense<0.000000e+00> : vector<16x64xf32>
    %506 = tpu.matmul %503, %505, %cst_174 {dimension_numbers = #tpu.dot_dimension_numbers<[1], [0], [0], [1], [0, 0, 1, 1], [], []>} : vector<16x32xf32>, vector<32x64xf32>, vector<16x64xf32> -> vector<16x64xf32>
    %c1_175 = arith.constant 1 : index
    %c0_176 = arith.constant 0 : index
    %c0_177 = arith.constant 0 : index
    %507 = vector.load %arg13[%c1_175, %c0_176, %c0_177] : memref<2x1x64xf32, #tpu.memory_space<vmem>>, vector<1x1x64xf32>
    %508 = vector.shape_cast %507 : vector<1x1x64xf32> to vector<1x64xf32>
    %509 = vector.broadcast %508 : vector<1x64xf32> to vector<16x64xf32>
    %510 = arith.addf %506, %509 : vector<16x64xf32>
    %cst_178 = arith.constant 5.000000e-01 : f32
    %511 = vector.broadcast %cst_178 : f32 to vector<16x64xf32>
    %512 = arith.mulf %511, %510 : vector<16x64xf32>
    %cst_179 = arith.constant 4.471500e-02 : f32
    %513 = vector.broadcast %cst_179 : f32 to vector<16x64xf32>
    %514 = arith.mulf %513, %510 : vector<16x64xf32>
    %515 = arith.mulf %514, %510 : vector<16x64xf32>
    %516 = arith.mulf %515, %510 : vector<16x64xf32>
    %517 = arith.addf %510, %516 : vector<16x64xf32>
    %cst_180 = arith.constant 0.797884583 : f32
    %518 = vector.broadcast %cst_180 : f32 to vector<16x64xf32>
    %519 = arith.mulf %518, %517 : vector<16x64xf32>
    %520 = math.tanh %519 : vector<16x64xf32>
    %cst_181 = arith.constant 1.000000e+00 : f32
    %521 = vector.broadcast %cst_181 : f32 to vector<16x64xf32>
    %522 = arith.addf %521, %520 : vector<16x64xf32>
    %523 = arith.mulf %512, %522 : vector<16x64xf32>
    %c1_182 = arith.constant 1 : index
    %c0_183 = arith.constant 0 : index
    %c0_184 = arith.constant 0 : index
    %524 = vector.load %arg14[%c1_182, %c0_183, %c0_184] : memref<2x64x32xf32, #tpu.memory_space<vmem>>, vector<1x64x32xf32>
    %525 = vector.shape_cast %524 : vector<1x64x32xf32> to vector<64x32xf32>
    %cst_185 = arith.constant dense<0.000000e+00> : vector<16x32xf32>
    %526 = tpu.matmul %523, %525, %cst_185 {dimension_numbers = #tpu.dot_dimension_numbers<[1], [0], [0], [1], [0, 0, 1, 1], [], []>} : vector<16x64xf32>, vector<64x32xf32>, vector<16x32xf32> -> vector<16x32xf32>
    %c1_186 = arith.constant 1 : index
    %c0_187 = arith.constant 0 : index
    %c0_188 = arith.constant 0 : index
    %527 = vector.load %arg15[%c1_186, %c0_187, %c0_188] : memref<2x1x32xf32, #tpu.memory_space<vmem>>, vector<1x1x32xf32>
    %528 = vector.shape_cast %527 : vector<1x1x32xf32> to vector<1x32xf32>
    %529 = vector.broadcast %528 : vector<1x32xf32> to vector<16x32xf32>
    %530 = arith.addf %526, %529 : vector<16x32xf32>
    %531 = arith.addf %503, %530 : vector<16x32xf32>
    %c1_189 = arith.constant 1 : index
    %c0_190 = arith.constant 0 : index
    %c0_191 = arith.constant 0 : index
    %532 = vector.load %arg16[%c1_189, %c0_190, %c0_191] : memref<2x1x32xf32, #tpu.memory_space<vmem>>, vector<1x1x32xf32>
    %533 = vector.shape_cast %532 : vector<1x1x32xf32> to vector<1x32xf32>
    %c1_192 = arith.constant 1 : index
    %c0_193 = arith.constant 0 : index
    %c0_194 = arith.constant 0 : index
    %534 = vector.load %arg17[%c1_192, %c0_193, %c0_194] : memref<2x1x32xf32, #tpu.memory_space<vmem>>, vector<1x1x32xf32>
    %535 = vector.shape_cast %534 : vector<1x1x32xf32> to vector<1x32xf32>
    %cst_195 = arith.constant dense<0.000000e+00> : vector<16xf32>
    %536 = vector.multi_reduction <add>, %531, %cst_195 [1] : vector<16x32xf32> to vector<16xf32>
    %537 = vector.shape_cast %536 : vector<16xf32> to vector<16x1xf32>
    %cst_196 = arith.constant 3.200000e+01 : f32
    %538 = vector.broadcast %cst_196 : f32 to vector<16x1xf32>
    %539 = arith.divf %537, %538 : vector<16x1xf32>
    %540 = vector.broadcast %539 : vector<16x1xf32> to vector<16x32xf32>
    %541 = arith.subf %531, %540 : vector<16x32xf32>
    %542 = arith.mulf %541, %541 : vector<16x32xf32>
    %cst_197 = arith.constant dense<0.000000e+00> : vector<16xf32>
    %543 = vector.multi_reduction <add>, %542, %cst_197 [1] : vector<16x32xf32> to vector<16xf32>
    %544 = vector.shape_cast %543 : vector<16xf32> to vector<16x1xf32>
    %cst_198 = arith.constant 3.200000e+01 : f32
    %545 = vector.broadcast %cst_198 : f32 to vector<16x1xf32>
    %546 = arith.divf %544, %545 : vector<16x1xf32>
    %547 = vector.broadcast %539 : vector<16x1xf32> to vector<16x32xf32>
    %548 = arith.subf %531, %547 : vector<16x32xf32>
    %cst_199 = arith.constant 9.99999996E-13 : f32
    %549 = vector.broadcast %cst_199 : f32 to vector<16x1xf32>
    %550 = arith.addf %546, %549 : vector<16x1xf32>
    %551 = math.rsqrt %550 : vector<16x1xf32>
    %552 = vector.broadcast %551 : vector<16x1xf32> to vector<16x32xf32>
    %553 = arith.mulf %548, %552 : vector<16x32xf32>
    %554 = vector.broadcast %533 : vector<1x32xf32> to vector<16x32xf32>
    %555 = arith.mulf %553, %554 : vector<16x32xf32>
    %556 = vector.broadcast %535 : vector<1x32xf32> to vector<16x32xf32>
    %557 = arith.addf %555, %556 : vector<16x32xf32>
    %c0_200 = arith.constant 0 : index
    %c0_201 = arith.constant 0 : index
    %558 = vector.load %arg1[%c0_200, %c0_201] : memref<16x16xf32, #tpu.memory_space<vmem>>, vector<16x16xf32>
    %559 = tpu.concatenate %557, %558 in 1 : vector<16x32xf32>, vector<16x16xf32> -> vector<16x48xf32>
    %560 = vector.shape_cast %559 : vector<16x48xf32> to vector<2x8x48xf32>
    %561 = vector.extract_strided_slice %560 {offsets = [0, 0, 0], sizes = [1, 8, 48], strides = [1, 1, 1]} : vector<2x8x48xf32> to vector<1x8x48xf32>
    %562 = vector.shape_cast %561 : vector<1x8x48xf32> to vector<8x48xf32>
    %cst_202 = arith.constant 0.000000e+00 : f32
    %563 = vector.broadcast %cst_202 : f32 to vector<7x8xf32>
    %c0_203 = arith.constant 0 : index
    %c0_204 = arith.constant 0 : index
    %564 = vector.load %arg19[%c0_203, %c0_204] : memref<1x8xf32, #tpu.memory_space<vmem>>, vector<1x8xf32>
    %565 = vector.broadcast %564 : vector<1x8xf32> to vector<7x8xf32>
    %566 = arith.addf %563, %565 : vector<7x8xf32>
    %567 = vector.extract_strided_slice %562 {offsets = [0, 0], sizes = [7, 48], strides = [1, 1]} : vector<8x48xf32> to vector<7x48xf32>
    %c0_205 = arith.constant 0 : index
    %c0_206 = arith.constant 0 : index
    %c0_207 = arith.constant 0 : index
    %568 = vector.load %arg18[%c0_205, %c0_206, %c0_207] : memref<2x48x8xf32, #tpu.memory_space<vmem>>, vector<1x48x8xf32>
    %569 = vector.shape_cast %568 : vector<1x48x8xf32> to vector<48x8xf32>
    %cst_208 = arith.constant dense<0.000000e+00> : vector<7x8xf32>
    %570 = tpu.matmul %567, %569, %cst_208 {dimension_numbers = #tpu.dot_dimension_numbers<[1], [0], [0], [1], [0, 0, 1, 1], [], []>} : vector<7x48xf32>, vector<48x8xf32>, vector<7x8xf32> -> vector<7x8xf32>
    %571 = arith.addf %566, %570 : vector<7x8xf32>
    %572 = vector.extract_strided_slice %562 {offsets = [1, 0], sizes = [7, 48], strides = [1, 1]} : vector<8x48xf32> to vector<7x48xf32>
    %c1_209 = arith.constant 1 : index
    %c0_210 = arith.constant 0 : index
    %c0_211 = arith.constant 0 : index
    %573 = vector.load %arg18[%c1_209, %c0_210, %c0_211] : memref<2x48x8xf32, #tpu.memory_space<vmem>>, vector<1x48x8xf32>
    %574 = vector.shape_cast %573 : vector<1x48x8xf32> to vector<48x8xf32>
    %cst_212 = arith.constant dense<0.000000e+00> : vector<7x8xf32>
    %575 = tpu.matmul %572, %574, %cst_212 {dimension_numbers = #tpu.dot_dimension_numbers<[1], [0], [0], [1], [0, 0, 1, 1], [], []>} : vector<7x48xf32>, vector<48x8xf32>, vector<7x8xf32> -> vector<7x8xf32>
    %576 = arith.addf %571, %575 : vector<7x8xf32>
    %cst_213 = arith.constant 0.000000e+00 : f32
    %577 = vector.broadcast %cst_213 : f32 to vector<7x8xf32>
    %578 = arith.maximumf %576, %577 : vector<7x8xf32>
    %cst_214 = arith.constant dense<0xFF800000> : vector<8xf32>
    %579 = vector.multi_reduction <maximumf>, %578, %cst_214 [0] : vector<7x8xf32> to vector<8xf32>
    %580 = vector.shape_cast %579 : vector<8xf32> to vector<1x8xf32>
    %cst_215 = arith.constant 0.000000e+00 : f32
    %581 = vector.broadcast %cst_215 : f32 to vector<6x8xf32>
    %c0_216 = arith.constant 0 : index
    %c0_217 = arith.constant 0 : index
    %582 = vector.load %arg21[%c0_216, %c0_217] : memref<1x8xf32, #tpu.memory_space<vmem>>, vector<1x8xf32>
    %583 = vector.broadcast %582 : vector<1x8xf32> to vector<6x8xf32>
    %584 = arith.addf %581, %583 : vector<6x8xf32>
    %585 = vector.extract_strided_slice %562 {offsets = [0, 0], sizes = [6, 48], strides = [1, 1]} : vector<8x48xf32> to vector<6x48xf32>
    %c0_218 = arith.constant 0 : index
    %c0_219 = arith.constant 0 : index
    %c0_220 = arith.constant 0 : index
    %586 = vector.load %arg20[%c0_218, %c0_219, %c0_220] : memref<3x48x8xf32, #tpu.memory_space<vmem>>, vector<1x48x8xf32>
    %587 = vector.shape_cast %586 : vector<1x48x8xf32> to vector<48x8xf32>
    %cst_221 = arith.constant dense<0.000000e+00> : vector<6x8xf32>
    %588 = tpu.matmul %585, %587, %cst_221 {dimension_numbers = #tpu.dot_dimension_numbers<[1], [0], [0], [1], [0, 0, 1, 1], [], []>} : vector<6x48xf32>, vector<48x8xf32>, vector<6x8xf32> -> vector<6x8xf32>
    %589 = arith.addf %584, %588 : vector<6x8xf32>
    %590 = vector.extract_strided_slice %562 {offsets = [1, 0], sizes = [6, 48], strides = [1, 1]} : vector<8x48xf32> to vector<6x48xf32>
    %c1_222 = arith.constant 1 : index
    %c0_223 = arith.constant 0 : index
    %c0_224 = arith.constant 0 : index
    %591 = vector.load %arg20[%c1_222, %c0_223, %c0_224] : memref<3x48x8xf32, #tpu.memory_space<vmem>>, vector<1x48x8xf32>
    %592 = vector.shape_cast %591 : vector<1x48x8xf32> to vector<48x8xf32>
    %cst_225 = arith.constant dense<0.000000e+00> : vector<6x8xf32>
    %593 = tpu.matmul %590, %592, %cst_225 {dimension_numbers = #tpu.dot_dimension_numbers<[1], [0], [0], [1], [0, 0, 1, 1], [], []>} : vector<6x48xf32>, vector<48x8xf32>, vector<6x8xf32> -> vector<6x8xf32>
    %594 = arith.addf %589, %593 : vector<6x8xf32>
    %595 = vector.extract_strided_slice %562 {offsets = [2, 0], sizes = [6, 48], strides = [1, 1]} : vector<8x48xf32> to vector<6x48xf32>
    %c2 = arith.constant 2 : index
    %c0_226 = arith.constant 0 : index
    %c0_227 = arith.constant 0 : index
    %596 = vector.load %arg20[%c2, %c0_226, %c0_227] : memref<3x48x8xf32, #tpu.memory_space<vmem>>, vector<1x48x8xf32>
    %597 = vector.shape_cast %596 : vector<1x48x8xf32> to vector<48x8xf32>
    %cst_228 = arith.constant dense<0.000000e+00> : vector<6x8xf32>
    %598 = tpu.matmul %595, %597, %cst_228 {dimension_numbers = #tpu.dot_dimension_numbers<[1], [0], [0], [1], [0, 0, 1, 1], [], []>} : vector<6x48xf32>, vector<48x8xf32>, vector<6x8xf32> -> vector<6x8xf32>
    %599 = arith.addf %594, %598 : vector<6x8xf32>
    %cst_229 = arith.constant 0.000000e+00 : f32
    %600 = vector.broadcast %cst_229 : f32 to vector<6x8xf32>
    %601 = arith.maximumf %599, %600 : vector<6x8xf32>
    %cst_230 = arith.constant dense<0xFF800000> : vector<8xf32>
    %602 = vector.multi_reduction <maximumf>, %601, %cst_230 [0] : vector<6x8xf32> to vector<8xf32>
    %603 = vector.shape_cast %602 : vector<8xf32> to vector<1x8xf32>
    %604 = tpu.concatenate %580, %603 in 1 : vector<1x8xf32>, vector<1x8xf32> -> vector<1x16xf32>
    %605 = vector.extract_strided_slice %560 {offsets = [1, 0, 0], sizes = [1, 8, 48], strides = [1, 1, 1]} : vector<2x8x48xf32> to vector<1x8x48xf32>
    %606 = vector.shape_cast %605 : vector<1x8x48xf32> to vector<8x48xf32>
    %cst_231 = arith.constant 0.000000e+00 : f32
    %607 = vector.broadcast %cst_231 : f32 to vector<7x8xf32>
    %c0_232 = arith.constant 0 : index
    %c0_233 = arith.constant 0 : index
    %608 = vector.load %arg19[%c0_232, %c0_233] : memref<1x8xf32, #tpu.memory_space<vmem>>, vector<1x8xf32>
    %609 = vector.broadcast %608 : vector<1x8xf32> to vector<7x8xf32>
    %610 = arith.addf %607, %609 : vector<7x8xf32>
    %611 = vector.extract_strided_slice %606 {offsets = [0, 0], sizes = [7, 48], strides = [1, 1]} : vector<8x48xf32> to vector<7x48xf32>
    %c0_234 = arith.constant 0 : index
    %c0_235 = arith.constant 0 : index
    %c0_236 = arith.constant 0 : index
    %612 = vector.load %arg18[%c0_234, %c0_235, %c0_236] : memref<2x48x8xf32, #tpu.memory_space<vmem>>, vector<1x48x8xf32>
    %613 = vector.shape_cast %612 : vector<1x48x8xf32> to vector<48x8xf32>
    %cst_237 = arith.constant dense<0.000000e+00> : vector<7x8xf32>
    %614 = tpu.matmul %611, %613, %cst_237 {dimension_numbers = #tpu.dot_dimension_numbers<[1], [0], [0], [1], [0, 0, 1, 1], [], []>} : vector<7x48xf32>, vector<48x8xf32>, vector<7x8xf32> -> vector<7x8xf32>
    %615 = arith.addf %610, %614 : vector<7x8xf32>
    %616 = vector.extract_strided_slice %606 {offsets = [1, 0], sizes = [7, 48], strides = [1, 1]} : vector<8x48xf32> to vector<7x48xf32>
    %c1_238 = arith.constant 1 : index
    %c0_239 = arith.constant 0 : index
    %c0_240 = arith.constant 0 : index
    %617 = vector.load %arg18[%c1_238, %c0_239, %c0_240] : memref<2x48x8xf32, #tpu.memory_space<vmem>>, vector<1x48x8xf32>
    %618 = vector.shape_cast %617 : vector<1x48x8xf32> to vector<48x8xf32>
    %cst_241 = arith.constant dense<0.000000e+00> : vector<7x8xf32>
    %619 = tpu.matmul %616, %618, %cst_241 {dimension_numbers = #tpu.dot_dimension_numbers<[1], [0], [0], [1], [0, 0, 1, 1], [], []>} : vector<7x48xf32>, vector<48x8xf32>, vector<7x8xf32> -> vector<7x8xf32>
    %620 = arith.addf %615, %619 : vector<7x8xf32>
    %cst_242 = arith.constant 0.000000e+00 : f32
    %621 = vector.broadcast %cst_242 : f32 to vector<7x8xf32>
    %622 = arith.maximumf %620, %621 : vector<7x8xf32>
    %cst_243 = arith.constant dense<0xFF800000> : vector<8xf32>
    %623 = vector.multi_reduction <maximumf>, %622, %cst_243 [0] : vector<7x8xf32> to vector<8xf32>
    %624 = vector.shape_cast %623 : vector<8xf32> to vector<1x8xf32>
    %cst_244 = arith.constant 0.000000e+00 : f32
    %625 = vector.broadcast %cst_244 : f32 to vector<6x8xf32>
    %c0_245 = arith.constant 0 : index
    %c0_246 = arith.constant 0 : index
    %626 = vector.load %arg21[%c0_245, %c0_246] : memref<1x8xf32, #tpu.memory_space<vmem>>, vector<1x8xf32>
    %627 = vector.broadcast %626 : vector<1x8xf32> to vector<6x8xf32>
    %628 = arith.addf %625, %627 : vector<6x8xf32>
    %629 = vector.extract_strided_slice %606 {offsets = [0, 0], sizes = [6, 48], strides = [1, 1]} : vector<8x48xf32> to vector<6x48xf32>
    %c0_247 = arith.constant 0 : index
    %c0_248 = arith.constant 0 : index
    %c0_249 = arith.constant 0 : index
    %630 = vector.load %arg20[%c0_247, %c0_248, %c0_249] : memref<3x48x8xf32, #tpu.memory_space<vmem>>, vector<1x48x8xf32>
    %631 = vector.shape_cast %630 : vector<1x48x8xf32> to vector<48x8xf32>
    %cst_250 = arith.constant dense<0.000000e+00> : vector<6x8xf32>
    %632 = tpu.matmul %629, %631, %cst_250 {dimension_numbers = #tpu.dot_dimension_numbers<[1], [0], [0], [1], [0, 0, 1, 1], [], []>} : vector<6x48xf32>, vector<48x8xf32>, vector<6x8xf32> -> vector<6x8xf32>
    %633 = arith.addf %628, %632 : vector<6x8xf32>
    %634 = vector.extract_strided_slice %606 {offsets = [1, 0], sizes = [6, 48], strides = [1, 1]} : vector<8x48xf32> to vector<6x48xf32>
    %c1_251 = arith.constant 1 : index
    %c0_252 = arith.constant 0 : index
    %c0_253 = arith.constant 0 : index
    %635 = vector.load %arg20[%c1_251, %c0_252, %c0_253] : memref<3x48x8xf32, #tpu.memory_space<vmem>>, vector<1x48x8xf32>
    %636 = vector.shape_cast %635 : vector<1x48x8xf32> to vector<48x8xf32>
    %cst_254 = arith.constant dense<0.000000e+00> : vector<6x8xf32>
    %637 = tpu.matmul %634, %636, %cst_254 {dimension_numbers = #tpu.dot_dimension_numbers<[1], [0], [0], [1], [0, 0, 1, 1], [], []>} : vector<6x48xf32>, vector<48x8xf32>, vector<6x8xf32> -> vector<6x8xf32>
    %638 = arith.addf %633, %637 : vector<6x8xf32>
    %639 = vector.extract_strided_slice %606 {offsets = [2, 0], sizes = [6, 48], strides = [1, 1]} : vector<8x48xf32> to vector<6x48xf32>
    %c2_255 = arith.constant 2 : index
    %c0_256 = arith.constant 0 : index
    %c0_257 = arith.constant 0 : index
    %640 = vector.load %arg20[%c2_255, %c0_256, %c0_257] : memref<3x48x8xf32, #tpu.memory_space<vmem>>, vector<1x48x8xf32>
    %641 = vector.shape_cast %640 : vector<1x48x8xf32> to vector<48x8xf32>
    %cst_258 = arith.constant dense<0.000000e+00> : vector<6x8xf32>
    %642 = tpu.matmul %639, %641, %cst_258 {dimension_numbers = #tpu.dot_dimension_numbers<[1], [0], [0], [1], [0, 0, 1, 1], [], []>} : vector<6x48xf32>, vector<48x8xf32>, vector<6x8xf32> -> vector<6x8xf32>
    %643 = arith.addf %638, %642 : vector<6x8xf32>
    %cst_259 = arith.constant 0.000000e+00 : f32
    %644 = vector.broadcast %cst_259 : f32 to vector<6x8xf32>
    %645 = arith.maximumf %643, %644 : vector<6x8xf32>
    %cst_260 = arith.constant dense<0xFF800000> : vector<8xf32>
    %646 = vector.multi_reduction <maximumf>, %645, %cst_260 [0] : vector<6x8xf32> to vector<8xf32>
    %647 = vector.shape_cast %646 : vector<8xf32> to vector<1x8xf32>
    %648 = tpu.concatenate %624, %647 in 1 : vector<1x8xf32>, vector<1x8xf32> -> vector<1x16xf32>
    %649 = tpu.concatenate %604, %648 in 0 : vector<1x16xf32>, vector<1x16xf32> -> vector<2x16xf32>
    %c0_261 = arith.constant 0 : index
    %c0_262 = arith.constant 0 : index
    %650 = vector.load %arg22[%c0_261, %c0_262] : memref<16x48xf32, #tpu.memory_space<vmem>>, vector<16x48xf32>
    %cst_263 = arith.constant dense<0.000000e+00> : vector<2x48xf32>
    %651 = tpu.matmul %649, %650, %cst_263 {dimension_numbers = #tpu.dot_dimension_numbers<[1], [0], [0], [1], [0, 0, 1, 1], [], []>} : vector<2x16xf32>, vector<16x48xf32>, vector<2x48xf32> -> vector<2x48xf32>
    %c0_264 = arith.constant 0 : index
    %c0_265 = arith.constant 0 : index
    %652 = vector.load %arg23[%c0_264, %c0_265] : memref<1x48xf32, #tpu.memory_space<vmem>>, vector<1x48xf32>
    %653 = vector.broadcast %652 : vector<1x48xf32> to vector<2x48xf32>
    %654 = arith.addf %651, %653 : vector<2x48xf32>
    %cst_266 = arith.constant 0.000000e+00 : f32
    %655 = vector.broadcast %cst_266 : f32 to vector<2x48xf32>
    %656 = arith.maximumf %654, %655 : vector<2x48xf32>
    %c0_267 = arith.constant 0 : index
    %c0_268 = arith.constant 0 : index
    %657 = vector.load %arg24[%c0_267, %c0_268] : memref<48x128xf32, #tpu.memory_space<vmem>>, vector<48x128xf32>
    %cst_269 = arith.constant dense<0.000000e+00> : vector<16x128xf32>
    %658 = tpu.matmul %559, %657, %cst_269 {dimension_numbers = #tpu.dot_dimension_numbers<[1], [0], [0], [1], [0, 0, 1, 1], [], []>} : vector<16x48xf32>, vector<48x128xf32>, vector<16x128xf32> -> vector<16x128xf32>
    %c0_270 = arith.constant 0 : index
    %c0_271 = arith.constant 0 : index
    %659 = vector.load %arg25[%c0_270, %c0_271] : memref<1x128xf32, #tpu.memory_space<vmem>>, vector<1x128xf32>
    %660 = vector.broadcast %659 : vector<1x128xf32> to vector<16x128xf32>
    %661 = arith.addf %658, %660 : vector<16x128xf32>
    %662 = vector.shape_cast %661 : vector<16x128xf32> to vector<2x8x128xf32>
    %663 = vector.extract_strided_slice %662 {offsets = [0, 0, 0], sizes = [2, 8, 32], strides = [1, 1, 1]} : vector<2x8x128xf32> to vector<2x8x32xf32>
    %664 = vector.extract_strided_slice %662 {offsets = [0, 0, 32], sizes = [2, 8, 32], strides = [1, 1, 1]} : vector<2x8x128xf32> to vector<2x8x32xf32>
    %665 = vector.extract_strided_slice %662 {offsets = [0, 0, 64], sizes = [2, 8, 32], strides = [1, 1, 1]} : vector<2x8x128xf32> to vector<2x8x32xf32>
    %666 = vector.extract_strided_slice %662 {offsets = [0, 0, 96], sizes = [2, 8, 32], strides = [1, 1, 1]} : vector<2x8x128xf32> to vector<2x8x32xf32>
    %c0_272 = arith.constant 0 : index
    %c0_273 = arith.constant 0 : index
    %667 = vector.load %arg3[%c0_272, %c0_273] : memref<2x1xi32, #tpu.memory_space<vmem>>, vector<2x1xi32>
    %cst_274 = arith.constant 0.000000e+00 : f32
    %668 = vector.broadcast %cst_274 : f32 to vector<2x32xf32>
    %cst_275 = arith.constant 0.000000e+00 : f32
    %669 = vector.broadcast %cst_275 : f32 to vector<2x32xf32>
    %cst_276 = arith.constant -3.000000e+38 : f32
    %670 = vector.broadcast %cst_276 : f32 to vector<2x32xf32>
    %c0_i32 = arith.constant 0 : i32
    %671 = vector.broadcast %c0_i32 : i32 to vector<2x1xi32>
    %672 = arith.cmpi sgt, %667, %671 : vector<2x1xi32>
    %673 = vector.extract_strided_slice %663 {offsets = [0, 0, 0], sizes = [2, 1, 32], strides = [1, 1, 1]} : vector<2x8x32xf32> to vector<2x1x32xf32>
    %674 = vector.shape_cast %673 : vector<2x1x32xf32> to vector<2x32xf32>
    %c0_277 = arith.constant 0 : index
    %c0_278 = arith.constant 0 : index
    %c0_279 = arith.constant 0 : index
    %675 = vector.load %arg26[%c0_277, %c0_278, %c0_279] : memref<4x32x32xf32, #tpu.memory_space<vmem>>, vector<1x32x32xf32>
    %676 = vector.shape_cast %675 : vector<1x32x32xf32> to vector<32x32xf32>
    %cst_280 = arith.constant dense<0.000000e+00> : vector<2x32xf32>
    %677 = tpu.matmul %668, %676, %cst_280 {dimension_numbers = #tpu.dot_dimension_numbers<[1], [0], [0], [1], [0, 0, 1, 1], [], []>} : vector<2x32xf32>, vector<32x32xf32>, vector<2x32xf32> -> vector<2x32xf32>
    %678 = arith.addf %674, %677 : vector<2x32xf32>
    %cst_281 = arith.constant 0.000000e+00 : f32
    %679 = vector.broadcast %cst_281 : f32 to vector<2x32xf32>
    %680 = arith.subf %679, %678 : vector<2x32xf32>
    %681 = math.exp %680 : vector<2x32xf32>
    %cst_282 = arith.constant 1.000000e+00 : f32
    %682 = vector.broadcast %cst_282 : f32 to vector<2x32xf32>
    %683 = arith.addf %682, %681 : vector<2x32xf32>
    %cst_283 = arith.constant 1.000000e+00 : f32
    %684 = vector.broadcast %cst_283 : f32 to vector<2x32xf32>
    %685 = arith.divf %684, %683 : vector<2x32xf32>
    %686 = vector.extract_strided_slice %664 {offsets = [0, 0, 0], sizes = [2, 1, 32], strides = [1, 1, 1]} : vector<2x8x32xf32> to vector<2x1x32xf32>
    %687 = vector.shape_cast %686 : vector<2x1x32xf32> to vector<2x32xf32>
    %c1_284 = arith.constant 1 : index
    %c0_285 = arith.constant 0 : index
    %c0_286 = arith.constant 0 : index
    %688 = vector.load %arg26[%c1_284, %c0_285, %c0_286] : memref<4x32x32xf32, #tpu.memory_space<vmem>>, vector<1x32x32xf32>
    %689 = vector.shape_cast %688 : vector<1x32x32xf32> to vector<32x32xf32>
    %cst_287 = arith.constant dense<0.000000e+00> : vector<2x32xf32>
    %690 = tpu.matmul %668, %689, %cst_287 {dimension_numbers = #tpu.dot_dimension_numbers<[1], [0], [0], [1], [0, 0, 1, 1], [], []>} : vector<2x32xf32>, vector<32x32xf32>, vector<2x32xf32> -> vector<2x32xf32>
    %691 = arith.addf %687, %690 : vector<2x32xf32>
    %cst_288 = arith.constant 0.000000e+00 : f32
    %692 = vector.broadcast %cst_288 : f32 to vector<2x32xf32>
    %693 = arith.subf %692, %691 : vector<2x32xf32>
    %694 = math.exp %693 : vector<2x32xf32>
    %cst_289 = arith.constant 1.000000e+00 : f32
    %695 = vector.broadcast %cst_289 : f32 to vector<2x32xf32>
    %696 = arith.addf %695, %694 : vector<2x32xf32>
    %cst_290 = arith.constant 1.000000e+00 : f32
    %697 = vector.broadcast %cst_290 : f32 to vector<2x32xf32>
    %698 = arith.divf %697, %696 : vector<2x32xf32>
    %699 = vector.extract_strided_slice %665 {offsets = [0, 0, 0], sizes = [2, 1, 32], strides = [1, 1, 1]} : vector<2x8x32xf32> to vector<2x1x32xf32>
    %700 = vector.shape_cast %699 : vector<2x1x32xf32> to vector<2x32xf32>
    %c2_291 = arith.constant 2 : index
    %c0_292 = arith.constant 0 : index
    %c0_293 = arith.constant 0 : index
    %701 = vector.load %arg26[%c2_291, %c0_292, %c0_293] : memref<4x32x32xf32, #tpu.memory_space<vmem>>, vector<1x32x32xf32>
    %702 = vector.shape_cast %701 : vector<1x32x32xf32> to vector<32x32xf32>
    %cst_294 = arith.constant dense<0.000000e+00> : vector<2x32xf32>
    %703 = tpu.matmul %668, %702, %cst_294 {dimension_numbers = #tpu.dot_dimension_numbers<[1], [0], [0], [1], [0, 0, 1, 1], [], []>} : vector<2x32xf32>, vector<32x32xf32>, vector<2x32xf32> -> vector<2x32xf32>
    %704 = arith.addf %700, %703 : vector<2x32xf32>
    %705 = math.tanh %704 : vector<2x32xf32>
    %706 = vector.extract_strided_slice %666 {offsets = [0, 0, 0], sizes = [2, 1, 32], strides = [1, 1, 1]} : vector<2x8x32xf32> to vector<2x1x32xf32>
    %707 = vector.shape_cast %706 : vector<2x1x32xf32> to vector<2x32xf32>
    %c3 = arith.constant 3 : index
    %c0_295 = arith.constant 0 : index
    %c0_296 = arith.constant 0 : index
    %708 = vector.load %arg26[%c3, %c0_295, %c0_296] : memref<4x32x32xf32, #tpu.memory_space<vmem>>, vector<1x32x32xf32>
    %709 = vector.shape_cast %708 : vector<1x32x32xf32> to vector<32x32xf32>
    %cst_297 = arith.constant dense<0.000000e+00> : vector<2x32xf32>
    %710 = tpu.matmul %668, %709, %cst_297 {dimension_numbers = #tpu.dot_dimension_numbers<[1], [0], [0], [1], [0, 0, 1, 1], [], []>} : vector<2x32xf32>, vector<32x32xf32>, vector<2x32xf32> -> vector<2x32xf32>
    %711 = arith.addf %707, %710 : vector<2x32xf32>
    %cst_298 = arith.constant 0.000000e+00 : f32
    %712 = vector.broadcast %cst_298 : f32 to vector<2x32xf32>
    %713 = arith.subf %712, %711 : vector<2x32xf32>
    %714 = math.exp %713 : vector<2x32xf32>
    %cst_299 = arith.constant 1.000000e+00 : f32
    %715 = vector.broadcast %cst_299 : f32 to vector<2x32xf32>
    %716 = arith.addf %715, %714 : vector<2x32xf32>
    %cst_300 = arith.constant 1.000000e+00 : f32
    %717 = vector.broadcast %cst_300 : f32 to vector<2x32xf32>
    %718 = arith.divf %717, %716 : vector<2x32xf32>
    %719 = arith.mulf %698, %669 : vector<2x32xf32>
    %720 = arith.mulf %685, %705 : vector<2x32xf32>
    %721 = arith.addf %719, %720 : vector<2x32xf32>
    %722 = math.tanh %721 : vector<2x32xf32>
    %723 = arith.mulf %718, %722 : vector<2x32xf32>
    %724 = vector.shape_cast %672 : vector<2x1xi1> to vector<2x1xi1>
    %725 = vector.broadcast %724 : vector<2x1xi1> to vector<2x32xi1>
    %726 = arith.select %725, %723, %668 : vector<2x32xi1>, vector<2x32xf32>
    %727 = vector.shape_cast %672 : vector<2x1xi1> to vector<2x1xi1>
    %728 = vector.broadcast %727 : vector<2x1xi1> to vector<2x32xi1>
    %729 = arith.select %728, %721, %669 : vector<2x32xi1>, vector<2x32xf32>
    %730 = arith.maximumf %670, %723 : vector<2x32xf32>
    %731 = vector.shape_cast %672 : vector<2x1xi1> to vector<2x1xi1>
    %732 = vector.broadcast %731 : vector<2x1xi1> to vector<2x32xi1>
    %733 = arith.select %732, %730, %670 : vector<2x32xi1>, vector<2x32xf32>
    %c1_i32 = arith.constant 1 : i32
    %734 = vector.broadcast %c1_i32 : i32 to vector<2x1xi32>
    %735 = arith.cmpi sgt, %667, %734 : vector<2x1xi32>
    %736 = vector.extract_strided_slice %663 {offsets = [0, 1, 0], sizes = [2, 1, 32], strides = [1, 1, 1]} : vector<2x8x32xf32> to vector<2x1x32xf32>
    %737 = vector.shape_cast %736 : vector<2x1x32xf32> to vector<2x32xf32>
    %c0_301 = arith.constant 0 : index
    %c0_302 = arith.constant 0 : index
    %c0_303 = arith.constant 0 : index
    %738 = vector.load %arg26[%c0_301, %c0_302, %c0_303] : memref<4x32x32xf32, #tpu.memory_space<vmem>>, vector<1x32x32xf32>
    %739 = vector.shape_cast %738 : vector<1x32x32xf32> to vector<32x32xf32>
    %cst_304 = arith.constant dense<0.000000e+00> : vector<2x32xf32>
    %740 = tpu.matmul %726, %739, %cst_304 {dimension_numbers = #tpu.dot_dimension_numbers<[1], [0], [0], [1], [0, 0, 1, 1], [], []>} : vector<2x32xf32>, vector<32x32xf32>, vector<2x32xf32> -> vector<2x32xf32>
    %741 = arith.addf %737, %740 : vector<2x32xf32>
    %cst_305 = arith.constant 0.000000e+00 : f32
    %742 = vector.broadcast %cst_305 : f32 to vector<2x32xf32>
    %743 = arith.subf %742, %741 : vector<2x32xf32>
    %744 = math.exp %743 : vector<2x32xf32>
    %cst_306 = arith.constant 1.000000e+00 : f32
    %745 = vector.broadcast %cst_306 : f32 to vector<2x32xf32>
    %746 = arith.addf %745, %744 : vector<2x32xf32>
    %cst_307 = arith.constant 1.000000e+00 : f32
    %747 = vector.broadcast %cst_307 : f32 to vector<2x32xf32>
    %748 = arith.divf %747, %746 : vector<2x32xf32>
    %749 = vector.extract_strided_slice %664 {offsets = [0, 1, 0], sizes = [2, 1, 32], strides = [1, 1, 1]} : vector<2x8x32xf32> to vector<2x1x32xf32>
    %750 = vector.shape_cast %749 : vector<2x1x32xf32> to vector<2x32xf32>
    %c1_308 = arith.constant 1 : index
    %c0_309 = arith.constant 0 : index
    %c0_310 = arith.constant 0 : index
    %751 = vector.load %arg26[%c1_308, %c0_309, %c0_310] : memref<4x32x32xf32, #tpu.memory_space<vmem>>, vector<1x32x32xf32>
    %752 = vector.shape_cast %751 : vector<1x32x32xf32> to vector<32x32xf32>
    %cst_311 = arith.constant dense<0.000000e+00> : vector<2x32xf32>
    %753 = tpu.matmul %726, %752, %cst_311 {dimension_numbers = #tpu.dot_dimension_numbers<[1], [0], [0], [1], [0, 0, 1, 1], [], []>} : vector<2x32xf32>, vector<32x32xf32>, vector<2x32xf32> -> vector<2x32xf32>
    %754 = arith.addf %750, %753 : vector<2x32xf32>
    %cst_312 = arith.constant 0.000000e+00 : f32
    %755 = vector.broadcast %cst_312 : f32 to vector<2x32xf32>
    %756 = arith.subf %755, %754 : vector<2x32xf32>
    %757 = math.exp %756 : vector<2x32xf32>
    %cst_313 = arith.constant 1.000000e+00 : f32
    %758 = vector.broadcast %cst_313 : f32 to vector<2x32xf32>
    %759 = arith.addf %758, %757 : vector<2x32xf32>
    %cst_314 = arith.constant 1.000000e+00 : f32
    %760 = vector.broadcast %cst_314 : f32 to vector<2x32xf32>
    %761 = arith.divf %760, %759 : vector<2x32xf32>
    %762 = vector.extract_strided_slice %665 {offsets = [0, 1, 0], sizes = [2, 1, 32], strides = [1, 1, 1]} : vector<2x8x32xf32> to vector<2x1x32xf32>
    %763 = vector.shape_cast %762 : vector<2x1x32xf32> to vector<2x32xf32>
    %c2_315 = arith.constant 2 : index
    %c0_316 = arith.constant 0 : index
    %c0_317 = arith.constant 0 : index
    %764 = vector.load %arg26[%c2_315, %c0_316, %c0_317] : memref<4x32x32xf32, #tpu.memory_space<vmem>>, vector<1x32x32xf32>
    %765 = vector.shape_cast %764 : vector<1x32x32xf32> to vector<32x32xf32>
    %cst_318 = arith.constant dense<0.000000e+00> : vector<2x32xf32>
    %766 = tpu.matmul %726, %765, %cst_318 {dimension_numbers = #tpu.dot_dimension_numbers<[1], [0], [0], [1], [0, 0, 1, 1], [], []>} : vector<2x32xf32>, vector<32x32xf32>, vector<2x32xf32> -> vector<2x32xf32>
    %767 = arith.addf %763, %766 : vector<2x32xf32>
    %768 = math.tanh %767 : vector<2x32xf32>
    %769 = vector.extract_strided_slice %666 {offsets = [0, 1, 0], sizes = [2, 1, 32], strides = [1, 1, 1]} : vector<2x8x32xf32> to vector<2x1x32xf32>
    %770 = vector.shape_cast %769 : vector<2x1x32xf32> to vector<2x32xf32>
    %c3_319 = arith.constant 3 : index
    %c0_320 = arith.constant 0 : index
    %c0_321 = arith.constant 0 : index
    %771 = vector.load %arg26[%c3_319, %c0_320, %c0_321] : memref<4x32x32xf32, #tpu.memory_space<vmem>>, vector<1x32x32xf32>
    %772 = vector.shape_cast %771 : vector<1x32x32xf32> to vector<32x32xf32>
    %cst_322 = arith.constant dense<0.000000e+00> : vector<2x32xf32>
    %773 = tpu.matmul %726, %772, %cst_322 {dimension_numbers = #tpu.dot_dimension_numbers<[1], [0], [0], [1], [0, 0, 1, 1], [], []>} : vector<2x32xf32>, vector<32x32xf32>, vector<2x32xf32> -> vector<2x32xf32>
    %774 = arith.addf %770, %773 : vector<2x32xf32>
    %cst_323 = arith.constant 0.000000e+00 : f32
    %775 = vector.broadcast %cst_323 : f32 to vector<2x32xf32>
    %776 = arith.subf %775, %774 : vector<2x32xf32>
    %777 = math.exp %776 : vector<2x32xf32>
    %cst_324 = arith.constant 1.000000e+00 : f32
    %778 = vector.broadcast %cst_324 : f32 to vector<2x32xf32>
    %779 = arith.addf %778, %777 : vector<2x32xf32>
    %cst_325 = arith.constant 1.000000e+00 : f32
    %780 = vector.broadcast %cst_325 : f32 to vector<2x32xf32>
    %781 = arith.divf %780, %779 : vector<2x32xf32>
    %782 = arith.mulf %761, %729 : vector<2x32xf32>
    %783 = arith.mulf %748, %768 : vector<2x32xf32>
    %784 = arith.addf %782, %783 : vector<2x32xf32>
    %785 = math.tanh %784 : vector<2x32xf32>
    %786 = arith.mulf %781, %785 : vector<2x32xf32>
    %787 = vector.shape_cast %735 : vector<2x1xi1> to vector<2x1xi1>
    %788 = vector.broadcast %787 : vector<2x1xi1> to vector<2x32xi1>
    %789 = arith.select %788, %786, %726 : vector<2x32xi1>, vector<2x32xf32>
    %790 = vector.shape_cast %735 : vector<2x1xi1> to vector<2x1xi1>
    %791 = vector.broadcast %790 : vector<2x1xi1> to vector<2x32xi1>
    %792 = arith.select %791, %784, %729 : vector<2x32xi1>, vector<2x32xf32>
    %793 = arith.maximumf %733, %786 : vector<2x32xf32>
    %794 = vector.shape_cast %735 : vector<2x1xi1> to vector<2x1xi1>
    %795 = vector.broadcast %794 : vector<2x1xi1> to vector<2x32xi1>
    %796 = arith.select %795, %793, %733 : vector<2x32xi1>, vector<2x32xf32>
    %c2_i32 = arith.constant 2 : i32
    %797 = vector.broadcast %c2_i32 : i32 to vector<2x1xi32>
    %798 = arith.cmpi sgt, %667, %797 : vector<2x1xi32>
    %799 = vector.extract_strided_slice %663 {offsets = [0, 2, 0], sizes = [2, 1, 32], strides = [1, 1, 1]} : vector<2x8x32xf32> to vector<2x1x32xf32>
    %800 = vector.shape_cast %799 : vector<2x1x32xf32> to vector<2x32xf32>
    %c0_326 = arith.constant 0 : index
    %c0_327 = arith.constant 0 : index
    %c0_328 = arith.constant 0 : index
    %801 = vector.load %arg26[%c0_326, %c0_327, %c0_328] : memref<4x32x32xf32, #tpu.memory_space<vmem>>, vector<1x32x32xf32>
    %802 = vector.shape_cast %801 : vector<1x32x32xf32> to vector<32x32xf32>
    %cst_329 = arith.constant dense<0.000000e+00> : vector<2x32xf32>
    %803 = tpu.matmul %789, %802, %cst_329 {dimension_numbers = #tpu.dot_dimension_numbers<[1], [0], [0], [1], [0, 0, 1, 1], [], []>} : vector<2x32xf32>, vector<32x32xf32>, vector<2x32xf32> -> vector<2x32xf32>
    %804 = arith.addf %800, %803 : vector<2x32xf32>
    %cst_330 = arith.constant 0.000000e+00 : f32
    %805 = vector.broadcast %cst_330 : f32 to vector<2x32xf32>
    %806 = arith.subf %805, %804 : vector<2x32xf32>
    %807 = math.exp %806 : vector<2x32xf32>
    %cst_331 = arith.constant 1.000000e+00 : f32
    %808 = vector.broadcast %cst_331 : f32 to vector<2x32xf32>
    %809 = arith.addf %808, %807 : vector<2x32xf32>
    %cst_332 = arith.constant 1.000000e+00 : f32
    %810 = vector.broadcast %cst_332 : f32 to vector<2x32xf32>
    %811 = arith.divf %810, %809 : vector<2x32xf32>
    %812 = vector.extract_strided_slice %664 {offsets = [0, 2, 0], sizes = [2, 1, 32], strides = [1, 1, 1]} : vector<2x8x32xf32> to vector<2x1x32xf32>
    %813 = vector.shape_cast %812 : vector<2x1x32xf32> to vector<2x32xf32>
    %c1_333 = arith.constant 1 : index
    %c0_334 = arith.constant 0 : index
    %c0_335 = arith.constant 0 : index
    %814 = vector.load %arg26[%c1_333, %c0_334, %c0_335] : memref<4x32x32xf32, #tpu.memory_space<vmem>>, vector<1x32x32xf32>
    %815 = vector.shape_cast %814 : vector<1x32x32xf32> to vector<32x32xf32>
    %cst_336 = arith.constant dense<0.000000e+00> : vector<2x32xf32>
    %816 = tpu.matmul %789, %815, %cst_336 {dimension_numbers = #tpu.dot_dimension_numbers<[1], [0], [0], [1], [0, 0, 1, 1], [], []>} : vector<2x32xf32>, vector<32x32xf32>, vector<2x32xf32> -> vector<2x32xf32>
    %817 = arith.addf %813, %816 : vector<2x32xf32>
    %cst_337 = arith.constant 0.000000e+00 : f32
    %818 = vector.broadcast %cst_337 : f32 to vector<2x32xf32>
    %819 = arith.subf %818, %817 : vector<2x32xf32>
    %820 = math.exp %819 : vector<2x32xf32>
    %cst_338 = arith.constant 1.000000e+00 : f32
    %821 = vector.broadcast %cst_338 : f32 to vector<2x32xf32>
    %822 = arith.addf %821, %820 : vector<2x32xf32>
    %cst_339 = arith.constant 1.000000e+00 : f32
    %823 = vector.broadcast %cst_339 : f32 to vector<2x32xf32>
    %824 = arith.divf %823, %822 : vector<2x32xf32>
    %825 = vector.extract_strided_slice %665 {offsets = [0, 2, 0], sizes = [2, 1, 32], strides = [1, 1, 1]} : vector<2x8x32xf32> to vector<2x1x32xf32>
    %826 = vector.shape_cast %825 : vector<2x1x32xf32> to vector<2x32xf32>
    %c2_340 = arith.constant 2 : index
    %c0_341 = arith.constant 0 : index
    %c0_342 = arith.constant 0 : index
    %827 = vector.load %arg26[%c2_340, %c0_341, %c0_342] : memref<4x32x32xf32, #tpu.memory_space<vmem>>, vector<1x32x32xf32>
    %828 = vector.shape_cast %827 : vector<1x32x32xf32> to vector<32x32xf32>
    %cst_343 = arith.constant dense<0.000000e+00> : vector<2x32xf32>
    %829 = tpu.matmul %789, %828, %cst_343 {dimension_numbers = #tpu.dot_dimension_numbers<[1], [0], [0], [1], [0, 0, 1, 1], [], []>} : vector<2x32xf32>, vector<32x32xf32>, vector<2x32xf32> -> vector<2x32xf32>
    %830 = arith.addf %826, %829 : vector<2x32xf32>
    %831 = math.tanh %830 : vector<2x32xf32>
    %832 = vector.extract_strided_slice %666 {offsets = [0, 2, 0], sizes = [2, 1, 32], strides = [1, 1, 1]} : vector<2x8x32xf32> to vector<2x1x32xf32>
    %833 = vector.shape_cast %832 : vector<2x1x32xf32> to vector<2x32xf32>
    %c3_344 = arith.constant 3 : index
    %c0_345 = arith.constant 0 : index
    %c0_346 = arith.constant 0 : index
    %834 = vector.load %arg26[%c3_344, %c0_345, %c0_346] : memref<4x32x32xf32, #tpu.memory_space<vmem>>, vector<1x32x32xf32>
    %835 = vector.shape_cast %834 : vector<1x32x32xf32> to vector<32x32xf32>
    %cst_347 = arith.constant dense<0.000000e+00> : vector<2x32xf32>
    %836 = tpu.matmul %789, %835, %cst_347 {dimension_numbers = #tpu.dot_dimension_numbers<[1], [0], [0], [1], [0, 0, 1, 1], [], []>} : vector<2x32xf32>, vector<32x32xf32>, vector<2x32xf32> -> vector<2x32xf32>
    %837 = arith.addf %833, %836 : vector<2x32xf32>
    %cst_348 = arith.constant 0.000000e+00 : f32
    %838 = vector.broadcast %cst_348 : f32 to vector<2x32xf32>
    %839 = arith.subf %838, %837 : vector<2x32xf32>
    %840 = math.exp %839 : vector<2x32xf32>
    %cst_349 = arith.constant 1.000000e+00 : f32
    %841 = vector.broadcast %cst_349 : f32 to vector<2x32xf32>
    %842 = arith.addf %841, %840 : vector<2x32xf32>
    %cst_350 = arith.constant 1.000000e+00 : f32
    %843 = vector.broadcast %cst_350 : f32 to vector<2x32xf32>
    %844 = arith.divf %843, %842 : vector<2x32xf32>
    %845 = arith.mulf %824, %792 : vector<2x32xf32>
    %846 = arith.mulf %811, %831 : vector<2x32xf32>
    %847 = arith.addf %845, %846 : vector<2x32xf32>
    %848 = math.tanh %847 : vector<2x32xf32>
    %849 = arith.mulf %844, %848 : vector<2x32xf32>
    %850 = vector.shape_cast %798 : vector<2x1xi1> to vector<2x1xi1>
    %851 = vector.broadcast %850 : vector<2x1xi1> to vector<2x32xi1>
    %852 = arith.select %851, %849, %789 : vector<2x32xi1>, vector<2x32xf32>
    %853 = vector.shape_cast %798 : vector<2x1xi1> to vector<2x1xi1>
    %854 = vector.broadcast %853 : vector<2x1xi1> to vector<2x32xi1>
    %855 = arith.select %854, %847, %792 : vector<2x32xi1>, vector<2x32xf32>
    %856 = arith.maximumf %796, %849 : vector<2x32xf32>
    %857 = vector.shape_cast %798 : vector<2x1xi1> to vector<2x1xi1>
    %858 = vector.broadcast %857 : vector<2x1xi1> to vector<2x32xi1>
    %859 = arith.select %858, %856, %796 : vector<2x32xi1>, vector<2x32xf32>
    %c3_i32 = arith.constant 3 : i32
    %860 = vector.broadcast %c3_i32 : i32 to vector<2x1xi32>
    %861 = arith.cmpi sgt, %667, %860 : vector<2x1xi32>
    %862 = vector.extract_strided_slice %663 {offsets = [0, 3, 0], sizes = [2, 1, 32], strides = [1, 1, 1]} : vector<2x8x32xf32> to vector<2x1x32xf32>
    %863 = vector.shape_cast %862 : vector<2x1x32xf32> to vector<2x32xf32>
    %c0_351 = arith.constant 0 : index
    %c0_352 = arith.constant 0 : index
    %c0_353 = arith.constant 0 : index
    %864 = vector.load %arg26[%c0_351, %c0_352, %c0_353] : memref<4x32x32xf32, #tpu.memory_space<vmem>>, vector<1x32x32xf32>
    %865 = vector.shape_cast %864 : vector<1x32x32xf32> to vector<32x32xf32>
    %cst_354 = arith.constant dense<0.000000e+00> : vector<2x32xf32>
    %866 = tpu.matmul %852, %865, %cst_354 {dimension_numbers = #tpu.dot_dimension_numbers<[1], [0], [0], [1], [0, 0, 1, 1], [], []>} : vector<2x32xf32>, vector<32x32xf32>, vector<2x32xf32> -> vector<2x32xf32>
    %867 = arith.addf %863, %866 : vector<2x32xf32>
    %cst_355 = arith.constant 0.000000e+00 : f32
    %868 = vector.broadcast %cst_355 : f32 to vector<2x32xf32>
    %869 = arith.subf %868, %867 : vector<2x32xf32>
    %870 = math.exp %869 : vector<2x32xf32>
    %cst_356 = arith.constant 1.000000e+00 : f32
    %871 = vector.broadcast %cst_356 : f32 to vector<2x32xf32>
    %872 = arith.addf %871, %870 : vector<2x32xf32>
    %cst_357 = arith.constant 1.000000e+00 : f32
    %873 = vector.broadcast %cst_357 : f32 to vector<2x32xf32>
    %874 = arith.divf %873, %872 : vector<2x32xf32>
    %875 = vector.extract_strided_slice %664 {offsets = [0, 3, 0], sizes = [2, 1, 32], strides = [1, 1, 1]} : vector<2x8x32xf32> to vector<2x1x32xf32>
    %876 = vector.shape_cast %875 : vector<2x1x32xf32> to vector<2x32xf32>
    %c1_358 = arith.constant 1 : index
    %c0_359 = arith.constant 0 : index
    %c0_360 = arith.constant 0 : index
    %877 = vector.load %arg26[%c1_358, %c0_359, %c0_360] : memref<4x32x32xf32, #tpu.memory_space<vmem>>, vector<1x32x32xf32>
    %878 = vector.shape_cast %877 : vector<1x32x32xf32> to vector<32x32xf32>
    %cst_361 = arith.constant dense<0.000000e+00> : vector<2x32xf32>
    %879 = tpu.matmul %852, %878, %cst_361 {dimension_numbers = #tpu.dot_dimension_numbers<[1], [0], [0], [1], [0, 0, 1, 1], [], []>} : vector<2x32xf32>, vector<32x32xf32>, vector<2x32xf32> -> vector<2x32xf32>
    %880 = arith.addf %876, %879 : vector<2x32xf32>
    %cst_362 = arith.constant 0.000000e+00 : f32
    %881 = vector.broadcast %cst_362 : f32 to vector<2x32xf32>
    %882 = arith.subf %881, %880 : vector<2x32xf32>
    %883 = math.exp %882 : vector<2x32xf32>
    %cst_363 = arith.constant 1.000000e+00 : f32
    %884 = vector.broadcast %cst_363 : f32 to vector<2x32xf32>
    %885 = arith.addf %884, %883 : vector<2x32xf32>
    %cst_364 = arith.constant 1.000000e+00 : f32
    %886 = vector.broadcast %cst_364 : f32 to vector<2x32xf32>
    %887 = arith.divf %886, %885 : vector<2x32xf32>
    %888 = vector.extract_strided_slice %665 {offsets = [0, 3, 0], sizes = [2, 1, 32], strides = [1, 1, 1]} : vector<2x8x32xf32> to vector<2x1x32xf32>
    %889 = vector.shape_cast %888 : vector<2x1x32xf32> to vector<2x32xf32>
    %c2_365 = arith.constant 2 : index
    %c0_366 = arith.constant 0 : index
    %c0_367 = arith.constant 0 : index
    %890 = vector.load %arg26[%c2_365, %c0_366, %c0_367] : memref<4x32x32xf32, #tpu.memory_space<vmem>>, vector<1x32x32xf32>
    %891 = vector.shape_cast %890 : vector<1x32x32xf32> to vector<32x32xf32>
    %cst_368 = arith.constant dense<0.000000e+00> : vector<2x32xf32>
    %892 = tpu.matmul %852, %891, %cst_368 {dimension_numbers = #tpu.dot_dimension_numbers<[1], [0], [0], [1], [0, 0, 1, 1], [], []>} : vector<2x32xf32>, vector<32x32xf32>, vector<2x32xf32> -> vector<2x32xf32>
    %893 = arith.addf %889, %892 : vector<2x32xf32>
    %894 = math.tanh %893 : vector<2x32xf32>
    %895 = vector.extract_strided_slice %666 {offsets = [0, 3, 0], sizes = [2, 1, 32], strides = [1, 1, 1]} : vector<2x8x32xf32> to vector<2x1x32xf32>
    %896 = vector.shape_cast %895 : vector<2x1x32xf32> to vector<2x32xf32>
    %c3_369 = arith.constant 3 : index
    %c0_370 = arith.constant 0 : index
    %c0_371 = arith.constant 0 : index
    %897 = vector.load %arg26[%c3_369, %c0_370, %c0_371] : memref<4x32x32xf32, #tpu.memory_space<vmem>>, vector<1x32x32xf32>
    %898 = vector.shape_cast %897 : vector<1x32x32xf32> to vector<32x32xf32>
    %cst_372 = arith.constant dense<0.000000e+00> : vector<2x32xf32>
    %899 = tpu.matmul %852, %898, %cst_372 {dimension_numbers = #tpu.dot_dimension_numbers<[1], [0], [0], [1], [0, 0, 1, 1], [], []>} : vector<2x32xf32>, vector<32x32xf32>, vector<2x32xf32> -> vector<2x32xf32>
    %900 = arith.addf %896, %899 : vector<2x32xf32>
    %cst_373 = arith.constant 0.000000e+00 : f32
    %901 = vector.broadcast %cst_373 : f32 to vector<2x32xf32>
    %902 = arith.subf %901, %900 : vector<2x32xf32>
    %903 = math.exp %902 : vector<2x32xf32>
    %cst_374 = arith.constant 1.000000e+00 : f32
    %904 = vector.broadcast %cst_374 : f32 to vector<2x32xf32>
    %905 = arith.addf %904, %903 : vector<2x32xf32>
    %cst_375 = arith.constant 1.000000e+00 : f32
    %906 = vector.broadcast %cst_375 : f32 to vector<2x32xf32>
    %907 = arith.divf %906, %905 : vector<2x32xf32>
    %908 = arith.mulf %887, %855 : vector<2x32xf32>
    %909 = arith.mulf %874, %894 : vector<2x32xf32>
    %910 = arith.addf %908, %909 : vector<2x32xf32>
    %911 = math.tanh %910 : vector<2x32xf32>
    %912 = arith.mulf %907, %911 : vector<2x32xf32>
    %913 = vector.shape_cast %861 : vector<2x1xi1> to vector<2x1xi1>
    %914 = vector.broadcast %913 : vector<2x1xi1> to vector<2x32xi1>
    %915 = arith.select %914, %912, %852 : vector<2x32xi1>, vector<2x32xf32>
    %916 = vector.shape_cast %861 : vector<2x1xi1> to vector<2x1xi1>
    %917 = vector.broadcast %916 : vector<2x1xi1> to vector<2x32xi1>
    %918 = arith.select %917, %910, %855 : vector<2x32xi1>, vector<2x32xf32>
    %919 = arith.maximumf %859, %912 : vector<2x32xf32>
    %920 = vector.shape_cast %861 : vector<2x1xi1> to vector<2x1xi1>
    %921 = vector.broadcast %920 : vector<2x1xi1> to vector<2x32xi1>
    %922 = arith.select %921, %919, %859 : vector<2x32xi1>, vector<2x32xf32>
    %c4_i32 = arith.constant 4 : i32
    %923 = vector.broadcast %c4_i32 : i32 to vector<2x1xi32>
    %924 = arith.cmpi sgt, %667, %923 : vector<2x1xi32>
    %925 = vector.extract_strided_slice %663 {offsets = [0, 4, 0], sizes = [2, 1, 32], strides = [1, 1, 1]} : vector<2x8x32xf32> to vector<2x1x32xf32>
    %926 = vector.shape_cast %925 : vector<2x1x32xf32> to vector<2x32xf32>
    %c0_376 = arith.constant 0 : index
    %c0_377 = arith.constant 0 : index
    %c0_378 = arith.constant 0 : index
    %927 = vector.load %arg26[%c0_376, %c0_377, %c0_378] : memref<4x32x32xf32, #tpu.memory_space<vmem>>, vector<1x32x32xf32>
    %928 = vector.shape_cast %927 : vector<1x32x32xf32> to vector<32x32xf32>
    %cst_379 = arith.constant dense<0.000000e+00> : vector<2x32xf32>
    %929 = tpu.matmul %915, %928, %cst_379 {dimension_numbers = #tpu.dot_dimension_numbers<[1], [0], [0], [1], [0, 0, 1, 1], [], []>} : vector<2x32xf32>, vector<32x32xf32>, vector<2x32xf32> -> vector<2x32xf32>
    %930 = arith.addf %926, %929 : vector<2x32xf32>
    %cst_380 = arith.constant 0.000000e+00 : f32
    %931 = vector.broadcast %cst_380 : f32 to vector<2x32xf32>
    %932 = arith.subf %931, %930 : vector<2x32xf32>
    %933 = math.exp %932 : vector<2x32xf32>
    %cst_381 = arith.constant 1.000000e+00 : f32
    %934 = vector.broadcast %cst_381 : f32 to vector<2x32xf32>
    %935 = arith.addf %934, %933 : vector<2x32xf32>
    %cst_382 = arith.constant 1.000000e+00 : f32
    %936 = vector.broadcast %cst_382 : f32 to vector<2x32xf32>
    %937 = arith.divf %936, %935 : vector<2x32xf32>
    %938 = vector.extract_strided_slice %664 {offsets = [0, 4, 0], sizes = [2, 1, 32], strides = [1, 1, 1]} : vector<2x8x32xf32> to vector<2x1x32xf32>
    %939 = vector.shape_cast %938 : vector<2x1x32xf32> to vector<2x32xf32>
    %c1_383 = arith.constant 1 : index
    %c0_384 = arith.constant 0 : index
    %c0_385 = arith.constant 0 : index
    %940 = vector.load %arg26[%c1_383, %c0_384, %c0_385] : memref<4x32x32xf32, #tpu.memory_space<vmem>>, vector<1x32x32xf32>
    %941 = vector.shape_cast %940 : vector<1x32x32xf32> to vector<32x32xf32>
    %cst_386 = arith.constant dense<0.000000e+00> : vector<2x32xf32>
    %942 = tpu.matmul %915, %941, %cst_386 {dimension_numbers = #tpu.dot_dimension_numbers<[1], [0], [0], [1], [0, 0, 1, 1], [], []>} : vector<2x32xf32>, vector<32x32xf32>, vector<2x32xf32> -> vector<2x32xf32>
    %943 = arith.addf %939, %942 : vector<2x32xf32>
    %cst_387 = arith.constant 0.000000e+00 : f32
    %944 = vector.broadcast %cst_387 : f32 to vector<2x32xf32>
    %945 = arith.subf %944, %943 : vector<2x32xf32>
    %946 = math.exp %945 : vector<2x32xf32>
    %cst_388 = arith.constant 1.000000e+00 : f32
    %947 = vector.broadcast %cst_388 : f32 to vector<2x32xf32>
    %948 = arith.addf %947, %946 : vector<2x32xf32>
    %cst_389 = arith.constant 1.000000e+00 : f32
    %949 = vector.broadcast %cst_389 : f32 to vector<2x32xf32>
    %950 = arith.divf %949, %948 : vector<2x32xf32>
    %951 = vector.extract_strided_slice %665 {offsets = [0, 4, 0], sizes = [2, 1, 32], strides = [1, 1, 1]} : vector<2x8x32xf32> to vector<2x1x32xf32>
    %952 = vector.shape_cast %951 : vector<2x1x32xf32> to vector<2x32xf32>
    %c2_390 = arith.constant 2 : index
    %c0_391 = arith.constant 0 : index
    %c0_392 = arith.constant 0 : index
    %953 = vector.load %arg26[%c2_390, %c0_391, %c0_392] : memref<4x32x32xf32, #tpu.memory_space<vmem>>, vector<1x32x32xf32>
    %954 = vector.shape_cast %953 : vector<1x32x32xf32> to vector<32x32xf32>
    %cst_393 = arith.constant dense<0.000000e+00> : vector<2x32xf32>
    %955 = tpu.matmul %915, %954, %cst_393 {dimension_numbers = #tpu.dot_dimension_numbers<[1], [0], [0], [1], [0, 0, 1, 1], [], []>} : vector<2x32xf32>, vector<32x32xf32>, vector<2x32xf32> -> vector<2x32xf32>
    %956 = arith.addf %952, %955 : vector<2x32xf32>
    %957 = math.tanh %956 : vector<2x32xf32>
    %958 = vector.extract_strided_slice %666 {offsets = [0, 4, 0], sizes = [2, 1, 32], strides = [1, 1, 1]} : vector<2x8x32xf32> to vector<2x1x32xf32>
    %959 = vector.shape_cast %958 : vector<2x1x32xf32> to vector<2x32xf32>
    %c3_394 = arith.constant 3 : index
    %c0_395 = arith.constant 0 : index
    %c0_396 = arith.constant 0 : index
    %960 = vector.load %arg26[%c3_394, %c0_395, %c0_396] : memref<4x32x32xf32, #tpu.memory_space<vmem>>, vector<1x32x32xf32>
    %961 = vector.shape_cast %960 : vector<1x32x32xf32> to vector<32x32xf32>
    %cst_397 = arith.constant dense<0.000000e+00> : vector<2x32xf32>
    %962 = tpu.matmul %915, %961, %cst_397 {dimension_numbers = #tpu.dot_dimension_numbers<[1], [0], [0], [1], [0, 0, 1, 1], [], []>} : vector<2x32xf32>, vector<32x32xf32>, vector<2x32xf32> -> vector<2x32xf32>
    %963 = arith.addf %959, %962 : vector<2x32xf32>
    %cst_398 = arith.constant 0.000000e+00 : f32
    %964 = vector.broadcast %cst_398 : f32 to vector<2x32xf32>
    %965 = arith.subf %964, %963 : vector<2x32xf32>
    %966 = math.exp %965 : vector<2x32xf32>
    %cst_399 = arith.constant 1.000000e+00 : f32
    %967 = vector.broadcast %cst_399 : f32 to vector<2x32xf32>
    %968 = arith.addf %967, %966 : vector<2x32xf32>
    %cst_400 = arith.constant 1.000000e+00 : f32
    %969 = vector.broadcast %cst_400 : f32 to vector<2x32xf32>
    %970 = arith.divf %969, %968 : vector<2x32xf32>
    %971 = arith.mulf %950, %918 : vector<2x32xf32>
    %972 = arith.mulf %937, %957 : vector<2x32xf32>
    %973 = arith.addf %971, %972 : vector<2x32xf32>
    %974 = math.tanh %973 : vector<2x32xf32>
    %975 = arith.mulf %970, %974 : vector<2x32xf32>
    %976 = vector.shape_cast %924 : vector<2x1xi1> to vector<2x1xi1>
    %977 = vector.broadcast %976 : vector<2x1xi1> to vector<2x32xi1>
    %978 = arith.select %977, %975, %915 : vector<2x32xi1>, vector<2x32xf32>
    %979 = vector.shape_cast %924 : vector<2x1xi1> to vector<2x1xi1>
    %980 = vector.broadcast %979 : vector<2x1xi1> to vector<2x32xi1>
    %981 = arith.select %980, %973, %918 : vector<2x32xi1>, vector<2x32xf32>
    %982 = arith.maximumf %922, %975 : vector<2x32xf32>
    %983 = vector.shape_cast %924 : vector<2x1xi1> to vector<2x1xi1>
    %984 = vector.broadcast %983 : vector<2x1xi1> to vector<2x32xi1>
    %985 = arith.select %984, %982, %922 : vector<2x32xi1>, vector<2x32xf32>
    %c5_i32 = arith.constant 5 : i32
    %986 = vector.broadcast %c5_i32 : i32 to vector<2x1xi32>
    %987 = arith.cmpi sgt, %667, %986 : vector<2x1xi32>
    %988 = vector.extract_strided_slice %663 {offsets = [0, 5, 0], sizes = [2, 1, 32], strides = [1, 1, 1]} : vector<2x8x32xf32> to vector<2x1x32xf32>
    %989 = vector.shape_cast %988 : vector<2x1x32xf32> to vector<2x32xf32>
    %c0_401 = arith.constant 0 : index
    %c0_402 = arith.constant 0 : index
    %c0_403 = arith.constant 0 : index
    %990 = vector.load %arg26[%c0_401, %c0_402, %c0_403] : memref<4x32x32xf32, #tpu.memory_space<vmem>>, vector<1x32x32xf32>
    %991 = vector.shape_cast %990 : vector<1x32x32xf32> to vector<32x32xf32>
    %cst_404 = arith.constant dense<0.000000e+00> : vector<2x32xf32>
    %992 = tpu.matmul %978, %991, %cst_404 {dimension_numbers = #tpu.dot_dimension_numbers<[1], [0], [0], [1], [0, 0, 1, 1], [], []>} : vector<2x32xf32>, vector<32x32xf32>, vector<2x32xf32> -> vector<2x32xf32>
    %993 = arith.addf %989, %992 : vector<2x32xf32>
    %cst_405 = arith.constant 0.000000e+00 : f32
    %994 = vector.broadcast %cst_405 : f32 to vector<2x32xf32>
    %995 = arith.subf %994, %993 : vector<2x32xf32>
    %996 = math.exp %995 : vector<2x32xf32>
    %cst_406 = arith.constant 1.000000e+00 : f32
    %997 = vector.broadcast %cst_406 : f32 to vector<2x32xf32>
    %998 = arith.addf %997, %996 : vector<2x32xf32>
    %cst_407 = arith.constant 1.000000e+00 : f32
    %999 = vector.broadcast %cst_407 : f32 to vector<2x32xf32>
    %1000 = arith.divf %999, %998 : vector<2x32xf32>
    %1001 = vector.extract_strided_slice %664 {offsets = [0, 5, 0], sizes = [2, 1, 32], strides = [1, 1, 1]} : vector<2x8x32xf32> to vector<2x1x32xf32>
    %1002 = vector.shape_cast %1001 : vector<2x1x32xf32> to vector<2x32xf32>
    %c1_408 = arith.constant 1 : index
    %c0_409 = arith.constant 0 : index
    %c0_410 = arith.constant 0 : index
    %1003 = vector.load %arg26[%c1_408, %c0_409, %c0_410] : memref<4x32x32xf32, #tpu.memory_space<vmem>>, vector<1x32x32xf32>
    %1004 = vector.shape_cast %1003 : vector<1x32x32xf32> to vector<32x32xf32>
    %cst_411 = arith.constant dense<0.000000e+00> : vector<2x32xf32>
    %1005 = tpu.matmul %978, %1004, %cst_411 {dimension_numbers = #tpu.dot_dimension_numbers<[1], [0], [0], [1], [0, 0, 1, 1], [], []>} : vector<2x32xf32>, vector<32x32xf32>, vector<2x32xf32> -> vector<2x32xf32>
    %1006 = arith.addf %1002, %1005 : vector<2x32xf32>
    %cst_412 = arith.constant 0.000000e+00 : f32
    %1007 = vector.broadcast %cst_412 : f32 to vector<2x32xf32>
    %1008 = arith.subf %1007, %1006 : vector<2x32xf32>
    %1009 = math.exp %1008 : vector<2x32xf32>
    %cst_413 = arith.constant 1.000000e+00 : f32
    %1010 = vector.broadcast %cst_413 : f32 to vector<2x32xf32>
    %1011 = arith.addf %1010, %1009 : vector<2x32xf32>
    %cst_414 = arith.constant 1.000000e+00 : f32
    %1012 = vector.broadcast %cst_414 : f32 to vector<2x32xf32>
    %1013 = arith.divf %1012, %1011 : vector<2x32xf32>
    %1014 = vector.extract_strided_slice %665 {offsets = [0, 5, 0], sizes = [2, 1, 32], strides = [1, 1, 1]} : vector<2x8x32xf32> to vector<2x1x32xf32>
    %1015 = vector.shape_cast %1014 : vector<2x1x32xf32> to vector<2x32xf32>
    %c2_415 = arith.constant 2 : index
    %c0_416 = arith.constant 0 : index
    %c0_417 = arith.constant 0 : index
    %1016 = vector.load %arg26[%c2_415, %c0_416, %c0_417] : memref<4x32x32xf32, #tpu.memory_space<vmem>>, vector<1x32x32xf32>
    %1017 = vector.shape_cast %1016 : vector<1x32x32xf32> to vector<32x32xf32>
    %cst_418 = arith.constant dense<0.000000e+00> : vector<2x32xf32>
    %1018 = tpu.matmul %978, %1017, %cst_418 {dimension_numbers = #tpu.dot_dimension_numbers<[1], [0], [0], [1], [0, 0, 1, 1], [], []>} : vector<2x32xf32>, vector<32x32xf32>, vector<2x32xf32> -> vector<2x32xf32>
    %1019 = arith.addf %1015, %1018 : vector<2x32xf32>
    %1020 = math.tanh %1019 : vector<2x32xf32>
    %1021 = vector.extract_strided_slice %666 {offsets = [0, 5, 0], sizes = [2, 1, 32], strides = [1, 1, 1]} : vector<2x8x32xf32> to vector<2x1x32xf32>
    %1022 = vector.shape_cast %1021 : vector<2x1x32xf32> to vector<2x32xf32>
    %c3_419 = arith.constant 3 : index
    %c0_420 = arith.constant 0 : index
    %c0_421 = arith.constant 0 : index
    %1023 = vector.load %arg26[%c3_419, %c0_420, %c0_421] : memref<4x32x32xf32, #tpu.memory_space<vmem>>, vector<1x32x32xf32>
    %1024 = vector.shape_cast %1023 : vector<1x32x32xf32> to vector<32x32xf32>
    %cst_422 = arith.constant dense<0.000000e+00> : vector<2x32xf32>
    %1025 = tpu.matmul %978, %1024, %cst_422 {dimension_numbers = #tpu.dot_dimension_numbers<[1], [0], [0], [1], [0, 0, 1, 1], [], []>} : vector<2x32xf32>, vector<32x32xf32>, vector<2x32xf32> -> vector<2x32xf32>
    %1026 = arith.addf %1022, %1025 : vector<2x32xf32>
    %cst_423 = arith.constant 0.000000e+00 : f32
    %1027 = vector.broadcast %cst_423 : f32 to vector<2x32xf32>
    %1028 = arith.subf %1027, %1026 : vector<2x32xf32>
    %1029 = math.exp %1028 : vector<2x32xf32>
    %cst_424 = arith.constant 1.000000e+00 : f32
    %1030 = vector.broadcast %cst_424 : f32 to vector<2x32xf32>
    %1031 = arith.addf %1030, %1029 : vector<2x32xf32>
    %cst_425 = arith.constant 1.000000e+00 : f32
    %1032 = vector.broadcast %cst_425 : f32 to vector<2x32xf32>
    %1033 = arith.divf %1032, %1031 : vector<2x32xf32>
    %1034 = arith.mulf %1013, %981 : vector<2x32xf32>
    %1035 = arith.mulf %1000, %1020 : vector<2x32xf32>
    %1036 = arith.addf %1034, %1035 : vector<2x32xf32>
    %1037 = math.tanh %1036 : vector<2x32xf32>
    %1038 = arith.mulf %1033, %1037 : vector<2x32xf32>
    %1039 = vector.shape_cast %987 : vector<2x1xi1> to vector<2x1xi1>
    %1040 = vector.broadcast %1039 : vector<2x1xi1> to vector<2x32xi1>
    %1041 = arith.select %1040, %1038, %978 : vector<2x32xi1>, vector<2x32xf32>
    %1042 = vector.shape_cast %987 : vector<2x1xi1> to vector<2x1xi1>
    %1043 = vector.broadcast %1042 : vector<2x1xi1> to vector<2x32xi1>
    %1044 = arith.select %1043, %1036, %981 : vector<2x32xi1>, vector<2x32xf32>
    %1045 = arith.maximumf %985, %1038 : vector<2x32xf32>
    %1046 = vector.shape_cast %987 : vector<2x1xi1> to vector<2x1xi1>
    %1047 = vector.broadcast %1046 : vector<2x1xi1> to vector<2x32xi1>
    %1048 = arith.select %1047, %1045, %985 : vector<2x32xi1>, vector<2x32xf32>
    %c6_i32 = arith.constant 6 : i32
    %1049 = vector.broadcast %c6_i32 : i32 to vector<2x1xi32>
    %1050 = arith.cmpi sgt, %667, %1049 : vector<2x1xi32>
    %1051 = vector.extract_strided_slice %663 {offsets = [0, 6, 0], sizes = [2, 1, 32], strides = [1, 1, 1]} : vector<2x8x32xf32> to vector<2x1x32xf32>
    %1052 = vector.shape_cast %1051 : vector<2x1x32xf32> to vector<2x32xf32>
    %c0_426 = arith.constant 0 : index
    %c0_427 = arith.constant 0 : index
    %c0_428 = arith.constant 0 : index
    %1053 = vector.load %arg26[%c0_426, %c0_427, %c0_428] : memref<4x32x32xf32, #tpu.memory_space<vmem>>, vector<1x32x32xf32>
    %1054 = vector.shape_cast %1053 : vector<1x32x32xf32> to vector<32x32xf32>
    %cst_429 = arith.constant dense<0.000000e+00> : vector<2x32xf32>
    %1055 = tpu.matmul %1041, %1054, %cst_429 {dimension_numbers = #tpu.dot_dimension_numbers<[1], [0], [0], [1], [0, 0, 1, 1], [], []>} : vector<2x32xf32>, vector<32x32xf32>, vector<2x32xf32> -> vector<2x32xf32>
    %1056 = arith.addf %1052, %1055 : vector<2x32xf32>
    %cst_430 = arith.constant 0.000000e+00 : f32
    %1057 = vector.broadcast %cst_430 : f32 to vector<2x32xf32>
    %1058 = arith.subf %1057, %1056 : vector<2x32xf32>
    %1059 = math.exp %1058 : vector<2x32xf32>
    %cst_431 = arith.constant 1.000000e+00 : f32
    %1060 = vector.broadcast %cst_431 : f32 to vector<2x32xf32>
    %1061 = arith.addf %1060, %1059 : vector<2x32xf32>
    %cst_432 = arith.constant 1.000000e+00 : f32
    %1062 = vector.broadcast %cst_432 : f32 to vector<2x32xf32>
    %1063 = arith.divf %1062, %1061 : vector<2x32xf32>
    %1064 = vector.extract_strided_slice %664 {offsets = [0, 6, 0], sizes = [2, 1, 32], strides = [1, 1, 1]} : vector<2x8x32xf32> to vector<2x1x32xf32>
    %1065 = vector.shape_cast %1064 : vector<2x1x32xf32> to vector<2x32xf32>
    %c1_433 = arith.constant 1 : index
    %c0_434 = arith.constant 0 : index
    %c0_435 = arith.constant 0 : index
    %1066 = vector.load %arg26[%c1_433, %c0_434, %c0_435] : memref<4x32x32xf32, #tpu.memory_space<vmem>>, vector<1x32x32xf32>
    %1067 = vector.shape_cast %1066 : vector<1x32x32xf32> to vector<32x32xf32>
    %cst_436 = arith.constant dense<0.000000e+00> : vector<2x32xf32>
    %1068 = tpu.matmul %1041, %1067, %cst_436 {dimension_numbers = #tpu.dot_dimension_numbers<[1], [0], [0], [1], [0, 0, 1, 1], [], []>} : vector<2x32xf32>, vector<32x32xf32>, vector<2x32xf32> -> vector<2x32xf32>
    %1069 = arith.addf %1065, %1068 : vector<2x32xf32>
    %cst_437 = arith.constant 0.000000e+00 : f32
    %1070 = vector.broadcast %cst_437 : f32 to vector<2x32xf32>
    %1071 = arith.subf %1070, %1069 : vector<2x32xf32>
    %1072 = math.exp %1071 : vector<2x32xf32>
    %cst_438 = arith.constant 1.000000e+00 : f32
    %1073 = vector.broadcast %cst_438 : f32 to vector<2x32xf32>
    %1074 = arith.addf %1073, %1072 : vector<2x32xf32>
    %cst_439 = arith.constant 1.000000e+00 : f32
    %1075 = vector.broadcast %cst_439 : f32 to vector<2x32xf32>
    %1076 = arith.divf %1075, %1074 : vector<2x32xf32>
    %1077 = vector.extract_strided_slice %665 {offsets = [0, 6, 0], sizes = [2, 1, 32], strides = [1, 1, 1]} : vector<2x8x32xf32> to vector<2x1x32xf32>
    %1078 = vector.shape_cast %1077 : vector<2x1x32xf32> to vector<2x32xf32>
    %c2_440 = arith.constant 2 : index
    %c0_441 = arith.constant 0 : index
    %c0_442 = arith.constant 0 : index
    %1079 = vector.load %arg26[%c2_440, %c0_441, %c0_442] : memref<4x32x32xf32, #tpu.memory_space<vmem>>, vector<1x32x32xf32>
    %1080 = vector.shape_cast %1079 : vector<1x32x32xf32> to vector<32x32xf32>
    %cst_443 = arith.constant dense<0.000000e+00> : vector<2x32xf32>
    %1081 = tpu.matmul %1041, %1080, %cst_443 {dimension_numbers = #tpu.dot_dimension_numbers<[1], [0], [0], [1], [0, 0, 1, 1], [], []>} : vector<2x32xf32>, vector<32x32xf32>, vector<2x32xf32> -> vector<2x32xf32>
    %1082 = arith.addf %1078, %1081 : vector<2x32xf32>
    %1083 = math.tanh %1082 : vector<2x32xf32>
    %1084 = vector.extract_strided_slice %666 {offsets = [0, 6, 0], sizes = [2, 1, 32], strides = [1, 1, 1]} : vector<2x8x32xf32> to vector<2x1x32xf32>
    %1085 = vector.shape_cast %1084 : vector<2x1x32xf32> to vector<2x32xf32>
    %c3_444 = arith.constant 3 : index
    %c0_445 = arith.constant 0 : index
    %c0_446 = arith.constant 0 : index
    %1086 = vector.load %arg26[%c3_444, %c0_445, %c0_446] : memref<4x32x32xf32, #tpu.memory_space<vmem>>, vector<1x32x32xf32>
    %1087 = vector.shape_cast %1086 : vector<1x32x32xf32> to vector<32x32xf32>
    %cst_447 = arith.constant dense<0.000000e+00> : vector<2x32xf32>
    %1088 = tpu.matmul %1041, %1087, %cst_447 {dimension_numbers = #tpu.dot_dimension_numbers<[1], [0], [0], [1], [0, 0, 1, 1], [], []>} : vector<2x32xf32>, vector<32x32xf32>, vector<2x32xf32> -> vector<2x32xf32>
    %1089 = arith.addf %1085, %1088 : vector<2x32xf32>
    %cst_448 = arith.constant 0.000000e+00 : f32
    %1090 = vector.broadcast %cst_448 : f32 to vector<2x32xf32>
    %1091 = arith.subf %1090, %1089 : vector<2x32xf32>
    %1092 = math.exp %1091 : vector<2x32xf32>
    %cst_449 = arith.constant 1.000000e+00 : f32
    %1093 = vector.broadcast %cst_449 : f32 to vector<2x32xf32>
    %1094 = arith.addf %1093, %1092 : vector<2x32xf32>
    %cst_450 = arith.constant 1.000000e+00 : f32
    %1095 = vector.broadcast %cst_450 : f32 to vector<2x32xf32>
    %1096 = arith.divf %1095, %1094 : vector<2x32xf32>
    %1097 = arith.mulf %1076, %1044 : vector<2x32xf32>
    %1098 = arith.mulf %1063, %1083 : vector<2x32xf32>
    %1099 = arith.addf %1097, %1098 : vector<2x32xf32>
    %1100 = math.tanh %1099 : vector<2x32xf32>
    %1101 = arith.mulf %1096, %1100 : vector<2x32xf32>
    %1102 = vector.shape_cast %1050 : vector<2x1xi1> to vector<2x1xi1>
    %1103 = vector.broadcast %1102 : vector<2x1xi1> to vector<2x32xi1>
    %1104 = arith.select %1103, %1101, %1041 : vector<2x32xi1>, vector<2x32xf32>
    %1105 = vector.shape_cast %1050 : vector<2x1xi1> to vector<2x1xi1>
    %1106 = vector.broadcast %1105 : vector<2x1xi1> to vector<2x32xi1>
    %1107 = arith.select %1106, %1099, %1044 : vector<2x32xi1>, vector<2x32xf32>
    %1108 = arith.maximumf %1048, %1101 : vector<2x32xf32>
    %1109 = vector.shape_cast %1050 : vector<2x1xi1> to vector<2x1xi1>
    %1110 = vector.broadcast %1109 : vector<2x1xi1> to vector<2x32xi1>
    %1111 = arith.select %1110, %1108, %1048 : vector<2x32xi1>, vector<2x32xf32>
    %c7_i32 = arith.constant 7 : i32
    %1112 = vector.broadcast %c7_i32 : i32 to vector<2x1xi32>
    %1113 = arith.cmpi sgt, %667, %1112 : vector<2x1xi32>
    %1114 = vector.extract_strided_slice %663 {offsets = [0, 7, 0], sizes = [2, 1, 32], strides = [1, 1, 1]} : vector<2x8x32xf32> to vector<2x1x32xf32>
    %1115 = vector.shape_cast %1114 : vector<2x1x32xf32> to vector<2x32xf32>
    %c0_451 = arith.constant 0 : index
    %c0_452 = arith.constant 0 : index
    %c0_453 = arith.constant 0 : index
    %1116 = vector.load %arg26[%c0_451, %c0_452, %c0_453] : memref<4x32x32xf32, #tpu.memory_space<vmem>>, vector<1x32x32xf32>
    %1117 = vector.shape_cast %1116 : vector<1x32x32xf32> to vector<32x32xf32>
    %cst_454 = arith.constant dense<0.000000e+00> : vector<2x32xf32>
    %1118 = tpu.matmul %1104, %1117, %cst_454 {dimension_numbers = #tpu.dot_dimension_numbers<[1], [0], [0], [1], [0, 0, 1, 1], [], []>} : vector<2x32xf32>, vector<32x32xf32>, vector<2x32xf32> -> vector<2x32xf32>
    %1119 = arith.addf %1115, %1118 : vector<2x32xf32>
    %cst_455 = arith.constant 0.000000e+00 : f32
    %1120 = vector.broadcast %cst_455 : f32 to vector<2x32xf32>
    %1121 = arith.subf %1120, %1119 : vector<2x32xf32>
    %1122 = math.exp %1121 : vector<2x32xf32>
    %cst_456 = arith.constant 1.000000e+00 : f32
    %1123 = vector.broadcast %cst_456 : f32 to vector<2x32xf32>
    %1124 = arith.addf %1123, %1122 : vector<2x32xf32>
    %cst_457 = arith.constant 1.000000e+00 : f32
    %1125 = vector.broadcast %cst_457 : f32 to vector<2x32xf32>
    %1126 = arith.divf %1125, %1124 : vector<2x32xf32>
    %1127 = vector.extract_strided_slice %664 {offsets = [0, 7, 0], sizes = [2, 1, 32], strides = [1, 1, 1]} : vector<2x8x32xf32> to vector<2x1x32xf32>
    %1128 = vector.shape_cast %1127 : vector<2x1x32xf32> to vector<2x32xf32>
    %c1_458 = arith.constant 1 : index
    %c0_459 = arith.constant 0 : index
    %c0_460 = arith.constant 0 : index
    %1129 = vector.load %arg26[%c1_458, %c0_459, %c0_460] : memref<4x32x32xf32, #tpu.memory_space<vmem>>, vector<1x32x32xf32>
    %1130 = vector.shape_cast %1129 : vector<1x32x32xf32> to vector<32x32xf32>
    %cst_461 = arith.constant dense<0.000000e+00> : vector<2x32xf32>
    %1131 = tpu.matmul %1104, %1130, %cst_461 {dimension_numbers = #tpu.dot_dimension_numbers<[1], [0], [0], [1], [0, 0, 1, 1], [], []>} : vector<2x32xf32>, vector<32x32xf32>, vector<2x32xf32> -> vector<2x32xf32>
    %1132 = arith.addf %1128, %1131 : vector<2x32xf32>
    %cst_462 = arith.constant 0.000000e+00 : f32
    %1133 = vector.broadcast %cst_462 : f32 to vector<2x32xf32>
    %1134 = arith.subf %1133, %1132 : vector<2x32xf32>
    %1135 = math.exp %1134 : vector<2x32xf32>
    %cst_463 = arith.constant 1.000000e+00 : f32
    %1136 = vector.broadcast %cst_463 : f32 to vector<2x32xf32>
    %1137 = arith.addf %1136, %1135 : vector<2x32xf32>
    %cst_464 = arith.constant 1.000000e+00 : f32
    %1138 = vector.broadcast %cst_464 : f32 to vector<2x32xf32>
    %1139 = arith.divf %1138, %1137 : vector<2x32xf32>
    %1140 = vector.extract_strided_slice %665 {offsets = [0, 7, 0], sizes = [2, 1, 32], strides = [1, 1, 1]} : vector<2x8x32xf32> to vector<2x1x32xf32>
    %1141 = vector.shape_cast %1140 : vector<2x1x32xf32> to vector<2x32xf32>
    %c2_465 = arith.constant 2 : index
    %c0_466 = arith.constant 0 : index
    %c0_467 = arith.constant 0 : index
    %1142 = vector.load %arg26[%c2_465, %c0_466, %c0_467] : memref<4x32x32xf32, #tpu.memory_space<vmem>>, vector<1x32x32xf32>
    %1143 = vector.shape_cast %1142 : vector<1x32x32xf32> to vector<32x32xf32>
    %cst_468 = arith.constant dense<0.000000e+00> : vector<2x32xf32>
    %1144 = tpu.matmul %1104, %1143, %cst_468 {dimension_numbers = #tpu.dot_dimension_numbers<[1], [0], [0], [1], [0, 0, 1, 1], [], []>} : vector<2x32xf32>, vector<32x32xf32>, vector<2x32xf32> -> vector<2x32xf32>
    %1145 = arith.addf %1141, %1144 : vector<2x32xf32>
    %1146 = math.tanh %1145 : vector<2x32xf32>
    %1147 = vector.extract_strided_slice %666 {offsets = [0, 7, 0], sizes = [2, 1, 32], strides = [1, 1, 1]} : vector<2x8x32xf32> to vector<2x1x32xf32>
    %1148 = vector.shape_cast %1147 : vector<2x1x32xf32> to vector<2x32xf32>
    %c3_469 = arith.constant 3 : index
    %c0_470 = arith.constant 0 : index
    %c0_471 = arith.constant 0 : index
    %1149 = vector.load %arg26[%c3_469, %c0_470, %c0_471] : memref<4x32x32xf32, #tpu.memory_space<vmem>>, vector<1x32x32xf32>
    %1150 = vector.shape_cast %1149 : vector<1x32x32xf32> to vector<32x32xf32>
    %cst_472 = arith.constant dense<0.000000e+00> : vector<2x32xf32>
    %1151 = tpu.matmul %1104, %1150, %cst_472 {dimension_numbers = #tpu.dot_dimension_numbers<[1], [0], [0], [1], [0, 0, 1, 1], [], []>} : vector<2x32xf32>, vector<32x32xf32>, vector<2x32xf32> -> vector<2x32xf32>
    %1152 = arith.addf %1148, %1151 : vector<2x32xf32>
    %cst_473 = arith.constant 0.000000e+00 : f32
    %1153 = vector.broadcast %cst_473 : f32 to vector<2x32xf32>
    %1154 = arith.subf %1153, %1152 : vector<2x32xf32>
    %1155 = math.exp %1154 : vector<2x32xf32>
    %cst_474 = arith.constant 1.000000e+00 : f32
    %1156 = vector.broadcast %cst_474 : f32 to vector<2x32xf32>
    %1157 = arith.addf %1156, %1155 : vector<2x32xf32>
    %cst_475 = arith.constant 1.000000e+00 : f32
    %1158 = vector.broadcast %cst_475 : f32 to vector<2x32xf32>
    %1159 = arith.divf %1158, %1157 : vector<2x32xf32>
    %1160 = arith.mulf %1139, %1107 : vector<2x32xf32>
    %1161 = arith.mulf %1126, %1146 : vector<2x32xf32>
    %1162 = arith.addf %1160, %1161 : vector<2x32xf32>
    %1163 = math.tanh %1162 : vector<2x32xf32>
    %1164 = arith.mulf %1159, %1163 : vector<2x32xf32>
    %1165 = arith.maximumf %1111, %1164 : vector<2x32xf32>
    %1166 = vector.shape_cast %1113 : vector<2x1xi1> to vector<2x1xi1>
    %1167 = vector.broadcast %1166 : vector<2x1xi1> to vector<2x32xi1>
    %1168 = arith.select %1167, %1165, %1111 : vector<2x32xi1>, vector<2x32xf32>
    %c0_476 = arith.constant 0 : index
    %c0_477 = arith.constant 0 : index
    %1169 = vector.load %arg27[%c0_476, %c0_477] : memref<32x16xf32, #tpu.memory_space<vmem>>, vector<32x16xf32>
    %cst_478 = arith.constant dense<0.000000e+00> : vector<2x16xf32>
    %1170 = tpu.matmul %1168, %1169, %cst_478 {dimension_numbers = #tpu.dot_dimension_numbers<[1], [0], [0], [1], [0, 0, 1, 1], [], []>} : vector<2x32xf32>, vector<32x16xf32>, vector<2x16xf32> -> vector<2x16xf32>
    %c0_479 = arith.constant 0 : index
    %c0_480 = arith.constant 0 : index
    %1171 = vector.load %arg28[%c0_479, %c0_480] : memref<1x16xf32, #tpu.memory_space<vmem>>, vector<1x16xf32>
    %1172 = vector.broadcast %1171 : vector<1x16xf32> to vector<2x16xf32>
    %1173 = arith.addf %1170, %1172 : vector<2x16xf32>
    %cst_481 = arith.constant 0.000000e+00 : f32
    %1174 = vector.broadcast %cst_481 : f32 to vector<2x16xf32>
    %1175 = arith.maximumf %1173, %1174 : vector<2x16xf32>
    %1176 = tpu.concatenate %1175, %656 in 1 : vector<2x16xf32>, vector<2x48xf32> -> vector<2x64xf32>
    %c0_482 = arith.constant 0 : index
    %c0_483 = arith.constant 0 : index
    %1177 = vector.load %arg29[%c0_482, %c0_483] : memref<64x128xf32, #tpu.memory_space<vmem>>, vector<64x128xf32>
    %cst_484 = arith.constant dense<0.000000e+00> : vector<2x128xf32>
    %1178 = tpu.matmul %1176, %1177, %cst_484 {dimension_numbers = #tpu.dot_dimension_numbers<[1], [0], [0], [1], [0, 0, 1, 1], [], []>} : vector<2x64xf32>, vector<64x128xf32>, vector<2x128xf32> -> vector<2x128xf32>
    %c0_485 = arith.constant 0 : index
    %c0_486 = arith.constant 0 : index
    %1179 = vector.load %arg30[%c0_485, %c0_486] : memref<1x128xf32, #tpu.memory_space<vmem>>, vector<1x128xf32>
    %1180 = vector.broadcast %1179 : vector<1x128xf32> to vector<2x128xf32>
    %1181 = arith.addf %1178, %1180 : vector<2x128xf32>
    %cst_487 = arith.constant dense<0xFF800000> : vector<2xf32>
    %1182 = vector.multi_reduction <maximumf>, %1181, %cst_487 [1] : vector<2x128xf32> to vector<2xf32>
    %1183 = vector.shape_cast %1182 : vector<2xf32> to vector<2x1xf32>
    %1184 = vector.broadcast %1183 : vector<2x1xf32> to vector<2x128xf32>
    %1185 = arith.subf %1181, %1184 : vector<2x128xf32>
    %1186 = math.exp %1185 : vector<2x128xf32>
    %cst_488 = arith.constant dense<0.000000e+00> : vector<2xf32>
    %1187 = vector.multi_reduction <add>, %1186, %cst_488 [1] : vector<2x128xf32> to vector<2xf32>
    %1188 = vector.shape_cast %1187 : vector<2xf32> to vector<2x1xf32>
    %1189 = vector.broadcast %1188 : vector<2x1xf32> to vector<2x128xf32>
    %1190 = arith.divf %1186, %1189 : vector<2x128xf32>
    %c0_489 = arith.constant 0 : index
    %c0_490 = arith.constant 0 : index
    %1191 = vector.load %arg31[%c0_489, %c0_490] : memref<2x128xf32, #tpu.memory_space<vmem>>, vector<2x128xf32>
    tpu.vector_store %arg31[%c0_489, %c0_490], %1190 {strides = array<i32>} : memref<2x128xf32, #tpu.memory_space<vmem>>, vector<2x128xf32>,
    return
  }
}

</mosaic_0001>

<llo_original>
// kernel: ie_forward.1
$region0: #{ie_forward.1}
  #allocation0 [shape = 'u32[]', space=smem, size = 0x4, offset = 0x4, fixed_abs, tag = 'smem constant byte address 0x4 - core index']
  #allocation1 [shape = 'u32[144,128]{1,0:T(1,128)}', space=vmem, size = 0x12000, scoped, tag = 'internal scratch']
  %s0 = inlined_call_operand.smem [shape: u32[32], index: -1, kind: input, shape index: {}]
  %s1 = sld [smem:[%s0]]
  %s2 = scalar_lea.smem %s0, 1
  %s3 = sld [smem:[%s2]]
  %s4 = scalar_lea.smem %s0, 2
  %s5 = sld [smem:[%s4]]
  %s6 = scalar_lea.smem %s0, 3
  %s7 = sld [smem:[%s6]]
  %s8 = scalar_lea.smem %s0, 4
  %s9 = sld [smem:[%s8]]
  %s10 = scalar_lea.smem %s0, 5
  %s11 = sld [smem:[%s10]]
  %s12 = scalar_lea.smem %s0, 6
  %s13 = sld [smem:[%s12]]
  %s14 = scalar_lea.smem %s0, 7
  %s15 = sld [smem:[%s14]]
  %s16 = scalar_lea.smem %s0, 8
  %s17 = sld [smem:[%s16]]
  %s18 = scalar_lea.smem %s0, 9
  %s19 = sld [smem:[%s18]]
  %s20 = scalar_lea.smem %s0, 10
  %s21 = sld [smem:[%s20]]
  %s22 = scalar_lea.smem %s0, 11
  %s23 = sld [smem:[%s22]]
  %s24 = scalar_lea.smem %s0, 12
  %s25 = sld [smem:[%s24]]
  %s26 = scalar_lea.smem %s0, 13
  %s27 = sld [smem:[%s26]]
  %s28 = scalar_lea.smem %s0, 14
  %s29 = sld [smem:[%s28]]
  %s30 = scalar_lea.smem %s0, 15
  %s31 = sld [smem:[%s30]]
  %s32 = scalar_lea.smem %s0, 16
  %s33 = sld [smem:[%s32]]
  %s34 = scalar_lea.smem %s0, 17
  %s35 = sld [smem:[%s34]]
  %s36 = scalar_lea.smem %s0, 18
  %s37 = sld [smem:[%s36]]
  %s38 = scalar_lea.smem %s0, 19
  %s39 = sld [smem:[%s38]]
  %s40 = scalar_lea.smem %s0, 20
  %s41 = sld [smem:[%s40]]
  %s42 = scalar_lea.smem %s0, 21
  %s43 = sld [smem:[%s42]]
  %s44 = scalar_lea.smem %s0, 22
  %s45 = sld [smem:[%s44]]
  %s46 = scalar_lea.smem %s0, 23
  %s47 = sld [smem:[%s46]]
  %s48 = scalar_lea.smem %s0, 24
  %s49 = sld [smem:[%s48]]
  %s50 = scalar_lea.smem %s0, 25
  %s51 = sld [smem:[%s50]]
  %s52 = scalar_lea.smem %s0, 26
  %s53 = sld [smem:[%s52]]
  %s54 = scalar_lea.smem %s0, 27
  %s55 = sld [smem:[%s54]]
  %s56 = scalar_lea.smem %s0, 28
  %s57 = sld [smem:[%s56]]
  %s58 = scalar_lea.smem %s0, 29
  %s59 = sld [smem:[%s58]]
  %s60 = scalar_lea.smem %s0, 30
  %s61 = sld [smem:[%s60]]
  %s62 = scalar_lea.smem %s0, 31
  %s63 = sld [smem:[%s62]]
  %s64 = sld [smem:[#allocation0]]
  $region134: #{ie_forward.1} parent=0
    _
  %s66 = ssub.s32 1, %s64
  %s67 = scalar_select 0, %s66, %s64
  $region1: #{ie_forward.1} parent=0
    #allocation2 [shape = 'u8[1024]{0}', space=vmem, size = 0x400, scoped, tag = 'output window, operand 0, single buffered']
    #allocation3 [shape = 's32[1]{0}', space=sflag, size = 0x4, scoped, tag = 'scoped memory for ie_forward.1']
    %68 = vsyncpa [#allocation3], 0
    // Predicated region
    $region2: #{ie_forward.1} parent=1 // pred_check
      _
    $region3: #{ie_forward.1} parent=1 // pred_check_branch
      %70 = sbr.rel (0) target = $region5
    $region4: #{ie_forward.1} parent=1 // pred_region
      _
    $region5: #{ie_forward.1} parent=1 // pred_fallthru
      _
    // Predicated region
    $region6: #{ie_forward.1} parent=1 // pred_check
      _
    $region7: #{ie_forward.1} parent=1 // pred_check_branch
      %72 = sbr.rel (0) target = $region9
    $region8: #{ie_forward.1} parent=1 // pred_region
      _
    $region9: #{ie_forward.1} parent=1 // pred_fallthru
      _
    // Predicated region
    $region10: #{ie_forward.1} parent=1 // pred_check
      _
    $region11: #{ie_forward.1} parent=1 // pred_check_branch
      %74 = sbr.rel (0) target = $region13
    $region12: #{ie_forward.1} parent=1 // pred_region
      _
    $region13: #{ie_forward.1} parent=1 // pred_fallthru
      _
    // Predicated region
    $region14: #{ie_forward.1} parent=1 // pred_check
      _
    $region15: #{ie_forward.1} parent=1 // pred_check_branch
      %76 = sbr.rel (0) target = $region17
    $region16: #{ie_forward.1} parent=1 // pred_region
      _
    $region17: #{ie_forward.1} parent=1 // pred_fallthru
      _
    // Predicated region
    $region18: #{ie_forward.1} parent=1 // pred_check
      _
    $region19: #{ie_forward.1} parent=1 // pred_check_branch
      %78 = sbr.rel (0) target = $region21
    $region20: #{ie_forward.1} parent=1 // pred_region
      _
    $region21: #{ie_forward.1} parent=1 // pred_fallthru
      _
    // Predicated region
    $region22: #{ie_forward.1} parent=1 // pred_check
      _
    $region23: #{ie_forward.1} parent=1 // pred_check_branch
      %80 = sbr.rel (0) target = $region25
    $region24: #{ie_forward.1} parent=1 // pred_region
      _
    $region25: #{ie_forward.1} parent=1 // pred_fallthru
      _
    // Predicated region
    $region26: #{ie_forward.1} parent=1 // pred_check
      _
    $region27: #{ie_forward.1} parent=1 // pred_check_branch
      %82 = sbr.rel (0) target = $region29
    $region28: #{ie_forward.1} parent=1 // pred_region
      _
    $region29: #{ie_forward.1} parent=1 // pred_fallthru
      _
    // Predicated region
    $region30: #{ie_forward.1} parent=1 // pred_check
      _
    $region31: #{ie_forward.1} parent=1 // pred_check_branch
      %84 = sbr.rel (0) target = $region33
    $region32: #{ie_forward.1} parent=1 // pred_region
      _
    $region33: #{ie_forward.1} parent=1 // pred_fallthru
      _
    // Predicated region
    $region34: #{ie_forward.1} parent=1 // pred_check
      _
    $region35: #{ie_forward.1} parent=1 // pred_check_branch
      %86 = sbr.rel (0) target = $region37
    $region36: #{ie_forward.1} parent=1 // pred_region
      _
    $region37: #{ie_forward.1} parent=1 // pred_fallthru
      _
    // Predicated region
    $region38: #{ie_forward.1} parent=1 // pred_check
      _
    $region39: #{ie_forward.1} parent=1 // pred_check_branch
      %88 = sbr.rel (0) target = $region41
    $region40: #{ie_forward.1} parent=1 // pred_region
      _
    $region41: #{ie_forward.1} parent=1 // pred_fallthru
      _
    // Predicated region
    $region42: #{ie_forward.1} parent=1 // pred_check
      _
    $region43: #{ie_forward.1} parent=1 // pred_check_branch
      %90 = sbr.rel (0) target = $region45
    $region44: #{ie_forward.1} parent=1 // pred_region
      _
    $region45: #{ie_forward.1} parent=1 // pred_fallthru
      _
    // Predicated region
    $region46: #{ie_forward.1} parent=1 // pred_check
      _
    $region47: #{ie_forward.1} parent=1 // pred_check_branch
      %92 = sbr.rel (0) target = $region49
    $region48: #{ie_forward.1} parent=1 // pred_region
      _
    $region49: #{ie_forward.1} parent=1 // pred_fallthru
      _
    // Predicated region
    $region50: #{ie_forward.1} parent=1 // pred_check
      _
    $region51: #{ie_forward.1} parent=1 // pred_check_branch
      %94 = sbr.rel (0) target = $region53
    $region52: #{ie_forward.1} parent=1 // pred_region
      _
    $region53: #{ie_forward.1} parent=1 // pred_fallthru
      _
    // Predicated region
    $region54: #{ie_forward.1} parent=1 // pred_check
      _
    $region55: #{ie_forward.1} parent=1 // pred_check_branch
      %96 = sbr.rel (0) target = $region57
    $region56: #{ie_forward.1} parent=1 // pred_region
      _
    $region57: #{ie_forward.1} parent=1 // pred_fallthru
      _
    // Predicated region
    $region58: #{ie_forward.1} parent=1 // pred_check
      _
    $region59: #{ie_forward.1} parent=1 // pred_check_branch
      %98 = sbr.rel (0) target = $region61
    $region60: #{ie_forward.1} parent=1 // pred_region
      _
    $region61: #{ie_forward.1} parent=1 // pred_fallthru
      _
    // Predicated region
    $region62: #{ie_forward.1} parent=1 // pred_check
      _
    $region63: #{ie_forward.1} parent=1 // pred_check_branch
      %100 = sbr.rel (0) target = $region65
    $region64: #{ie_forward.1} parent=1 // pred_region
      _
    $region65: #{ie_forward.1} parent=1 // pred_fallthru
      _
    // Predicated region
    $region66: #{ie_forward.1} parent=1 // pred_check
      _
    $region67: #{ie_forward.1} parent=1 // pred_check_branch
      %102 = sbr.rel (0) target = $region69
    $region68: #{ie_forward.1} parent=1 // pred_region
      _
    $region69: #{ie_forward.1} parent=1 // pred_fallthru
      _
    // Predicated region
    $region70: #{ie_forward.1} parent=1 // pred_check
      _
    $region71: #{ie_forward.1} parent=1 // pred_check_branch
      %104 = sbr.rel (0) target = $region73
    $region72: #{ie_forward.1} parent=1 // pred_region
      _
    $region73: #{ie_forward.1} parent=1 // pred_fallthru
      _
    // Predicated region
    $region74: #{ie_forward.1} parent=1 // pred_check
      _
    $region75: #{ie_forward.1} parent=1 // pred_check_branch
      %106 = sbr.rel (0) target = $region77
    $region76: #{ie_forward.1} parent=1 // pred_region
      _
    $region77: #{ie_forward.1} parent=1 // pred_fallthru
      _
    // Predicated region
    $region78: #{ie_forward.1} parent=1 // pred_check
      _
    $region79: #{ie_forward.1} parent=1 // pred_check_branch
      %108 = sbr.rel (0) target = $region81
    $region80: #{ie_forward.1} parent=1 // pred_region
      _
    $region81: #{ie_forward.1} parent=1 // pred_fallthru
      _
    // Predicated region
    $region82: #{ie_forward.1} parent=1 // pred_check
      _
    $region83: #{ie_forward.1} parent=1 // pred_check_branch
      %110 = sbr.rel (0) target = $region85
    $region84: #{ie_forward.1} parent=1 // pred_region
      _
    $region85: #{ie_forward.1} parent=1 // pred_fallthru
      _
    // Predicated region
    $region86: #{ie_forward.1} parent=1 // pred_check
      _
    $region87: #{ie_forward.1} parent=1 // pred_check_branch
      %112 = sbr.rel (0) target = $region89
    $region88: #{ie_forward.1} parent=1 // pred_region
      _
    $region89: #{ie_forward.1} parent=1 // pred_fallthru
      _
    // Predicated region
    $region90: #{ie_forward.1} parent=1 // pred_check
      _
    $region91: #{ie_forward.1} parent=1 // pred_check_branch
      %114 = sbr.rel (0) target = $region93
    $region92: #{ie_forward.1} parent=1 // pred_region
      _
    $region93: #{ie_forward.1} parent=1 // pred_fallthru
      _
    // Predicated region
    $region94: #{ie_forward.1} parent=1 // pred_check
      _
    $region95: #{ie_forward.1} parent=1 // pred_check_branch
      %116 = sbr.rel (0) target = $region97
    $region96: #{ie_forward.1} parent=1 // pred_region
      _
    $region97: #{ie_forward.1} parent=1 // pred_fallthru
      _
    // Predicated region
    $region98: #{ie_forward.1} parent=1 // pred_check
      _
    $region99: #{ie_forward.1} parent=1 // pred_check_branch
      %118 = sbr.rel (0) target = $region101
    $region100: #{ie_forward.1} parent=1 // pred_region
      _
    $region101: #{ie_forward.1} parent=1 // pred_fallthru
      _
    // Predicated region
    $region102: #{ie_forward.1} parent=1 // pred_check
      _
    $region103: #{ie_forward.1} parent=1 // pred_check_branch
      %120 = sbr.rel (0) target = $region105
    $region104: #{ie_forward.1} parent=1 // pred_region
      _
    $region105: #{ie_forward.1} parent=1 // pred_fallthru
      _
    // Predicated region
    $region106: #{ie_forward.1} parent=1 // pred_check
      _
    $region107: #{ie_forward.1} parent=1 // pred_check_branch
      %122 = sbr.rel (0) target = $region109
    $region108: #{ie_forward.1} parent=1 // pred_region
      _
    $region109: #{ie_forward.1} parent=1 // pred_fallthru
      _
    // Predicated region
    $region110: #{ie_forward.1} parent=1 // pred_check
      _
    $region111: #{ie_forward.1} parent=1 // pred_check_branch
      %124 = sbr.rel (0) target = $region113
    $region112: #{ie_forward.1} parent=1 // pred_region
      _
    $region113: #{ie_forward.1} parent=1 // pred_fallthru
      _
    // Predicated region
    $region114: #{ie_forward.1} parent=1 // pred_check
      _
    $region115: #{ie_forward.1} parent=1 // pred_check_branch
      %126 = sbr.rel (0) target = $region117
    $region116: #{ie_forward.1} parent=1 // pred_region
      _
    $region117: #{ie_forward.1} parent=1 // pred_fallthru
      _
    // Predicated region
    $region118: #{ie_forward.1} parent=1 // pred_check
      _
    $region119: #{ie_forward.1} parent=1 // pred_check_branch
      %128 = sbr.rel (0) target = $region121
    $region120: #{ie_forward.1} parent=1 // pred_region
      _
    $region121: #{ie_forward.1} parent=1 // pred_fallthru
      _
    // Predicated region
    $region122: #{ie_forward.1} parent=1 // pred_check
      _
    $region123: #{ie_forward.1} parent=1 // pred_check_branch
      %130 = sbr.rel (0) target = $region125
    $region124: #{ie_forward.1} parent=1 // pred_region
      _
    $region125: #{ie_forward.1} parent=1 // pred_fallthru
      _
    %v131 = vld [vmem:[%s1] sm:$0xff]
    %v132 = vld [vmem:[%s1 + $0x8] sm:$0xff]
    %v133 = vld [vmem:[%s9] sm:$0x1]
    %v134 = vld [vmem:[%s11] sm:$0x1]
    %vm135 = vcmask 261120
    %v136 = vsel %vm135, %v131, 0.0
    %137 = vadd.xlane.f32.xlu0 %v136
    %v138 = vpop.xlane.xlu0 %137
    %v139 = vsel %vm135, %v132, 0.0
    %140 = vadd.xlane.f32.xlu0 %v139
    %v141 = vpop.xlane.xlu0 %140
    %v142 = vrcp.pop 32.0
    %v143 = vmul.f32 %v138, %v142
    %v144 = vmul.f32 %v141, %v142
    %v145 = vsub.f32 %v131, %v143
    %v146 = vsub.f32 %v132, %v144
    %v147 = vmul.f32 %v145, %v145
    %v148 = vmul.f32 %v146, %v146
    %v149 = vsel %vm135, %v147, 0.0
    %150 = vadd.xlane.f32.xlu0 %v149
    %v151 = vpop.xlane.xlu0 %150
    %v152 = vsel %vm135, %v148, 0.0
    %153 = vadd.xlane.f32.xlu0 %v152
    %v154 = vpop.xlane.xlu0 %153
    %v155 = vmul.f32 %v151, %v142
    %v156 = vmul.f32 %v154, %v142
    %v157 = vadd.f32 %v155, 1e-12
    %v158 = vadd.f32 %v156, 1e-12
    %v159 = vrsqrt.pop %v157
    %v160 = vrsqrt.pop %v158
    %v161 = vmul.f32 %v145, %v159
    %v162 = vmul.f32 %v146, %v160
    %v164 = vlaneseq
    %v165 = vshrl.u32 %v164, 7
    %v166 = vsub.s32 0, %v165
    %v167 = vrot.slane %v133, %v166
    %v169 = vmul.f32 %v161, %v167
    %v170 = vmul.f32 %v162, %v167
    %v172 = vlaneseq
    %v173 = vshrl.u32 %v172, 7
    %v174 = vsub.s32 0, %v173
    %v175 = vrot.slane %v134, %v174
    %v177 = vadd.f32 %v169, %v175
    %v178 = vadd.f32 %v170, %v175
    %v179 = vld [vmem:[%s5] sm:$0x3]
    %v180 = vsub.f32 %v179, 1.0
    %v181 = vmul.f32 %v180, 1e+30
    %v182 = vld [vmem:[%s13] sm:$0xff]
    %v183 = vld [vmem:[%s13 + $0x8] sm:$0xff]
    %v184 = vld [vmem:[%s13 + $0x10] sm:$0xff]
    %v185 = vld [vmem:[%s13 + $0x18] sm:$0xff]
    %v186 = vld [vmem:[%s15] sm:$0x1]
    %v188 = vlaneseq
    %v189 = vshrl.u32 %v188, 7
    %v190 = vsub.s32 0, %v189
    %v191 = vrot.slane %v186, %v190
    %v194 = vsel %vm135, %v177, 0
    %v197 = vsel %vm135, %v178, 0
    %199 = vmatprep.subr.mxu0 0.0
    %200 = vmatpush1.msra.mxu0 0.0
    %201 = vmatprep.subr.mxu0 0.0
    %202 = vmatpush1.msra.mxu0 0.0
    %203 = vmatprep.subr.mxu0 0.0
    %204 = vmatpush1.msra.mxu0 0.0
    %205 = vmatprep.subr.mxu0 0.0
    %206 = vmatpush1.msra.mxu0 0.0
    %207 = vmatprep.subr.mxu0 0.0
    %208 = vmatpush1.msra.mxu0 0.0
    %209 = vmatprep.subr.mxu0 0.0
    %210 = vmatpush1.msra.mxu0 0.0
    %211 = vmatprep.subr.mxu0 0.0
    %212 = vmatpush1.msra.mxu0 0.0
    %213 = vmatprep.subr.mxu0 0.0
    %214 = vmatpush1.msra.mxu0 0.0
    %215 = vmatprep.subr.mxu0 0.0
    %216 = vmatpush1.msra.mxu0 0.0
    %217 = vmatprep.subr.mxu0 0.0
    %218 = vmatpush1.msra.mxu0 0.0
    %219 = vmatprep.subr.mxu0 0.0
    %220 = vmatpush1.msra.mxu0 0.0
    %221 = vmatprep.subr.mxu0 0.0
    %222 = vmatpush1.msra.mxu0 0.0
    %223 = vmatprep.subr.mxu0 0.0
    %224 = vmatpush1.msra.mxu0 %v185
    %225 = vmatprep.subr.mxu0 0.0
    %226 = vmatpush1.msra.mxu0 %v184
    %227 = vmatprep.subr.mxu0 0.0
    %228 = vmatpush1.msra.mxu0 %v183
    %229 = vmatprep.subr.mxu0 0.0
    %230 = vmatpush1.msra.mxu0 %v182
    %231 = vmatprep.subr.mxu0 0.0
    %232 = vmatpush2.msra.mxu0 0.0
    %233 = vmatprep.subr.mxu0 0.0
    %234 = vmatpush2.msra.mxu0 0.0
    %235 = vmatprep.subr.mxu0 0.0
    %236 = vmatpush2.msra.mxu0 0.0
    %237 = vmatprep.subr.mxu0 0.0
    %238 = vmatpush2.msra.mxu0 0.0
    %239 = vmatprep.subr.mxu0 0.0
    %240 = vmatpush2.msra.mxu0 0.0
    %241 = vmatprep.subr.mxu0 0.0
    %242 = vmatpush2.msra.mxu0 0.0
    %243 = vmatprep.subr.mxu0 0.0
    %244 = vmatpush2.msra.mxu0 0.0
    %245 = vmatprep.subr.mxu0 0.0
    %246 = vmatpush2.msra.mxu0 0.0
    %247 = vmatprep.subr.mxu0 0.0
    %248 = vmatpush2.msra.mxu0 0.0
    %249 = vmatprep.subr.mxu0 0.0
    %250 = vmatpush2.msra.mxu0 0.0
    %251 = vmatprep.subr.mxu0 0.0
    %252 = vmatpush2.msra.mxu0 0.0
    %253 = vmatprep.subr.mxu0 0.0
    %254 = vmatpush2.msra.mxu0 0.0
    %255 = vmatprep.subr.mxu0 0.0
    %256 = vmatpush2.msra.mxu0 0.0
    %257 = vmatprep.subr.mxu0 0.0
    %258 = vmatpush2.msra.mxu0 0.0
    %259 = vmatprep.subr.mxu0 0.0
    %260 = vmatpush2.msra.mxu0 0.0
    %261 = vmatprep.subr.mxu0 0.0
    %262 = vmatpush2.msra.mxu0 0.0
    %263 = vmatprep.mubr.f32.mxu0 0.0
    %264 = vmatmul.mubr.f32.gmra.mxu0 %v194
    %v265 = vpop.f32.mrf.mxu0
    %v266 = vadd.f32 %v191, %v265
    %v267 = vpop.f32.mrf.mxu0
    %268 = vmatprep.mubr.f32.mxu0 0.0
    %269 = vmatmul.mubr.f32.gmra.mxu0 %v197
    %v270 = vpop.f32.mrf.mxu0
    %v271 = vadd.f32 %v191, %v270
    %v272 = vpop.f32.mrf.mxu0
    %273 = vdwg.mxu0
    %275 = vrot.lane.b32.xlu0 %v266, 96
    %v276 = vpop.permute.xlu0 %275
    %vm277 = vcmask 64512
    %v278 = vsel %vm277, %v266, 0
    %v280 = vsel %vm277, %v276, 0
    %282 = vmatprep.subr.mxu0 0.0
    %283 = vmatpush1.xpose.msra.mxu0 0.0
    %284 = vmatprep.subr.mxu0 0.0
    %285 = vmatpush1.xpose.msra.mxu0 0.0
    %286 = vmatprep.subr.mxu0 0.0
    %287 = vmatpush1.xpose.msra.mxu0 0.0
    %288 = vmatprep.subr.mxu0 0.0
    %289 = vmatpush1.xpose.msra.mxu0 0.0
    %290 = vmatprep.subr.mxu0 0.0
    %291 = vmatpush1.xpose.msra.mxu0 0.0
    %292 = vmatprep.subr.mxu0 0.0
    %293 = vmatpush1.xpose.msra.mxu0 0.0
    %294 = vmatprep.subr.mxu0 0.0
    %295 = vmatpush1.xpose.msra.mxu0 0.0
    %296 = vmatprep.subr.mxu0 0.0
    %297 = vmatpush1.xpose.msra.mxu0 0.0
    %298 = vmatprep.subr.mxu0 0.0
    %299 = vmatpush1.xpose.msra.mxu0 0.0
    %300 = vmatprep.subr.mxu0 0.0
    %301 = vmatpush1.xpose.msra.mxu0 0.0
    %302 = vmatprep.subr.mxu0 0.0
    %303 = vmatpush1.xpose.msra.mxu0 0.0
    %304 = vmatprep.subr.mxu0 0.0
    %305 = vmatpush1.xpose.msra.mxu0 0.0
    %306 = vmatprep.subr.mxu0 0.0
    %307 = vmatpush1.xpose.msra.mxu0 0.0
    %308 = vmatprep.subr.mxu0 0.0
    %309 = vmatpush1.xpose.msra.mxu0 0.0
    %310 = vmatprep.subr.mxu0 0.0
    %311 = vmatpush1.xpose.msra.mxu0 0.0
    %312 = vmatprep.subr.mxu0 0.0
    %313 = vmatpush1.xpose.msra.mxu0 %v280
    %314 = vmatprep.subr.mxu0 0.0
    %315 = vmatpush2.xpose.msra.mxu0 0.0
    %316 = vmatprep.subr.mxu0 0.0
    %317 = vmatpush2.xpose.msra.mxu0 0.0
    %318 = vmatprep.subr.mxu0 0.0
    %319 = vmatpush2.xpose.msra.mxu0 0.0
    %320 = vmatprep.subr.mxu0 0.0
    %321 = vmatpush2.xpose.msra.mxu0 0.0
    %322 = vmatprep.subr.mxu0 0.0
    %323 = vmatpush2.xpose.msra.mxu0 0.0
    %324 = vmatprep.subr.mxu0 0.0
    %325 = vmatpush2.xpose.msra.mxu0 0.0
    %326 = vmatprep.subr.mxu0 0.0
    %327 = vmatpush2.xpose.msra.mxu0 0.0
    %328 = vmatprep.subr.mxu0 0.0
    %329 = vmatpush2.xpose.msra.mxu0 0.0
    %330 = vmatprep.subr.mxu0 0.0
    %331 = vmatpush2.xpose.msra.mxu0 0.0
    %332 = vmatprep.subr.mxu0 0.0
    %333 = vmatpush2.xpose.msra.mxu0 0.0
    %334 = vmatprep.subr.mxu0 0.0
    %335 = vmatpush2.xpose.msra.mxu0 0.0
    %336 = vmatprep.subr.mxu0 0.0
    %337 = vmatpush2.xpose.msra.mxu0 0.0
    %338 = vmatprep.subr.mxu0 0.0
    %339 = vmatpush2.xpose.msra.mxu0 0.0
    %340 = vmatprep.subr.mxu0 0.0
    %341 = vmatpush2.xpose.msra.mxu0 0.0
    %342 = vmatprep.subr.mxu0 0.0
    %343 = vmatpush2.xpose.msra.mxu0 0.0
    %344 = vmatprep.subr.mxu0 0.0
    %345 = vmatpush2.xpose.msra.mxu0 0.0
    %346 = vmatprep.mubr.f32.mxu0 0.0
    %347 = vmatmul.mubr.f32.gmra.mxu0 %v278
    %v348 = vpop.f32.mrf.mxu0
    %v349 = vadd.f32 0.0, %v348
    %v350 = vpop.f32.mrf.mxu0
    %351 = vdwg.mxu0
    %v352 = vmul.f32 %v349, 0.35355338
    %v353 = vlaneseq
    %v354 = vshrl.u32 %v353, 7
    %v355 = vsub.s32 0, %v354
    %v356 = vrot.slane %v181, %v355
    %v357 = vadd.f32 %v352, %v356
    %v358 = vsel %vm277, %v357, -inf
    %359 = vmax.xlane.f32.xlu0 %v358
    %v360 = vpop.xlane.xlu0 %359
    %v361 = vsub.f32 %v357, %v360
    %v362 = vmul.f32 %v361, 1.442695
    %v363 = vpow.pop %v362
    %v364 = vsel %vm277, %v363, 0.0
    %365 = vadd.xlane.f32.xlu0 %v364
    %v366 = vpop.xlane.xlu0 %365
    %v367 = vrcp.pop %v366
    %v368 = vmul.f32 %v363, %v367
    %369 = vrot.lane.b32.xlu0 %v266, 64
    %v370 = vpop.permute.xlu0 %369
    %v373 = vsel %vm277, %v368, 0
    %375 = vmatprep.subr.mxu0 0.0
    %376 = vmatpush1.msra.mxu0 0.0
    %377 = vmatprep.subr.mxu0 0.0
    %378 = vmatpush1.msra.mxu0 0.0
    %379 = vmatprep.subr.mxu0 0.0
    %380 = vmatpush1.msra.mxu0 0.0
    %381 = vmatprep.subr.mxu0 0.0
    %382 = vmatpush1.msra.mxu0 0.0
    %383 = vmatprep.subr.mxu0 0.0
    %384 = vmatpush1.msra.mxu0 0.0
    %385 = vmatprep.subr.mxu0 0.0
    %386 = vmatpush1.msra.mxu0 0.0
    %387 = vmatprep.subr.mxu0 0.0
    %388 = vmatpush1.msra.mxu0 0.0
    %389 = vmatprep.subr.mxu0 0.0
    %390 = vmatpush1.msra.mxu0 0.0
    %391 = vmatprep.subr.mxu0 0.0
    %392 = vmatpush1.msra.mxu0 0.0
    %393 = vmatprep.subr.mxu0 0.0
    %394 = vmatpush1.msra.mxu0 0.0
    %395 = vmatprep.subr.mxu0 0.0
    %396 = vmatpush1.msra.mxu0 0.0
    %397 = vmatprep.subr.mxu0 0.0
    %398 = vmatpush1.msra.mxu0 0.0
    %399 = vmatprep.subr.mxu0 0.0
    %400 = vmatpush1.msra.mxu0 0.0
    %401 = vmatprep.subr.mxu0 0.0
    %402 = vmatpush1.msra.mxu0 0.0
    %403 = vmatprep.subr.mxu0 0.0
    %404 = vmatpush1.msra.mxu0 0.0
    %405 = vmatprep.subr.mxu0 0.0
    %406 = vmatpush1.msra.mxu0 %v370
    %407 = vmatprep.subr.mxu0 0.0
    %408 = vmatpush2.msra.mxu0 0.0
    %409 = vmatprep.subr.mxu0 0.0
    %410 = vmatpush2.msra.mxu0 0.0
    %411 = vmatprep.subr.mxu0 0.0
    %412 = vmatpush2.msra.mxu0 0.0
    %413 = vmatprep.subr.mxu0 0.0
    %414 = vmatpush2.msra.mxu0 0.0
    %415 = vmatprep.subr.mxu0 0.0
    %416 = vmatpush2.msra.mxu0 0.0
    %417 = vmatprep.subr.mxu0 0.0
    %418 = vmatpush2.msra.mxu0 0.0
    %419 = vmatprep.subr.mxu0 0.0
    %420 = vmatpush2.msra.mxu0 0.0
    %421 = vmatprep.subr.mxu0 0.0
    %422 = vmatpush2.msra.mxu0 0.0
    %423 = vmatprep.subr.mxu0 0.0
    %424 = vmatpush2.msra.mxu0 0.0
    %425 = vmatprep.subr.mxu0 0.0
    %426 = vmatpush2.msra.mxu0 0.0
    %427 = vmatprep.subr.mxu0 0.0
    %428 = vmatpush2.msra.mxu0 0.0
    %429 = vmatprep.subr.mxu0 0.0
    %430 = vmatpush2.msra.mxu0 0.0
    %431 = vmatprep.subr.mxu0 0.0
    %432 = vmatpush2.msra.mxu0 0.0
    %433 = vmatprep.subr.mxu0 0.0
    %434 = vmatpush2.msra.mxu0 0.0
    %435 = vmatprep.subr.mxu0 0.0
    %436 = vmatpush2.msra.mxu0 0.0
    %437 = vmatprep.subr.mxu0 0.0
    %438 = vmatpush2.msra.mxu0 0.0
    %439 = vmatprep.mubr.f32.mxu0 0.0
    %440 = vmatmul.mubr.f32.gmra.mxu0 %v373
    %v441 = vpop.f32.mrf.mxu0
    %v442 = vadd.f32 0.0, %v441
    %v443 = vpop.f32.mrf.mxu0
    %444 = vdwg.mxu0
    %446 = vrot.lane.b32.xlu0 %v271, 96
    %v447 = vpop.permute.xlu0 %446
    %v448 = vsel %vm277, %v271, 0
    %v450 = vsel %vm277, %v447, 0
    %452 = vmatprep.subr.mxu0 0.0
    %453 = vmatpush1.xpose.msra.mxu0 0.0
    %454 = vmatprep.subr.mxu0 0.0
    %455 = vmatpush1.xpose.msra.mxu0 0.0
    %456 = vmatprep.subr.mxu0 0.0
    %457 = vmatpush1.xpose.msra.mxu0 0.0
    %458 = vmatprep.subr.mxu0 0.0
    %459 = vmatpush1.xpose.msra.mxu0 0.0
    %460 = vmatprep.subr.mxu0 0.0
    %461 = vmatpush1.xpose.msra.mxu0 0.0
    %462 = vmatprep.subr.mxu0 0.0
    %463 = vmatpush1.xpose.msra.mxu0 0.0
    %464 = vmatprep.subr.mxu0 0.0
    %465 = vmatpush1.xpose.msra.mxu0 0.0
    %466 = vmatprep.subr.mxu0 0.0
    %467 = vmatpush1.xpose.msra.mxu0 0.0
    %468 = vmatprep.subr.mxu0 0.0
    %469 = vmatpush1.xpose.msra.mxu0 0.0
    %470 = vmatprep.subr.mxu0 0.0
    %471 = vmatpush1.xpose.msra.mxu0 0.0
    %472 = vmatprep.subr.mxu0 0.0
    %473 = vmatpush1.xpose.msra.mxu0 0.0
    %474 = vmatprep.subr.mxu0 0.0
    %475 = vmatpush1.xpose.msra.mxu0 0.0
    %476 = vmatprep.subr.mxu0 0.0
    %477 = vmatpush1.xpose.msra.mxu0 0.0
    %478 = vmatprep.subr.mxu0 0.0
    %479 = vmatpush1.xpose.msra.mxu0 0.0
    %480 = vmatprep.subr.mxu0 0.0
    %481 = vmatpush1.xpose.msra.mxu0 0.0
    %482 = vmatprep.subr.mxu0 0.0
    %483 = vmatpush1.xpose.msra.mxu0 %v450
    %484 = vmatprep.subr.mxu0 0.0
    %485 = vmatpush2.xpose.msra.mxu0 0.0
    %486 = vmatprep.subr.mxu0 0.0
    %487 = vmatpush2.xpose.msra.mxu0 0.0
    %488 = vmatprep.subr.mxu0 0.0
    %489 = vmatpush2.xpose.msra.mxu0 0.0
    %490 = vmatprep.subr.mxu0 0.0
    %491 = vmatpush2.xpose.msra.mxu0 0.0
    %492 = vmatprep.subr.mxu0 0.0
    %493 = vmatpush2.xpose.msra.mxu0 0.0
    %494 = vmatprep.subr.mxu0 0.0
    %495 = vmatpush2.xpose.msra.mxu0 0.0
    %496 = vmatprep.subr.mxu0 0.0
    %497 = vmatpush2.xpose.msra.mxu0 0.0
    %498 = vmatprep.subr.mxu0 0.0
    %499 = vmatpush2.xpose.msra.mxu0 0.0
    %500 = vmatprep.subr.mxu0 0.0
    %501 = vmatpush2.xpose.msra.mxu0 0.0
    %502 = vmatprep.subr.mxu0 0.0
    %503 = vmatpush2.xpose.msra.mxu0 0.0
    %504 = vmatprep.subr.mxu0 0.0
    %505 = vmatpush2.xpose.msra.mxu0 0.0
    %506 = vmatprep.subr.mxu0 0.0
    %507 = vmatpush2.xpose.msra.mxu0 0.0
    %508 = vmatprep.subr.mxu0 0.0
    %509 = vmatpush2.xpose.msra.mxu0 0.0
    %510 = vmatprep.subr.mxu0 0.0
    %511 = vmatpush2.xpose.msra.mxu0 0.0
    %512 = vmatprep.subr.mxu0 0.0
    %513 = vmatpush2.xpose.msra.mxu0 0.0
    %514 = vmatprep.subr.mxu0 0.0
    %515 = vmatpush2.xpose.msra.mxu0 0.0
    %516 = vmatprep.mubr.f32.mxu0 0.0
    %517 = vmatmul.mubr.f32.gmra.mxu0 %v448
    %v518 = vpop.f32.mrf.mxu0
    %v519 = vadd.f32 0.0, %v518
    %v520 = vpop.f32.mrf.mxu0
    %521 = vdwg.mxu0
    %v522 = vmul.f32 %v519, 0.35355338
    %v523 = vlaneseq
    %v524 = vshrl.u32 %v523, 7
    %v525 = vsub.s32 1, %v524
    %v526 = vrot.slane %v181, %v525
    %v527 = vadd.f32 %v522, %v526
    %v528 = vsel %vm277, %v527, -inf
    %529 = vmax.xlane.f32.xlu0 %v528
    %v530 = vpop.xlane.xlu0 %529
    %v531 = vsub.f32 %v527, %v530
    %v532 = vmul.f32 %v531, 1.442695
    %v533 = vpow.pop %v532
    %v534 = vsel %vm277, %v533, 0.0
    %535 = vadd.xlane.f32.xlu0 %v534
    %v536 = vpop.xlane.xlu0 %535
    %v537 = vrcp.pop %v536
    %v538 = vmul.f32 %v533, %v537
    %539 = vrot.lane.b32.xlu0 %v271, 64
    %v540 = vpop.permute.xlu0 %539
    %v543 = vsel %vm277, %v538, 0
    %545 = vmatprep.subr.mxu0 0.0
    %546 = vmatpush1.msra.mxu0 0.0
    %547 = vmatprep.subr.mxu0 0.0
    %548 = vmatpush1.msra.mxu0 0.0
    %549 = vmatprep.subr.mxu0 0.0
    %550 = vmatpush1.msra.mxu0 0.0
    %551 = vmatprep.subr.mxu0 0.0
    %552 = vmatpush1.msra.mxu0 0.0
    %553 = vmatprep.subr.mxu0 0.0
    %554 = vmatpush1.msra.mxu0 0.0
    %555 = vmatprep.subr.mxu0 0.0
    %556 = vmatpush1.msra.mxu0 0.0
    %557 = vmatprep.subr.mxu0 0.0
    %558 = vmatpush1.msra.mxu0 0.0
    %559 = vmatprep.subr.mxu0 0.0
    %560 = vmatpush1.msra.mxu0 0.0
    %561 = vmatprep.subr.mxu0 0.0
    %562 = vmatpush1.msra.mxu0 0.0
    %563 = vmatprep.subr.mxu0 0.0
    %564 = vmatpush1.msra.mxu0 0.0
    %565 = vmatprep.subr.mxu0 0.0
    %566 = vmatpush1.msra.mxu0 0.0
    %567 = vmatprep.subr.mxu0 0.0
    %568 = vmatpush1.msra.mxu0 0.0
    %569 = vmatprep.subr.mxu0 0.0
    %570 = vmatpush1.msra.mxu0 0.0
    %571 = vmatprep.subr.mxu0 0.0
    %572 = vmatpush1.msra.mxu0 0.0
    %573 = vmatprep.subr.mxu0 0.0
    %574 = vmatpush1.msra.mxu0 0.0
    %575 = vmatprep.subr.mxu0 0.0
    %576 = vmatpush1.msra.mxu0 %v540
    %577 = vmatprep.subr.mxu0 0.0
    %578 = vmatpush2.msra.mxu0 0.0
    %579 = vmatprep.subr.mxu0 0.0
    %580 = vmatpush2.msra.mxu0 0.0
    %581 = vmatprep.subr.mxu0 0.0
    %582 = vmatpush2.msra.mxu0 0.0
    %583 = vmatprep.subr.mxu0 0.0
    %584 = vmatpush2.msra.mxu0 0.0
    %585 = vmatprep.subr.mxu0 0.0
    %586 = vmatpush2.msra.mxu0 0.0
    %587 = vmatprep.subr.mxu0 0.0
    %588 = vmatpush2.msra.mxu0 0.0
    %589 = vmatprep.subr.mxu0 0.0
    %590 = vmatpush2.msra.mxu0 0.0
    %591 = vmatprep.subr.mxu0 0.0
    %592 = vmatpush2.msra.mxu0 0.0
    %593 = vmatprep.subr.mxu0 0.0
    %594 = vmatpush2.msra.mxu0 0.0
    %595 = vmatprep.subr.mxu0 0.0
    %596 = vmatpush2.msra.mxu0 0.0
    %597 = vmatprep.subr.mxu0 0.0
    %598 = vmatpush2.msra.mxu0 0.0
    %599 = vmatprep.subr.mxu0 0.0
    %600 = vmatpush2.msra.mxu0 0.0
    %601 = vmatprep.subr.mxu0 0.0
    %602 = vmatpush2.msra.mxu0 0.0
    %603 = vmatprep.subr.mxu0 0.0
    %604 = vmatpush2.msra.mxu0 0.0
    %605 = vmatprep.subr.mxu0 0.0
    %606 = vmatpush2.msra.mxu0 0.0
    %607 = vmatprep.subr.mxu0 0.0
    %608 = vmatpush2.msra.mxu0 0.0
    %609 = vmatprep.mubr.f32.mxu0 0.0
    %610 = vmatmul.mubr.f32.gmra.mxu0 %v543
    %v611 = vpop.f32.mrf.mxu0
    %v612 = vadd.f32 0.0, %v611
    %v613 = vpop.f32.mrf.mxu0
    %614 = vdwg.mxu0
    %615 = vrot.lane.b32.xlu0 %v266, 120
    %v616 = vpop.permute.xlu0 %615
    %617 = vrot.lane.b32.xlu0 %v266, 88
    %v618 = vpop.permute.xlu0 %617
    %v619 = vsel %vm277, %v616, 0
    %v621 = vsel %vm277, %v618, 0
    %623 = vmatprep.subr.mxu0 0.0
    %624 = vmatpush1.xpose.msra.mxu0 0.0
    %625 = vmatprep.subr.mxu0 0.0
    %626 = vmatpush1.xpose.msra.mxu0 0.0
    %627 = vmatprep.subr.mxu0 0.0
    %628 = vmatpush1.xpose.msra.mxu0 0.0
    %629 = vmatprep.subr.mxu0 0.0
    %630 = vmatpush1.xpose.msra.mxu0 0.0
    %631 = vmatprep.subr.mxu0 0.0
    %632 = vmatpush1.xpose.msra.mxu0 0.0
    %633 = vmatprep.subr.mxu0 0.0
    %634 = vmatpush1.xpose.msra.mxu0 0.0
    %635 = vmatprep.subr.mxu0 0.0
    %636 = vmatpush1.xpose.msra.mxu0 0.0
    %637 = vmatprep.subr.mxu0 0.0
    %638 = vmatpush1.xpose.msra.mxu0 0.0
    %639 = vmatprep.subr.mxu0 0.0
    %640 = vmatpush1.xpose.msra.mxu0 0.0
    %641 = vmatprep.subr.mxu0 0.0
    %642 = vmatpush1.xpose.msra.mxu0 0.0
    %643 = vmatprep.subr.mxu0 0.0
    %644 = vmatpush1.xpose.msra.mxu0 0.0
    %645 = vmatprep.subr.mxu0 0.0
    %646 = vmatpush1.xpose.msra.mxu0 0.0
    %647 = vmatprep.subr.mxu0 0.0
    %648 = vmatpush1.xpose.msra.mxu0 0.0
    %649 = vmatprep.subr.mxu0 0.0
    %650 = vmatpush1.xpose.msra.mxu0 0.0
    %651 = vmatprep.subr.mxu0 0.0
    %652 = vmatpush1.xpose.msra.mxu0 0.0
    %653 = vmatprep.subr.mxu0 0.0
    %654 = vmatpush1.xpose.msra.mxu0 %v621
    %655 = vmatprep.subr.mxu0 0.0
    %656 = vmatpush2.xpose.msra.mxu0 0.0
    %657 = vmatprep.subr.mxu0 0.0
    %658 = vmatpush2.xpose.msra.mxu0 0.0
    %659 = vmatprep.subr.mxu0 0.0
    %660 = vmatpush2.xpose.msra.mxu0 0.0
    %661 = vmatprep.subr.mxu0 0.0
    %662 = vmatpush2.xpose.msra.mxu0 0.0
    %663 = vmatprep.subr.mxu0 0.0
    %664 = vmatpush2.xpose.msra.mxu0 0.0
    %665 = vmatprep.subr.mxu0 0.0
    %666 = vmatpush2.xpose.msra.mxu0 0.0
    %667 = vmatprep.subr.mxu0 0.0
    %668 = vmatpush2.xpose.msra.mxu0 0.0
    %669 = vmatprep.subr.mxu0 0.0
    %670 = vmatpush2.xpose.msra.mxu0 0.0
    %671 = vmatprep.subr.mxu0 0.0
    %672 = vmatpush2.xpose.msra.mxu0 0.0
    %673 = vmatprep.subr.mxu0 0.0
    %674 = vmatpush2.xpose.msra.mxu0 0.0
    %675 = vmatprep.subr.mxu0 0.0
    %676 = vmatpush2.xpose.msra.mxu0 0.0
    %677 = vmatprep.subr.mxu0 0.0
    %678 = vmatpush2.xpose.msra.mxu0 0.0
    %679 = vmatprep.subr.mxu0 0.0
    %680 = vmatpush2.xpose.msra.mxu0 0.0
    %681 = vmatprep.subr.mxu0 0.0
    %682 = vmatpush2.xpose.msra.mxu0 0.0
    %683 = vmatprep.subr.mxu0 0.0
    %684 = vmatpush2.xpose.msra.mxu0 0.0
    %685 = vmatprep.subr.mxu0 0.0
    %686 = vmatpush2.xpose.msra.mxu0 0.0
    %687 = vmatprep.mubr.f32.mxu0 0.0
    %688 = vmatmul.mubr.f32.gmra.mxu0 %v619
    %v689 = vpop.f32.mrf.mxu0
    %v690 = vadd.f32 0.0, %v689
    %v691 = vpop.f32.mrf.mxu0
    %692 = vdwg.mxu0
    %v693 = vmul.f32 %v690, 0.35355338
    %v694 = vadd.f32 %v693, %v356
    %v695 = vsel %vm277, %v694, -inf
    %696 = vmax.xlane.f32.xlu0 %v695
    %v697 = vpop.xlane.xlu0 %696
    %v698 = vsub.f32 %v694, %v697
    %v699 = vmul.f32 %v698, 1.442695
    %v700 = vpow.pop %v699
    %v701 = vsel %vm277, %v700, 0.0
    %702 = vadd.xlane.f32.xlu0 %v701
    %v703 = vpop.xlane.xlu0 %702
    %v704 = vrcp.pop %v703
    %v705 = vmul.f32 %v700, %v704
    %706 = vrot.lane.b32.xlu0 %v266, 56
    %v707 = vpop.permute.xlu0 %706
    %v710 = vsel %vm277, %v705, 0
    %712 = vmatprep.subr.mxu0 0.0
    %713 = vmatpush1.msra.mxu0 0.0
    %714 = vmatprep.subr.mxu0 0.0
    %715 = vmatpush1.msra.mxu0 0.0
    %716 = vmatprep.subr.mxu0 0.0
    %717 = vmatpush1.msra.mxu0 0.0
    %718 = vmatprep.subr.mxu0 0.0
    %719 = vmatpush1.msra.mxu0 0.0
    %720 = vmatprep.subr.mxu0 0.0
    %721 = vmatpush1.msra.mxu0 0.0
    %722 = vmatprep.subr.mxu0 0.0
    %723 = vmatpush1.msra.mxu0 0.0
    %724 = vmatprep.subr.mxu0 0.0
    %725 = vmatpush1.msra.mxu0 0.0
    %726 = vmatprep.subr.mxu0 0.0
    %727 = vmatpush1.msra.mxu0 0.0
    %728 = vmatprep.subr.mxu0 0.0
    %729 = vmatpush1.msra.mxu0 0.0
    %730 = vmatprep.subr.mxu0 0.0
    %731 = vmatpush1.msra.mxu0 0.0
    %732 = vmatprep.subr.mxu0 0.0
    %733 = vmatpush1.msra.mxu0 0.0
    %734 = vmatprep.subr.mxu0 0.0
    %735 = vmatpush1.msra.mxu0 0.0
    %736 = vmatprep.subr.mxu0 0.0
    %737 = vmatpush1.msra.mxu0 0.0
    %738 = vmatprep.subr.mxu0 0.0
    %739 = vmatpush1.msra.mxu0 0.0
    %740 = vmatprep.subr.mxu0 0.0
    %741 = vmatpush1.msra.mxu0 0.0
    %742 = vmatprep.subr.mxu0 0.0
    %743 = vmatpush1.msra.mxu0 %v707
    %744 = vmatprep.subr.mxu0 0.0
    %745 = vmatpush2.msra.mxu0 0.0
    %746 = vmatprep.subr.mxu0 0.0
    %747 = vmatpush2.msra.mxu0 0.0
    %748 = vmatprep.subr.mxu0 0.0
    %749 = vmatpush2.msra.mxu0 0.0
    %750 = vmatprep.subr.mxu0 0.0
    %751 = vmatpush2.msra.mxu0 0.0
    %752 = vmatprep.subr.mxu0 0.0
    %753 = vmatpush2.msra.mxu0 0.0
    %754 = vmatprep.subr.mxu0 0.0
    %755 = vmatpush2.msra.mxu0 0.0
    %756 = vmatprep.subr.mxu0 0.0
    %757 = vmatpush2.msra.mxu0 0.0
    %758 = vmatprep.subr.mxu0 0.0
    %759 = vmatpush2.msra.mxu0 0.0
    %760 = vmatprep.subr.mxu0 0.0
    %761 = vmatpush2.msra.mxu0 0.0
    %762 = vmatprep.subr.mxu0 0.0
    %763 = vmatpush2.msra.mxu0 0.0
    %764 = vmatprep.subr.mxu0 0.0
    %765 = vmatpush2.msra.mxu0 0.0
    %766 = vmatprep.subr.mxu0 0.0
    %767 = vmatpush2.msra.mxu0 0.0
    %768 = vmatprep.subr.mxu0 0.0
    %769 = vmatpush2.msra.mxu0 0.0
    %770 = vmatprep.subr.mxu0 0.0
    %771 = vmatpush2.msra.mxu0 0.0
    %772 = vmatprep.subr.mxu0 0.0
    %773 = vmatpush2.msra.mxu0 0.0
    %774 = vmatprep.subr.mxu0 0.0
    %775 = vmatpush2.msra.mxu0 0.0
    %776 = vmatprep.mubr.f32.mxu0 0.0
    %777 = vmatmul.mubr.f32.gmra.mxu0 %v710
    %v778 = vpop.f32.mrf.mxu0
    %v779 = vadd.f32 0.0, %v778
    %v780 = vpop.f32.mrf.mxu0
    %781 = vdwg.mxu0
    %782 = vrot.lane.b32.xlu0 %v271, 120
    %v783 = vpop.permute.xlu0 %782
    %784 = vrot.lane.b32.xlu0 %v271, 88
    %v785 = vpop.permute.xlu0 %784
    %v786 = vsel %vm277, %v783, 0
    %v788 = vsel %vm277, %v785, 0
    %790 = vmatprep.subr.mxu0 0.0
    %791 = vmatpush1.xpose.msra.mxu0 0.0
    %792 = vmatprep.subr.mxu0 0.0
    %793 = vmatpush1.xpose.msra.mxu0 0.0
    %794 = vmatprep.subr.mxu0 0.0
    %795 = vmatpush1.xpose.msra.mxu0 0.0
    %796 = vmatprep.subr.mxu0 0.0
    %797 = vmatpush1.xpose.msra.mxu0 0.0
    %798 = vmatprep.subr.mxu0 0.0
    %799 = vmatpush1.xpose.msra.mxu0 0.0
    %800 = vmatprep.subr.mxu0 0.0
    %801 = vmatpush1.xpose.msra.mxu0 0.0
    %802 = vmatprep.subr.mxu0 0.0
    %803 = vmatpush1.xpose.msra.mxu0 0.0
    %804 = vmatprep.subr.mxu0 0.0
    %805 = vmatpush1.xpose.msra.mxu0 0.0
    %806 = vmatprep.subr.mxu0 0.0
    %807 = vmatpush1.xpose.msra.mxu0 0.0
    %808 = vmatprep.subr.mxu0 0.0
    %809 = vmatpush1.xpose.msra.mxu0 0.0
    %810 = vmatprep.subr.mxu0 0.0
    %811 = vmatpush1.xpose.msra.mxu0 0.0
    %812 = vmatprep.subr.mxu0 0.0
    %813 = vmatpush1.xpose.msra.mxu0 0.0
    %814 = vmatprep.subr.mxu0 0.0
    %815 = vmatpush1.xpose.msra.mxu0 0.0
    %816 = vmatprep.subr.mxu0 0.0
    %817 = vmatpush1.xpose.msra.mxu0 0.0
    %818 = vmatprep.subr.mxu0 0.0
    %819 = vmatpush1.xpose.msra.mxu0 0.0
    %820 = vmatprep.subr.mxu0 0.0
    %821 = vmatpush1.xpose.msra.mxu0 %v788
    %822 = vmatprep.subr.mxu0 0.0
    %823 = vmatpush2.xpose.msra.mxu0 0.0
    %824 = vmatprep.subr.mxu0 0.0
    %825 = vmatpush2.xpose.msra.mxu0 0.0
    %826 = vmatprep.subr.mxu0 0.0
    %827 = vmatpush2.xpose.msra.mxu0 0.0
    %828 = vmatprep.subr.mxu0 0.0
    %829 = vmatpush2.xpose.msra.mxu0 0.0
    %830 = vmatprep.subr.mxu0 0.0
    %831 = vmatpush2.xpose.msra.mxu0 0.0
    %832 = vmatprep.subr.mxu0 0.0
    %833 = vmatpush2.xpose.msra.mxu0 0.0
    %834 = vmatprep.subr.mxu0 0.0
    %835 = vmatpush2.xpose.msra.mxu0 0.0
    %836 = vmatprep.subr.mxu0 0.0
    %837 = vmatpush2.xpose.msra.mxu0 0.0
    %838 = vmatprep.subr.mxu0 0.0
    %839 = vmatpush2.xpose.msra.mxu0 0.0
    %840 = vmatprep.subr.mxu0 0.0
    %841 = vmatpush2.xpose.msra.mxu0 0.0
    %842 = vmatprep.subr.mxu0 0.0
    %843 = vmatpush2.xpose.msra.mxu0 0.0
    %844 = vmatprep.subr.mxu0 0.0
    %845 = vmatpush2.xpose.msra.mxu0 0.0
    %846 = vmatprep.subr.mxu0 0.0
    %847 = vmatpush2.xpose.msra.mxu0 0.0
    %848 = vmatprep.subr.mxu0 0.0
    %849 = vmatpush2.xpose.msra.mxu0 0.0
    %850 = vmatprep.subr.mxu0 0.0
    %851 = vmatpush2.xpose.msra.mxu0 0.0
    %852 = vmatprep.subr.mxu0 0.0
    %853 = vmatpush2.xpose.msra.mxu0 0.0
    %854 = vmatprep.mubr.f32.mxu0 0.0
    %855 = vmatmul.mubr.f32.gmra.mxu0 %v786
    %v856 = vpop.f32.mrf.mxu0
    %v857 = vadd.f32 0.0, %v856
    %v858 = vpop.f32.mrf.mxu0
    %859 = vdwg.mxu0
    %v860 = vmul.f32 %v857, 0.35355338
    %v861 = vadd.f32 %v860, %v526
    %v862 = vsel %vm277, %v861, -inf
    %863 = vmax.xlane.f32.xlu0 %v862
    %v864 = vpop.xlane.xlu0 %863
    %v865 = vsub.f32 %v861, %v864
    %v866 = vmul.f32 %v865, 1.442695
    %v867 = vpow.pop %v866
    %v868 = vsel %vm277, %v867, 0.0
    %869 = vadd.xlane.f32.xlu0 %v868
    %v870 = vpop.xlane.xlu0 %869
    %v871 = vrcp.pop %v870
    %v872 = vmul.f32 %v867, %v871
    %873 = vrot.lane.b32.xlu0 %v271, 56
    %v874 = vpop.permute.xlu0 %873
    %v877 = vsel %vm277, %v872, 0
    %879 = vmatprep.subr.mxu0 0.0
    %880 = vmatpush1.msra.mxu0 0.0
    %881 = vmatprep.subr.mxu0 0.0
    %882 = vmatpush1.msra.mxu0 0.0
    %883 = vmatprep.subr.mxu0 0.0
    %884 = vmatpush1.msra.mxu0 0.0
    %885 = vmatprep.subr.mxu0 0.0
    %886 = vmatpush1.msra.mxu0 0.0
    %887 = vmatprep.subr.mxu0 0.0
    %888 = vmatpush1.msra.mxu0 0.0
    %889 = vmatprep.subr.mxu0 0.0
    %890 = vmatpush1.msra.mxu0 0.0
    %891 = vmatprep.subr.mxu0 0.0
    %892 = vmatpush1.msra.mxu0 0.0
    %893 = vmatprep.subr.mxu0 0.0
    %894 = vmatpush1.msra.mxu0 0.0
    %895 = vmatprep.subr.mxu0 0.0
    %896 = vmatpush1.msra.mxu0 0.0
    %897 = vmatprep.subr.mxu0 0.0
    %898 = vmatpush1.msra.mxu0 0.0
    %899 = vmatprep.subr.mxu0 0.0
    %900 = vmatpush1.msra.mxu0 0.0
    %901 = vmatprep.subr.mxu0 0.0
    %902 = vmatpush1.msra.mxu0 0.0
    %903 = vmatprep.subr.mxu0 0.0
    %904 = vmatpush1.msra.mxu0 0.0
    %905 = vmatprep.subr.mxu0 0.0
    %906 = vmatpush1.msra.mxu0 0.0
    %907 = vmatprep.subr.mxu0 0.0
    %908 = vmatpush1.msra.mxu0 0.0
    %909 = vmatprep.subr.mxu0 0.0
    %910 = vmatpush1.msra.mxu0 %v874
    %911 = vmatprep.subr.mxu0 0.0
    %912 = vmatpush2.msra.mxu0 0.0
    %913 = vmatprep.subr.mxu0 0.0
    %914 = vmatpush2.msra.mxu0 0.0
    %915 = vmatprep.subr.mxu0 0.0
    %916 = vmatpush2.msra.mxu0 0.0
    %917 = vmatprep.subr.mxu0 0.0
    %918 = vmatpush2.msra.mxu0 0.0
    %919 = vmatprep.subr.mxu0 0.0
    %920 = vmatpush2.msra.mxu0 0.0
    %921 = vmatprep.subr.mxu0 0.0
    %922 = vmatpush2.msra.mxu0 0.0
    %923 = vmatprep.subr.mxu0 0.0
    %924 = vmatpush2.msra.mxu0 0.0
    %925 = vmatprep.subr.mxu0 0.0
    %926 = vmatpush2.msra.mxu0 0.0
    %927 = vmatprep.subr.mxu0 0.0
    %928 = vmatpush2.msra.mxu0 0.0
    %929 = vmatprep.subr.mxu0 0.0
    %930 = vmatpush2.msra.mxu0 0.0
    %931 = vmatprep.subr.mxu0 0.0
    %932 = vmatpush2.msra.mxu0 0.0
    %933 = vmatprep.subr.mxu0 0.0
    %934 = vmatpush2.msra.mxu0 0.0
    %935 = vmatprep.subr.mxu0 0.0
    %936 = vmatpush2.msra.mxu0 0.0
    %937 = vmatprep.subr.mxu0 0.0
    %938 = vmatpush2.msra.mxu0 0.0
    %939 = vmatprep.subr.mxu0 0.0
    %940 = vmatpush2.msra.mxu0 0.0
    %941 = vmatprep.subr.mxu0 0.0
    %942 = vmatpush2.msra.mxu0 0.0
    %943 = vmatprep.mubr.f32.mxu0 0.0
    %944 = vmatmul.mubr.f32.gmra.mxu0 %v877
    %v945 = vpop.f32.mrf.mxu0
    %v946 = vadd.f32 0.0, %v945
    %v947 = vpop.f32.mrf.mxu0
    %948 = vdwg.mxu0
    %949 = vrot.lane.b32.xlu0 %v266, 112
    %v950 = vpop.permute.xlu0 %949
    %951 = vrot.lane.b32.xlu0 %v266, 80
    %v952 = vpop.permute.xlu0 %951
    %v953 = vsel %vm277, %v950, 0
    %v955 = vsel %vm277, %v952, 0
    %957 = vmatprep.subr.mxu0 0.0
    %958 = vmatpush1.xpose.msra.mxu0 0.0
    %959 = vmatprep.subr.mxu0 0.0
    %960 = vmatpush1.xpose.msra.mxu0 0.0
    %961 = vmatprep.subr.mxu0 0.0
    %962 = vmatpush1.xpose.msra.mxu0 0.0
    %963 = vmatprep.subr.mxu0 0.0
    %964 = vmatpush1.xpose.msra.mxu0 0.0
    %965 = vmatprep.subr.mxu0 0.0
    %966 = vmatpush1.xpose.msra.mxu0 0.0
    %967 = vmatprep.subr.mxu0 0.0
    %968 = vmatpush1.xpose.msra.mxu0 0.0
    %969 = vmatprep.subr.mxu0 0.0
    %970 = vmatpush1.xpose.msra.mxu0 0.0
    %971 = vmatprep.subr.mxu0 0.0
    %972 = vmatpush1.xpose.msra.mxu0 0.0
    %973 = vmatprep.subr.mxu0 0.0
    %974 = vmatpush1.xpose.msra.mxu0 0.0
    %975 = vmatprep.subr.mxu0 0.0
    %976 = vmatpush1.xpose.msra.mxu0 0.0
    %977 = vmatprep.subr.mxu0 0.0
    %978 = vmatpush1.xpose.msra.mxu0 0.0
    %979 = vmatprep.subr.mxu0 0.0
    %980 = vmatpush1.xpose.msra.mxu0 0.0
    %981 = vmatprep.subr.mxu0 0.0
    %982 = vmatpush1.xpose.msra.mxu0 0.0
    %983 = vmatprep.subr.mxu0 0.0
    %984 = vmatpush1.xpose.msra.mxu0 0.0
    %985 = vmatprep.subr.mxu0 0.0
    %986 = vmatpush1.xpose.msra.mxu0 0.0
    %987 = vmatprep.subr.mxu0 0.0
    %988 = vmatpush1.xpose.msra.mxu0 %v955
    %989 = vmatprep.subr.mxu0 0.0
    %990 = vmatpush2.xpose.msra.mxu0 0.0
    %991 = vmatprep.subr.mxu0 0.0
    %992 = vmatpush2.xpose.msra.mxu0 0.0
    %993 = vmatprep.subr.mxu0 0.0
    %994 = vmatpush2.xpose.msra.mxu0 0.0
    %995 = vmatprep.subr.mxu0 0.0
    %996 = vmatpush2.xpose.msra.mxu0 0.0
    %997 = vmatprep.subr.mxu0 0.0
    %998 = vmatpush2.xpose.msra.mxu0 0.0
    %999 = vmatprep.subr.mxu0 0.0
    %1000 = vmatpush2.xpose.msra.mxu0 0.0
    %1001 = vmatprep.subr.mxu0 0.0
    %1002 = vmatpush2.xpose.msra.mxu0 0.0
    %1003 = vmatprep.subr.mxu0 0.0
    %1004 = vmatpush2.xpose.msra.mxu0 0.0
    %1005 = vmatprep.subr.mxu0 0.0
    %1006 = vmatpush2.xpose.msra.mxu0 0.0
    %1007 = vmatprep.subr.mxu0 0.0
    %1008 = vmatpush2.xpose.msra.mxu0 0.0
    %1009 = vmatprep.subr.mxu0 0.0
    %1010 = vmatpush2.xpose.msra.mxu0 0.0
    %1011 = vmatprep.subr.mxu0 0.0
    %1012 = vmatpush2.xpose.msra.mxu0 0.0
    %1013 = vmatprep.subr.mxu0 0.0
    %1014 = vmatpush2.xpose.msra.mxu0 0.0
    %1015 = vmatprep.subr.mxu0 0.0
    %1016 = vmatpush2.xpose.msra.mxu0 0.0
    %1017 = vmatprep.subr.mxu0 0.0
    %1018 = vmatpush2.xpose.msra.mxu0 0.0
    %1019 = vmatprep.subr.mxu0 0.0
    %1020 = vmatpush2.xpose.msra.mxu0 0.0
    %1021 = vmatprep.mubr.f32.mxu0 0.0
    %1022 = vmatmul.mubr.f32.gmra.mxu0 %v953
    %v1023 = vpop.f32.mrf.mxu0
    %v1024 = vadd.f32 0.0, %v1023
    %v1025 = vpop.f32.mrf.mxu0
    %1026 = vdwg.mxu0
    %v1027 = vmul.f32 %v1024, 0.35355338
    %v1028 = vadd.f32 %v1027, %v356
    %v1029 = vsel %vm277, %v1028, -inf
    %1030 = vmax.xlane.f32.xlu0 %v1029
    %v1031 = vpop.xlane.xlu0 %1030
    %v1032 = vsub.f32 %v1028, %v1031
    %v1033 = vmul.f32 %v1032, 1.442695
    %v1034 = vpow.pop %v1033
    %v1035 = vsel %vm277, %v1034, 0.0
    %1036 = vadd.xlane.f32.xlu0 %v1035
    %v1037 = vpop.xlane.xlu0 %1036
    %v1038 = vrcp.pop %v1037
    %v1039 = vmul.f32 %v1034, %v1038
    %1040 = vrot.lane.b32.xlu0 %v266, 48
    %v1041 = vpop.permute.xlu0 %1040
    %v1044 = vsel %vm277, %v1039, 0
    %1046 = vmatprep.subr.mxu0 0.0
    %1047 = vmatpush1.msra.mxu0 0.0
    %1048 = vmatprep.subr.mxu0 0.0
    %1049 = vmatpush1.msra.mxu0 0.0
    %1050 = vmatprep.subr.mxu0 0.0
    %1051 = vmatpush1.msra.mxu0 0.0
    %1052 = vmatprep.subr.mxu0 0.0
    %1053 = vmatpush1.msra.mxu0 0.0
    %1054 = vmatprep.subr.mxu0 0.0
    %1055 = vmatpush1.msra.mxu0 0.0
    %1056 = vmatprep.subr.mxu0 0.0
    %1057 = vmatpush1.msra.mxu0 0.0
    %1058 = vmatprep.subr.mxu0 0.0
    %1059 = vmatpush1.msra.mxu0 0.0
    %1060 = vmatprep.subr.mxu0 0.0
    %1061 = vmatpush1.msra.mxu0 0.0
    %1062 = vmatprep.subr.mxu0 0.0
    %1063 = vmatpush1.msra.mxu0 0.0
    %1064 = vmatprep.subr.mxu0 0.0
    %1065 = vmatpush1.msra.mxu0 0.0
    %1066 = vmatprep.subr.mxu0 0.0
    %1067 = vmatpush1.msra.mxu0 0.0
    %1068 = vmatprep.subr.mxu0 0.0
    %1069 = vmatpush1.msra.mxu0 0.0
    %1070 = vmatprep.subr.mxu0 0.0
    %1071 = vmatpush1.msra.mxu0 0.0
    %1072 = vmatprep.subr.mxu0 0.0
    %1073 = vmatpush1.msra.mxu0 0.0
    %1074 = vmatprep.subr.mxu0 0.0
    %1075 = vmatpush1.msra.mxu0 0.0
    %1076 = vmatprep.subr.mxu0 0.0
    %1077 = vmatpush1.msra.mxu0 %v1041
    %1078 = vmatprep.subr.mxu0 0.0
    %1079 = vmatpush2.msra.mxu0 0.0
    %1080 = vmatprep.subr.mxu0 0.0
    %1081 = vmatpush2.msra.mxu0 0.0
    %1082 = vmatprep.subr.mxu0 0.0
    %1083 = vmatpush2.msra.mxu0 0.0
    %1084 = vmatprep.subr.mxu0 0.0
    %1085 = vmatpush2.msra.mxu0 0.0
    %1086 = vmatprep.subr.mxu0 0.0
    %1087 = vmatpush2.msra.mxu0 0.0
    %1088 = vmatprep.subr.mxu0 0.0
    %1089 = vmatpush2.msra.mxu0 0.0
    %1090 = vmatprep.subr.mxu0 0.0
    %1091 = vmatpush2.msra.mxu0 0.0
    %1092 = vmatprep.subr.mxu0 0.0
    %1093 = vmatpush2.msra.mxu0 0.0
    %1094 = vmatprep.subr.mxu0 0.0
    %1095 = vmatpush2.msra.mxu0 0.0
    %1096 = vmatprep.subr.mxu0 0.0
    %1097 = vmatpush2.msra.mxu0 0.0
    %1098 = vmatprep.subr.mxu0 0.0
    %1099 = vmatpush2.msra.mxu0 0.0
    %1100 = vmatprep.subr.mxu0 0.0
    %1101 = vmatpush2.msra.mxu0 0.0
    %1102 = vmatprep.subr.mxu0 0.0
    %1103 = vmatpush2.msra.mxu0 0.0
    %1104 = vmatprep.subr.mxu0 0.0
    %1105 = vmatpush2.msra.mxu0 0.0
    %1106 = vmatprep.subr.mxu0 0.0
    %1107 = vmatpush2.msra.mxu0 0.0
    %1108 = vmatprep.subr.mxu0 0.0
    %1109 = vmatpush2.msra.mxu0 0.0
    %1110 = vmatprep.mubr.f32.mxu0 0.0
    %1111 = vmatmul.mubr.f32.gmra.mxu0 %v1044
    %v1112 = vpop.f32.mrf.mxu0
    %v1113 = vadd.f32 0.0, %v1112
    %v1114 = vpop.f32.mrf.mxu0
    %1115 = vdwg.mxu0
    %1116 = vrot.lane.b32.xlu0 %v271, 112
    %v1117 = vpop.permute.xlu0 %1116
    %1118 = vrot.lane.b32.xlu0 %v271, 80
    %v1119 = vpop.permute.xlu0 %1118
    %v1120 = vsel %vm277, %v1117, 0
    %v1122 = vsel %vm277, %v1119, 0
    %1124 = vmatprep.subr.mxu0 0.0
    %1125 = vmatpush1.xpose.msra.mxu0 0.0
    %1126 = vmatprep.subr.mxu0 0.0
    %1127 = vmatpush1.xpose.msra.mxu0 0.0
    %1128 = vmatprep.subr.mxu0 0.0
    %1129 = vmatpush1.xpose.msra.mxu0 0.0
    %1130 = vmatprep.subr.mxu0 0.0
    %1131 = vmatpush1.xpose.msra.mxu0 0.0
    %1132 = vmatprep.subr.mxu0 0.0
    %1133 = vmatpush1.xpose.msra.mxu0 0.0
    %1134 = vmatprep.subr.mxu0 0.0
    %1135 = vmatpush1.xpose.msra.mxu0 0.0
    %1136 = vmatprep.subr.mxu0 0.0
    %1137 = vmatpush1.xpose.msra.mxu0 0.0
    %1138 = vmatprep.subr.mxu0 0.0
    %1139 = vmatpush1.xpose.msra.mxu0 0.0
    %1140 = vmatprep.subr.mxu0 0.0
    %1141 = vmatpush1.xpose.msra.mxu0 0.0
    %1142 = vmatprep.subr.mxu0 0.0
    %1143 = vmatpush1.xpose.msra.mxu0 0.0
    %1144 = vmatprep.subr.mxu0 0.0
    %1145 = vmatpush1.xpose.msra.mxu0 0.0
    %1146 = vmatprep.subr.mxu0 0.0
    %1147 = vmatpush1.xpose.msra.mxu0 0.0
    %1148 = vmatprep.subr.mxu0 0.0
    %1149 = vmatpush1.xpose.msra.mxu0 0.0
    %1150 = vmatprep.subr.mxu0 0.0
    %1151 = vmatpush1.xpose.msra.mxu0 0.0
    %1152 = vmatprep.subr.mxu0 0.0
    %1153 = vmatpush1.xpose.msra.mxu0 0.0
    %1154 = vmatprep.subr.mxu0 0.0
    %1155 = vmatpush1.xpose.msra.mxu0 %v1122
    %1156 = vmatprep.subr.mxu0 0.0
    %1157 = vmatpush2.xpose.msra.mxu0 0.0
    %1158 = vmatprep.subr.mxu0 0.0
    %1159 = vmatpush2.xpose.msra.mxu0 0.0
    %1160 = vmatprep.subr.mxu0 0.0
    %1161 = vmatpush2.xpose.msra.mxu0 0.0
    %1162 = vmatprep.subr.mxu0 0.0
    %1163 = vmatpush2.xpose.msra.mxu0 0.0
    %1164 = vmatprep.subr.mxu0 0.0
    %1165 = vmatpush2.xpose.msra.mxu0 0.0
    %1166 = vmatprep.subr.mxu0 0.0
    %1167 = vmatpush2.xpose.msra.mxu0 0.0
    %1168 = vmatprep.subr.mxu0 0.0
    %1169 = vmatpush2.xpose.msra.mxu0 0.0
    %1170 = vmatprep.subr.mxu0 0.0
    %1171 = vmatpush2.xpose.msra.mxu0 0.0
    %1172 = vmatprep.subr.mxu0 0.0
    %1173 = vmatpush2.xpose.msra.mxu0 0.0
    %1174 = vmatprep.subr.mxu0 0.0
    %1175 = vmatpush2.xpose.msra.mxu0 0.0
    %1176 = vmatprep.subr.mxu0 0.0
    %1177 = vmatpush2.xpose.msra.mxu0 0.0
    %1178 = vmatprep.subr.mxu0 0.0
    %1179 = vmatpush2.xpose.msra.mxu0 0.0
    %1180 = vmatprep.subr.mxu0 0.0
    %1181 = vmatpush2.xpose.msra.mxu0 0.0
    %1182 = vmatprep.subr.mxu0 0.0
    %1183 = vmatpush2.xpose.msra.mxu0 0.0
    %1184 = vmatprep.subr.mxu0 0.0
    %1185 = vmatpush2.xpose.msra.mxu0 0.0
    %1186 = vmatprep.subr.mxu0 0.0
    %1187 = vmatpush2.xpose.msra.mxu0 0.0
    %1188 = vmatprep.mubr.f32.mxu0 0.0
    %1189 = vmatmul.mubr.f32.gmra.mxu0 %v1120
    %v1190 = vpop.f32.mrf.mxu0
    %v1191 = vadd.f32 0.0, %v1190
    %v1192 = vpop.f32.mrf.mxu0
    %1193 = vdwg.mxu0
    %v1194 = vmul.f32 %v1191, 0.35355338
    %v1195 = vadd.f32 %v1194, %v526
    %v1196 = vsel %vm277, %v1195, -inf
    %1197 = vmax.xlane.f32.xlu0 %v1196
    %v1198 = vpop.xlane.xlu0 %1197
    %v1199 = vsub.f32 %v1195, %v1198
    %v1200 = vmul.f32 %v1199, 1.442695
    %v1201 = vpow.pop %v1200
    %v1202 = vsel %vm277, %v1201, 0.0
    %1203 = vadd.xlane.f32.xlu0 %v1202
    %v1204 = vpop.xlane.xlu0 %1203
    %v1205 = vrcp.pop %v1204
    %v1206 = vmul.f32 %v1201, %v1205
    %1207 = vrot.lane.b32.xlu0 %v271, 48
    %v1208 = vpop.permute.xlu0 %1207
    %v1211 = vsel %vm277, %v1206, 0
    %1213 = vmatprep.subr.mxu0 0.0
    %1214 = vmatpush1.msra.mxu0 0.0
    %1215 = vmatprep.subr.mxu0 0.0
    %1216 = vmatpush1.msra.mxu0 0.0
    %1217 = vmatprep.subr.mxu0 0.0
    %1218 = vmatpush1.msra.mxu0 0.0
    %1219 = vmatprep.subr.mxu0 0.0
    %1220 = vmatpush1.msra.mxu0 0.0
    %1221 = vmatprep.subr.mxu0 0.0
    %1222 = vmatpush1.msra.mxu0 0.0
    %1223 = vmatprep.subr.mxu0 0.0
    %1224 = vmatpush1.msra.mxu0 0.0
    %1225 = vmatprep.subr.mxu0 0.0
    %1226 = vmatpush1.msra.mxu0 0.0
    %1227 = vmatprep.subr.mxu0 0.0
    %1228 = vmatpush1.msra.mxu0 0.0
    %1229 = vmatprep.subr.mxu0 0.0
    %1230 = vmatpush1.msra.mxu0 0.0
    %1231 = vmatprep.subr.mxu0 0.0
    %1232 = vmatpush1.msra.mxu0 0.0
    %1233 = vmatprep.subr.mxu0 0.0
    %1234 = vmatpush1.msra.mxu0 0.0
    %1235 = vmatprep.subr.mxu0 0.0
    %1236 = vmatpush1.msra.mxu0 0.0
    %1237 = vmatprep.subr.mxu0 0.0
    %1238 = vmatpush1.msra.mxu0 0.0
    %1239 = vmatprep.subr.mxu0 0.0
    %1240 = vmatpush1.msra.mxu0 0.0
    %1241 = vmatprep.subr.mxu0 0.0
    %1242 = vmatpush1.msra.mxu0 0.0
    %1243 = vmatprep.subr.mxu0 0.0
    %1244 = vmatpush1.msra.mxu0 %v1208
    %1245 = vmatprep.subr.mxu0 0.0
    %1246 = vmatpush2.msra.mxu0 0.0
    %1247 = vmatprep.subr.mxu0 0.0
    %1248 = vmatpush2.msra.mxu0 0.0
    %1249 = vmatprep.subr.mxu0 0.0
    %1250 = vmatpush2.msra.mxu0 0.0
    %1251 = vmatprep.subr.mxu0 0.0
    %1252 = vmatpush2.msra.mxu0 0.0
    %1253 = vmatprep.subr.mxu0 0.0
    %1254 = vmatpush2.msra.mxu0 0.0
    %1255 = vmatprep.subr.mxu0 0.0
    %1256 = vmatpush2.msra.mxu0 0.0
    %1257 = vmatprep.subr.mxu0 0.0
    %1258 = vmatpush2.msra.mxu0 0.0
    %1259 = vmatprep.subr.mxu0 0.0
    %1260 = vmatpush2.msra.mxu0 0.0
    %1261 = vmatprep.subr.mxu0 0.0
    %1262 = vmatpush2.msra.mxu0 0.0
    %1263 = vmatprep.subr.mxu0 0.0
    %1264 = vmatpush2.msra.mxu0 0.0
    %1265 = vmatprep.subr.mxu0 0.0
    %1266 = vmatpush2.msra.mxu0 0.0
    %1267 = vmatprep.subr.mxu0 0.0
    %1268 = vmatpush2.msra.mxu0 0.0
    %1269 = vmatprep.subr.mxu0 0.0
    %1270 = vmatpush2.msra.mxu0 0.0
    %1271 = vmatprep.subr.mxu0 0.0
    %1272 = vmatpush2.msra.mxu0 0.0
    %1273 = vmatprep.subr.mxu0 0.0
    %1274 = vmatpush2.msra.mxu0 0.0
    %1275 = vmatprep.subr.mxu0 0.0
    %1276 = vmatpush2.msra.mxu0 0.0
    %1277 = vmatprep.mubr.f32.mxu0 0.0
    %1278 = vmatmul.mubr.f32.gmra.mxu0 %v1211
    %v1279 = vpop.f32.mrf.mxu0
    %v1280 = vadd.f32 0.0, %v1279
    %v1281 = vpop.f32.mrf.mxu0
    %1282 = vdwg.mxu0
    %1283 = vrot.lane.b32.xlu0 %v266, 104
    %v1284 = vpop.permute.xlu0 %1283
    %1285 = vrot.lane.b32.xlu0 %v266, 72
    %v1286 = vpop.permute.xlu0 %1285
    %v1287 = vsel %vm277, %v1284, 0
    %v1289 = vsel %vm277, %v1286, 0
    %1291 = vmatprep.subr.mxu0 0.0
    %1292 = vmatpush1.xpose.msra.mxu0 0.0
    %1293 = vmatprep.subr.mxu0 0.0
    %1294 = vmatpush1.xpose.msra.mxu0 0.0
    %1295 = vmatprep.subr.mxu0 0.0
    %1296 = vmatpush1.xpose.msra.mxu0 0.0
    %1297 = vmatprep.subr.mxu0 0.0
    %1298 = vmatpush1.xpose.msra.mxu0 0.0
    %1299 = vmatprep.subr.mxu0 0.0
    %1300 = vmatpush1.xpose.msra.mxu0 0.0
    %1301 = vmatprep.subr.mxu0 0.0
    %1302 = vmatpush1.xpose.msra.mxu0 0.0
    %1303 = vmatprep.subr.mxu0 0.0
    %1304 = vmatpush1.xpose.msra.mxu0 0.0
    %1305 = vmatprep.subr.mxu0 0.0
    %1306 = vmatpush1.xpose.msra.mxu0 0.0
    %1307 = vmatprep.subr.mxu0 0.0
    %1308 = vmatpush1.xpose.msra.mxu0 0.0
    %1309 = vmatprep.subr.mxu0 0.0
    %1310 = vmatpush1.xpose.msra.mxu0 0.0
    %1311 = vmatprep.subr.mxu0 0.0
    %1312 = vmatpush1.xpose.msra.mxu0 0.0
    %1313 = vmatprep.subr.mxu0 0.0
    %1314 = vmatpush1.xpose.msra.mxu0 0.0
    %1315 = vmatprep.subr.mxu0 0.0
    %1316 = vmatpush1.xpose.msra.mxu0 0.0
    %1317 = vmatprep.subr.mxu0 0.0
    %1318 = vmatpush1.xpose.msra.mxu0 0.0
    %1319 = vmatprep.subr.mxu0 0.0
    %1320 = vmatpush1.xpose.msra.mxu0 0.0
    %1321 = vmatprep.subr.mxu0 0.0
    %1322 = vmatpush1.xpose.msra.mxu0 %v1289
    %1323 = vmatprep.subr.mxu0 0.0
    %1324 = vmatpush2.xpose.msra.mxu0 0.0
    %1325 = vmatprep.subr.mxu0 0.0
    %1326 = vmatpush2.xpose.msra.mxu0 0.0
    %1327 = vmatprep.subr.mxu0 0.0
    %1328 = vmatpush2.xpose.msra.mxu0 0.0
    %1329 = vmatprep.subr.mxu0 0.0
    %1330 = vmatpush2.xpose.msra.mxu0 0.0
    %1331 = vmatprep.subr.mxu0 0.0
    %1332 = vmatpush2.xpose.msra.mxu0 0.0
    %1333 = vmatprep.subr.mxu0 0.0
    %1334 = vmatpush2.xpose.msra.mxu0 0.0
    %1335 = vmatprep.subr.mxu0 0.0
    %1336 = vmatpush2.xpose.msra.mxu0 0.0
    %1337 = vmatprep.subr.mxu0 0.0
    %1338 = vmatpush2.xpose.msra.mxu0 0.0
    %1339 = vmatprep.subr.mxu0 0.0
    %1340 = vmatpush2.xpose.msra.mxu0 0.0
    %1341 = vmatprep.subr.mxu0 0.0
    %1342 = vmatpush2.xpose.msra.mxu0 0.0
    %1343 = vmatprep.subr.mxu0 0.0
    %1344 = vmatpush2.xpose.msra.mxu0 0.0
    %1345 = vmatprep.subr.mxu0 0.0
    %1346 = vmatpush2.xpose.msra.mxu0 0.0
    %1347 = vmatprep.subr.mxu0 0.0
    %1348 = vmatpush2.xpose.msra.mxu0 0.0
    %1349 = vmatprep.subr.mxu0 0.0
    %1350 = vmatpush2.xpose.msra.mxu0 0.0
    %1351 = vmatprep.subr.mxu0 0.0
    %1352 = vmatpush2.xpose.msra.mxu0 0.0
    %1353 = vmatprep.subr.mxu0 0.0
    %1354 = vmatpush2.xpose.msra.mxu0 0.0
    %1355 = vmatprep.mubr.f32.mxu0 0.0
    %1356 = vmatmul.mubr.f32.gmra.mxu0 %v1287
    %v1357 = vpop.f32.mrf.mxu0
    %v1358 = vadd.f32 0.0, %v1357
    %v1359 = vpop.f32.mrf.mxu0
    %1360 = vdwg.mxu0
    %v1361 = vmul.f32 %v1358, 0.35355338
    %v1362 = vadd.f32 %v1361, %v356
    %v1363 = vsel %vm277, %v1362, -inf
    %1364 = vmax.xlane.f32.xlu0 %v1363
    %v1365 = vpop.xlane.xlu0 %1364
    %v1366 = vsub.f32 %v1362, %v1365
    %v1367 = vmul.f32 %v1366, 1.442695
    %v1368 = vpow.pop %v1367
    %v1369 = vsel %vm277, %v1368, 0.0
    %1370 = vadd.xlane.f32.xlu0 %v1369
    %v1371 = vpop.xlane.xlu0 %1370
    %v1372 = vrcp.pop %v1371
    %v1373 = vmul.f32 %v1368, %v1372
    %1374 = vrot.lane.b32.xlu0 %v266, 40
    %v1375 = vpop.permute.xlu0 %1374
    %v1378 = vsel %vm277, %v1373, 0
    %1380 = vmatprep.subr.mxu0 0.0
    %1381 = vmatpush1.msra.mxu0 0.0
    %1382 = vmatprep.subr.mxu0 0.0
    %1383 = vmatpush1.msra.mxu0 0.0
    %1384 = vmatprep.subr.mxu0 0.0
    %1385 = vmatpush1.msra.mxu0 0.0
    %1386 = vmatprep.subr.mxu0 0.0
    %1387 = vmatpush1.msra.mxu0 0.0
    %1388 = vmatprep.subr.mxu0 0.0
    %1389 = vmatpush1.msra.mxu0 0.0
    %1390 = vmatprep.subr.mxu0 0.0
    %1391 = vmatpush1.msra.mxu0 0.0
    %1392 = vmatprep.subr.mxu0 0.0
    %1393 = vmatpush1.msra.mxu0 0.0
    %1394 = vmatprep.subr.mxu0 0.0
    %1395 = vmatpush1.msra.mxu0 0.0
    %1396 = vmatprep.subr.mxu0 0.0
    %1397 = vmatpush1.msra.mxu0 0.0
    %1398 = vmatprep.subr.mxu0 0.0
    %1399 = vmatpush1.msra.mxu0 0.0
    %1400 = vmatprep.subr.mxu0 0.0
    %1401 = vmatpush1.msra.mxu0 0.0
    %1402 = vmatprep.subr.mxu0 0.0
    %1403 = vmatpush1.msra.mxu0 0.0
    %1404 = vmatprep.subr.mxu0 0.0
    %1405 = vmatpush1.msra.mxu0 0.0
    %1406 = vmatprep.subr.mxu0 0.0
    %1407 = vmatpush1.msra.mxu0 0.0
    %1408 = vmatprep.subr.mxu0 0.0
    %1409 = vmatpush1.msra.mxu0 0.0
    %1410 = vmatprep.subr.mxu0 0.0
    %1411 = vmatpush1.msra.mxu0 %v1375
    %1412 = vmatprep.subr.mxu0 0.0
    %1413 = vmatpush2.msra.mxu0 0.0
    %1414 = vmatprep.subr.mxu0 0.0
    %1415 = vmatpush2.msra.mxu0 0.0
    %1416 = vmatprep.subr.mxu0 0.0
    %1417 = vmatpush2.msra.mxu0 0.0
    %1418 = vmatprep.subr.mxu0 0.0
    %1419 = vmatpush2.msra.mxu0 0.0
    %1420 = vmatprep.subr.mxu0 0.0
    %1421 = vmatpush2.msra.mxu0 0.0
    %1422 = vmatprep.subr.mxu0 0.0
    %1423 = vmatpush2.msra.mxu0 0.0
    %1424 = vmatprep.subr.mxu0 0.0
    %1425 = vmatpush2.msra.mxu0 0.0
    %1426 = vmatprep.subr.mxu0 0.0
    %1427 = vmatpush2.msra.mxu0 0.0
    %1428 = vmatprep.subr.mxu0 0.0
    %1429 = vmatpush2.msra.mxu0 0.0
    %1430 = vmatprep.subr.mxu0 0.0
    %1431 = vmatpush2.msra.mxu0 0.0
    %1432 = vmatprep.subr.mxu0 0.0
    %1433 = vmatpush2.msra.mxu0 0.0
    %1434 = vmatprep.subr.mxu0 0.0
    %1435 = vmatpush2.msra.mxu0 0.0
    %1436 = vmatprep.subr.mxu0 0.0
    %1437 = vmatpush2.msra.mxu0 0.0
    %1438 = vmatprep.subr.mxu0 0.0
    %1439 = vmatpush2.msra.mxu0 0.0
    %1440 = vmatprep.subr.mxu0 0.0
    %1441 = vmatpush2.msra.mxu0 0.0
    %1442 = vmatprep.subr.mxu0 0.0
    %1443 = vmatpush2.msra.mxu0 0.0
    %1444 = vmatprep.mubr.f32.mxu0 0.0
    %1445 = vmatmul.mubr.f32.gmra.mxu0 %v1378
    %v1446 = vpop.f32.mrf.mxu0
    %v1447 = vadd.f32 0.0, %v1446
    %v1448 = vpop.f32.mrf.mxu0
    %1449 = vdwg.mxu0
    %1450 = vrot.lane.b32.xlu0 %v271, 104
    %v1451 = vpop.permute.xlu0 %1450
    %1452 = vrot.lane.b32.xlu0 %v271, 72
    %v1453 = vpop.permute.xlu0 %1452
    %v1454 = vsel %vm277, %v1451, 0
    %v1456 = vsel %vm277, %v1453, 0
    %1458 = vmatprep.subr.mxu0 0.0
    %1459 = vmatpush1.xpose.msra.mxu0 0.0
    %1460 = vmatprep.subr.mxu0 0.0
    %1461 = vmatpush1.xpose.msra.mxu0 0.0
    %1462 = vmatprep.subr.mxu0 0.0
    %1463 = vmatpush1.xpose.msra.mxu0 0.0
    %1464 = vmatprep.subr.mxu0 0.0
    %1465 = vmatpush1.xpose.msra.mxu0 0.0
    %1466 = vmatprep.subr.mxu0 0.0
    %1467 = vmatpush1.xpose.msra.mxu0 0.0
    %1468 = vmatprep.subr.mxu0 0.0
    %1469 = vmatpush1.xpose.msra.mxu0 0.0
    %1470 = vmatprep.subr.mxu0 0.0
    %1471 = vmatpush1.xpose.msra.mxu0 0.0
    %1472 = vmatprep.subr.mxu0 0.0
    %1473 = vmatpush1.xpose.msra.mxu0 0.0
    %1474 = vmatprep.subr.mxu0 0.0
    %1475 = vmatpush1.xpose.msra.mxu0 0.0
    %1476 = vmatprep.subr.mxu0 0.0
    %1477 = vmatpush1.xpose.msra.mxu0 0.0
    %1478 = vmatprep.subr.mxu0 0.0
    %1479 = vmatpush1.xpose.msra.mxu0 0.0
    %1480 = vmatprep.subr.mxu0 0.0
    %1481 = vmatpush1.xpose.msra.mxu0 0.0
    %1482 = vmatprep.subr.mxu0 0.0
    %1483 = vmatpush1.xpose.msra.mxu0 0.0
    %1484 = vmatprep.subr.mxu0 0.0
    %1485 = vmatpush1.xpose.msra.mxu0 0.0
    %1486 = vmatprep.subr.mxu0 0.0
    %1487 = vmatpush1.xpose.msra.mxu0 0.0
    %1488 = vmatprep.subr.mxu0 0.0
    %1489 = vmatpush1.xpose.msra.mxu0 %v1456
    %1490 = vmatprep.subr.mxu0 0.0
    %1491 = vmatpush2.xpose.msra.mxu0 0.0
    %1492 = vmatprep.subr.mxu0 0.0
    %1493 = vmatpush2.xpose.msra.mxu0 0.0
    %1494 = vmatprep.subr.mxu0 0.0
    %1495 = vmatpush2.xpose.msra.mxu0 0.0
    %1496 = vmatprep.subr.mxu0 0.0
    %1497 = vmatpush2.xpose.msra.mxu0 0.0
    %1498 = vmatprep.subr.mxu0 0.0
    %1499 = vmatpush2.xpose.msra.mxu0 0.0
    %1500 = vmatprep.subr.mxu0 0.0
    %1501 = vmatpush2.xpose.msra.mxu0 0.0
    %1502 = vmatprep.subr.mxu0 0.0
    %1503 = vmatpush2.xpose.msra.mxu0 0.0
    %1504 = vmatprep.subr.mxu0 0.0
    %1505 = vmatpush2.xpose.msra.mxu0 0.0
    %1506 = vmatprep.subr.mxu0 0.0
    %1507 = vmatpush2.xpose.msra.mxu0 0.0
    %1508 = vmatprep.subr.mxu0 0.0
    %1509 = vmatpush2.xpose.msra.mxu0 0.0
    %1510 = vmatprep.subr.mxu0 0.0
    %1511 = vmatpush2.xpose.msra.mxu0 0.0
    %1512 = vmatprep.subr.mxu0 0.0
    %1513 = vmatpush2.xpose.msra.mxu0 0.0
    %1514 = vmatprep.subr.mxu0 0.0
    %1515 = vmatpush2.xpose.msra.mxu0 0.0
    %1516 = vmatprep.subr.mxu0 0.0
    %1517 = vmatpush2.xpose.msra.mxu0 0.0
    %1518 = vmatprep.subr.mxu0 0.0
    %1519 = vmatpush2.xpose.msra.mxu0 0.0
    %1520 = vmatprep.subr.mxu0 0.0
    %1521 = vmatpush2.xpose.msra.mxu0 0.0
    %1522 = vmatprep.mubr.f32.mxu0 0.0
    %1523 = vmatmul.mubr.f32.gmra.mxu0 %v1454
    %v1524 = vpop.f32.mrf.mxu0
    %v1525 = vadd.f32 0.0, %v1524
    %v1526 = vpop.f32.mrf.mxu0
    %1527 = vdwg.mxu0
    %v1528 = vmul.f32 %v1525, 0.35355338
    %v1529 = vadd.f32 %v1528, %v526
    %v1530 = vsel %vm277, %v1529, -inf
    %1531 = vmax.xlane.f32.xlu0 %v1530
    %v1532 = vpop.xlane.xlu0 %1531
    %v1533 = vsub.f32 %v1529, %v1532
    %v1534 = vmul.f32 %v1533, 1.442695
    %v1535 = vpow.pop %v1534
    %v1536 = vsel %vm277, %v1535, 0.0
    %1537 = vadd.xlane.f32.xlu0 %v1536
    %v1538 = vpop.xlane.xlu0 %1537
    %v1539 = vrcp.pop %v1538
    %v1540 = vmul.f32 %v1535, %v1539
    %1541 = vrot.lane.b32.xlu0 %v271, 40
    %v1542 = vpop.permute.xlu0 %1541
    %v1545 = vsel %vm277, %v1540, 0
    %1547 = vmatprep.subr.mxu0 0.0
    %1548 = vmatpush1.msra.mxu0 0.0
    %1549 = vmatprep.subr.mxu0 0.0
    %1550 = vmatpush1.msra.mxu0 0.0
    %1551 = vmatprep.subr.mxu0 0.0
    %1552 = vmatpush1.msra.mxu0 0.0
    %1553 = vmatprep.subr.mxu0 0.0
    %1554 = vmatpush1.msra.mxu0 0.0
    %1555 = vmatprep.subr.mxu0 0.0
    %1556 = vmatpush1.msra.mxu0 0.0
    %1557 = vmatprep.subr.mxu0 0.0
    %1558 = vmatpush1.msra.mxu0 0.0
    %1559 = vmatprep.subr.mxu0 0.0
    %1560 = vmatpush1.msra.mxu0 0.0
    %1561 = vmatprep.subr.mxu0 0.0
    %1562 = vmatpush1.msra.mxu0 0.0
    %1563 = vmatprep.subr.mxu0 0.0
    %1564 = vmatpush1.msra.mxu0 0.0
    %1565 = vmatprep.subr.mxu0 0.0
    %1566 = vmatpush1.msra.mxu0 0.0
    %1567 = vmatprep.subr.mxu0 0.0
    %1568 = vmatpush1.msra.mxu0 0.0
    %1569 = vmatprep.subr.mxu0 0.0
    %1570 = vmatpush1.msra.mxu0 0.0
    %1571 = vmatprep.subr.mxu0 0.0
    %1572 = vmatpush1.msra.mxu0 0.0
    %1573 = vmatprep.subr.mxu0 0.0
    %1574 = vmatpush1.msra.mxu0 0.0
    %1575 = vmatprep.subr.mxu0 0.0
    %1576 = vmatpush1.msra.mxu0 0.0
    %1577 = vmatprep.subr.mxu0 0.0
    %1578 = vmatpush1.msra.mxu0 %v1542
    %1579 = vmatprep.subr.mxu0 0.0
    %1580 = vmatpush2.msra.mxu0 0.0
    %1581 = vmatprep.subr.mxu0 0.0
    %1582 = vmatpush2.msra.mxu0 0.0
    %1583 = vmatprep.subr.mxu0 0.0
    %1584 = vmatpush2.msra.mxu0 0.0
    %1585 = vmatprep.subr.mxu0 0.0
    %1586 = vmatpush2.msra.mxu0 0.0
    %1587 = vmatprep.subr.mxu0 0.0
    %1588 = vmatpush2.msra.mxu0 0.0
    %1589 = vmatprep.subr.mxu0 0.0
    %1590 = vmatpush2.msra.mxu0 0.0
    %1591 = vmatprep.subr.mxu0 0.0
    %1592 = vmatpush2.msra.mxu0 0.0
    %1593 = vmatprep.subr.mxu0 0.0
    %1594 = vmatpush2.msra.mxu0 0.0
    %1595 = vmatprep.subr.mxu0 0.0
    %1596 = vmatpush2.msra.mxu0 0.0
    %1597 = vmatprep.subr.mxu0 0.0
    %1598 = vmatpush2.msra.mxu0 0.0
    %1599 = vmatprep.subr.mxu0 0.0
    %1600 = vmatpush2.msra.mxu0 0.0
    %1601 = vmatprep.subr.mxu0 0.0
    %1602 = vmatpush2.msra.mxu0 0.0
    %1603 = vmatprep.subr.mxu0 0.0
    %1604 = vmatpush2.msra.mxu0 0.0
    %1605 = vmatprep.subr.mxu0 0.0
    %1606 = vmatpush2.msra.mxu0 0.0
    %1607 = vmatprep.subr.mxu0 0.0
    %1608 = vmatpush2.msra.mxu0 0.0
    %1609 = vmatprep.subr.mxu0 0.0
    %1610 = vmatpush2.msra.mxu0 0.0
    %1611 = vmatprep.mubr.f32.mxu0 0.0
    %1612 = vmatmul.mubr.f32.gmra.mxu0 %v1545
    %v1613 = vpop.f32.mrf.mxu0
    %v1614 = vadd.f32 0.0, %v1613
    %v1615 = vpop.f32.mrf.mxu0
    %1616 = vdwg.mxu0
    %1619 = vrot.lane.b32.xlu0 %v779, 8
    %v1620 = vpop.permute.xlu0 %1619
    %1621 = vrot.lane.b32.xlu0 %v946, 8
    %v1622 = vpop.permute.xlu0 %1621
    %1627 = vrot.lane.b32.xlu0 %v1113, 16
    %v1628 = vpop.permute.xlu0 %1627
    %1629 = vrot.lane.b32.xlu0 %v1280, 16
    %v1630 = vpop.permute.xlu0 %1629
    %1635 = vrot.lane.b32.xlu0 %v1447, 24
    %v1636 = vpop.permute.xlu0 %1635
    %1637 = vrot.lane.b32.xlu0 %v1614, 24
    %v1638 = vpop.permute.xlu0 %1637
    %v1641 = vsel %vm277, %v442, %v1620
    %v1642 = vsel %vm277, %v612, %v1622
    %vm1643 = vcmask 130048
    %v1644 = vsel %vm1643, %v1641, %v1628
    %v1645 = vsel %vm1643, %v1642, %v1630
    %vm1646 = vcmask 195584
    %v1647 = vsel %vm1646, %v1644, %v1636
    %v1648 = vsel %vm1646, %v1645, %v1638
    %v1649 = vld [vmem:[%s17] sm:$0xff]
    %v1650 = vld [vmem:[%s17 + $0x8] sm:$0xff]
    %v1651 = vld [vmem:[%s17 + $0x10] sm:$0xff]
    %v1652 = vld [vmem:[%s17 + $0x18] sm:$0xff]
    %v1653 = vld [vmem:[%s19] sm:$0x1]
    %v1655 = vlaneseq
    %v1656 = vshrl.u32 %v1655, 7
    %v1657 = vsub.s32 0, %v1656
    %v1658 = vrot.slane %v1653, %v1657
    %v1661 = vsel %vm135, %v1647, 0
    %v1664 = vsel %vm135, %v1648, 0
    %1666 = vmatprep.subr.mxu0 0.0
    %1667 = vmatpush1.msra.mxu0 0.0
    %1668 = vmatprep.subr.mxu0 0.0
    %1669 = vmatpush1.msra.mxu0 0.0
    %1670 = vmatprep.subr.mxu0 0.0
    %1671 = vmatpush1.msra.mxu0 0.0
    %1672 = vmatprep.subr.mxu0 0.0
    %1673 = vmatpush1.msra.mxu0 0.0
    %1674 = vmatprep.subr.mxu0 0.0
    %1675 = vmatpush1.msra.mxu0 0.0
    %1676 = vmatprep.subr.mxu0 0.0
    %1677 = vmatpush1.msra.mxu0 0.0
    %1678 = vmatprep.subr.mxu0 0.0
    %1679 = vmatpush1.msra.mxu0 0.0
    %1680 = vmatprep.subr.mxu0 0.0
    %1681 = vmatpush1.msra.mxu0 0.0
    %1682 = vmatprep.subr.mxu0 0.0
    %1683 = vmatpush1.msra.mxu0 0.0
    %1684 = vmatprep.subr.mxu0 0.0
    %1685 = vmatpush1.msra.mxu0 0.0
    %1686 = vmatprep.subr.mxu0 0.0
    %1687 = vmatpush1.msra.mxu0 0.0
    %1688 = vmatprep.subr.mxu0 0.0
    %1689 = vmatpush1.msra.mxu0 0.0
    %1690 = vmatprep.subr.mxu0 0.0
    %1691 = vmatpush1.msra.mxu0 %v1652
    %1692 = vmatprep.subr.mxu0 0.0
    %1693 = vmatpush1.msra.mxu0 %v1651
    %1694 = vmatprep.subr.mxu0 0.0
    %1695 = vmatpush1.msra.mxu0 %v1650
    %1696 = vmatprep.subr.mxu0 0.0
    %1697 = vmatpush1.msra.mxu0 %v1649
    %1698 = vmatprep.subr.mxu0 0.0
    %1699 = vmatpush2.msra.mxu0 0.0
    %1700 = vmatprep.subr.mxu0 0.0
    %1701 = vmatpush2.msra.mxu0 0.0
    %1702 = vmatprep.subr.mxu0 0.0
    %1703 = vmatpush2.msra.mxu0 0.0
    %1704 = vmatprep.subr.mxu0 0.0
    %1705 = vmatpush2.msra.mxu0 0.0
    %1706 = vmatprep.subr.mxu0 0.0
    %1707 = vmatpush2.msra.mxu0 0.0
    %1708 = vmatprep.subr.mxu0 0.0
    %1709 = vmatpush2.msra.mxu0 0.0
    %1710 = vmatprep.subr.mxu0 0.0
    %1711 = vmatpush2.msra.mxu0 0.0
    %1712 = vmatprep.subr.mxu0 0.0
    %1713 = vmatpush2.msra.mxu0 0.0
    %1714 = vmatprep.subr.mxu0 0.0
    %1715 = vmatpush2.msra.mxu0 0.0
    %1716 = vmatprep.subr.mxu0 0.0
    %1717 = vmatpush2.msra.mxu0 0.0
    %1718 = vmatprep.subr.mxu0 0.0
    %1719 = vmatpush2.msra.mxu0 0.0
    %1720 = vmatprep.subr.mxu0 0.0
    %1721 = vmatpush2.msra.mxu0 0.0
    %1722 = vmatprep.subr.mxu0 0.0
    %1723 = vmatpush2.msra.mxu0 0.0
    %1724 = vmatprep.subr.mxu0 0.0
    %1725 = vmatpush2.msra.mxu0 0.0
    %1726 = vmatprep.subr.mxu0 0.0
    %1727 = vmatpush2.msra.mxu0 0.0
    %1728 = vmatprep.subr.mxu0 0.0
    %1729 = vmatpush2.msra.mxu0 0.0
    %1730 = vmatprep.mubr.f32.mxu0 0.0
    %1731 = vmatmul.mubr.f32.gmra.mxu0 %v1661
    %v1732 = vpop.f32.mrf.mxu0
    %v1733 = vadd.f32 %v1658, %v1732
    %v1734 = vpop.f32.mrf.mxu0
    %1735 = vmatprep.mubr.f32.mxu0 0.0
    %1736 = vmatmul.mubr.f32.gmra.mxu0 %v1664
    %v1737 = vpop.f32.mrf.mxu0
    %v1738 = vadd.f32 %v1658, %v1737
    %v1739 = vpop.f32.mrf.mxu0
    %1740 = vdwg.mxu0
    %v1741 = vadd.f32 %v177, %v1733
    %v1742 = vadd.f32 %v178, %v1738
    %v1743 = vld [vmem:[%s21] sm:$0x1]
    %v1744 = vld [vmem:[%s23] sm:$0x1]
    %v1745 = vsel %vm135, %v1741, 0.0
    %1746 = vadd.xlane.f32.xlu0 %v1745
    %v1747 = vpop.xlane.xlu0 %1746
    %v1748 = vsel %vm135, %v1742, 0.0
    %1749 = vadd.xlane.f32.xlu0 %v1748
    %v1750 = vpop.xlane.xlu0 %1749
    %v1751 = vmul.f32 %v1747, %v142
    %v1752 = vmul.f32 %v1750, %v142
    %v1753 = vsub.f32 %v1741, %v1751
    %v1754 = vsub.f32 %v1742, %v1752
    %v1755 = vmul.f32 %v1753, %v1753
    %v1756 = vmul.f32 %v1754, %v1754
    %v1757 = vsel %vm135, %v1755, 0.0
    %1758 = vadd.xlane.f32.xlu0 %v1757
    %v1759 = vpop.xlane.xlu0 %1758
    %v1760 = vsel %vm135, %v1756, 0.0
    %1761 = vadd.xlane.f32.xlu0 %v1760
    %v1762 = vpop.xlane.xlu0 %1761
    %v1763 = vmul.f32 %v1759, %v142
    %v1764 = vmul.f32 %v1762, %v142
    %v1765 = vadd.f32 %v1763, 1e-12
    %v1766 = vadd.f32 %v1764, 1e-12
    %v1767 = vrsqrt.pop %v1765
    %v1768 = vrsqrt.pop %v1766
    %v1769 = vmul.f32 %v1753, %v1767
    %v1770 = vmul.f32 %v1754, %v1768
    %v1772 = vlaneseq
    %v1773 = vshrl.u32 %v1772, 7
    %v1774 = vsub.s32 0, %v1773
    %v1775 = vrot.slane %v1743, %v1774
    %v1777 = vmul.f32 %v1769, %v1775
    %v1778 = vmul.f32 %v1770, %v1775
    %v1780 = vlaneseq
    %v1781 = vshrl.u32 %v1780, 7
    %v1782 = vsub.s32 0, %v1781
    %v1783 = vrot.slane %v1744, %v1782
    %v1785 = vadd.f32 %v1777, %v1783
    %v1786 = vadd.f32 %v1778, %v1783
    %v1787 = vld [vmem:[%s25] sm:$0xff]
    %v1788 = vld [vmem:[%s25 + $0x8] sm:$0xff]
    %v1789 = vld [vmem:[%s25 + $0x10] sm:$0xff]
    %v1790 = vld [vmem:[%s25 + $0x18] sm:$0xff]
    %v1791 = vld [vmem:[%s27] sm:$0x1]
    %v1793 = vlaneseq
    %v1794 = vshrl.u32 %v1793, 7
    %v1795 = vsub.s32 0, %v1794
    %v1796 = vrot.slane %v1791, %v1795
    %v1799 = vsel %vm135, %v1785, 0
    %v1802 = vsel %vm135, %v1786, 0
    %1804 = vmatprep.subr.mxu0 0.0
    %1805 = vmatpush1.msra.mxu0 0.0
    %1806 = vmatprep.subr.mxu0 0.0
    %1807 = vmatpush1.msra.mxu0 0.0
    %1808 = vmatprep.subr.mxu0 0.0
    %1809 = vmatpush1.msra.mxu0 0.0
    %1810 = vmatprep.subr.mxu0 0.0
    %1811 = vmatpush1.msra.mxu0 0.0
    %1812 = vmatprep.subr.mxu0 0.0
    %1813 = vmatpush1.msra.mxu0 0.0
    %1814 = vmatprep.subr.mxu0 0.0
    %1815 = vmatpush1.msra.mxu0 0.0
    %1816 = vmatprep.subr.mxu0 0.0
    %1817 = vmatpush1.msra.mxu0 0.0
    %1818 = vmatprep.subr.mxu0 0.0
    %1819 = vmatpush1.msra.mxu0 0.0
    %1820 = vmatprep.subr.mxu0 0.0
    %1821 = vmatpush1.msra.mxu0 0.0
    %1822 = vmatprep.subr.mxu0 0.0
    %1823 = vmatpush1.msra.mxu0 0.0
    %1824 = vmatprep.subr.mxu0 0.0
    %1825 = vmatpush1.msra.mxu0 0.0
    %1826 = vmatprep.subr.mxu0 0.0
    %1827 = vmatpush1.msra.mxu0 0.0
    %1828 = vmatprep.subr.mxu0 0.0
    %1829 = vmatpush1.msra.mxu0 %v1790
    %1830 = vmatprep.subr.mxu0 0.0
    %1831 = vmatpush1.msra.mxu0 %v1789
    %1832 = vmatprep.subr.mxu0 0.0
    %1833 = vmatpush1.msra.mxu0 %v1788
    %1834 = vmatprep.subr.mxu0 0.0
    %1835 = vmatpush1.msra.mxu0 %v1787
    %1836 = vmatprep.subr.mxu0 0.0
    %1837 = vmatpush2.msra.mxu0 0.0
    %1838 = vmatprep.subr.mxu0 0.0
    %1839 = vmatpush2.msra.mxu0 0.0
    %1840 = vmatprep.subr.mxu0 0.0
    %1841 = vmatpush2.msra.mxu0 0.0
    %1842 = vmatprep.subr.mxu0 0.0
    %1843 = vmatpush2.msra.mxu0 0.0
    %1844 = vmatprep.subr.mxu0 0.0
    %1845 = vmatpush2.msra.mxu0 0.0
    %1846 = vmatprep.subr.mxu0 0.0
    %1847 = vmatpush2.msra.mxu0 0.0
    %1848 = vmatprep.subr.mxu0 0.0
    %1849 = vmatpush2.msra.mxu0 0.0
    %1850 = vmatprep.subr.mxu0 0.0
    %1851 = vmatpush2.msra.mxu0 0.0
    %1852 = vmatprep.subr.mxu0 0.0
    %1853 = vmatpush2.msra.mxu0 0.0
    %1854 = vmatprep.subr.mxu0 0.0
    %1855 = vmatpush2.msra.mxu0 0.0
    %1856 = vmatprep.subr.mxu0 0.0
    %1857 = vmatpush2.msra.mxu0 0.0
    %1858 = vmatprep.subr.mxu0 0.0
    %1859 = vmatpush2.msra.mxu0 0.0
    %1860 = vmatprep.subr.mxu0 0.0
    %1861 = vmatpush2.msra.mxu0 0.0
    %1862 = vmatprep.subr.mxu0 0.0
    %1863 = vmatpush2.msra.mxu0 0.0
    %1864 = vmatprep.subr.mxu0 0.0
    %1865 = vmatpush2.msra.mxu0 0.0
    %1866 = vmatprep.subr.mxu0 0.0
    %1867 = vmatpush2.msra.mxu0 0.0
    %1868 = vmatprep.mubr.f32.mxu0 0.0
    %1869 = vmatmul.mubr.f32.gmra.mxu0 %v1799
    %v1870 = vpop.f32.mrf.mxu0
    %v1871 = vadd.f32 %v1796, %v1870
    %v1872 = vpop.f32.mrf.mxu0
    %1873 = vmatprep.mubr.f32.mxu0 0.0
    %1874 = vmatmul.mubr.f32.gmra.mxu0 %v1802
    %v1875 = vpop.f32.mrf.mxu0
    %v1876 = vadd.f32 %v1796, %v1875
    %v1877 = vpop.f32.mrf.mxu0
    %1878 = vdwg.mxu0
    %v1879 = vmul.f32 %v1871, 0.5
    %v1880 = vmul.f32 %v1876, 0.5
    %v1881 = vmul.f32 %v1871, 0.044715
    %v1882 = vmul.f32 %v1876, 0.044715
    %v1883 = vmul.f32 %v1881, %v1871
    %v1884 = vmul.f32 %v1882, %v1876
    %v1885 = vmul.f32 %v1883, %v1871
    %v1886 = vmul.f32 %v1884, %v1876
    %v1887 = vadd.f32 %v1871, %v1885
    %v1888 = vadd.f32 %v1876, %v1886
    %v1889 = vmul.f32 %v1887, 0.7978846
    %v1890 = vmul.f32 %v1888, 0.7978846
    %v1891 = vtanh.pop %v1889
    %v1892 = vtanh.pop %v1890
    %v1893 = vadd.f32 %v1891, 1.0
    %v1894 = vadd.f32 %v1892, 1.0
    %v1895 = vmul.f32 %v1879, %v1893
    %v1896 = vmul.f32 %v1880, %v1894
    %v1897 = vld [vmem:[%s29] sm:$0xff]
    %v1898 = vld [vmem:[%s29 + $0x8] sm:$0xff]
    %v1899 = vld [vmem:[%s29 + $0x10] sm:$0xff]
    %v1900 = vld [vmem:[%s29 + $0x18] sm:$0xff]
    %v1901 = vld [vmem:[%s29 + $0x20] sm:$0xff]
    %v1902 = vld [vmem:[%s29 + $0x28] sm:$0xff]
    %v1903 = vld [vmem:[%s29 + $0x30] sm:$0xff]
    %v1904 = vld [vmem:[%s29 + $0x38] sm:$0xff]
    %v1905 = vld [vmem:[%s31] sm:$0x1]
    %v1907 = vlaneseq
    %v1908 = vshrl.u32 %v1907, 7
    %v1909 = vsub.s32 0, %v1908
    %v1910 = vrot.slane %v1905, %v1909
    %vm1912 = vcmask 523264
    %v1914 = vsel %vm1912, %v1895, 0
    %v1917 = vsel %vm1912, %v1896, 0
    %1919 = vmatprep.subr.mxu0 0.0
    %1920 = vmatpush1.msra.mxu0 0.0
    %1921 = vmatprep.subr.mxu0 0.0
    %1922 = vmatpush1.msra.mxu0 0.0
    %1923 = vmatprep.subr.mxu0 0.0
    %1924 = vmatpush1.msra.mxu0 0.0
    %1925 = vmatprep.subr.mxu0 0.0
    %1926 = vmatpush1.msra.mxu0 0.0
    %1927 = vmatprep.subr.mxu0 0.0
    %1928 = vmatpush1.msra.mxu0 0.0
    %1929 = vmatprep.subr.mxu0 0.0
    %1930 = vmatpush1.msra.mxu0 0.0
    %1931 = vmatprep.subr.mxu0 0.0
    %1932 = vmatpush1.msra.mxu0 0.0
    %1933 = vmatprep.subr.mxu0 0.0
    %1934 = vmatpush1.msra.mxu0 0.0
    %1935 = vmatprep.subr.mxu0 0.0
    %1936 = vmatpush1.msra.mxu0 %v1904
    %1937 = vmatprep.subr.mxu0 0.0
    %1938 = vmatpush1.msra.mxu0 %v1903
    %1939 = vmatprep.subr.mxu0 0.0
    %1940 = vmatpush1.msra.mxu0 %v1902
    %1941 = vmatprep.subr.mxu0 0.0
    %1942 = vmatpush1.msra.mxu0 %v1901
    %1943 = vmatprep.subr.mxu0 0.0
    %1944 = vmatpush1.msra.mxu0 %v1900
    %1945 = vmatprep.subr.mxu0 0.0
    %1946 = vmatpush1.msra.mxu0 %v1899
    %1947 = vmatprep.subr.mxu0 0.0
    %1948 = vmatpush1.msra.mxu0 %v1898
    %1949 = vmatprep.subr.mxu0 0.0
    %1950 = vmatpush1.msra.mxu0 %v1897
    %1951 = vmatprep.subr.mxu0 0.0
    %1952 = vmatpush2.msra.mxu0 0.0
    %1953 = vmatprep.subr.mxu0 0.0
    %1954 = vmatpush2.msra.mxu0 0.0
    %1955 = vmatprep.subr.mxu0 0.0
    %1956 = vmatpush2.msra.mxu0 0.0
    %1957 = vmatprep.subr.mxu0 0.0
    %1958 = vmatpush2.msra.mxu0 0.0
    %1959 = vmatprep.subr.mxu0 0.0
    %1960 = vmatpush2.msra.mxu0 0.0
    %1961 = vmatprep.subr.mxu0 0.0
    %1962 = vmatpush2.msra.mxu0 0.0
    %1963 = vmatprep.subr.mxu0 0.0
    %1964 = vmatpush2.msra.mxu0 0.0
    %1965 = vmatprep.subr.mxu0 0.0
    %1966 = vmatpush2.msra.mxu0 0.0
    %1967 = vmatprep.subr.mxu0 0.0
    %1968 = vmatpush2.msra.mxu0 0.0
    %1969 = vmatprep.subr.mxu0 0.0
    %1970 = vmatpush2.msra.mxu0 0.0
    %1971 = vmatprep.subr.mxu0 0.0
    %1972 = vmatpush2.msra.mxu0 0.0
    %1973 = vmatprep.subr.mxu0 0.0
    %1974 = vmatpush2.msra.mxu0 0.0
    %1975 = vmatprep.subr.mxu0 0.0
    %1976 = vmatpush2.msra.mxu0 0.0
    %1977 = vmatprep.subr.mxu0 0.0
    %1978 = vmatpush2.msra.mxu0 0.0
    %1979 = vmatprep.subr.mxu0 0.0
    %1980 = vmatpush2.msra.mxu0 0.0
    %1981 = vmatprep.subr.mxu0 0.0
    %1982 = vmatpush2.msra.mxu0 0.0
    %1983 = vmatprep.mubr.f32.mxu0 0.0
    %1984 = vmatmul.mubr.f32.gmra.mxu0 %v1914
    %v1985 = vpop.f32.mrf.mxu0
    %v1986 = vadd.f32 %v1910, %v1985
    %v1987 = vpop.f32.mrf.mxu0
    %1988 = vmatprep.mubr.f32.mxu0 0.0
    %1989 = vmatmul.mubr.f32.gmra.mxu0 %v1917
    %v1990 = vpop.f32.mrf.mxu0
    %v1991 = vadd.f32 %v1910, %v1990
    %v1992 = vpop.f32.mrf.mxu0
    %1993 = vdwg.mxu0
    %v1994 = vadd.f32 %v1785, %v1986
    %v1995 = vadd.f32 %v1786, %v1991
    %v1996 = vld [vmem:[%s33] sm:$0x1]
    %v1997 = vld [vmem:[%s35] sm:$0x1]
    %v1998 = vsel %vm135, %v1994, 0.0
    %1999 = vadd.xlane.f32.xlu0 %v1998
    %v2000 = vpop.xlane.xlu0 %1999
    %v2001 = vsel %vm135, %v1995, 0.0
    %2002 = vadd.xlane.f32.xlu0 %v2001
    %v2003 = vpop.xlane.xlu0 %2002
    %v2004 = vmul.f32 %v2000, %v142
    %v2005 = vmul.f32 %v2003, %v142
    %v2006 = vsub.f32 %v1994, %v2004
    %v2007 = vsub.f32 %v1995, %v2005
    %v2008 = vmul.f32 %v2006, %v2006
    %v2009 = vmul.f32 %v2007, %v2007
    %v2010 = vsel %vm135, %v2008, 0.0
    %2011 = vadd.xlane.f32.xlu0 %v2010
    %v2012 = vpop.xlane.xlu0 %2011
    %v2013 = vsel %vm135, %v2009, 0.0
    %2014 = vadd.xlane.f32.xlu0 %v2013
    %v2015 = vpop.xlane.xlu0 %2014
    %v2016 = vmul.f32 %v2012, %v142
    %v2017 = vmul.f32 %v2015, %v142
    %v2018 = vadd.f32 %v2016, 1e-12
    %v2019 = vadd.f32 %v2017, 1e-12
    %v2020 = vrsqrt.pop %v2018
    %v2021 = vrsqrt.pop %v2019
    %v2022 = vmul.f32 %v2006, %v2020
    %v2023 = vmul.f32 %v2007, %v2021
    %v2025 = vlaneseq
    %v2026 = vshrl.u32 %v2025, 7
    %v2027 = vsub.s32 0, %v2026
    %v2028 = vrot.slane %v1996, %v2027
    %v2030 = vmul.f32 %v2022, %v2028
    %v2031 = vmul.f32 %v2023, %v2028
    %v2033 = vlaneseq
    %v2034 = vshrl.u32 %v2033, 7
    %v2035 = vsub.s32 0, %v2034
    %v2036 = vrot.slane %v1997, %v2035
    %v2038 = vadd.f32 %v2030, %v2036
    %v2039 = vadd.f32 %v2031, %v2036
    %s2040 = scalar_lea.vmem %s13, 32
    %v2041 = vld [vmem:[%s2040] sm:$0xff]
    %v2042 = vld [vmem:[%s2040 + $0x8] sm:$0xff]
    %v2043 = vld [vmem:[%s2040 + $0x10] sm:$0xff]
    %v2044 = vld [vmem:[%s2040 + $0x18] sm:$0xff]
    %s2045 = scalar_lea.vmem %s15, 1
    %v2046 = vld [vmem:[%s2045] sm:$0x1]
    %v2048 = vlaneseq
    %v2049 = vshrl.u32 %v2048, 7
    %v2050 = vsub.s32 0, %v2049
    %v2051 = vrot.slane %v2046, %v2050
    %v2054 = vsel %vm135, %v2038, 0
    %v2057 = vsel %vm135, %v2039, 0
    %2059 = vmatprep.subr.mxu0 0.0
    %2060 = vmatpush1.msra.mxu0 0.0
    %2061 = vmatprep.subr.mxu0 0.0
    %2062 = vmatpush1.msra.mxu0 0.0
    %2063 = vmatprep.subr.mxu0 0.0
    %2064 = vmatpush1.msra.mxu0 0.0
    %2065 = vmatprep.subr.mxu0 0.0
    %2066 = vmatpush1.msra.mxu0 0.0
    %2067 = vmatprep.subr.mxu0 0.0
    %2068 = vmatpush1.msra.mxu0 0.0
    %2069 = vmatprep.subr.mxu0 0.0
    %2070 = vmatpush1.msra.mxu0 0.0
    %2071 = vmatprep.subr.mxu0 0.0
    %2072 = vmatpush1.msra.mxu0 0.0
    %2073 = vmatprep.subr.mxu0 0.0
    %2074 = vmatpush1.msra.mxu0 0.0
    %2075 = vmatprep.subr.mxu0 0.0
    %2076 = vmatpush1.msra.mxu0 0.0
    %2077 = vmatprep.subr.mxu0 0.0
    %2078 = vmatpush1.msra.mxu0 0.0
    %2079 = vmatprep.subr.mxu0 0.0
    %2080 = vmatpush1.msra.mxu0 0.0
    %2081 = vmatprep.subr.mxu0 0.0
    %2082 = vmatpush1.msra.mxu0 0.0
    %2083 = vmatprep.subr.mxu0 0.0
    %2084 = vmatpush1.msra.mxu0 %v2044
    %2085 = vmatprep.subr.mxu0 0.0
    %2086 = vmatpush1.msra.mxu0 %v2043
    %2087 = vmatprep.subr.mxu0 0.0
    %2088 = vmatpush1.msra.mxu0 %v2042
    %2089 = vmatprep.subr.mxu0 0.0
    %2090 = vmatpush1.msra.mxu0 %v2041
    %2091 = vmatprep.subr.mxu0 0.0
    %2092 = vmatpush2.msra.mxu0 0.0
    %2093 = vmatprep.subr.mxu0 0.0
    %2094 = vmatpush2.msra.mxu0 0.0
    %2095 = vmatprep.subr.mxu0 0.0
    %2096 = vmatpush2.msra.mxu0 0.0
    %2097 = vmatprep.subr.mxu0 0.0
    %2098 = vmatpush2.msra.mxu0 0.0
    %2099 = vmatprep.subr.mxu0 0.0
    %2100 = vmatpush2.msra.mxu0 0.0
    %2101 = vmatprep.subr.mxu0 0.0
    %2102 = vmatpush2.msra.mxu0 0.0
    %2103 = vmatprep.subr.mxu0 0.0
    %2104 = vmatpush2.msra.mxu0 0.0
    %2105 = vmatprep.subr.mxu0 0.0
    %2106 = vmatpush2.msra.mxu0 0.0
    %2107 = vmatprep.subr.mxu0 0.0
    %2108 = vmatpush2.msra.mxu0 0.0
    %2109 = vmatprep.subr.mxu0 0.0
    %2110 = vmatpush2.msra.mxu0 0.0
    %2111 = vmatprep.subr.mxu0 0.0
    %2112 = vmatpush2.msra.mxu0 0.0
    %2113 = vmatprep.subr.mxu0 0.0
    %2114 = vmatpush2.msra.mxu0 0.0
    %2115 = vmatprep.subr.mxu0 0.0
    %2116 = vmatpush2.msra.mxu0 0.0
    %2117 = vmatprep.subr.mxu0 0.0
    %2118 = vmatpush2.msra.mxu0 0.0
    %2119 = vmatprep.subr.mxu0 0.0
    %2120 = vmatpush2.msra.mxu0 0.0
    %2121 = vmatprep.subr.mxu0 0.0
    %2122 = vmatpush2.msra.mxu0 0.0
    %2123 = vmatprep.mubr.f32.mxu0 0.0
    %2124 = vmatmul.mubr.f32.gmra.mxu0 %v2054
    %v2125 = vpop.f32.mrf.mxu0
    %v2126 = vadd.f32 %v2051, %v2125
    %v2127 = vpop.f32.mrf.mxu0
    %2128 = vmatprep.mubr.f32.mxu0 0.0
    %2129 = vmatmul.mubr.f32.gmra.mxu0 %v2057
    %v2130 = vpop.f32.mrf.mxu0
    %v2131 = vadd.f32 %v2051, %v2130
    %v2132 = vpop.f32.mrf.mxu0
    %2133 = vdwg.mxu0
    %2135 = vrot.lane.b32.xlu0 %v2126, 96
    %v2136 = vpop.permute.xlu0 %2135
    %v2137 = vsel %vm277, %v2126, 0
    %v2139 = vsel %vm277, %v2136, 0
    %2141 = vmatprep.subr.mxu0 0.0
    %2142 = vmatpush1.xpose.msra.mxu0 0.0
    %2143 = vmatprep.subr.mxu0 0.0
    %2144 = vmatpush1.xpose.msra.mxu0 0.0
    %2145 = vmatprep.subr.mxu0 0.0
    %2146 = vmatpush1.xpose.msra.mxu0 0.0
    %2147 = vmatprep.subr.mxu0 0.0
    %2148 = vmatpush1.xpose.msra.mxu0 0.0
    %2149 = vmatprep.subr.mxu0 0.0
    %2150 = vmatpush1.xpose.msra.mxu0 0.0
    %2151 = vmatprep.subr.mxu0 0.0
    %2152 = vmatpush1.xpose.msra.mxu0 0.0
    %2153 = vmatprep.subr.mxu0 0.0
    %2154 = vmatpush1.xpose.msra.mxu0 0.0
    %2155 = vmatprep.subr.mxu0 0.0
    %2156 = vmatpush1.xpose.msra.mxu0 0.0
    %2157 = vmatprep.subr.mxu0 0.0
    %2158 = vmatpush1.xpose.msra.mxu0 0.0
    %2159 = vmatprep.subr.mxu0 0.0
    %2160 = vmatpush1.xpose.msra.mxu0 0.0
    %2161 = vmatprep.subr.mxu0 0.0
    %2162 = vmatpush1.xpose.msra.mxu0 0.0
    %2163 = vmatprep.subr.mxu0 0.0
    %2164 = vmatpush1.xpose.msra.mxu0 0.0
    %2165 = vmatprep.subr.mxu0 0.0
    %2166 = vmatpush1.xpose.msra.mxu0 0.0
    %2167 = vmatprep.subr.mxu0 0.0
    %2168 = vmatpush1.xpose.msra.mxu0 0.0
    %2169 = vmatprep.subr.mxu0 0.0
    %2170 = vmatpush1.xpose.msra.mxu0 0.0
    %2171 = vmatprep.subr.mxu0 0.0
    %2172 = vmatpush1.xpose.msra.mxu0 %v2139
    %2173 = vmatprep.subr.mxu0 0.0
    %2174 = vmatpush2.xpose.msra.mxu0 0.0
    %2175 = vmatprep.subr.mxu0 0.0
    %2176 = vmatpush2.xpose.msra.mxu0 0.0
    %2177 = vmatprep.subr.mxu0 0.0
    %2178 = vmatpush2.xpose.msra.mxu0 0.0
    %2179 = vmatprep.subr.mxu0 0.0
    %2180 = vmatpush2.xpose.msra.mxu0 0.0
    %2181 = vmatprep.subr.mxu0 0.0
    %2182 = vmatpush2.xpose.msra.mxu0 0.0
    %2183 = vmatprep.subr.mxu0 0.0
    %2184 = vmatpush2.xpose.msra.mxu0 0.0
    %2185 = vmatprep.subr.mxu0 0.0
    %2186 = vmatpush2.xpose.msra.mxu0 0.0
    %2187 = vmatprep.subr.mxu0 0.0
    %2188 = vmatpush2.xpose.msra.mxu0 0.0
    %2189 = vmatprep.subr.mxu0 0.0
    %2190 = vmatpush2.xpose.msra.mxu0 0.0
    %2191 = vmatprep.subr.mxu0 0.0
    %2192 = vmatpush2.xpose.msra.mxu0 0.0
    %2193 = vmatprep.subr.mxu0 0.0
    %2194 = vmatpush2.xpose.msra.mxu0 0.0
    %2195 = vmatprep.subr.mxu0 0.0
    %2196 = vmatpush2.xpose.msra.mxu0 0.0
    %2197 = vmatprep.subr.mxu0 0.0
    %2198 = vmatpush2.xpose.msra.mxu0 0.0
    %2199 = vmatprep.subr.mxu0 0.0
    %2200 = vmatpush2.xpose.msra.mxu0 0.0
    %2201 = vmatprep.subr.mxu0 0.0
    %2202 = vmatpush2.xpose.msra.mxu0 0.0
    %2203 = vmatprep.subr.mxu0 0.0
    %2204 = vmatpush2.xpose.msra.mxu0 0.0
    %2205 = vmatprep.mubr.f32.mxu0 0.0
    %2206 = vmatmul.mubr.f32.gmra.mxu0 %v2137
    %v2207 = vpop.f32.mrf.mxu0
    %v2208 = vadd.f32 0.0, %v2207
    %v2209 = vpop.f32.mrf.mxu0
    %2210 = vdwg.mxu0
    %v2211 = vmul.f32 %v2208, 0.35355338
    %v2212 = vadd.f32 %v2211, %v356
    %v2213 = vsel %vm277, %v2212, -inf
    %2214 = vmax.xlane.f32.xlu0 %v2213
    %v2215 = vpop.xlane.xlu0 %2214
    %v2216 = vsub.f32 %v2212, %v2215
    %v2217 = vmul.f32 %v2216, 1.442695
    %v2218 = vpow.pop %v2217
    %v2219 = vsel %vm277, %v2218, 0.0
    %2220 = vadd.xlane.f32.xlu0 %v2219
    %v2221 = vpop.xlane.xlu0 %2220
    %v2222 = vrcp.pop %v2221
    %v2223 = vmul.f32 %v2218, %v2222
    %2224 = vrot.lane.b32.xlu0 %v2126, 64
    %v2225 = vpop.permute.xlu0 %2224
    %v2228 = vsel %vm277, %v2223, 0
    %2230 = vmatprep.subr.mxu0 0.0
    %2231 = vmatpush1.msra.mxu0 0.0
    %2232 = vmatprep.subr.mxu0 0.0
    %2233 = vmatpush1.msra.mxu0 0.0
    %2234 = vmatprep.subr.mxu0 0.0
    %2235 = vmatpush1.msra.mxu0 0.0
    %2236 = vmatprep.subr.mxu0 0.0
    %2237 = vmatpush1.msra.mxu0 0.0
    %2238 = vmatprep.subr.mxu0 0.0
    %2239 = vmatpush1.msra.mxu0 0.0
    %2240 = vmatprep.subr.mxu0 0.0
    %2241 = vmatpush1.msra.mxu0 0.0
    %2242 = vmatprep.subr.mxu0 0.0
    %2243 = vmatpush1.msra.mxu0 0.0
    %2244 = vmatprep.subr.mxu0 0.0
    %2245 = vmatpush1.msra.mxu0 0.0
    %2246 = vmatprep.subr.mxu0 0.0
    %2247 = vmatpush1.msra.mxu0 0.0
    %2248 = vmatprep.subr.mxu0 0.0
    %2249 = vmatpush1.msra.mxu0 0.0
    %2250 = vmatprep.subr.mxu0 0.0
    %2251 = vmatpush1.msra.mxu0 0.0
    %2252 = vmatprep.subr.mxu0 0.0
    %2253 = vmatpush1.msra.mxu0 0.0
    %2254 = vmatprep.subr.mxu0 0.0
    %2255 = vmatpush1.msra.mxu0 0.0
    %2256 = vmatprep.subr.mxu0 0.0
    %2257 = vmatpush1.msra.mxu0 0.0
    %2258 = vmatprep.subr.mxu0 0.0
    %2259 = vmatpush1.msra.mxu0 0.0
    %2260 = vmatprep.subr.mxu0 0.0
    %2261 = vmatpush1.msra.mxu0 %v2225
    %2262 = vmatprep.subr.mxu0 0.0
    %2263 = vmatpush2.msra.mxu0 0.0
    %2264 = vmatprep.subr.mxu0 0.0
    %2265 = vmatpush2.msra.mxu0 0.0
    %2266 = vmatprep.subr.mxu0 0.0
    %2267 = vmatpush2.msra.mxu0 0.0
    %2268 = vmatprep.subr.mxu0 0.0
    %2269 = vmatpush2.msra.mxu0 0.0
    %2270 = vmatprep.subr.mxu0 0.0
    %2271 = vmatpush2.msra.mxu0 0.0
    %2272 = vmatprep.subr.mxu0 0.0
    %2273 = vmatpush2.msra.mxu0 0.0
    %2274 = vmatprep.subr.mxu0 0.0
    %2275 = vmatpush2.msra.mxu0 0.0
    %2276 = vmatprep.subr.mxu0 0.0
    %2277 = vmatpush2.msra.mxu0 0.0
    %2278 = vmatprep.subr.mxu0 0.0
    %2279 = vmatpush2.msra.mxu0 0.0
    %2280 = vmatprep.subr.mxu0 0.0
    %2281 = vmatpush2.msra.mxu0 0.0
    %2282 = vmatprep.subr.mxu0 0.0
    %2283 = vmatpush2.msra.mxu0 0.0
    %2284 = vmatprep.subr.mxu0 0.0
    %2285 = vmatpush2.msra.mxu0 0.0
    %2286 = vmatprep.subr.mxu0 0.0
    %2287 = vmatpush2.msra.mxu0 0.0
    %2288 = vmatprep.subr.mxu0 0.0
    %2289 = vmatpush2.msra.mxu0 0.0
    %2290 = vmatprep.subr.mxu0 0.0
    %2291 = vmatpush2.msra.mxu0 0.0
    %2292 = vmatprep.subr.mxu0 0.0
    %2293 = vmatpush2.msra.mxu0 0.0
    %2294 = vmatprep.mubr.f32.mxu0 0.0
    %2295 = vmatmul.mubr.f32.gmra.mxu0 %v2228
    %v2296 = vpop.f32.mrf.mxu0
    %v2297 = vadd.f32 0.0, %v2296
    %v2298 = vpop.f32.mrf.mxu0
    %2299 = vdwg.mxu0
    %2301 = vrot.lane.b32.xlu0 %v2131, 96
    %v2302 = vpop.permute.xlu0 %2301
    %v2303 = vsel %vm277, %v2131, 0
    %v2305 = vsel %vm277, %v2302, 0
    %2307 = vmatprep.subr.mxu0 0.0
    %2308 = vmatpush1.xpose.msra.mxu0 0.0
    %2309 = vmatprep.subr.mxu0 0.0
    %2310 = vmatpush1.xpose.msra.mxu0 0.0
    %2311 = vmatprep.subr.mxu0 0.0
    %2312 = vmatpush1.xpose.msra.mxu0 0.0
    %2313 = vmatprep.subr.mxu0 0.0
    %2314 = vmatpush1.xpose.msra.mxu0 0.0
    %2315 = vmatprep.subr.mxu0 0.0
    %2316 = vmatpush1.xpose.msra.mxu0 0.0
    %2317 = vmatprep.subr.mxu0 0.0
    %2318 = vmatpush1.xpose.msra.mxu0 0.0
    %2319 = vmatprep.subr.mxu0 0.0
    %2320 = vmatpush1.xpose.msra.mxu0 0.0
    %2321 = vmatprep.subr.mxu0 0.0
    %2322 = vmatpush1.xpose.msra.mxu0 0.0
    %2323 = vmatprep.subr.mxu0 0.0
    %2324 = vmatpush1.xpose.msra.mxu0 0.0
    %2325 = vmatprep.subr.mxu0 0.0
    %2326 = vmatpush1.xpose.msra.mxu0 0.0
    %2327 = vmatprep.subr.mxu0 0.0
    %2328 = vmatpush1.xpose.msra.mxu0 0.0
    %2329 = vmatprep.subr.mxu0 0.0
    %2330 = vmatpush1.xpose.msra.mxu0 0.0
    %2331 = vmatprep.subr.mxu0 0.0
    %2332 = vmatpush1.xpose.msra.mxu0 0.0
    %2333 = vmatprep.subr.mxu0 0.0
    %2334 = vmatpush1.xpose.msra.mxu0 0.0
    %2335 = vmatprep.subr.mxu0 0.0
    %2336 = vmatpush1.xpose.msra.mxu0 0.0
    %2337 = vmatprep.subr.mxu0 0.0
    %2338 = vmatpush1.xpose.msra.mxu0 %v2305
    %2339 = vmatprep.subr.mxu0 0.0
    %2340 = vmatpush2.xpose.msra.mxu0 0.0
    %2341 = vmatprep.subr.mxu0 0.0
    %2342 = vmatpush2.xpose.msra.mxu0 0.0
    %2343 = vmatprep.subr.mxu0 0.0
    %2344 = vmatpush2.xpose.msra.mxu0 0.0
    %2345 = vmatprep.subr.mxu0 0.0
    %2346 = vmatpush2.xpose.msra.mxu0 0.0
    %2347 = vmatprep.subr.mxu0 0.0
    %2348 = vmatpush2.xpose.msra.mxu0 0.0
    %2349 = vmatprep.subr.mxu0 0.0
    %2350 = vmatpush2.xpose.msra.mxu0 0.0
    %2351 = vmatprep.subr.mxu0 0.0
    %2352 = vmatpush2.xpose.msra.mxu0 0.0
    %2353 = vmatprep.subr.mxu0 0.0
    %2354 = vmatpush2.xpose.msra.mxu0 0.0
    %2355 = vmatprep.subr.mxu0 0.0
    %2356 = vmatpush2.xpose.msra.mxu0 0.0
    %2357 = vmatprep.subr.mxu0 0.0
    %2358 = vmatpush2.xpose.msra.mxu0 0.0
    %2359 = vmatprep.subr.mxu0 0.0
    %2360 = vmatpush2.xpose.msra.mxu0 0.0
    %2361 = vmatprep.subr.mxu0 0.0
    %2362 = vmatpush2.xpose.msra.mxu0 0.0
    %2363 = vmatprep.subr.mxu0 0.0
    %2364 = vmatpush2.xpose.msra.mxu0 0.0
    %2365 = vmatprep.subr.mxu0 0.0
    %2366 = vmatpush2.xpose.msra.mxu0 0.0
    %2367 = vmatprep.subr.mxu0 0.0
    %2368 = vmatpush2.xpose.msra.mxu0 0.0
    %2369 = vmatprep.subr.mxu0 0.0
    %2370 = vmatpush2.xpose.msra.mxu0 0.0
    %2371 = vmatprep.mubr.f32.mxu0 0.0
    %2372 = vmatmul.mubr.f32.gmra.mxu0 %v2303
    %v2373 = vpop.f32.mrf.mxu0
    %v2374 = vadd.f32 0.0, %v2373
    %v2375 = vpop.f32.mrf.mxu0
    %2376 = vdwg.mxu0
    %v2377 = vmul.f32 %v2374, 0.35355338
    %v2378 = vadd.f32 %v2377, %v526
    %v2379 = vsel %vm277, %v2378, -inf
    %2380 = vmax.xlane.f32.xlu0 %v2379
    %v2381 = vpop.xlane.xlu0 %2380
    %v2382 = vsub.f32 %v2378, %v2381
    %v2383 = vmul.f32 %v2382, 1.442695
    %v2384 = vpow.pop %v2383
    %v2385 = vsel %vm277, %v2384, 0.0
    %2386 = vadd.xlane.f32.xlu0 %v2385
    %v2387 = vpop.xlane.xlu0 %2386
    %v2388 = vrcp.pop %v2387
    %v2389 = vmul.f32 %v2384, %v2388
    %2390 = vrot.lane.b32.xlu0 %v2131, 64
    %v2391 = vpop.permute.xlu0 %2390
    %v2394 = vsel %vm277, %v2389, 0
    %2396 = vmatprep.subr.mxu0 0.0
    %2397 = vmatpush1.msra.mxu0 0.0
    %2398 = vmatprep.subr.mxu0 0.0
    %2399 = vmatpush1.msra.mxu0 0.0
    %2400 = vmatprep.subr.mxu0 0.0
    %2401 = vmatpush1.msra.mxu0 0.0
    %2402 = vmatprep.subr.mxu0 0.0
    %2403 = vmatpush1.msra.mxu0 0.0
    %2404 = vmatprep.subr.mxu0 0.0
    %2405 = vmatpush1.msra.mxu0 0.0
    %2406 = vmatprep.subr.mxu0 0.0
    %2407 = vmatpush1.msra.mxu0 0.0
    %2408 = vmatprep.subr.mxu0 0.0
    %2409 = vmatpush1.msra.mxu0 0.0
    %2410 = vmatprep.subr.mxu0 0.0
    %2411 = vmatpush1.msra.mxu0 0.0
    %2412 = vmatprep.subr.mxu0 0.0
    %2413 = vmatpush1.msra.mxu0 0.0
    %2414 = vmatprep.subr.mxu0 0.0
    %2415 = vmatpush1.msra.mxu0 0.0
    %2416 = vmatprep.subr.mxu0 0.0
    %2417 = vmatpush1.msra.mxu0 0.0
    %2418 = vmatprep.subr.mxu0 0.0
    %2419 = vmatpush1.msra.mxu0 0.0
    %2420 = vmatprep.subr.mxu0 0.0
    %2421 = vmatpush1.msra.mxu0 0.0
    %2422 = vmatprep.subr.mxu0 0.0
    %2423 = vmatpush1.msra.mxu0 0.0
    %2424 = vmatprep.subr.mxu0 0.0
    %2425 = vmatpush1.msra.mxu0 0.0
    %2426 = vmatprep.subr.mxu0 0.0
    %2427 = vmatpush1.msra.mxu0 %v2391
    %2428 = vmatprep.subr.mxu0 0.0
    %2429 = vmatpush2.msra.mxu0 0.0
    %2430 = vmatprep.subr.mxu0 0.0
    %2431 = vmatpush2.msra.mxu0 0.0
    %2432 = vmatprep.subr.mxu0 0.0
    %2433 = vmatpush2.msra.mxu0 0.0
    %2434 = vmatprep.subr.mxu0 0.0
    %2435 = vmatpush2.msra.mxu0 0.0
    %2436 = vmatprep.subr.mxu0 0.0
    %2437 = vmatpush2.msra.mxu0 0.0
    %2438 = vmatprep.subr.mxu0 0.0
    %2439 = vmatpush2.msra.mxu0 0.0
    %2440 = vmatprep.subr.mxu0 0.0
    %2441 = vmatpush2.msra.mxu0 0.0
    %2442 = vmatprep.subr.mxu0 0.0
    %2443 = vmatpush2.msra.mxu0 0.0
    %2444 = vmatprep.subr.mxu0 0.0
    %2445 = vmatpush2.msra.mxu0 0.0
    %2446 = vmatprep.subr.mxu0 0.0
    %2447 = vmatpush2.msra.mxu0 0.0
    %2448 = vmatprep.subr.mxu0 0.0
    %2449 = vmatpush2.msra.mxu0 0.0
    %2450 = vmatprep.subr.mxu0 0.0
    %2451 = vmatpush2.msra.mxu0 0.0
    %2452 = vmatprep.subr.mxu0 0.0
    %2453 = vmatpush2.msra.mxu0 0.0
    %2454 = vmatprep.subr.mxu0 0.0
    %2455 = vmatpush2.msra.mxu0 0.0
    %2456 = vmatprep.subr.mxu0 0.0
    %2457 = vmatpush2.msra.mxu0 0.0
    %2458 = vmatprep.subr.mxu0 0.0
    %2459 = vmatpush2.msra.mxu0 0.0
    %2460 = vmatprep.mubr.f32.mxu0 0.0
    %2461 = vmatmul.mubr.f32.gmra.mxu0 %v2394
    %v2462 = vpop.f32.mrf.mxu0
    %v2463 = vadd.f32 0.0, %v2462
    %v2464 = vpop.f32.mrf.mxu0
    %2465 = vdwg.mxu0
    %2466 = vrot.lane.b32.xlu0 %v2126, 120
    %v2467 = vpop.permute.xlu0 %2466
    %2468 = vrot.lane.b32.xlu0 %v2126, 88
    %v2469 = vpop.permute.xlu0 %2468
    %v2470 = vsel %vm277, %v2467, 0
    %v2472 = vsel %vm277, %v2469, 0
    %2474 = vmatprep.subr.mxu0 0.0
    %2475 = vmatpush1.xpose.msra.mxu0 0.0
    %2476 = vmatprep.subr.mxu0 0.0
    %2477 = vmatpush1.xpose.msra.mxu0 0.0
    %2478 = vmatprep.subr.mxu0 0.0
    %2479 = vmatpush1.xpose.msra.mxu0 0.0
    %2480 = vmatprep.subr.mxu0 0.0
    %2481 = vmatpush1.xpose.msra.mxu0 0.0
    %2482 = vmatprep.subr.mxu0 0.0
    %2483 = vmatpush1.xpose.msra.mxu0 0.0
    %2484 = vmatprep.subr.mxu0 0.0
    %2485 = vmatpush1.xpose.msra.mxu0 0.0
    %2486 = vmatprep.subr.mxu0 0.0
    %2487 = vmatpush1.xpose.msra.mxu0 0.0
    %2488 = vmatprep.subr.mxu0 0.0
    %2489 = vmatpush1.xpose.msra.mxu0 0.0
    %2490 = vmatprep.subr.mxu0 0.0
    %2491 = vmatpush1.xpose.msra.mxu0 0.0
    %2492 = vmatprep.subr.mxu0 0.0
    %2493 = vmatpush1.xpose.msra.mxu0 0.0
    %2494 = vmatprep.subr.mxu0 0.0
    %2495 = vmatpush1.xpose.msra.mxu0 0.0
    %2496 = vmatprep.subr.mxu0 0.0
    %2497 = vmatpush1.xpose.msra.mxu0 0.0
    %2498 = vmatprep.subr.mxu0 0.0
    %2499 = vmatpush1.xpose.msra.mxu0 0.0
    %2500 = vmatprep.subr.mxu0 0.0
    %2501 = vmatpush1.xpose.msra.mxu0 0.0
    %2502 = vmatprep.subr.mxu0 0.0
    %2503 = vmatpush1.xpose.msra.mxu0 0.0
    %2504 = vmatprep.subr.mxu0 0.0
    %2505 = vmatpush1.xpose.msra.mxu0 %v2472
    %2506 = vmatprep.subr.mxu0 0.0
    %2507 = vmatpush2.xpose.msra.mxu0 0.0
    %2508 = vmatprep.subr.mxu0 0.0
    %2509 = vmatpush2.xpose.msra.mxu0 0.0
    %2510 = vmatprep.subr.mxu0 0.0
    %2511 = vmatpush2.xpose.msra.mxu0 0.0
    %2512 = vmatprep.subr.mxu0 0.0
    %2513 = vmatpush2.xpose.msra.mxu0 0.0
    %2514 = vmatprep.subr.mxu0 0.0
    %2515 = vmatpush2.xpose.msra.mxu0 0.0
    %2516 = vmatprep.subr.mxu0 0.0
    %2517 = vmatpush2.xpose.msra.mxu0 0.0
    %2518 = vmatprep.subr.mxu0 0.0
    %2519 = vmatpush2.xpose.msra.mxu0 0.0
    %2520 = vmatprep.subr.mxu0 0.0
    %2521 = vmatpush2.xpose.msra.mxu0 0.0
    %2522 = vmatprep.subr.mxu0 0.0
    %2523 = vmatpush2.xpose.msra.mxu0 0.0
    %2524 = vmatprep.subr.mxu0 0.0
    %2525 = vmatpush2.xpose.msra.mxu0 0.0
    %2526 = vmatprep.subr.mxu0 0.0
    %2527 = vmatpush2.xpose.msra.mxu0 0.0
    %2528 = vmatprep.subr.mxu0 0.0
    %2529 = vmatpush2.xpose.msra.mxu0 0.0
    %2530 = vmatprep.subr.mxu0 0.0
    %2531 = vmatpush2.xpose.msra.mxu0 0.0
    %2532 = vmatprep.subr.mxu0 0.0
    %2533 = vmatpush2.xpose.msra.mxu0 0.0
    %2534 = vmatprep.subr.mxu0 0.0
    %2535 = vmatpush2.xpose.msra.mxu0 0.0
    %2536 = vmatprep.subr.mxu0 0.0
    %2537 = vmatpush2.xpose.msra.mxu0 0.0
    %2538 = vmatprep.mubr.f32.mxu0 0.0
    %2539 = vmatmul.mubr.f32.gmra.mxu0 %v2470
    %v2540 = vpop.f32.mrf.mxu0
    %v2541 = vadd.f32 0.0, %v2540
    %v2542 = vpop.f32.mrf.mxu0
    %2543 = vdwg.mxu0
    %v2544 = vmul.f32 %v2541, 0.35355338
    %v2545 = vadd.f32 %v2544, %v356
    %v2546 = vsel %vm277, %v2545, -inf
    %2547 = vmax.xlane.f32.xlu0 %v2546
    %v2548 = vpop.xlane.xlu0 %2547
    %v2549 = vsub.f32 %v2545, %v2548
    %v2550 = vmul.f32 %v2549, 1.442695
    %v2551 = vpow.pop %v2550
    %v2552 = vsel %vm277, %v2551, 0.0
    %2553 = vadd.xlane.f32.xlu0 %v2552
    %v2554 = vpop.xlane.xlu0 %2553
    %v2555 = vrcp.pop %v2554
    %v2556 = vmul.f32 %v2551, %v2555
    %2557 = vrot.lane.b32.xlu0 %v2126, 56
    %v2558 = vpop.permute.xlu0 %2557
    %v2561 = vsel %vm277, %v2556, 0
    %2563 = vmatprep.subr.mxu0 0.0
    %2564 = vmatpush1.msra.mxu0 0.0
    %2565 = vmatprep.subr.mxu0 0.0
    %2566 = vmatpush1.msra.mxu0 0.0
    %2567 = vmatprep.subr.mxu0 0.0
    %2568 = vmatpush1.msra.mxu0 0.0
    %2569 = vmatprep.subr.mxu0 0.0
    %2570 = vmatpush1.msra.mxu0 0.0
    %2571 = vmatprep.subr.mxu0 0.0
    %2572 = vmatpush1.msra.mxu0 0.0
    %2573 = vmatprep.subr.mxu0 0.0
    %2574 = vmatpush1.msra.mxu0 0.0
    %2575 = vmatprep.subr.mxu0 0.0
    %2576 = vmatpush1.msra.mxu0 0.0
    %2577 = vmatprep.subr.mxu0 0.0
    %2578 = vmatpush1.msra.mxu0 0.0
    %2579 = vmatprep.subr.mxu0 0.0
    %2580 = vmatpush1.msra.mxu0 0.0
    %2581 = vmatprep.subr.mxu0 0.0
    %2582 = vmatpush1.msra.mxu0 0.0
    %2583 = vmatprep.subr.mxu0 0.0
    %2584 = vmatpush1.msra.mxu0 0.0
    %2585 = vmatprep.subr.mxu0 0.0
    %2586 = vmatpush1.msra.mxu0 0.0
    %2587 = vmatprep.subr.mxu0 0.0
    %2588 = vmatpush1.msra.mxu0 0.0
    %2589 = vmatprep.subr.mxu0 0.0
    %2590 = vmatpush1.msra.mxu0 0.0
    %2591 = vmatprep.subr.mxu0 0.0
    %2592 = vmatpush1.msra.mxu0 0.0
    %2593 = vmatprep.subr.mxu0 0.0
    %2594 = vmatpush1.msra.mxu0 %v2558
    %2595 = vmatprep.subr.mxu0 0.0
    %2596 = vmatpush2.msra.mxu0 0.0
    %2597 = vmatprep.subr.mxu0 0.0
    %2598 = vmatpush2.msra.mxu0 0.0
    %2599 = vmatprep.subr.mxu0 0.0
    %2600 = vmatpush2.msra.mxu0 0.0
    %2601 = vmatprep.subr.mxu0 0.0
    %2602 = vmatpush2.msra.mxu0 0.0
    %2603 = vmatprep.subr.mxu0 0.0
    %2604 = vmatpush2.msra.mxu0 0.0
    %2605 = vmatprep.subr.mxu0 0.0
    %2606 = vmatpush2.msra.mxu0 0.0
    %2607 = vmatprep.subr.mxu0 0.0
    %2608 = vmatpush2.msra.mxu0 0.0
    %2609 = vmatprep.subr.mxu0 0.0
    %2610 = vmatpush2.msra.mxu0 0.0
    %2611 = vmatprep.subr.mxu0 0.0
    %2612 = vmatpush2.msra.mxu0 0.0
    %2613 = vmatprep.subr.mxu0 0.0
    %2614 = vmatpush2.msra.mxu0 0.0
    %2615 = vmatprep.subr.mxu0 0.0
    %2616 = vmatpush2.msra.mxu0 0.0
    %2617 = vmatprep.subr.mxu0 0.0
    %2618 = vmatpush2.msra.mxu0 0.0
    %2619 = vmatprep.subr.mxu0 0.0
    %2620 = vmatpush2.msra.mxu0 0.0
    %2621 = vmatprep.subr.mxu0 0.0
    %2622 = vmatpush2.msra.mxu0 0.0
    %2623 = vmatprep.subr.mxu0 0.0
    %2624 = vmatpush2.msra.mxu0 0.0
    %2625 = vmatprep.subr.mxu0 0.0
    %2626 = vmatpush2.msra.mxu0 0.0
    %2627 = vmatprep.mubr.f32.mxu0 0.0
    %2628 = vmatmul.mubr.f32.gmra.mxu0 %v2561
    %v2629 = vpop.f32.mrf.mxu0
    %v2630 = vadd.f32 0.0, %v2629
    %v2631 = vpop.f32.mrf.mxu0
    %2632 = vdwg.mxu0
    %2633 = vrot.lane.b32.xlu0 %v2131, 120
    %v2634 = vpop.permute.xlu0 %2633
    %2635 = vrot.lane.b32.xlu0 %v2131, 88
    %v2636 = vpop.permute.xlu0 %2635
    %v2637 = vsel %vm277, %v2634, 0
    %v2639 = vsel %vm277, %v2636, 0
    %2641 = vmatprep.subr.mxu0 0.0
    %2642 = vmatpush1.xpose.msra.mxu0 0.0
    %2643 = vmatprep.subr.mxu0 0.0
    %2644 = vmatpush1.xpose.msra.mxu0 0.0
    %2645 = vmatprep.subr.mxu0 0.0
    %2646 = vmatpush1.xpose.msra.mxu0 0.0
    %2647 = vmatprep.subr.mxu0 0.0
    %2648 = vmatpush1.xpose.msra.mxu0 0.0
    %2649 = vmatprep.subr.mxu0 0.0
    %2650 = vmatpush1.xpose.msra.mxu0 0.0
    %2651 = vmatprep.subr.mxu0 0.0
    %2652 = vmatpush1.xpose.msra.mxu0 0.0
    %2653 = vmatprep.subr.mxu0 0.0
    %2654 = vmatpush1.xpose.msra.mxu0 0.0
    %2655 = vmatprep.subr.mxu0 0.0
    %2656 = vmatpush1.xpose.msra.mxu0 0.0
    %2657 = vmatprep.subr.mxu0 0.0
    %2658 = vmatpush1.xpose.msra.mxu0 0.0
    %2659 = vmatprep.subr.mxu0 0.0
    %2660 = vmatpush1.xpose.msra.mxu0 0.0
    %2661 = vmatprep.subr.mxu0 0.0
    %2662 = vmatpush1.xpose.msra.mxu0 0.0
    %2663 = vmatprep.subr.mxu0 0.0
    %2664 = vmatpush1.xpose.msra.mxu0 0.0
    %2665 = vmatprep.subr.mxu0 0.0
    %2666 = vmatpush1.xpose.msra.mxu0 0.0
    %2667 = vmatprep.subr.mxu0 0.0
    %2668 = vmatpush1.xpose.msra.mxu0 0.0
    %2669 = vmatprep.subr.mxu0 0.0
    %2670 = vmatpush1.xpose.msra.mxu0 0.0
    %2671 = vmatprep.subr.mxu0 0.0
    %2672 = vmatpush1.xpose.msra.mxu0 %v2639
    %2673 = vmatprep.subr.mxu0 0.0
    %2674 = vmatpush2.xpose.msra.mxu0 0.0
    %2675 = vmatprep.subr.mxu0 0.0
    %2676 = vmatpush2.xpose.msra.mxu0 0.0
    %2677 = vmatprep.subr.mxu0 0.0
    %2678 = vmatpush2.xpose.msra.mxu0 0.0
    %2679 = vmatprep.subr.mxu0 0.0
    %2680 = vmatpush2.xpose.msra.mxu0 0.0
    %2681 = vmatprep.subr.mxu0 0.0
    %2682 = vmatpush2.xpose.msra.mxu0 0.0
    %2683 = vmatprep.subr.mxu0 0.0
    %2684 = vmatpush2.xpose.msra.mxu0 0.0
    %2685 = vmatprep.subr.mxu0 0.0
    %2686 = vmatpush2.xpose.msra.mxu0 0.0
    %2687 = vmatprep.subr.mxu0 0.0
    %2688 = vmatpush2.xpose.msra.mxu0 0.0
    %2689 = vmatprep.subr.mxu0 0.0
    %2690 = vmatpush2.xpose.msra.mxu0 0.0
    %2691 = vmatprep.subr.mxu0 0.0
    %2692 = vmatpush2.xpose.msra.mxu0 0.0
    %2693 = vmatprep.subr.mxu0 0.0
    %2694 = vmatpush2.xpose.msra.mxu0 0.0
    %2695 = vmatprep.subr.mxu0 0.0
    %2696 = vmatpush2.xpose.msra.mxu0 0.0
    %2697 = vmatprep.subr.mxu0 0.0
    %2698 = vmatpush2.xpose.msra.mxu0 0.0
    %2699 = vmatprep.subr.mxu0 0.0
    %2700 = vmatpush2.xpose.msra.mxu0 0.0
    %2701 = vmatprep.subr.mxu0 0.0
    %2702 = vmatpush2.xpose.msra.mxu0 0.0
    %2703 = vmatprep.subr.mxu0 0.0
    %2704 = vmatpush2.xpose.msra.mxu0 0.0
    %2705 = vmatprep.mubr.f32.mxu0 0.0
    %2706 = vmatmul.mubr.f32.gmra.mxu0 %v2637
    %v2707 = vpop.f32.mrf.mxu0
    %v2708 = vadd.f32 0.0, %v2707
    %v2709 = vpop.f32.mrf.mxu0
    %2710 = vdwg.mxu0
    %v2711 = vmul.f32 %v2708, 0.35355338
    %v2712 = vadd.f32 %v2711, %v526
    %v2713 = vsel %vm277, %v2712, -inf
    %2714 = vmax.xlane.f32.xlu0 %v2713
    %v2715 = vpop.xlane.xlu0 %2714
    %v2716 = vsub.f32 %v2712, %v2715
    %v2717 = vmul.f32 %v2716, 1.442695
    %v2718 = vpow.pop %v2717
    %v2719 = vsel %vm277, %v2718, 0.0
    %2720 = vadd.xlane.f32.xlu0 %v2719
    %v2721 = vpop.xlane.xlu0 %2720
    %v2722 = vrcp.pop %v2721
    %v2723 = vmul.f32 %v2718, %v2722
    %2724 = vrot.lane.b32.xlu0 %v2131, 56
    %v2725 = vpop.permute.xlu0 %2724
    %v2728 = vsel %vm277, %v2723, 0
    %2730 = vmatprep.subr.mxu0 0.0
    %2731 = vmatpush1.msra.mxu0 0.0
    %2732 = vmatprep.subr.mxu0 0.0
    %2733 = vmatpush1.msra.mxu0 0.0
    %2734 = vmatprep.subr.mxu0 0.0
    %2735 = vmatpush1.msra.mxu0 0.0
    %2736 = vmatprep.subr.mxu0 0.0
    %2737 = vmatpush1.msra.mxu0 0.0
    %2738 = vmatprep.subr.mxu0 0.0
    %2739 = vmatpush1.msra.mxu0 0.0
    %2740 = vmatprep.subr.mxu0 0.0
    %2741 = vmatpush1.msra.mxu0 0.0
    %2742 = vmatprep.subr.mxu0 0.0
    %2743 = vmatpush1.msra.mxu0 0.0
    %2744 = vmatprep.subr.mxu0 0.0
    %2745 = vmatpush1.msra.mxu0 0.0
    %2746 = vmatprep.subr.mxu0 0.0
    %2747 = vmatpush1.msra.mxu0 0.0
    %2748 = vmatprep.subr.mxu0 0.0
    %2749 = vmatpush1.msra.mxu0 0.0
    %2750 = vmatprep.subr.mxu0 0.0
    %2751 = vmatpush1.msra.mxu0 0.0
    %2752 = vmatprep.subr.mxu0 0.0
    %2753 = vmatpush1.msra.mxu0 0.0
    %2754 = vmatprep.subr.mxu0 0.0
    %2755 = vmatpush1.msra.mxu0 0.0
    %2756 = vmatprep.subr.mxu0 0.0
    %2757 = vmatpush1.msra.mxu0 0.0
    %2758 = vmatprep.subr.mxu0 0.0
    %2759 = vmatpush1.msra.mxu0 0.0
    %2760 = vmatprep.subr.mxu0 0.0
    %2761 = vmatpush1.msra.mxu0 %v2725
    %2762 = vmatprep.subr.mxu0 0.0
    %2763 = vmatpush2.msra.mxu0 0.0
    %2764 = vmatprep.subr.mxu0 0.0
    %2765 = vmatpush2.msra.mxu0 0.0
    %2766 = vmatprep.subr.mxu0 0.0
    %2767 = vmatpush2.msra.mxu0 0.0
    %2768 = vmatprep.subr.mxu0 0.0
    %2769 = vmatpush2.msra.mxu0 0.0
    %2770 = vmatprep.subr.mxu0 0.0
    %2771 = vmatpush2.msra.mxu0 0.0
    %2772 = vmatprep.subr.mxu0 0.0
    %2773 = vmatpush2.msra.mxu0 0.0
    %2774 = vmatprep.subr.mxu0 0.0
    %2775 = vmatpush2.msra.mxu0 0.0
    %2776 = vmatprep.subr.mxu0 0.0
    %2777 = vmatpush2.msra.mxu0 0.0
    %2778 = vmatprep.subr.mxu0 0.0
    %2779 = vmatpush2.msra.mxu0 0.0
    %2780 = vmatprep.subr.mxu0 0.0
    %2781 = vmatpush2.msra.mxu0 0.0
    %2782 = vmatprep.subr.mxu0 0.0
    %2783 = vmatpush2.msra.mxu0 0.0
    %2784 = vmatprep.subr.mxu0 0.0
    %2785 = vmatpush2.msra.mxu0 0.0
    %2786 = vmatprep.subr.mxu0 0.0
    %2787 = vmatpush2.msra.mxu0 0.0
    %2788 = vmatprep.subr.mxu0 0.0
    %2789 = vmatpush2.msra.mxu0 0.0
    %2790 = vmatprep.subr.mxu0 0.0
    %2791 = vmatpush2.msra.mxu0 0.0
    %2792 = vmatprep.subr.mxu0 0.0
    %2793 = vmatpush2.msra.mxu0 0.0
    %2794 = vmatprep.mubr.f32.mxu0 0.0
    %2795 = vmatmul.mubr.f32.gmra.mxu0 %v2728
    %v2796 = vpop.f32.mrf.mxu0
    %v2797 = vadd.f32 0.0, %v2796
    %v2798 = vpop.f32.mrf.mxu0
    %2799 = vdwg.mxu0
    %2800 = vrot.lane.b32.xlu0 %v2126, 112
    %v2801 = vpop.permute.xlu0 %2800
    %2802 = vrot.lane.b32.xlu0 %v2126, 80
    %v2803 = vpop.permute.xlu0 %2802
    %v2804 = vsel %vm277, %v2801, 0
    %v2806 = vsel %vm277, %v2803, 0
    %2808 = vmatprep.subr.mxu0 0.0
    %2809 = vmatpush1.xpose.msra.mxu0 0.0
    %2810 = vmatprep.subr.mxu0 0.0
    %2811 = vmatpush1.xpose.msra.mxu0 0.0
    %2812 = vmatprep.subr.mxu0 0.0
    %2813 = vmatpush1.xpose.msra.mxu0 0.0
    %2814 = vmatprep.subr.mxu0 0.0
    %2815 = vmatpush1.xpose.msra.mxu0 0.0
    %2816 = vmatprep.subr.mxu0 0.0
    %2817 = vmatpush1.xpose.msra.mxu0 0.0
    %2818 = vmatprep.subr.mxu0 0.0
    %2819 = vmatpush1.xpose.msra.mxu0 0.0
    %2820 = vmatprep.subr.mxu0 0.0
    %2821 = vmatpush1.xpose.msra.mxu0 0.0
    %2822 = vmatprep.subr.mxu0 0.0
    %2823 = vmatpush1.xpose.msra.mxu0 0.0
    %2824 = vmatprep.subr.mxu0 0.0
    %2825 = vmatpush1.xpose.msra.mxu0 0.0
    %2826 = vmatprep.subr.mxu0 0.0
    %2827 = vmatpush1.xpose.msra.mxu0 0.0
    %2828 = vmatprep.subr.mxu0 0.0
    %2829 = vmatpush1.xpose.msra.mxu0 0.0
    %2830 = vmatprep.subr.mxu0 0.0
    %2831 = vmatpush1.xpose.msra.mxu0 0.0
    %2832 = vmatprep.subr.mxu0 0.0
    %2833 = vmatpush1.xpose.msra.mxu0 0.0
    %2834 = vmatprep.subr.mxu0 0.0
    %2835 = vmatpush1.xpose.msra.mxu0 0.0
    %2836 = vmatprep.subr.mxu0 0.0
    %2837 = vmatpush1.xpose.msra.mxu0 0.0
    %2838 = vmatprep.subr.mxu0 0.0
    %2839 = vmatpush1.xpose.msra.mxu0 %v2806
    %2840 = vmatprep.subr.mxu0 0.0
    %2841 = vmatpush2.xpose.msra.mxu0 0.0
    %2842 = vmatprep.subr.mxu0 0.0
    %2843 = vmatpush2.xpose.msra.mxu0 0.0
    %2844 = vmatprep.subr.mxu0 0.0
    %2845 = vmatpush2.xpose.msra.mxu0 0.0
    %2846 = vmatprep.subr.mxu0 0.0
    %2847 = vmatpush2.xpose.msra.mxu0 0.0
    %2848 = vmatprep.subr.mxu0 0.0
    %2849 = vmatpush2.xpose.msra.mxu0 0.0
    %2850 = vmatprep.subr.mxu0 0.0
    %2851 = vmatpush2.xpose.msra.mxu0 0.0
    %2852 = vmatprep.subr.mxu0 0.0
    %2853 = vmatpush2.xpose.msra.mxu0 0.0
    %2854 = vmatprep.subr.mxu0 0.0
    %2855 = vmatpush2.xpose.msra.mxu0 0.0
    %2856 = vmatprep.subr.mxu0 0.0
    %2857 = vmatpush2.xpose.msra.mxu0 0.0
    %2858 = vmatprep.subr.mxu0 0.0
    %2859 = vmatpush2.xpose.msra.mxu0 0.0
    %2860 = vmatprep.subr.mxu0 0.0
    %2861 = vmatpush2.xpose.msra.mxu0 0.0
    %2862 = vmatprep.subr.mxu0 0.0
    %2863 = vmatpush2.xpose.msra.mxu0 0.0
    %2864 = vmatprep.subr.mxu0 0.0
    %2865 = vmatpush2.xpose.msra.mxu0 0.0
    %2866 = vmatprep.subr.mxu0 0.0
    %2867 = vmatpush2.xpose.msra.mxu0 0.0
    %2868 = vmatprep.subr.mxu0 0.0
    %2869 = vmatpush2.xpose.msra.mxu0 0.0
    %2870 = vmatprep.subr.mxu0 0.0
    %2871 = vmatpush2.xpose.msra.mxu0 0.0
    %2872 = vmatprep.mubr.f32.mxu0 0.0
    %2873 = vmatmul.mubr.f32.gmra.mxu0 %v2804
    %v2874 = vpop.f32.mrf.mxu0
    %v2875 = vadd.f32 0.0, %v2874
    %v2876 = vpop.f32.mrf.mxu0
    %2877 = vdwg.mxu0
    %v2878 = vmul.f32 %v2875, 0.35355338
    %v2879 = vadd.f32 %v2878, %v356
    %v2880 = vsel %vm277, %v2879, -inf
    %2881 = vmax.xlane.f32.xlu0 %v2880
    %v2882 = vpop.xlane.xlu0 %2881
    %v2883 = vsub.f32 %v2879, %v2882
    %v2884 = vmul.f32 %v2883, 1.442695
    %v2885 = vpow.pop %v2884
    %v2886 = vsel %vm277, %v2885, 0.0
    %2887 = vadd.xlane.f32.xlu0 %v2886
    %v2888 = vpop.xlane.xlu0 %2887
    %v2889 = vrcp.pop %v2888
    %v2890 = vmul.f32 %v2885, %v2889
    %2891 = vrot.lane.b32.xlu0 %v2126, 48
    %v2892 = vpop.permute.xlu0 %2891
    %v2895 = vsel %vm277, %v2890, 0
    %2897 = vmatprep.subr.mxu0 0.0
    %2898 = vmatpush1.msra.mxu0 0.0
    %2899 = vmatprep.subr.mxu0 0.0
    %2900 = vmatpush1.msra.mxu0 0.0
    %2901 = vmatprep.subr.mxu0 0.0
    %2902 = vmatpush1.msra.mxu0 0.0
    %2903 = vmatprep.subr.mxu0 0.0
    %2904 = vmatpush1.msra.mxu0 0.0
    %2905 = vmatprep.subr.mxu0 0.0
    %2906 = vmatpush1.msra.mxu0 0.0
    %2907 = vmatprep.subr.mxu0 0.0
    %2908 = vmatpush1.msra.mxu0 0.0
    %2909 = vmatprep.subr.mxu0 0.0
    %2910 = vmatpush1.msra.mxu0 0.0
    %2911 = vmatprep.subr.mxu0 0.0
    %2912 = vmatpush1.msra.mxu0 0.0
    %2913 = vmatprep.subr.mxu0 0.0
    %2914 = vmatpush1.msra.mxu0 0.0
    %2915 = vmatprep.subr.mxu0 0.0
    %2916 = vmatpush1.msra.mxu0 0.0
    %2917 = vmatprep.subr.mxu0 0.0
    %2918 = vmatpush1.msra.mxu0 0.0
    %2919 = vmatprep.subr.mxu0 0.0
    %2920 = vmatpush1.msra.mxu0 0.0
    %2921 = vmatprep.subr.mxu0 0.0
    %2922 = vmatpush1.msra.mxu0 0.0
    %2923 = vmatprep.subr.mxu0 0.0
    %2924 = vmatpush1.msra.mxu0 0.0
    %2925 = vmatprep.subr.mxu0 0.0
    %2926 = vmatpush1.msra.mxu0 0.0
    %2927 = vmatprep.subr.mxu0 0.0
    %2928 = vmatpush1.msra.mxu0 %v2892
    %2929 = vmatprep.subr.mxu0 0.0
    %2930 = vmatpush2.msra.mxu0 0.0
    %2931 = vmatprep.subr.mxu0 0.0
    %2932 = vmatpush2.msra.mxu0 0.0
    %2933 = vmatprep.subr.mxu0 0.0
    %2934 = vmatpush2.msra.mxu0 0.0
    %2935 = vmatprep.subr.mxu0 0.0
    %2936 = vmatpush2.msra.mxu0 0.0
    %2937 = vmatprep.subr.mxu0 0.0
    %2938 = vmatpush2.msra.mxu0 0.0
    %2939 = vmatprep.subr.mxu0 0.0
    %2940 = vmatpush2.msra.mxu0 0.0
    %2941 = vmatprep.subr.mxu0 0.0
    %2942 = vmatpush2.msra.mxu0 0.0
    %2943 = vmatprep.subr.mxu0 0.0
    %2944 = vmatpush2.msra.mxu0 0.0
    %2945 = vmatprep.subr.mxu0 0.0
    %2946 = vmatpush2.msra.mxu0 0.0
    %2947 = vmatprep.subr.mxu0 0.0
    %2948 = vmatpush2.msra.mxu0 0.0
    %2949 = vmatprep.subr.mxu0 0.0
    %2950 = vmatpush2.msra.mxu0 0.0
    %2951 = vmatprep.subr.mxu0 0.0
    %2952 = vmatpush2.msra.mxu0 0.0
    %2953 = vmatprep.subr.mxu0 0.0
    %2954 = vmatpush2.msra.mxu0 0.0
    %2955 = vmatprep.subr.mxu0 0.0
    %2956 = vmatpush2.msra.mxu0 0.0
    %2957 = vmatprep.subr.mxu0 0.0
    %2958 = vmatpush2.msra.mxu0 0.0
    %2959 = vmatprep.subr.mxu0 0.0
    %2960 = vmatpush2.msra.mxu0 0.0
    %2961 = vmatprep.mubr.f32.mxu0 0.0
    %2962 = vmatmul.mubr.f32.gmra.mxu0 %v2895
    %v2963 = vpop.f32.mrf.mxu0
    %v2964 = vadd.f32 0.0, %v2963
    %v2965 = vpop.f32.mrf.mxu0
    %2966 = vdwg.mxu0
    %2967 = vrot.lane.b32.xlu0 %v2131, 112
    %v2968 = vpop.permute.xlu0 %2967
    %2969 = vrot.lane.b32.xlu0 %v2131, 80
    %v2970 = vpop.permute.xlu0 %2969
    %v2971 = vsel %vm277, %v2968, 0
    %v2973 = vsel %vm277, %v2970, 0
    %2975 = vmatprep.subr.mxu0 0.0
    %2976 = vmatpush1.xpose.msra.mxu0 0.0
    %2977 = vmatprep.subr.mxu0 0.0
    %2978 = vmatpush1.xpose.msra.mxu0 0.0
    %2979 = vmatprep.subr.mxu0 0.0
    %2980 = vmatpush1.xpose.msra.mxu0 0.0
    %2981 = vmatprep.subr.mxu0 0.0
    %2982 = vmatpush1.xpose.msra.mxu0 0.0
    %2983 = vmatprep.subr.mxu0 0.0
    %2984 = vmatpush1.xpose.msra.mxu0 0.0
    %2985 = vmatprep.subr.mxu0 0.0
    %2986 = vmatpush1.xpose.msra.mxu0 0.0
    %2987 = vmatprep.subr.mxu0 0.0
    %2988 = vmatpush1.xpose.msra.mxu0 0.0
    %2989 = vmatprep.subr.mxu0 0.0
    %2990 = vmatpush1.xpose.msra.mxu0 0.0
    %2991 = vmatprep.subr.mxu0 0.0
    %2992 = vmatpush1.xpose.msra.mxu0 0.0
    %2993 = vmatprep.subr.mxu0 0.0
    %2994 = vmatpush1.xpose.msra.mxu0 0.0
    %2995 = vmatprep.subr.mxu0 0.0
    %2996 = vmatpush1.xpose.msra.mxu0 0.0
    %2997 = vmatprep.subr.mxu0 0.0
    %2998 = vmatpush1.xpose.msra.mxu0 0.0
    %2999 = vmatprep.subr.mxu0 0.0
    %3000 = vmatpush1.xpose.msra.mxu0 0.0
    %3001 = vmatprep.subr.mxu0 0.0
    %3002 = vmatpush1.xpose.msra.mxu0 0.0
    %3003 = vmatprep.subr.mxu0 0.0
    %3004 = vmatpush1.xpose.msra.mxu0 0.0
    %3005 = vmatprep.subr.mxu0 0.0
    %3006 = vmatpush1.xpose.msra.mxu0 %v2973
    %3007 = vmatprep.subr.mxu0 0.0
    %3008 = vmatpush2.xpose.msra.mxu0 0.0
    %3009 = vmatprep.subr.mxu0 0.0
    %3010 = vmatpush2.xpose.msra.mxu0 0.0
    %3011 = vmatprep.subr.mxu0 0.0
    %3012 = vmatpush2.xpose.msra.mxu0 0.0
    %3013 = vmatprep.subr.mxu0 0.0
    %3014 = vmatpush2.xpose.msra.mxu0 0.0
    %3015 = vmatprep.subr.mxu0 0.0
    %3016 = vmatpush2.xpose.msra.mxu0 0.0
    %3017 = vmatprep.subr.mxu0 0.0
    %3018 = vmatpush2.xpose.msra.mxu0 0.0
    %3019 = vmatprep.subr.mxu0 0.0
    %3020 = vmatpush2.xpose.msra.mxu0 0.0
    %3021 = vmatprep.subr.mxu0 0.0
    %3022 = vmatpush2.xpose.msra.mxu0 0.0
    %3023 = vmatprep.subr.mxu0 0.0
    %3024 = vmatpush2.xpose.msra.mxu0 0.0
    %3025 = vmatprep.subr.mxu0 0.0
    %3026 = vmatpush2.xpose.msra.mxu0 0.0
    %3027 = vmatprep.subr.mxu0 0.0
    %3028 = vmatpush2.xpose.msra.mxu0 0.0
    %3029 = vmatprep.subr.mxu0 0.0
    %3030 = vmatpush2.xpose.msra.mxu0 0.0
    %3031 = vmatprep.subr.mxu0 0.0
    %3032 = vmatpush2.xpose.msra.mxu0 0.0
    %3033 = vmatprep.subr.mxu0 0.0
    %3034 = vmatpush2.xpose.msra.mxu0 0.0
    %3035 = vmatprep.subr.mxu0 0.0
    %3036 = vmatpush2.xpose.msra.mxu0 0.0
    %3037 = vmatprep.subr.mxu0 0.0
    %3038 = vmatpush2.xpose.msra.mxu0 0.0
    %3039 = vmatprep.mubr.f32.mxu0 0.0
    %3040 = vmatmul.mubr.f32.gmra.mxu0 %v2971
    %v3041 = vpop.f32.mrf.mxu0
    %v3042 = vadd.f32 0.0, %v3041
    %v3043 = vpop.f32.mrf.mxu0
    %3044 = vdwg.mxu0
    %v3045 = vmul.f32 %v3042, 0.35355338
    %v3046 = vadd.f32 %v3045, %v526
    %v3047 = vsel %vm277, %v3046, -inf
    %3048 = vmax.xlane.f32.xlu0 %v3047
    %v3049 = vpop.xlane.xlu0 %3048
    %v3050 = vsub.f32 %v3046, %v3049
    %v3051 = vmul.f32 %v3050, 1.442695
    %v3052 = vpow.pop %v3051
    %v3053 = vsel %vm277, %v3052, 0.0
    %3054 = vadd.xlane.f32.xlu0 %v3053
    %v3055 = vpop.xlane.xlu0 %3054
    %v3056 = vrcp.pop %v3055
    %v3057 = vmul.f32 %v3052, %v3056
    %3058 = vrot.lane.b32.xlu0 %v2131, 48
    %v3059 = vpop.permute.xlu0 %3058
    %v3062 = vsel %vm277, %v3057, 0
    %3064 = vmatprep.subr.mxu0 0.0
    %3065 = vmatpush1.msra.mxu0 0.0
    %3066 = vmatprep.subr.mxu0 0.0
    %3067 = vmatpush1.msra.mxu0 0.0
    %3068 = vmatprep.subr.mxu0 0.0
    %3069 = vmatpush1.msra.mxu0 0.0
    %3070 = vmatprep.subr.mxu0 0.0
    %3071 = vmatpush1.msra.mxu0 0.0
    %3072 = vmatprep.subr.mxu0 0.0
    %3073 = vmatpush1.msra.mxu0 0.0
    %3074 = vmatprep.subr.mxu0 0.0
    %3075 = vmatpush1.msra.mxu0 0.0
    %3076 = vmatprep.subr.mxu0 0.0
    %3077 = vmatpush1.msra.mxu0 0.0
    %3078 = vmatprep.subr.mxu0 0.0
    %3079 = vmatpush1.msra.mxu0 0.0
    %3080 = vmatprep.subr.mxu0 0.0
    %3081 = vmatpush1.msra.mxu0 0.0
    %3082 = vmatprep.subr.mxu0 0.0
    %3083 = vmatpush1.msra.mxu0 0.0
    %3084 = vmatprep.subr.mxu0 0.0
    %3085 = vmatpush1.msra.mxu0 0.0
    %3086 = vmatprep.subr.mxu0 0.0
    %3087 = vmatpush1.msra.mxu0 0.0
    %3088 = vmatprep.subr.mxu0 0.0
    %3089 = vmatpush1.msra.mxu0 0.0
    %3090 = vmatprep.subr.mxu0 0.0
    %3091 = vmatpush1.msra.mxu0 0.0
    %3092 = vmatprep.subr.mxu0 0.0
    %3093 = vmatpush1.msra.mxu0 0.0
    %3094 = vmatprep.subr.mxu0 0.0
    %3095 = vmatpush1.msra.mxu0 %v3059
    %3096 = vmatprep.subr.mxu0 0.0
    %3097 = vmatpush2.msra.mxu0 0.0
    %3098 = vmatprep.subr.mxu0 0.0
    %3099 = vmatpush2.msra.mxu0 0.0
    %3100 = vmatprep.subr.mxu0 0.0
    %3101 = vmatpush2.msra.mxu0 0.0
    %3102 = vmatprep.subr.mxu0 0.0
    %3103 = vmatpush2.msra.mxu0 0.0
    %3104 = vmatprep.subr.mxu0 0.0
    %3105 = vmatpush2.msra.mxu0 0.0
    %3106 = vmatprep.subr.mxu0 0.0
    %3107 = vmatpush2.msra.mxu0 0.0
    %3108 = vmatprep.subr.mxu0 0.0
    %3109 = vmatpush2.msra.mxu0 0.0
    %3110 = vmatprep.subr.mxu0 0.0
    %3111 = vmatpush2.msra.mxu0 0.0
    %3112 = vmatprep.subr.mxu0 0.0
    %3113 = vmatpush2.msra.mxu0 0.0
    %3114 = vmatprep.subr.mxu0 0.0
    %3115 = vmatpush2.msra.mxu0 0.0
    %3116 = vmatprep.subr.mxu0 0.0
    %3117 = vmatpush2.msra.mxu0 0.0
    %3118 = vmatprep.subr.mxu0 0.0
    %3119 = vmatpush2.msra.mxu0 0.0
    %3120 = vmatprep.subr.mxu0 0.0
    %3121 = vmatpush2.msra.mxu0 0.0
    %3122 = vmatprep.subr.mxu0 0.0
    %3123 = vmatpush2.msra.mxu0 0.0
    %3124 = vmatprep.subr.mxu0 0.0
    %3125 = vmatpush2.msra.mxu0 0.0
    %3126 = vmatprep.subr.mxu0 0.0
    %3127 = vmatpush2.msra.mxu0 0.0
    %3128 = vmatprep.mubr.f32.mxu0 0.0
    %3129 = vmatmul.mubr.f32.gmra.mxu0 %v3062
    %v3130 = vpop.f32.mrf.mxu0
    %v3131 = vadd.f32 0.0, %v3130
    %v3132 = vpop.f32.mrf.mxu0
    %3133 = vdwg.mxu0
    %3134 = vrot.lane.b32.xlu0 %v2126, 104
    %v3135 = vpop.permute.xlu0 %3134
    %3136 = vrot.lane.b32.xlu0 %v2126, 72
    %v3137 = vpop.permute.xlu0 %3136
    %v3138 = vsel %vm277, %v3135, 0
    %v3140 = vsel %vm277, %v3137, 0
    %3142 = vmatprep.subr.mxu0 0.0
    %3143 = vmatpush1.xpose.msra.mxu0 0.0
    %3144 = vmatprep.subr.mxu0 0.0
    %3145 = vmatpush1.xpose.msra.mxu0 0.0
    %3146 = vmatprep.subr.mxu0 0.0
    %3147 = vmatpush1.xpose.msra.mxu0 0.0
    %3148 = vmatprep.subr.mxu0 0.0
    %3149 = vmatpush1.xpose.msra.mxu0 0.0
    %3150 = vmatprep.subr.mxu0 0.0
    %3151 = vmatpush1.xpose.msra.mxu0 0.0
    %3152 = vmatprep.subr.mxu0 0.0
    %3153 = vmatpush1.xpose.msra.mxu0 0.0
    %3154 = vmatprep.subr.mxu0 0.0
    %3155 = vmatpush1.xpose.msra.mxu0 0.0
    %3156 = vmatprep.subr.mxu0 0.0
    %3157 = vmatpush1.xpose.msra.mxu0 0.0
    %3158 = vmatprep.subr.mxu0 0.0
    %3159 = vmatpush1.xpose.msra.mxu0 0.0
    %3160 = vmatprep.subr.mxu0 0.0
    %3161 = vmatpush1.xpose.msra.mxu0 0.0
    %3162 = vmatprep.subr.mxu0 0.0
    %3163 = vmatpush1.xpose.msra.mxu0 0.0
    %3164 = vmatprep.subr.mxu0 0.0
    %3165 = vmatpush1.xpose.msra.mxu0 0.0
    %3166 = vmatprep.subr.mxu0 0.0
    %3167 = vmatpush1.xpose.msra.mxu0 0.0
    %3168 = vmatprep.subr.mxu0 0.0
    %3169 = vmatpush1.xpose.msra.mxu0 0.0
    %3170 = vmatprep.subr.mxu0 0.0
    %3171 = vmatpush1.xpose.msra.mxu0 0.0
    %3172 = vmatprep.subr.mxu0 0.0
    %3173 = vmatpush1.xpose.msra.mxu0 %v3140
    %3174 = vmatprep.subr.mxu0 0.0
    %3175 = vmatpush2.xpose.msra.mxu0 0.0
    %3176 = vmatprep.subr.mxu0 0.0
    %3177 = vmatpush2.xpose.msra.mxu0 0.0
    %3178 = vmatprep.subr.mxu0 0.0
    %3179 = vmatpush2.xpose.msra.mxu0 0.0
    %3180 = vmatprep.subr.mxu0 0.0
    %3181 = vmatpush2.xpose.msra.mxu0 0.0
    %3182 = vmatprep.subr.mxu0 0.0
    %3183 = vmatpush2.xpose.msra.mxu0 0.0
    %3184 = vmatprep.subr.mxu0 0.0
    %3185 = vmatpush2.xpose.msra.mxu0 0.0
    %3186 = vmatprep.subr.mxu0 0.0
    %3187 = vmatpush2.xpose.msra.mxu0 0.0
    %3188 = vmatprep.subr.mxu0 0.0
    %3189 = vmatpush2.xpose.msra.mxu0 0.0
    %3190 = vmatprep.subr.mxu0 0.0
    %3191 = vmatpush2.xpose.msra.mxu0 0.0
    %3192 = vmatprep.subr.mxu0 0.0
    %3193 = vmatpush2.xpose.msra.mxu0 0.0
    %3194 = vmatprep.subr.mxu0 0.0
    %3195 = vmatpush2.xpose.msra.mxu0 0.0
    %3196 = vmatprep.subr.mxu0 0.0
    %3197 = vmatpush2.xpose.msra.mxu0 0.0
    %3198 = vmatprep.subr.mxu0 0.0
    %3199 = vmatpush2.xpose.msra.mxu0 0.0
    %3200 = vmatprep.subr.mxu0 0.0
    %3201 = vmatpush2.xpose.msra.mxu0 0.0
    %3202 = vmatprep.subr.mxu0 0.0
    %3203 = vmatpush2.xpose.msra.mxu0 0.0
    %3204 = vmatprep.subr.mxu0 0.0
    %3205 = vmatpush2.xpose.msra.mxu0 0.0
    %3206 = vmatprep.mubr.f32.mxu0 0.0
    %3207 = vmatmul.mubr.f32.gmra.mxu0 %v3138
    %v3208 = vpop.f32.mrf.mxu0
    %v3209 = vadd.f32 0.0, %v3208
    %v3210 = vpop.f32.mrf.mxu0
    %3211 = vdwg.mxu0
    %v3212 = vmul.f32 %v3209, 0.35355338
    %v3213 = vadd.f32 %v3212, %v356
    %v3214 = vsel %vm277, %v3213, -inf
    %3215 = vmax.xlane.f32.xlu0 %v3214
    %v3216 = vpop.xlane.xlu0 %3215
    %v3217 = vsub.f32 %v3213, %v3216
    %v3218 = vmul.f32 %v3217, 1.442695
    %v3219 = vpow.pop %v3218
    %v3220 = vsel %vm277, %v3219, 0.0
    %3221 = vadd.xlane.f32.xlu0 %v3220
    %v3222 = vpop.xlane.xlu0 %3221
    %v3223 = vrcp.pop %v3222
    %v3224 = vmul.f32 %v3219, %v3223
    %3225 = vrot.lane.b32.xlu0 %v2126, 40
    %v3226 = vpop.permute.xlu0 %3225
    %v3229 = vsel %vm277, %v3224, 0
    %3231 = vmatprep.subr.mxu0 0.0
    %3232 = vmatpush1.msra.mxu0 0.0
    %3233 = vmatprep.subr.mxu0 0.0
    %3234 = vmatpush1.msra.mxu0 0.0
    %3235 = vmatprep.subr.mxu0 0.0
    %3236 = vmatpush1.msra.mxu0 0.0
    %3237 = vmatprep.subr.mxu0 0.0
    %3238 = vmatpush1.msra.mxu0 0.0
    %3239 = vmatprep.subr.mxu0 0.0
    %3240 = vmatpush1.msra.mxu0 0.0
    %3241 = vmatprep.subr.mxu0 0.0
    %3242 = vmatpush1.msra.mxu0 0.0
    %3243 = vmatprep.subr.mxu0 0.0
    %3244 = vmatpush1.msra.mxu0 0.0
    %3245 = vmatprep.subr.mxu0 0.0
    %3246 = vmatpush1.msra.mxu0 0.0
    %3247 = vmatprep.subr.mxu0 0.0
    %3248 = vmatpush1.msra.mxu0 0.0
    %3249 = vmatprep.subr.mxu0 0.0
    %3250 = vmatpush1.msra.mxu0 0.0
    %3251 = vmatprep.subr.mxu0 0.0
    %3252 = vmatpush1.msra.mxu0 0.0
    %3253 = vmatprep.subr.mxu0 0.0
    %3254 = vmatpush1.msra.mxu0 0.0
    %3255 = vmatprep.subr.mxu0 0.0
    %3256 = vmatpush1.msra.mxu0 0.0
    %3257 = vmatprep.subr.mxu0 0.0
    %3258 = vmatpush1.msra.mxu0 0.0
    %3259 = vmatprep.subr.mxu0 0.0
    %3260 = vmatpush1.msra.mxu0 0.0
    %3261 = vmatprep.subr.mxu0 0.0
    %3262 = vmatpush1.msra.mxu0 %v3226
    %3263 = vmatprep.subr.mxu0 0.0
    %3264 = vmatpush2.msra.mxu0 0.0
    %3265 = vmatprep.subr.mxu0 0.0
    %3266 = vmatpush2.msra.mxu0 0.0
    %3267 = vmatprep.subr.mxu0 0.0
    %3268 = vmatpush2.msra.mxu0 0.0
    %3269 = vmatprep.subr.mxu0 0.0
    %3270 = vmatpush2.msra.mxu0 0.0
    %3271 = vmatprep.subr.mxu0 0.0
    %3272 = vmatpush2.msra.mxu0 0.0
    %3273 = vmatprep.subr.mxu0 0.0
    %3274 = vmatpush2.msra.mxu0 0.0
    %3275 = vmatprep.subr.mxu0 0.0
    %3276 = vmatpush2.msra.mxu0 0.0
    %3277 = vmatprep.subr.mxu0 0.0
    %3278 = vmatpush2.msra.mxu0 0.0
    %3279 = vmatprep.subr.mxu0 0.0
    %3280 = vmatpush2.msra.mxu0 0.0
    %3281 = vmatprep.subr.mxu0 0.0
    %3282 = vmatpush2.msra.mxu0 0.0
    %3283 = vmatprep.subr.mxu0 0.0
    %3284 = vmatpush2.msra.mxu0 0.0
    %3285 = vmatprep.subr.mxu0 0.0
    %3286 = vmatpush2.msra.mxu0 0.0
    %3287 = vmatprep.subr.mxu0 0.0
    %3288 = vmatpush2.msra.mxu0 0.0
    %3289 = vmatprep.subr.mxu0 0.0
    %3290 = vmatpush2.msra.mxu0 0.0
    %3291 = vmatprep.subr.mxu0 0.0
    %3292 = vmatpush2.msra.mxu0 0.0
    %3293 = vmatprep.subr.mxu0 0.0
    %3294 = vmatpush2.msra.mxu0 0.0
    %3295 = vmatprep.mubr.f32.mxu0 0.0
    %3296 = vmatmul.mubr.f32.gmra.mxu0 %v3229
    %v3297 = vpop.f32.mrf.mxu0
    %v3298 = vadd.f32 0.0, %v3297
    %v3299 = vpop.f32.mrf.mxu0
    %3300 = vdwg.mxu0
    %3301 = vrot.lane.b32.xlu0 %v2131, 104
    %v3302 = vpop.permute.xlu0 %3301
    %3303 = vrot.lane.b32.xlu0 %v2131, 72
    %v3304 = vpop.permute.xlu0 %3303
    %v3305 = vsel %vm277, %v3302, 0
    %v3307 = vsel %vm277, %v3304, 0
    %3309 = vmatprep.subr.mxu0 0.0
    %3310 = vmatpush1.xpose.msra.mxu0 0.0
    %3311 = vmatprep.subr.mxu0 0.0
    %3312 = vmatpush1.xpose.msra.mxu0 0.0
    %3313 = vmatprep.subr.mxu0 0.0
    %3314 = vmatpush1.xpose.msra.mxu0 0.0
    %3315 = vmatprep.subr.mxu0 0.0
    %3316 = vmatpush1.xpose.msra.mxu0 0.0
    %3317 = vmatprep.subr.mxu0 0.0
    %3318 = vmatpush1.xpose.msra.mxu0 0.0
    %3319 = vmatprep.subr.mxu0 0.0
    %3320 = vmatpush1.xpose.msra.mxu0 0.0
    %3321 = vmatprep.subr.mxu0 0.0
    %3322 = vmatpush1.xpose.msra.mxu0 0.0
    %3323 = vmatprep.subr.mxu0 0.0
    %3324 = vmatpush1.xpose.msra.mxu0 0.0
    %3325 = vmatprep.subr.mxu0 0.0
    %3326 = vmatpush1.xpose.msra.mxu0 0.0
    %3327 = vmatprep.subr.mxu0 0.0
    %3328 = vmatpush1.xpose.msra.mxu0 0.0
    %3329 = vmatprep.subr.mxu0 0.0
    %3330 = vmatpush1.xpose.msra.mxu0 0.0
    %3331 = vmatprep.subr.mxu0 0.0
    %3332 = vmatpush1.xpose.msra.mxu0 0.0
    %3333 = vmatprep.subr.mxu0 0.0
    %3334 = vmatpush1.xpose.msra.mxu0 0.0
    %3335 = vmatprep.subr.mxu0 0.0
    %3336 = vmatpush1.xpose.msra.mxu0 0.0
    %3337 = vmatprep.subr.mxu0 0.0
    %3338 = vmatpush1.xpose.msra.mxu0 0.0
    %3339 = vmatprep.subr.mxu0 0.0
    %3340 = vmatpush1.xpose.msra.mxu0 %v3307
    %3341 = vmatprep.subr.mxu0 0.0
    %3342 = vmatpush2.xpose.msra.mxu0 0.0
    %3343 = vmatprep.subr.mxu0 0.0
    %3344 = vmatpush2.xpose.msra.mxu0 0.0
    %3345 = vmatprep.subr.mxu0 0.0
    %3346 = vmatpush2.xpose.msra.mxu0 0.0
    %3347 = vmatprep.subr.mxu0 0.0
    %3348 = vmatpush2.xpose.msra.mxu0 0.0
    %3349 = vmatprep.subr.mxu0 0.0
    %3350 = vmatpush2.xpose.msra.mxu0 0.0
    %3351 = vmatprep.subr.mxu0 0.0
    %3352 = vmatpush2.xpose.msra.mxu0 0.0
    %3353 = vmatprep.subr.mxu0 0.0
    %3354 = vmatpush2.xpose.msra.mxu0 0.0
    %3355 = vmatprep.subr.mxu0 0.0
    %3356 = vmatpush2.xpose.msra.mxu0 0.0
    %3357 = vmatprep.subr.mxu0 0.0
    %3358 = vmatpush2.xpose.msra.mxu0 0.0
    %3359 = vmatprep.subr.mxu0 0.0
    %3360 = vmatpush2.xpose.msra.mxu0 0.0
    %3361 = vmatprep.subr.mxu0 0.0
    %3362 = vmatpush2.xpose.msra.mxu0 0.0
    %3363 = vmatprep.subr.mxu0 0.0
    %3364 = vmatpush2.xpose.msra.mxu0 0.0
    %3365 = vmatprep.subr.mxu0 0.0
    %3366 = vmatpush2.xpose.msra.mxu0 0.0
    %3367 = vmatprep.subr.mxu0 0.0
    %3368 = vmatpush2.xpose.msra.mxu0 0.0
    %3369 = vmatprep.subr.mxu0 0.0
    %3370 = vmatpush2.xpose.msra.mxu0 0.0
    %3371 = vmatprep.subr.mxu0 0.0
    %3372 = vmatpush2.xpose.msra.mxu0 0.0
    %3373 = vmatprep.mubr.f32.mxu0 0.0
    %3374 = vmatmul.mubr.f32.gmra.mxu0 %v3305
    %v3375 = vpop.f32.mrf.mxu0
    %v3376 = vadd.f32 0.0, %v3375
    %v3377 = vpop.f32.mrf.mxu0
    %3378 = vdwg.mxu0
    %v3379 = vmul.f32 %v3376, 0.35355338
    %v3380 = vadd.f32 %v3379, %v526
    %v3381 = vsel %vm277, %v3380, -inf
    %3382 = vmax.xlane.f32.xlu0 %v3381
    %v3383 = vpop.xlane.xlu0 %3382
    %v3384 = vsub.f32 %v3380, %v3383
    %v3385 = vmul.f32 %v3384, 1.442695
    %v3386 = vpow.pop %v3385
    %v3387 = vsel %vm277, %v3386, 0.0
    %3388 = vadd.xlane.f32.xlu0 %v3387
    %v3389 = vpop.xlane.xlu0 %3388
    %v3390 = vrcp.pop %v3389
    %v3391 = vmul.f32 %v3386, %v3390
    %3392 = vrot.lane.b32.xlu0 %v2131, 40
    %v3393 = vpop.permute.xlu0 %3392
    %v3396 = vsel %vm277, %v3391, 0
    %3398 = vmatprep.subr.mxu0 0.0
    %3399 = vmatpush1.msra.mxu0 0.0
    %3400 = vmatprep.subr.mxu0 0.0
    %3401 = vmatpush1.msra.mxu0 0.0
    %3402 = vmatprep.subr.mxu0 0.0
    %3403 = vmatpush1.msra.mxu0 0.0
    %3404 = vmatprep.subr.mxu0 0.0
    %3405 = vmatpush1.msra.mxu0 0.0
    %3406 = vmatprep.subr.mxu0 0.0
    %3407 = vmatpush1.msra.mxu0 0.0
    %3408 = vmatprep.subr.mxu0 0.0
    %3409 = vmatpush1.msra.mxu0 0.0
    %3410 = vmatprep.subr.mxu0 0.0
    %3411 = vmatpush1.msra.mxu0 0.0
    %3412 = vmatprep.subr.mxu0 0.0
    %3413 = vmatpush1.msra.mxu0 0.0
    %3414 = vmatprep.subr.mxu0 0.0
    %3415 = vmatpush1.msra.mxu0 0.0
    %3416 = vmatprep.subr.mxu0 0.0
    %3417 = vmatpush1.msra.mxu0 0.0
    %3418 = vmatprep.subr.mxu0 0.0
    %3419 = vmatpush1.msra.mxu0 0.0
    %3420 = vmatprep.subr.mxu0 0.0
    %3421 = vmatpush1.msra.mxu0 0.0
    %3422 = vmatprep.subr.mxu0 0.0
    %3423 = vmatpush1.msra.mxu0 0.0
    %3424 = vmatprep.subr.mxu0 0.0
    %3425 = vmatpush1.msra.mxu0 0.0
    %3426 = vmatprep.subr.mxu0 0.0
    %3427 = vmatpush1.msra.mxu0 0.0
    %3428 = vmatprep.subr.mxu0 0.0
    %3429 = vmatpush1.msra.mxu0 %v3393
    %3430 = vmatprep.subr.mxu0 0.0
    %3431 = vmatpush2.msra.mxu0 0.0
    %3432 = vmatprep.subr.mxu0 0.0
    %3433 = vmatpush2.msra.mxu0 0.0
    %3434 = vmatprep.subr.mxu0 0.0
    %3435 = vmatpush2.msra.mxu0 0.0
    %3436 = vmatprep.subr.mxu0 0.0
    %3437 = vmatpush2.msra.mxu0 0.0
    %3438 = vmatprep.subr.mxu0 0.0
    %3439 = vmatpush2.msra.mxu0 0.0
    %3440 = vmatprep.subr.mxu0 0.0
    %3441 = vmatpush2.msra.mxu0 0.0
    %3442 = vmatprep.subr.mxu0 0.0
    %3443 = vmatpush2.msra.mxu0 0.0
    %3444 = vmatprep.subr.mxu0 0.0
    %3445 = vmatpush2.msra.mxu0 0.0
    %3446 = vmatprep.subr.mxu0 0.0
    %3447 = vmatpush2.msra.mxu0 0.0
    %3448 = vmatprep.subr.mxu0 0.0
    %3449 = vmatpush2.msra.mxu0 0.0
    %3450 = vmatprep.subr.mxu0 0.0
    %3451 = vmatpush2.msra.mxu0 0.0
    %3452 = vmatprep.subr.mxu0 0.0
    %3453 = vmatpush2.msra.mxu0 0.0
    %3454 = vmatprep.subr.mxu0 0.0
    %3455 = vmatpush2.msra.mxu0 0.0
    %3456 = vmatprep.subr.mxu0 0.0
    %3457 = vmatpush2.msra.mxu0 0.0
    %3458 = vmatprep.subr.mxu0 0.0
    %3459 = vmatpush2.msra.mxu0 0.0
    %3460 = vmatprep.subr.mxu0 0.0
    %3461 = vmatpush2.msra.mxu0 0.0
    %3462 = vmatprep.mubr.f32.mxu0 0.0
    %3463 = vmatmul.mubr.f32.gmra.mxu0 %v3396
    %v3464 = vpop.f32.mrf.mxu0
    %v3465 = vadd.f32 0.0, %v3464
    %v3466 = vpop.f32.mrf.mxu0
    %3467 = vdwg.mxu0
    %3470 = vrot.lane.b32.xlu0 %v2630, 8
    %v3471 = vpop.permute.xlu0 %3470
    %3472 = vrot.lane.b32.xlu0 %v2797, 8
    %v3473 = vpop.permute.xlu0 %3472
    %3478 = vrot.lane.b32.xlu0 %v2964, 16
    %v3479 = vpop.permute.xlu0 %3478
    %3480 = vrot.lane.b32.xlu0 %v3131, 16
    %v3481 = vpop.permute.xlu0 %3480
    %3486 = vrot.lane.b32.xlu0 %v3298, 24
    %v3487 = vpop.permute.xlu0 %3486
    %3488 = vrot.lane.b32.xlu0 %v3465, 24
    %v3489 = vpop.permute.xlu0 %3488
    %v3492 = vsel %vm277, %v2297, %v3471
    %v3493 = vsel %vm277, %v2463, %v3473
    %v3494 = vsel %vm1643, %v3492, %v3479
    %v3495 = vsel %vm1643, %v3493, %v3481
    %v3496 = vsel %vm1646, %v3494, %v3487
    %v3497 = vsel %vm1646, %v3495, %v3489
    %s3498 = scalar_lea.vmem %s17, 32
    %v3499 = vld [vmem:[%s3498] sm:$0xff]
    %v3500 = vld [vmem:[%s3498 + $0x8] sm:$0xff]
    %v3501 = vld [vmem:[%s3498 + $0x10] sm:$0xff]
    %v3502 = vld [vmem:[%s3498 + $0x18] sm:$0xff]
    %s3503 = scalar_lea.vmem %s19, 1
    %v3504 = vld [vmem:[%s3503] sm:$0x1]
    %v3506 = vlaneseq
    %v3507 = vshrl.u32 %v3506, 7
    %v3508 = vsub.s32 0, %v3507
    %v3509 = vrot.slane %v3504, %v3508
    %v3512 = vsel %vm135, %v3496, 0
    %v3515 = vsel %vm135, %v3497, 0
    %3517 = vmatprep.subr.mxu0 0.0
    %3518 = vmatpush1.msra.mxu0 0.0
    %3519 = vmatprep.subr.mxu0 0.0
    %3520 = vmatpush1.msra.mxu0 0.0
    %3521 = vmatprep.subr.mxu0 0.0
    %3522 = vmatpush1.msra.mxu0 0.0
    %3523 = vmatprep.subr.mxu0 0.0
    %3524 = vmatpush1.msra.mxu0 0.0
    %3525 = vmatprep.subr.mxu0 0.0
    %3526 = vmatpush1.msra.mxu0 0.0
    %3527 = vmatprep.subr.mxu0 0.0
    %3528 = vmatpush1.msra.mxu0 0.0
    %3529 = vmatprep.subr.mxu0 0.0
    %3530 = vmatpush1.msra.mxu0 0.0
    %3531 = vmatprep.subr.mxu0 0.0
    %3532 = vmatpush1.msra.mxu0 0.0
    %3533 = vmatprep.subr.mxu0 0.0
    %3534 = vmatpush1.msra.mxu0 0.0
    %3535 = vmatprep.subr.mxu0 0.0
    %3536 = vmatpush1.msra.mxu0 0.0
    %3537 = vmatprep.subr.mxu0 0.0
    %3538 = vmatpush1.msra.mxu0 0.0
    %3539 = vmatprep.subr.mxu0 0.0
    %3540 = vmatpush1.msra.mxu0 0.0
    %3541 = vmatprep.subr.mxu0 0.0
    %3542 = vmatpush1.msra.mxu0 %v3502
    %3543 = vmatprep.subr.mxu0 0.0
    %3544 = vmatpush1.msra.mxu0 %v3501
    %3545 = vmatprep.subr.mxu0 0.0
    %3546 = vmatpush1.msra.mxu0 %v3500
    %3547 = vmatprep.subr.mxu0 0.0
    %3548 = vmatpush1.msra.mxu0 %v3499
    %3549 = vmatprep.subr.mxu0 0.0
    %3550 = vmatpush2.msra.mxu0 0.0
    %3551 = vmatprep.subr.mxu0 0.0
    %3552 = vmatpush2.msra.mxu0 0.0
    %3553 = vmatprep.subr.mxu0 0.0
    %3554 = vmatpush2.msra.mxu0 0.0
    %3555 = vmatprep.subr.mxu0 0.0
    %3556 = vmatpush2.msra.mxu0 0.0
    %3557 = vmatprep.subr.mxu0 0.0
    %3558 = vmatpush2.msra.mxu0 0.0
    %3559 = vmatprep.subr.mxu0 0.0
    %3560 = vmatpush2.msra.mxu0 0.0
    %3561 = vmatprep.subr.mxu0 0.0
    %3562 = vmatpush2.msra.mxu0 0.0
    %3563 = vmatprep.subr.mxu0 0.0
    %3564 = vmatpush2.msra.mxu0 0.0
    %3565 = vmatprep.subr.mxu0 0.0
    %3566 = vmatpush2.msra.mxu0 0.0
    %3567 = vmatprep.subr.mxu0 0.0
    %3568 = vmatpush2.msra.mxu0 0.0
    %3569 = vmatprep.subr.mxu0 0.0
    %3570 = vmatpush2.msra.mxu0 0.0
    %3571 = vmatprep.subr.mxu0 0.0
    %3572 = vmatpush2.msra.mxu0 0.0
    %3573 = vmatprep.subr.mxu0 0.0
    %3574 = vmatpush2.msra.mxu0 0.0
    %3575 = vmatprep.subr.mxu0 0.0
    %3576 = vmatpush2.msra.mxu0 0.0
    %3577 = vmatprep.subr.mxu0 0.0
    %3578 = vmatpush2.msra.mxu0 0.0
    %3579 = vmatprep.subr.mxu0 0.0
    %3580 = vmatpush2.msra.mxu0 0.0
    %3581 = vmatprep.mubr.f32.mxu0 0.0
    %3582 = vmatmul.mubr.f32.gmra.mxu0 %v3512
    %v3583 = vpop.f32.mrf.mxu0
    %v3584 = vadd.f32 %v3509, %v3583
    %v3585 = vpop.f32.mrf.mxu0
    %3586 = vmatprep.mubr.f32.mxu0 0.0
    %3587 = vmatmul.mubr.f32.gmra.mxu0 %v3515
    %v3588 = vpop.f32.mrf.mxu0
    %v3589 = vadd.f32 %v3509, %v3588
    %v3590 = vpop.f32.mrf.mxu0
    %3591 = vdwg.mxu0
    %v3592 = vadd.f32 %v2038, %v3584
    %v3593 = vadd.f32 %v2039, %v3589
    %s3594 = scalar_lea.vmem %s21, 1
    %v3595 = vld [vmem:[%s3594] sm:$0x1]
    %s3596 = scalar_lea.vmem %s23, 1
    %v3597 = vld [vmem:[%s3596] sm:$0x1]
    %v3598 = vsel %vm135, %v3592, 0.0
    %3599 = vadd.xlane.f32.xlu0 %v3598
    %v3600 = vpop.xlane.xlu0 %3599
    %v3601 = vsel %vm135, %v3593, 0.0
    %3602 = vadd.xlane.f32.xlu0 %v3601
    %v3603 = vpop.xlane.xlu0 %3602
    %v3604 = vmul.f32 %v3600, %v142
    %v3605 = vmul.f32 %v3603, %v142
    %v3606 = vsub.f32 %v3592, %v3604
    %v3607 = vsub.f32 %v3593, %v3605
    %v3608 = vmul.f32 %v3606, %v3606
    %v3609 = vmul.f32 %v3607, %v3607
    %v3610 = vsel %vm135, %v3608, 0.0
    %3611 = vadd.xlane.f32.xlu0 %v3610
    %v3612 = vpop.xlane.xlu0 %3611
    %v3613 = vsel %vm135, %v3609, 0.0
    %3614 = vadd.xlane.f32.xlu0 %v3613
    %v3615 = vpop.xlane.xlu0 %3614
    %v3616 = vmul.f32 %v3612, %v142
    %v3617 = vmul.f32 %v3615, %v142
    %v3618 = vadd.f32 %v3616, 1e-12
    %v3619 = vadd.f32 %v3617, 1e-12
    %v3620 = vrsqrt.pop %v3618
    %v3621 = vrsqrt.pop %v3619
    %v3622 = vmul.f32 %v3606, %v3620
    %v3623 = vmul.f32 %v3607, %v3621
    %v3625 = vlaneseq
    %v3626 = vshrl.u32 %v3625, 7
    %v3627 = vsub.s32 0, %v3626
    %v3628 = vrot.slane %v3595, %v3627
    %v3630 = vmul.f32 %v3622, %v3628
    %v3631 = vmul.f32 %v3623, %v3628
    %v3633 = vlaneseq
    %v3634 = vshrl.u32 %v3633, 7
    %v3635 = vsub.s32 0, %v3634
    %v3636 = vrot.slane %v3597, %v3635
    %v3638 = vadd.f32 %v3630, %v3636
    %v3639 = vadd.f32 %v3631, %v3636
    %s3640 = scalar_lea.vmem %s25, 32
    %v3641 = vld [vmem:[%s3640] sm:$0xff]
    %v3642 = vld [vmem:[%s3640 + $0x8] sm:$0xff]
    %v3643 = vld [vmem:[%s3640 + $0x10] sm:$0xff]
    %v3644 = vld [vmem:[%s3640 + $0x18] sm:$0xff]
    %s3645 = scalar_lea.vmem %s27, 1
    %v3646 = vld [vmem:[%s3645] sm:$0x1]
    %v3648 = vlaneseq
    %v3649 = vshrl.u32 %v3648, 7
    %v3650 = vsub.s32 0, %v3649
    %v3651 = vrot.slane %v3646, %v3650
    %v3654 = vsel %vm135, %v3638, 0
    %v3657 = vsel %vm135, %v3639, 0
    %3659 = vmatprep.subr.mxu0 0.0
    %3660 = vmatpush1.msra.mxu0 0.0
    %3661 = vmatprep.subr.mxu0 0.0
    %3662 = vmatpush1.msra.mxu0 0.0
    %3663 = vmatprep.subr.mxu0 0.0
    %3664 = vmatpush1.msra.mxu0 0.0
    %3665 = vmatprep.subr.mxu0 0.0
    %3666 = vmatpush1.msra.mxu0 0.0
    %3667 = vmatprep.subr.mxu0 0.0
    %3668 = vmatpush1.msra.mxu0 0.0
    %3669 = vmatprep.subr.mxu0 0.0
    %3670 = vmatpush1.msra.mxu0 0.0
    %3671 = vmatprep.subr.mxu0 0.0
    %3672 = vmatpush1.msra.mxu0 0.0
    %3673 = vmatprep.subr.mxu0 0.0
    %3674 = vmatpush1.msra.mxu0 0.0
    %3675 = vmatprep.subr.mxu0 0.0
    %3676 = vmatpush1.msra.mxu0 0.0
    %3677 = vmatprep.subr.mxu0 0.0
    %3678 = vmatpush1.msra.mxu0 0.0
    %3679 = vmatprep.subr.mxu0 0.0
    %3680 = vmatpush1.msra.mxu0 0.0
    %3681 = vmatprep.subr.mxu0 0.0
    %3682 = vmatpush1.msra.mxu0 0.0
    %3683 = vmatprep.subr.mxu0 0.0
    %3684 = vmatpush1.msra.mxu0 %v3644
    %3685 = vmatprep.subr.mxu0 0.0
    %3686 = vmatpush1.msra.mxu0 %v3643
    %3687 = vmatprep.subr.mxu0 0.0
    %3688 = vmatpush1.msra.mxu0 %v3642
    %3689 = vmatprep.subr.mxu0 0.0
    %3690 = vmatpush1.msra.mxu0 %v3641
    %3691 = vmatprep.subr.mxu0 0.0
    %3692 = vmatpush2.msra.mxu0 0.0
    %3693 = vmatprep.subr.mxu0 0.0
    %3694 = vmatpush2.msra.mxu0 0.0
    %3695 = vmatprep.subr.mxu0 0.0
    %3696 = vmatpush2.msra.mxu0 0.0
    %3697 = vmatprep.subr.mxu0 0.0
    %3698 = vmatpush2.msra.mxu0 0.0
    %3699 = vmatprep.subr.mxu0 0.0
    %3700 = vmatpush2.msra.mxu0 0.0
    %3701 = vmatprep.subr.mxu0 0.0
    %3702 = vmatpush2.msra.mxu0 0.0
    %3703 = vmatprep.subr.mxu0 0.0
    %3704 = vmatpush2.msra.mxu0 0.0
    %3705 = vmatprep.subr.mxu0 0.0
    %3706 = vmatpush2.msra.mxu0 0.0
    %3707 = vmatprep.subr.mxu0 0.0
    %3708 = vmatpush2.msra.mxu0 0.0
    %3709 = vmatprep.subr.mxu0 0.0
    %3710 = vmatpush2.msra.mxu0 0.0
    %3711 = vmatprep.subr.mxu0 0.0
    %3712 = vmatpush2.msra.mxu0 0.0
    %3713 = vmatprep.subr.mxu0 0.0
    %3714 = vmatpush2.msra.mxu0 0.0
    %3715 = vmatprep.subr.mxu0 0.0
    %3716 = vmatpush2.msra.mxu0 0.0
    %3717 = vmatprep.subr.mxu0 0.0
    %3718 = vmatpush2.msra.mxu0 0.0
    %3719 = vmatprep.subr.mxu0 0.0
    %3720 = vmatpush2.msra.mxu0 0.0
    %3721 = vmatprep.subr.mxu0 0.0
    %3722 = vmatpush2.msra.mxu0 0.0
    %3723 = vmatprep.mubr.f32.mxu0 0.0
    %3724 = vmatmul.mubr.f32.gmra.mxu0 %v3654
    %v3725 = vpop.f32.mrf.mxu0
    %v3726 = vadd.f32 %v3651, %v3725
    %v3727 = vpop.f32.mrf.mxu0
    %3728 = vmatprep.mubr.f32.mxu0 0.0
    %3729 = vmatmul.mubr.f32.gmra.mxu0 %v3657
    %v3730 = vpop.f32.mrf.mxu0
    %v3731 = vadd.f32 %v3651, %v3730
    %v3732 = vpop.f32.mrf.mxu0
    %3733 = vdwg.mxu0
    %v3734 = vmul.f32 %v3726, 0.5
    %v3735 = vmul.f32 %v3731, 0.5
    %v3736 = vmul.f32 %v3726, 0.044715
    %v3737 = vmul.f32 %v3731, 0.044715
    %v3738 = vmul.f32 %v3736, %v3726
    %v3739 = vmul.f32 %v3737, %v3731
    %v3740 = vmul.f32 %v3738, %v3726
    %v3741 = vmul.f32 %v3739, %v3731
    %v3742 = vadd.f32 %v3726, %v3740
    %v3743 = vadd.f32 %v3731, %v3741
    %v3744 = vmul.f32 %v3742, 0.7978846
    %v3745 = vmul.f32 %v3743, 0.7978846
    %v3746 = vtanh.pop %v3744
    %v3747 = vtanh.pop %v3745
    %v3748 = vadd.f32 %v3746, 1.0
    %v3749 = vadd.f32 %v3747, 1.0
    %v3750 = vmul.f32 %v3734, %v3748
    %v3751 = vmul.f32 %v3735, %v3749
    %s3752 = scalar_lea.vmem %s29, 64
    %v3753 = vld [vmem:[%s3752] sm:$0xff]
    %v3754 = vld [vmem:[%s3752 + $0x8] sm:$0xff]
    %v3755 = vld [vmem:[%s3752 + $0x10] sm:$0xff]
    %v3756 = vld [vmem:[%s3752 + $0x18] sm:$0xff]
    %v3757 = vld [vmem:[%s3752 + $0x20] sm:$0xff]
    %v3758 = vld [vmem:[%s3752 + $0x28] sm:$0xff]
    %v3759 = vld [vmem:[%s3752 + $0x30] sm:$0xff]
    %v3760 = vld [vmem:[%s3752 + $0x38] sm:$0xff]
    %s3761 = scalar_lea.vmem %s31, 1
    %v3762 = vld [vmem:[%s3761] sm:$0x1]
    %v3764 = vlaneseq
    %v3765 = vshrl.u32 %v3764, 7
    %v3766 = vsub.s32 0, %v3765
    %v3767 = vrot.slane %v3762, %v3766
    %v3770 = vsel %vm1912, %v3750, 0
    %v3773 = vsel %vm1912, %v3751, 0
    %3775 = vmatprep.subr.mxu0 0.0
    %3776 = vmatpush1.msra.mxu0 0.0
    %3777 = vmatprep.subr.mxu0 0.0
    %3778 = vmatpush1.msra.mxu0 0.0
    %3779 = vmatprep.subr.mxu0 0.0
    %3780 = vmatpush1.msra.mxu0 0.0
    %3781 = vmatprep.subr.mxu0 0.0
    %3782 = vmatpush1.msra.mxu0 0.0
    %3783 = vmatprep.subr.mxu0 0.0
    %3784 = vmatpush1.msra.mxu0 0.0
    %3785 = vmatprep.subr.mxu0 0.0
    %3786 = vmatpush1.msra.mxu0 0.0
    %3787 = vmatprep.subr.mxu0 0.0
    %3788 = vmatpush1.msra.mxu0 0.0
    %3789 = vmatprep.subr.mxu0 0.0
    %3790 = vmatpush1.msra.mxu0 0.0
    %3791 = vmatprep.subr.mxu0 0.0
    %3792 = vmatpush1.msra.mxu0 %v3760
    %3793 = vmatprep.subr.mxu0 0.0
    %3794 = vmatpush1.msra.mxu0 %v3759
    %3795 = vmatprep.subr.mxu0 0.0
    %3796 = vmatpush1.msra.mxu0 %v3758
    %3797 = vmatprep.subr.mxu0 0.0
    %3798 = vmatpush1.msra.mxu0 %v3757
    %3799 = vmatprep.subr.mxu0 0.0
    %3800 = vmatpush1.msra.mxu0 %v3756
    %3801 = vmatprep.subr.mxu0 0.0
    %3802 = vmatpush1.msra.mxu0 %v3755
    %3803 = vmatprep.subr.mxu0 0.0
    %3804 = vmatpush1.msra.mxu0 %v3754
    %3805 = vmatprep.subr.mxu0 0.0
    %3806 = vmatpush1.msra.mxu0 %v3753
    %3807 = vmatprep.subr.mxu0 0.0
    %3808 = vmatpush2.msra.mxu0 0.0
    %3809 = vmatprep.subr.mxu0 0.0
    %3810 = vmatpush2.msra.mxu0 0.0
    %3811 = vmatprep.subr.mxu0 0.0
    %3812 = vmatpush2.msra.mxu0 0.0
    %3813 = vmatprep.subr.mxu0 0.0
    %3814 = vmatpush2.msra.mxu0 0.0
    %3815 = vmatprep.subr.mxu0 0.0
    %3816 = vmatpush2.msra.mxu0 0.0
    %3817 = vmatprep.subr.mxu0 0.0
    %3818 = vmatpush2.msra.mxu0 0.0
    %3819 = vmatprep.subr.mxu0 0.0
    %3820 = vmatpush2.msra.mxu0 0.0
    %3821 = vmatprep.subr.mxu0 0.0
    %3822 = vmatpush2.msra.mxu0 0.0
    %3823 = vmatprep.subr.mxu0 0.0
    %3824 = vmatpush2.msra.mxu0 0.0
    %3825 = vmatprep.subr.mxu0 0.0
    %3826 = vmatpush2.msra.mxu0 0.0
    %3827 = vmatprep.subr.mxu0 0.0
    %3828 = vmatpush2.msra.mxu0 0.0
    %3829 = vmatprep.subr.mxu0 0.0
    %3830 = vmatpush2.msra.mxu0 0.0
    %3831 = vmatprep.subr.mxu0 0.0
    %3832 = vmatpush2.msra.mxu0 0.0
    %3833 = vmatprep.subr.mxu0 0.0
    %3834 = vmatpush2.msra.mxu0 0.0
    %3835 = vmatprep.subr.mxu0 0.0
    %3836 = vmatpush2.msra.mxu0 0.0
    %3837 = vmatprep.subr.mxu0 0.0
    %3838 = vmatpush2.msra.mxu0 0.0
    %3839 = vmatprep.mubr.f32.mxu0 0.0
    %3840 = vmatmul.mubr.f32.gmra.mxu0 %v3770
    %v3841 = vpop.f32.mrf.mxu0
    %v3842 = vadd.f32 %v3767, %v3841
    %v3843 = vpop.f32.mrf.mxu0
    %3844 = vmatprep.mubr.f32.mxu0 0.0
    %3845 = vmatmul.mubr.f32.gmra.mxu0 %v3773
    %v3846 = vpop.f32.mrf.mxu0
    %v3847 = vadd.f32 %v3767, %v3846
    %v3848 = vpop.f32.mrf.mxu0
    %3849 = vdwg.mxu0
    %v3850 = vadd.f32 %v3638, %v3842
    %v3851 = vadd.f32 %v3639, %v3847
    %s3852 = scalar_lea.vmem %s33, 1
    %v3853 = vld [vmem:[%s3852] sm:$0x1]
    %s3854 = scalar_lea.vmem %s35, 1
    %v3855 = vld [vmem:[%s3854] sm:$0x1]
    %v3856 = vsel %vm135, %v3850, 0.0
    %3857 = vadd.xlane.f32.xlu0 %v3856
    %v3858 = vpop.xlane.xlu0 %3857
    %v3859 = vsel %vm135, %v3851, 0.0
    %3860 = vadd.xlane.f32.xlu0 %v3859
    %v3861 = vpop.xlane.xlu0 %3860
    %v3862 = vmul.f32 %v3858, %v142
    %v3863 = vmul.f32 %v3861, %v142
    %v3864 = vsub.f32 %v3850, %v3862
    %v3865 = vsub.f32 %v3851, %v3863
    %v3866 = vmul.f32 %v3864, %v3864
    %v3867 = vmul.f32 %v3865, %v3865
    %v3868 = vsel %vm135, %v3866, 0.0
    %3869 = vadd.xlane.f32.xlu0 %v3868
    %v3870 = vpop.xlane.xlu0 %3869
    %v3871 = vsel %vm135, %v3867, 0.0
    %3872 = vadd.xlane.f32.xlu0 %v3871
    %v3873 = vpop.xlane.xlu0 %3872
    %v3874 = vmul.f32 %v3870, %v142
    %v3875 = vmul.f32 %v3873, %v142
    %v3876 = vadd.f32 %v3874, 1e-12
    %v3877 = vadd.f32 %v3875, 1e-12
    %v3878 = vrsqrt.pop %v3876
    %v3879 = vrsqrt.pop %v3877
    %v3880 = vmul.f32 %v3864, %v3878
    %v3881 = vmul.f32 %v3865, %v3879
    %v3883 = vlaneseq
    %v3884 = vshrl.u32 %v3883, 7
    %v3885 = vsub.s32 0, %v3884
    %v3886 = vrot.slane %v3853, %v3885
    %v3888 = vmul.f32 %v3880, %v3886
    %v3889 = vmul.f32 %v3881, %v3886
    %v3891 = vlaneseq
    %v3892 = vshrl.u32 %v3891, 7
    %v3893 = vsub.s32 0, %v3892
    %v3894 = vrot.slane %v3855, %v3893
    %v3896 = vadd.f32 %v3888, %v3894
    %v3897 = vadd.f32 %v3889, %v3894
    %v3898 = vld [vmem:[%s3] sm:$0xff]
    %v3899 = vld [vmem:[%s3 + $0x8] sm:$0xff]
    %3902 = vrot.lane.b32.xlu0 %v3898, 32
    %v3903 = vpop.permute.xlu0 %3902
    %3904 = vrot.lane.b32.xlu0 %v3899, 32
    %v3905 = vpop.permute.xlu0 %3904
    %v3908 = vsel %vm135, %v3896, %v3903
    %v3909 = vsel %vm135, %v3897, %v3905
    %v3910 = vld [vmem:[%s39] sm:$0x1]
    %v3912 = vlaneseq
    %v3913 = vshrl.u32 %v3912, 7
    %v3914 = vsub.s32 0, %v3913
    %v3915 = vrot.slane %v3910, %v3914
    %v3917 = vadd.f32 %v3915, 0.0
    %v3918 = vld [vmem:[%s37] sm:$0xff]
    %v3919 = vld [vmem:[%s37 + $0x8] sm:$0xff]
    %v3920 = vld [vmem:[%s37 + $0x10] sm:$0xff]
    %v3921 = vld [vmem:[%s37 + $0x18] sm:$0xff]
    %v3922 = vld [vmem:[%s37 + $0x20] sm:$0xff]
    %v3923 = vld [vmem:[%s37 + $0x28] sm:$0xff]
    %vm3924 = vcmask 392192
    %v3926 = vsel %vm3924, %v3908, 0
    %3928 = vmatprep.subr.mxu0 0.0
    %3929 = vmatpush1.msra.mxu0 0.0
    %3930 = vmatprep.subr.mxu0 0.0
    %3931 = vmatpush1.msra.mxu0 0.0
    %3932 = vmatprep.subr.mxu0 0.0
    %3933 = vmatpush1.msra.mxu0 0.0
    %3934 = vmatprep.subr.mxu0 0.0
    %3935 = vmatpush1.msra.mxu0 0.0
    %3936 = vmatprep.subr.mxu0 0.0
    %3937 = vmatpush1.msra.mxu0 0.0
    %3938 = vmatprep.subr.mxu0 0.0
    %3939 = vmatpush1.msra.mxu0 0.0
    %3940 = vmatprep.subr.mxu0 0.0
    %3941 = vmatpush1.msra.mxu0 0.0
    %3942 = vmatprep.subr.mxu0 0.0
    %3943 = vmatpush1.msra.mxu0 0.0
    %3944 = vmatprep.subr.mxu0 0.0
    %3945 = vmatpush1.msra.mxu0 0.0
    %3946 = vmatprep.subr.mxu0 0.0
    %3947 = vmatpush1.msra.mxu0 0.0
    %3948 = vmatprep.subr.mxu0 0.0
    %3949 = vmatpush1.msra.mxu0 %v3923
    %3950 = vmatprep.subr.mxu0 0.0
    %3951 = vmatpush1.msra.mxu0 %v3922
    %3952 = vmatprep.subr.mxu0 0.0
    %3953 = vmatpush1.msra.mxu0 %v3921
    %3954 = vmatprep.subr.mxu0 0.0
    %3955 = vmatpush1.msra.mxu0 %v3920
    %3956 = vmatprep.subr.mxu0 0.0
    %3957 = vmatpush1.msra.mxu0 %v3919
    %3958 = vmatprep.subr.mxu0 0.0
    %3959 = vmatpush1.msra.mxu0 %v3918
    %3960 = vmatprep.subr.mxu0 0.0
    %3961 = vmatpush2.msra.mxu0 0.0
    %3962 = vmatprep.subr.mxu0 0.0
    %3963 = vmatpush2.msra.mxu0 0.0
    %3964 = vmatprep.subr.mxu0 0.0
    %3965 = vmatpush2.msra.mxu0 0.0
    %3966 = vmatprep.subr.mxu0 0.0
    %3967 = vmatpush2.msra.mxu0 0.0
    %3968 = vmatprep.subr.mxu0 0.0
    %3969 = vmatpush2.msra.mxu0 0.0
    %3970 = vmatprep.subr.mxu0 0.0
    %3971 = vmatpush2.msra.mxu0 0.0
    %3972 = vmatprep.subr.mxu0 0.0
    %3973 = vmatpush2.msra.mxu0 0.0
    %3974 = vmatprep.subr.mxu0 0.0
    %3975 = vmatpush2.msra.mxu0 0.0
    %3976 = vmatprep.subr.mxu0 0.0
    %3977 = vmatpush2.msra.mxu0 0.0
    %3978 = vmatprep.subr.mxu0 0.0
    %3979 = vmatpush2.msra.mxu0 0.0
    %3980 = vmatprep.subr.mxu0 0.0
    %3981 = vmatpush2.msra.mxu0 0.0
    %3982 = vmatprep.subr.mxu0 0.0
    %3983 = vmatpush2.msra.mxu0 0.0
    %3984 = vmatprep.subr.mxu0 0.0
    %3985 = vmatpush2.msra.mxu0 0.0
    %3986 = vmatprep.subr.mxu0 0.0
    %3987 = vmatpush2.msra.mxu0 0.0
    %3988 = vmatprep.subr.mxu0 0.0
    %3989 = vmatpush2.msra.mxu0 0.0
    %3990 = vmatprep.subr.mxu0 0.0
    %3991 = vmatpush2.msra.mxu0 0.0
    %3992 = vmatprep.mubr.f32.mxu0 0.0
    %3993 = vmatmul.mubr.f32.gmra.mxu0 %v3926
    %v3994 = vpop.f32.mrf.mxu0
    %v3995 = vadd.f32 0.0, %v3994
    %v3996 = vpop.f32.mrf.mxu0
    %3997 = vdwg.mxu0
    %v3998 = vadd.f32 %v3917, %v3995
    %s3999 = scalar_lea.vmem %s37, 48
    %v4000 = vld [vmem:[%s3999] sm:$0xff]
    %v4001 = vld [vmem:[%s3999 + $0x8] sm:$0xff]
    %v4002 = vld [vmem:[%s3999 + $0x10] sm:$0xff]
    %v4003 = vld [vmem:[%s3999 + $0x18] sm:$0xff]
    %v4004 = vld [vmem:[%s3999 + $0x20] sm:$0xff]
    %v4005 = vld [vmem:[%s3999 + $0x28] sm:$0xff]
    %v4006 = vrot.slane %v3908, 1
    %v4007 = vsel %vm3924, %v4006, 0
    %4009 = vmatprep.subr.mxu0 0.0
    %4010 = vmatpush1.msra.mxu0 0.0
    %4011 = vmatprep.subr.mxu0 0.0
    %4012 = vmatpush1.msra.mxu0 0.0
    %4013 = vmatprep.subr.mxu0 0.0
    %4014 = vmatpush1.msra.mxu0 0.0
    %4015 = vmatprep.subr.mxu0 0.0
    %4016 = vmatpush1.msra.mxu0 0.0
    %4017 = vmatprep.subr.mxu0 0.0
    %4018 = vmatpush1.msra.mxu0 0.0
    %4019 = vmatprep.subr.mxu0 0.0
    %4020 = vmatpush1.msra.mxu0 0.0
    %4021 = vmatprep.subr.mxu0 0.0
    %4022 = vmatpush1.msra.mxu0 0.0
    %4023 = vmatprep.subr.mxu0 0.0
    %4024 = vmatpush1.msra.mxu0 0.0
    %4025 = vmatprep.subr.mxu0 0.0
    %4026 = vmatpush1.msra.mxu0 0.0
    %4027 = vmatprep.subr.mxu0 0.0
    %4028 = vmatpush1.msra.mxu0 0.0
    %4029 = vmatprep.subr.mxu0 0.0
    %4030 = vmatpush1.msra.mxu0 %v4005
    %4031 = vmatprep.subr.mxu0 0.0
    %4032 = vmatpush1.msra.mxu0 %v4004
    %4033 = vmatprep.subr.mxu0 0.0
    %4034 = vmatpush1.msra.mxu0 %v4003
    %4035 = vmatprep.subr.mxu0 0.0
    %4036 = vmatpush1.msra.mxu0 %v4002
    %4037 = vmatprep.subr.mxu0 0.0
    %4038 = vmatpush1.msra.mxu0 %v4001
    %4039 = vmatprep.subr.mxu0 0.0
    %4040 = vmatpush1.msra.mxu0 %v4000
    %4041 = vmatprep.subr.mxu0 0.0
    %4042 = vmatpush2.msra.mxu0 0.0
    %4043 = vmatprep.subr.mxu0 0.0
    %4044 = vmatpush2.msra.mxu0 0.0
    %4045 = vmatprep.subr.mxu0 0.0
    %4046 = vmatpush2.msra.mxu0 0.0
    %4047 = vmatprep.subr.mxu0 0.0
    %4048 = vmatpush2.msra.mxu0 0.0
    %4049 = vmatprep.subr.mxu0 0.0
    %4050 = vmatpush2.msra.mxu0 0.0
    %4051 = vmatprep.subr.mxu0 0.0
    %4052 = vmatpush2.msra.mxu0 0.0
    %4053 = vmatprep.subr.mxu0 0.0
    %4054 = vmatpush2.msra.mxu0 0.0
    %4055 = vmatprep.subr.mxu0 0.0
    %4056 = vmatpush2.msra.mxu0 0.0
    %4057 = vmatprep.subr.mxu0 0.0
    %4058 = vmatpush2.msra.mxu0 0.0
    %4059 = vmatprep.subr.mxu0 0.0
    %4060 = vmatpush2.msra.mxu0 0.0
    %4061 = vmatprep.subr.mxu0 0.0
    %4062 = vmatpush2.msra.mxu0 0.0
    %4063 = vmatprep.subr.mxu0 0.0
    %4064 = vmatpush2.msra.mxu0 0.0
    %4065 = vmatprep.subr.mxu0 0.0
    %4066 = vmatpush2.msra.mxu0 0.0
    %4067 = vmatprep.subr.mxu0 0.0
    %4068 = vmatpush2.msra.mxu0 0.0
    %4069 = vmatprep.subr.mxu0 0.0
    %4070 = vmatpush2.msra.mxu0 0.0
    %4071 = vmatprep.subr.mxu0 0.0
    %4072 = vmatpush2.msra.mxu0 0.0
    %4073 = vmatprep.mubr.f32.mxu0 0.0
    %4074 = vmatmul.mubr.f32.gmra.mxu0 %v4007
    %v4075 = vpop.f32.mrf.mxu0
    %v4076 = vadd.f32 0.0, %v4075
    %v4077 = vpop.f32.mrf.mxu0
    %4078 = vdwg.mxu0
    %v4079 = vadd.f32 %v3998, %v4076
    %v4080 = vmax.f32 %v4079, 0.0
    %vm4081 = vcmask 63488
    %v4082 = vsel %vm4081, %v4080, -inf
    %v4083 = vrot.slane %v4082, 4
    %v4084 = vmax.f32 %v4082, %v4083
    %v4085 = vrot.slane %v4084, 2
    %v4086 = vmax.f32 %v4084, %v4085
    %v4087 = vrot.slane %v4086, 1
    %v4088 = vmax.f32 %v4086, %v4087
    %v4089 = vld [vmem:[%s43] sm:$0x1]
    %v4091 = vlaneseq
    %v4092 = vshrl.u32 %v4091, 7
    %v4093 = vsub.s32 0, %v4092
    %v4094 = vrot.slane %v4089, %v4093
    %v4096 = vadd.f32 %v4094, 0.0
    %v4097 = vld [vmem:[%s41] sm:$0xff]
    %v4098 = vld [vmem:[%s41 + $0x8] sm:$0xff]
    %v4099 = vld [vmem:[%s41 + $0x10] sm:$0xff]
    %v4100 = vld [vmem:[%s41 + $0x18] sm:$0xff]
    %v4101 = vld [vmem:[%s41 + $0x20] sm:$0xff]
    %v4102 = vld [vmem:[%s41 + $0x28] sm:$0xff]
    %4103 = vmatprep.subr.mxu0 0.0
    %4104 = vmatpush1.msra.mxu0 0.0
    %4105 = vmatprep.subr.mxu0 0.0
    %4106 = vmatpush1.msra.mxu0 0.0
    %4107 = vmatprep.subr.mxu0 0.0
    %4108 = vmatpush1.msra.mxu0 0.0
    %4109 = vmatprep.subr.mxu0 0.0
    %4110 = vmatpush1.msra.mxu0 0.0
    %4111 = vmatprep.subr.mxu0 0.0
    %4112 = vmatpush1.msra.mxu0 0.0
    %4113 = vmatprep.subr.mxu0 0.0
    %4114 = vmatpush1.msra.mxu0 0.0
    %4115 = vmatprep.subr.mxu0 0.0
    %4116 = vmatpush1.msra.mxu0 0.0
    %4117 = vmatprep.subr.mxu0 0.0
    %4118 = vmatpush1.msra.mxu0 0.0
    %4119 = vmatprep.subr.mxu0 0.0
    %4120 = vmatpush1.msra.mxu0 0.0
    %4121 = vmatprep.subr.mxu0 0.0
    %4122 = vmatpush1.msra.mxu0 0.0
    %4123 = vmatprep.subr.mxu0 0.0
    %4124 = vmatpush1.msra.mxu0 %v4102
    %4125 = vmatprep.subr.mxu0 0.0
    %4126 = vmatpush1.msra.mxu0 %v4101
    %4127 = vmatprep.subr.mxu0 0.0
    %4128 = vmatpush1.msra.mxu0 %v4100
    %4129 = vmatprep.subr.mxu0 0.0
    %4130 = vmatpush1.msra.mxu0 %v4099
    %4131 = vmatprep.subr.mxu0 0.0
    %4132 = vmatpush1.msra.mxu0 %v4098
    %4133 = vmatprep.subr.mxu0 0.0
    %4134 = vmatpush1.msra.mxu0 %v4097
    %4135 = vmatprep.subr.mxu0 0.0
    %4136 = vmatpush2.msra.mxu0 0.0
    %4137 = vmatprep.subr.mxu0 0.0
    %4138 = vmatpush2.msra.mxu0 0.0
    %4139 = vmatprep.subr.mxu0 0.0
    %4140 = vmatpush2.msra.mxu0 0.0
    %4141 = vmatprep.subr.mxu0 0.0
    %4142 = vmatpush2.msra.mxu0 0.0
    %4143 = vmatprep.subr.mxu0 0.0
    %4144 = vmatpush2.msra.mxu0 0.0
    %4145 = vmatprep.subr.mxu0 0.0
    %4146 = vmatpush2.msra.mxu0 0.0
    %4147 = vmatprep.subr.mxu0 0.0
    %4148 = vmatpush2.msra.mxu0 0.0
    %4149 = vmatprep.subr.mxu0 0.0
    %4150 = vmatpush2.msra.mxu0 0.0
    %4151 = vmatprep.subr.mxu0 0.0
    %4152 = vmatpush2.msra.mxu0 0.0
    %4153 = vmatprep.subr.mxu0 0.0
    %4154 = vmatpush2.msra.mxu0 0.0
    %4155 = vmatprep.subr.mxu0 0.0
    %4156 = vmatpush2.msra.mxu0 0.0
    %4157 = vmatprep.subr.mxu0 0.0
    %4158 = vmatpush2.msra.mxu0 0.0
    %4159 = vmatprep.subr.mxu0 0.0
    %4160 = vmatpush2.msra.mxu0 0.0
    %4161 = vmatprep.subr.mxu0 0.0
    %4162 = vmatpush2.msra.mxu0 0.0
    %4163 = vmatprep.subr.mxu0 0.0
    %4164 = vmatpush2.msra.mxu0 0.0
    %4165 = vmatprep.subr.mxu0 0.0
    %4166 = vmatpush2.msra.mxu0 0.0
    %4167 = vmatprep.mubr.f32.mxu0 0.0
    %4168 = vmatmul.mubr.f32.gmra.mxu0 %v3926
    %v4169 = vpop.f32.mrf.mxu0
    %v4170 = vadd.f32 0.0, %v4169
    %v4171 = vpop.f32.mrf.mxu0
    %4172 = vdwg.mxu0
    %v4173 = vadd.f32 %v4096, %v4170
    %s4174 = scalar_lea.vmem %s41, 48
    %v4175 = vld [vmem:[%s4174] sm:$0xff]
    %v4176 = vld [vmem:[%s4174 + $0x8] sm:$0xff]
    %v4177 = vld [vmem:[%s4174 + $0x10] sm:$0xff]
    %v4178 = vld [vmem:[%s4174 + $0x18] sm:$0xff]
    %v4179 = vld [vmem:[%s4174 + $0x20] sm:$0xff]
    %v4180 = vld [vmem:[%s4174 + $0x28] sm:$0xff]
    %4181 = vmatprep.subr.mxu0 0.0
    %4182 = vmatpush1.msra.mxu0 0.0
    %4183 = vmatprep.subr.mxu0 0.0
    %4184 = vmatpush1.msra.mxu0 0.0
    %4185 = vmatprep.subr.mxu0 0.0
    %4186 = vmatpush1.msra.mxu0 0.0
    %4187 = vmatprep.subr.mxu0 0.0
    %4188 = vmatpush1.msra.mxu0 0.0
    %4189 = vmatprep.subr.mxu0 0.0
    %4190 = vmatpush1.msra.mxu0 0.0
    %4191 = vmatprep.subr.mxu0 0.0
    %4192 = vmatpush1.msra.mxu0 0.0
    %4193 = vmatprep.subr.mxu0 0.0
    %4194 = vmatpush1.msra.mxu0 0.0
    %4195 = vmatprep.subr.mxu0 0.0
    %4196 = vmatpush1.msra.mxu0 0.0
    %4197 = vmatprep.subr.mxu0 0.0
    %4198 = vmatpush1.msra.mxu0 0.0
    %4199 = vmatprep.subr.mxu0 0.0
    %4200 = vmatpush1.msra.mxu0 0.0
    %4201 = vmatprep.subr.mxu0 0.0
    %4202 = vmatpush1.msra.mxu0 %v4180
    %4203 = vmatprep.subr.mxu0 0.0
    %4204 = vmatpush1.msra.mxu0 %v4179
    %4205 = vmatprep.subr.mxu0 0.0
    %4206 = vmatpush1.msra.mxu0 %v4178
    %4207 = vmatprep.subr.mxu0 0.0
    %4208 = vmatpush1.msra.mxu0 %v4177
    %4209 = vmatprep.subr.mxu0 0.0
    %4210 = vmatpush1.msra.mxu0 %v4176
    %4211 = vmatprep.subr.mxu0 0.0
    %4212 = vmatpush1.msra.mxu0 %v4175
    %4213 = vmatprep.subr.mxu0 0.0
    %4214 = vmatpush2.msra.mxu0 0.0
    %4215 = vmatprep.subr.mxu0 0.0
    %4216 = vmatpush2.msra.mxu0 0.0
    %4217 = vmatprep.subr.mxu0 0.0
    %4218 = vmatpush2.msra.mxu0 0.0
    %4219 = vmatprep.subr.mxu0 0.0
    %4220 = vmatpush2.msra.mxu0 0.0
    %4221 = vmatprep.subr.mxu0 0.0
    %4222 = vmatpush2.msra.mxu0 0.0
    %4223 = vmatprep.subr.mxu0 0.0
    %4224 = vmatpush2.msra.mxu0 0.0
    %4225 = vmatprep.subr.mxu0 0.0
    %4226 = vmatpush2.msra.mxu0 0.0
    %4227 = vmatprep.subr.mxu0 0.0
    %4228 = vmatpush2.msra.mxu0 0.0
    %4229 = vmatprep.subr.mxu0 0.0
    %4230 = vmatpush2.msra.mxu0 0.0
    %4231 = vmatprep.subr.mxu0 0.0
    %4232 = vmatpush2.msra.mxu0 0.0
    %4233 = vmatprep.subr.mxu0 0.0
    %4234 = vmatpush2.msra.mxu0 0.0
    %4235 = vmatprep.subr.mxu0 0.0
    %4236 = vmatpush2.msra.mxu0 0.0
    %4237 = vmatprep.subr.mxu0 0.0
    %4238 = vmatpush2.msra.mxu0 0.0
    %4239 = vmatprep.subr.mxu0 0.0
    %4240 = vmatpush2.msra.mxu0 0.0
    %4241 = vmatprep.subr.mxu0 0.0
    %4242 = vmatpush2.msra.mxu0 0.0
    %4243 = vmatprep.subr.mxu0 0.0
    %4244 = vmatpush2.msra.mxu0 0.0
    %4245 = vmatprep.mubr.f32.mxu0 0.0
    %4246 = vmatmul.mubr.f32.gmra.mxu0 %v4007
    %v4247 = vpop.f32.mrf.mxu0
    %v4248 = vadd.f32 0.0, %v4247
    %v4249 = vpop.f32.mrf.mxu0
    %4250 = vdwg.mxu0
    %v4251 = vadd.f32 %v4173, %v4248
    %s4252 = scalar_lea.vmem %s41, 96
    %v4253 = vld [vmem:[%s4252] sm:$0xff]
    %v4254 = vld [vmem:[%s4252 + $0x8] sm:$0xff]
    %v4255 = vld [vmem:[%s4252 + $0x10] sm:$0xff]
    %v4256 = vld [vmem:[%s4252 + $0x18] sm:$0xff]
    %v4257 = vld [vmem:[%s4252 + $0x20] sm:$0xff]
    %v4258 = vld [vmem:[%s4252 + $0x28] sm:$0xff]
    %v4259 = vrot.slane %v3908, 2
    %v4260 = vsel %vm3924, %v4259, 0
    %4262 = vmatprep.subr.mxu0 0.0
    %4263 = vmatpush1.msra.mxu0 0.0
    %4264 = vmatprep.subr.mxu0 0.0
    %4265 = vmatpush1.msra.mxu0 0.0
    %4266 = vmatprep.subr.mxu0 0.0
    %4267 = vmatpush1.msra.mxu0 0.0
    %4268 = vmatprep.subr.mxu0 0.0
    %4269 = vmatpush1.msra.mxu0 0.0
    %4270 = vmatprep.subr.mxu0 0.0
    %4271 = vmatpush1.msra.mxu0 0.0
    %4272 = vmatprep.subr.mxu0 0.0
    %4273 = vmatpush1.msra.mxu0 0.0
    %4274 = vmatprep.subr.mxu0 0.0
    %4275 = vmatpush1.msra.mxu0 0.0
    %4276 = vmatprep.subr.mxu0 0.0
    %4277 = vmatpush1.msra.mxu0 0.0
    %4278 = vmatprep.subr.mxu0 0.0
    %4279 = vmatpush1.msra.mxu0 0.0
    %4280 = vmatprep.subr.mxu0 0.0
    %4281 = vmatpush1.msra.mxu0 0.0
    %4282 = vmatprep.subr.mxu0 0.0
    %4283 = vmatpush1.msra.mxu0 %v4258
    %4284 = vmatprep.subr.mxu0 0.0
    %4285 = vmatpush1.msra.mxu0 %v4257
    %4286 = vmatprep.subr.mxu0 0.0
    %4287 = vmatpush1.msra.mxu0 %v4256
    %4288 = vmatprep.subr.mxu0 0.0
    %4289 = vmatpush1.msra.mxu0 %v4255
    %4290 = vmatprep.subr.mxu0 0.0
    %4291 = vmatpush1.msra.mxu0 %v4254
    %4292 = vmatprep.subr.mxu0 0.0
    %4293 = vmatpush1.msra.mxu0 %v4253
    %4294 = vmatprep.subr.mxu0 0.0
    %4295 = vmatpush2.msra.mxu0 0.0
    %4296 = vmatprep.subr.mxu0 0.0
    %4297 = vmatpush2.msra.mxu0 0.0
    %4298 = vmatprep.subr.mxu0 0.0
    %4299 = vmatpush2.msra.mxu0 0.0
    %4300 = vmatprep.subr.mxu0 0.0
    %4301 = vmatpush2.msra.mxu0 0.0
    %4302 = vmatprep.subr.mxu0 0.0
    %4303 = vmatpush2.msra.mxu0 0.0
    %4304 = vmatprep.subr.mxu0 0.0
    %4305 = vmatpush2.msra.mxu0 0.0
    %4306 = vmatprep.subr.mxu0 0.0
    %4307 = vmatpush2.msra.mxu0 0.0
    %4308 = vmatprep.subr.mxu0 0.0
    %4309 = vmatpush2.msra.mxu0 0.0
    %4310 = vmatprep.subr.mxu0 0.0
    %4311 = vmatpush2.msra.mxu0 0.0
    %4312 = vmatprep.subr.mxu0 0.0
    %4313 = vmatpush2.msra.mxu0 0.0
    %4314 = vmatprep.subr.mxu0 0.0
    %4315 = vmatpush2.msra.mxu0 0.0
    %4316 = vmatprep.subr.mxu0 0.0
    %4317 = vmatpush2.msra.mxu0 0.0
    %4318 = vmatprep.subr.mxu0 0.0
    %4319 = vmatpush2.msra.mxu0 0.0
    %4320 = vmatprep.subr.mxu0 0.0
    %4321 = vmatpush2.msra.mxu0 0.0
    %4322 = vmatprep.subr.mxu0 0.0
    %4323 = vmatpush2.msra.mxu0 0.0
    %4324 = vmatprep.subr.mxu0 0.0
    %4325 = vmatpush2.msra.mxu0 0.0
    %4326 = vmatprep.mubr.f32.mxu0 0.0
    %4327 = vmatmul.mubr.f32.gmra.mxu0 %v4260
    %v4328 = vpop.f32.mrf.mxu0
    %v4329 = vadd.f32 0.0, %v4328
    %v4330 = vpop.f32.mrf.mxu0
    %4331 = vdwg.mxu0
    %v4332 = vadd.f32 %v4251, %v4329
    %v4333 = vmax.f32 %v4332, 0.0
    %vm4334 = vcmask 62464
    %v4335 = vsel %vm4334, %v4333, -inf
    %v4336 = vrot.slane %v4335, 4
    %v4337 = vmax.f32 %v4335, %v4336
    %v4338 = vrot.slane %v4337, 2
    %v4339 = vmax.f32 %v4337, %v4338
    %v4340 = vrot.slane %v4339, 1
    %v4341 = vmax.f32 %v4339, %v4340
    %4343 = vrot.lane.b32.xlu0 %v4341, 8
    %v4344 = vpop.permute.xlu0 %4343
    %v4346 = vsel %vm277, %v4088, %v4344
    %v4348 = vsel %vm3924, %v3909, 0
    %4350 = vmatprep.subr.mxu0 0.0
    %4351 = vmatpush1.msra.mxu0 0.0
    %4352 = vmatprep.subr.mxu0 0.0
    %4353 = vmatpush1.msra.mxu0 0.0
    %4354 = vmatprep.subr.mxu0 0.0
    %4355 = vmatpush1.msra.mxu0 0.0
    %4356 = vmatprep.subr.mxu0 0.0
    %4357 = vmatpush1.msra.mxu0 0.0
    %4358 = vmatprep.subr.mxu0 0.0
    %4359 = vmatpush1.msra.mxu0 0.0
    %4360 = vmatprep.subr.mxu0 0.0
    %4361 = vmatpush1.msra.mxu0 0.0
    %4362 = vmatprep.subr.mxu0 0.0
    %4363 = vmatpush1.msra.mxu0 0.0
    %4364 = vmatprep.subr.mxu0 0.0
    %4365 = vmatpush1.msra.mxu0 0.0
    %4366 = vmatprep.subr.mxu0 0.0
    %4367 = vmatpush1.msra.mxu0 0.0
    %4368 = vmatprep.subr.mxu0 0.0
    %4369 = vmatpush1.msra.mxu0 0.0
    %4370 = vmatprep.subr.mxu0 0.0
    %4371 = vmatpush1.msra.mxu0 %v3923
    %4372 = vmatprep.subr.mxu0 0.0
    %4373 = vmatpush1.msra.mxu0 %v3922
    %4374 = vmatprep.subr.mxu0 0.0
    %4375 = vmatpush1.msra.mxu0 %v3921
    %4376 = vmatprep.subr.mxu0 0.0
    %4377 = vmatpush1.msra.mxu0 %v3920
    %4378 = vmatprep.subr.mxu0 0.0
    %4379 = vmatpush1.msra.mxu0 %v3919
    %4380 = vmatprep.subr.mxu0 0.0
    %4381 = vmatpush1.msra.mxu0 %v3918
    %4382 = vmatprep.subr.mxu0 0.0
    %4383 = vmatpush2.msra.mxu0 0.0
    %4384 = vmatprep.subr.mxu0 0.0
    %4385 = vmatpush2.msra.mxu0 0.0
    %4386 = vmatprep.subr.mxu0 0.0
    %4387 = vmatpush2.msra.mxu0 0.0
    %4388 = vmatprep.subr.mxu0 0.0
    %4389 = vmatpush2.msra.mxu0 0.0
    %4390 = vmatprep.subr.mxu0 0.0
    %4391 = vmatpush2.msra.mxu0 0.0
    %4392 = vmatprep.subr.mxu0 0.0
    %4393 = vmatpush2.msra.mxu0 0.0
    %4394 = vmatprep.subr.mxu0 0.0
    %4395 = vmatpush2.msra.mxu0 0.0
    %4396 = vmatprep.subr.mxu0 0.0
    %4397 = vmatpush2.msra.mxu0 0.0
    %4398 = vmatprep.subr.mxu0 0.0
    %4399 = vmatpush2.msra.mxu0 0.0
    %4400 = vmatprep.subr.mxu0 0.0
    %4401 = vmatpush2.msra.mxu0 0.0
    %4402 = vmatprep.subr.mxu0 0.0
    %4403 = vmatpush2.msra.mxu0 0.0
    %4404 = vmatprep.subr.mxu0 0.0
    %4405 = vmatpush2.msra.mxu0 0.0
    %4406 = vmatprep.subr.mxu0 0.0
    %4407 = vmatpush2.msra.mxu0 0.0
    %4408 = vmatprep.subr.mxu0 0.0
    %4409 = vmatpush2.msra.mxu0 0.0
    %4410 = vmatprep.subr.mxu0 0.0
    %4411 = vmatpush2.msra.mxu0 0.0
    %4412 = vmatprep.subr.mxu0 0.0
    %4413 = vmatpush2.msra.mxu0 0.0
    %4414 = vmatprep.mubr.f32.mxu0 0.0
    %4415 = vmatmul.mubr.f32.gmra.mxu0 %v4348
    %v4416 = vpop.f32.mrf.mxu0
    %v4417 = vadd.f32 0.0, %v4416
    %v4418 = vpop.f32.mrf.mxu0
    %4419 = vdwg.mxu0
    %v4420 = vadd.f32 %v3917, %v4417
    %v4421 = vrot.slane %v3909, 1
    %v4422 = vsel %vm3924, %v4421, 0
    %4424 = vmatprep.subr.mxu0 0.0
    %4425 = vmatpush1.msra.mxu0 0.0
    %4426 = vmatprep.subr.mxu0 0.0
    %4427 = vmatpush1.msra.mxu0 0.0
    %4428 = vmatprep.subr.mxu0 0.0
    %4429 = vmatpush1.msra.mxu0 0.0
    %4430 = vmatprep.subr.mxu0 0.0
    %4431 = vmatpush1.msra.mxu0 0.0
    %4432 = vmatprep.subr.mxu0 0.0
    %4433 = vmatpush1.msra.mxu0 0.0
    %4434 = vmatprep.subr.mxu0 0.0
    %4435 = vmatpush1.msra.mxu0 0.0
    %4436 = vmatprep.subr.mxu0 0.0
    %4437 = vmatpush1.msra.mxu0 0.0
    %4438 = vmatprep.subr.mxu0 0.0
    %4439 = vmatpush1.msra.mxu0 0.0
    %4440 = vmatprep.subr.mxu0 0.0
    %4441 = vmatpush1.msra.mxu0 0.0
    %4442 = vmatprep.subr.mxu0 0.0
    %4443 = vmatpush1.msra.mxu0 0.0
    %4444 = vmatprep.subr.mxu0 0.0
    %4445 = vmatpush1.msra.mxu0 %v4005
    %4446 = vmatprep.subr.mxu0 0.0
    %4447 = vmatpush1.msra.mxu0 %v4004
    %4448 = vmatprep.subr.mxu0 0.0
    %4449 = vmatpush1.msra.mxu0 %v4003
    %4450 = vmatprep.subr.mxu0 0.0
    %4451 = vmatpush1.msra.mxu0 %v4002
    %4452 = vmatprep.subr.mxu0 0.0
    %4453 = vmatpush1.msra.mxu0 %v4001
    %4454 = vmatprep.subr.mxu0 0.0
    %4455 = vmatpush1.msra.mxu0 %v4000
    %4456 = vmatprep.subr.mxu0 0.0
    %4457 = vmatpush2.msra.mxu0 0.0
    %4458 = vmatprep.subr.mxu0 0.0
    %4459 = vmatpush2.msra.mxu0 0.0
    %4460 = vmatprep.subr.mxu0 0.0
    %4461 = vmatpush2.msra.mxu0 0.0
    %4462 = vmatprep.subr.mxu0 0.0
    %4463 = vmatpush2.msra.mxu0 0.0
    %4464 = vmatprep.subr.mxu0 0.0
    %4465 = vmatpush2.msra.mxu0 0.0
    %4466 = vmatprep.subr.mxu0 0.0
    %4467 = vmatpush2.msra.mxu0 0.0
    %4468 = vmatprep.subr.mxu0 0.0
    %4469 = vmatpush2.msra.mxu0 0.0
    %4470 = vmatprep.subr.mxu0 0.0
    %4471 = vmatpush2.msra.mxu0 0.0
    %4472 = vmatprep.subr.mxu0 0.0
    %4473 = vmatpush2.msra.mxu0 0.0
    %4474 = vmatprep.subr.mxu0 0.0
    %4475 = vmatpush2.msra.mxu0 0.0
    %4476 = vmatprep.subr.mxu0 0.0
    %4477 = vmatpush2.msra.mxu0 0.0
    %4478 = vmatprep.subr.mxu0 0.0
    %4479 = vmatpush2.msra.mxu0 0.0
    %4480 = vmatprep.subr.mxu0 0.0
    %4481 = vmatpush2.msra.mxu0 0.0
    %4482 = vmatprep.subr.mxu0 0.0
    %4483 = vmatpush2.msra.mxu0 0.0
    %4484 = vmatprep.subr.mxu0 0.0
    %4485 = vmatpush2.msra.mxu0 0.0
    %4486 = vmatprep.subr.mxu0 0.0
    %4487 = vmatpush2.msra.mxu0 0.0
    %4488 = vmatprep.mubr.f32.mxu0 0.0
    %4489 = vmatmul.mubr.f32.gmra.mxu0 %v4422
    %v4490 = vpop.f32.mrf.mxu0
    %v4491 = vadd.f32 0.0, %v4490
    %v4492 = vpop.f32.mrf.mxu0
    %4493 = vdwg.mxu0
    %v4494 = vadd.f32 %v4420, %v4491
    %v4495 = vmax.f32 %v4494, 0.0
    %v4496 = vsel %vm4081, %v4495, -inf
    %v4497 = vrot.slane %v4496, 4
    %v4498 = vmax.f32 %v4496, %v4497
    %v4499 = vrot.slane %v4498, 2
    %v4500 = vmax.f32 %v4498, %v4499
    %v4501 = vrot.slane %v4500, 1
    %v4502 = vmax.f32 %v4500, %v4501
    %4503 = vmatprep.subr.mxu0 0.0
    %4504 = vmatpush1.msra.mxu0 0.0
    %4505 = vmatprep.subr.mxu0 0.0
    %4506 = vmatpush1.msra.mxu0 0.0
    %4507 = vmatprep.subr.mxu0 0.0
    %4508 = vmatpush1.msra.mxu0 0.0
    %4509 = vmatprep.subr.mxu0 0.0
    %4510 = vmatpush1.msra.mxu0 0.0
    %4511 = vmatprep.subr.mxu0 0.0
    %4512 = vmatpush1.msra.mxu0 0.0
    %4513 = vmatprep.subr.mxu0 0.0
    %4514 = vmatpush1.msra.mxu0 0.0
    %4515 = vmatprep.subr.mxu0 0.0
    %4516 = vmatpush1.msra.mxu0 0.0
    %4517 = vmatprep.subr.mxu0 0.0
    %4518 = vmatpush1.msra.mxu0 0.0
    %4519 = vmatprep.subr.mxu0 0.0
    %4520 = vmatpush1.msra.mxu0 0.0
    %4521 = vmatprep.subr.mxu0 0.0
    %4522 = vmatpush1.msra.mxu0 0.0
    %4523 = vmatprep.subr.mxu0 0.0
    %4524 = vmatpush1.msra.mxu0 %v4102
    %4525 = vmatprep.subr.mxu0 0.0
    %4526 = vmatpush1.msra.mxu0 %v4101
    %4527 = vmatprep.subr.mxu0 0.0
    %4528 = vmatpush1.msra.mxu0 %v4100
    %4529 = vmatprep.subr.mxu0 0.0
    %4530 = vmatpush1.msra.mxu0 %v4099
    %4531 = vmatprep.subr.mxu0 0.0
    %4532 = vmatpush1.msra.mxu0 %v4098
    %4533 = vmatprep.subr.mxu0 0.0
    %4534 = vmatpush1.msra.mxu0 %v4097
    %4535 = vmatprep.subr.mxu0 0.0
    %4536 = vmatpush2.msra.mxu0 0.0
    %4537 = vmatprep.subr.mxu0 0.0
    %4538 = vmatpush2.msra.mxu0 0.0
    %4539 = vmatprep.subr.mxu0 0.0
    %4540 = vmatpush2.msra.mxu0 0.0
    %4541 = vmatprep.subr.mxu0 0.0
    %4542 = vmatpush2.msra.mxu0 0.0
    %4543 = vmatprep.subr.mxu0 0.0
    %4544 = vmatpush2.msra.mxu0 0.0
    %4545 = vmatprep.subr.mxu0 0.0
    %4546 = vmatpush2.msra.mxu0 0.0
    %4547 = vmatprep.subr.mxu0 0.0
    %4548 = vmatpush2.msra.mxu0 0.0
    %4549 = vmatprep.subr.mxu0 0.0
    %4550 = vmatpush2.msra.mxu0 0.0
    %4551 = vmatprep.subr.mxu0 0.0
    %4552 = vmatpush2.msra.mxu0 0.0
    %4553 = vmatprep.subr.mxu0 0.0
    %4554 = vmatpush2.msra.mxu0 0.0
    %4555 = vmatprep.subr.mxu0 0.0
    %4556 = vmatpush2.msra.mxu0 0.0
    %4557 = vmatprep.subr.mxu0 0.0
    %4558 = vmatpush2.msra.mxu0 0.0
    %4559 = vmatprep.subr.mxu0 0.0
    %4560 = vmatpush2.msra.mxu0 0.0
    %4561 = vmatprep.subr.mxu0 0.0
    %4562 = vmatpush2.msra.mxu0 0.0
    %4563 = vmatprep.subr.mxu0 0.0
    %4564 = vmatpush2.msra.mxu0 0.0
    %4565 = vmatprep.subr.mxu0 0.0
    %4566 = vmatpush2.msra.mxu0 0.0
    %4567 = vmatprep.mubr.f32.mxu0 0.0
    %4568 = vmatmul.mubr.f32.gmra.mxu0 %v4348
    %v4569 = vpop.f32.mrf.mxu0
    %v4570 = vadd.f32 0.0, %v4569
    %v4571 = vpop.f32.mrf.mxu0
    %4572 = vdwg.mxu0
    %v4573 = vadd.f32 %v4096, %v4570
    %4574 = vmatprep.subr.mxu0 0.0
    %4575 = vmatpush1.msra.mxu0 0.0
    %4576 = vmatprep.subr.mxu0 0.0
    %4577 = vmatpush1.msra.mxu0 0.0
    %4578 = vmatprep.subr.mxu0 0.0
    %4579 = vmatpush1.msra.mxu0 0.0
    %4580 = vmatprep.subr.mxu0 0.0
    %4581 = vmatpush1.msra.mxu0 0.0
    %4582 = vmatprep.subr.mxu0 0.0
    %4583 = vmatpush1.msra.mxu0 0.0
    %4584 = vmatprep.subr.mxu0 0.0
    %4585 = vmatpush1.msra.mxu0 0.0
    %4586 = vmatprep.subr.mxu0 0.0
    %4587 = vmatpush1.msra.mxu0 0.0
    %4588 = vmatprep.subr.mxu0 0.0
    %4589 = vmatpush1.msra.mxu0 0.0
    %4590 = vmatprep.subr.mxu0 0.0
    %4591 = vmatpush1.msra.mxu0 0.0
    %4592 = vmatprep.subr.mxu0 0.0
    %4593 = vmatpush1.msra.mxu0 0.0
    %4594 = vmatprep.subr.mxu0 0.0
    %4595 = vmatpush1.msra.mxu0 %v4180
    %4596 = vmatprep.subr.mxu0 0.0
    %4597 = vmatpush1.msra.mxu0 %v4179
    %4598 = vmatprep.subr.mxu0 0.0
    %4599 = vmatpush1.msra.mxu0 %v4178
    %4600 = vmatprep.subr.mxu0 0.0
    %4601 = vmatpush1.msra.mxu0 %v4177
    %4602 = vmatprep.subr.mxu0 0.0
    %4603 = vmatpush1.msra.mxu0 %v4176
    %4604 = vmatprep.subr.mxu0 0.0
    %4605 = vmatpush1.msra.mxu0 %v4175
    %4606 = vmatprep.subr.mxu0 0.0
    %4607 = vmatpush2.msra.mxu0 0.0
    %4608 = vmatprep.subr.mxu0 0.0
    %4609 = vmatpush2.msra.mxu0 0.0
    %4610 = vmatprep.subr.mxu0 0.0
    %4611 = vmatpush2.msra.mxu0 0.0
    %4612 = vmatprep.subr.mxu0 0.0
    %4613 = vmatpush2.msra.mxu0 0.0
    %4614 = vmatprep.subr.mxu0 0.0
    %4615 = vmatpush2.msra.mxu0 0.0
    %4616 = vmatprep.subr.mxu0 0.0
    %4617 = vmatpush2.msra.mxu0 0.0
    %4618 = vmatprep.subr.mxu0 0.0
    %4619 = vmatpush2.msra.mxu0 0.0
    %4620 = vmatprep.subr.mxu0 0.0
    %4621 = vmatpush2.msra.mxu0 0.0
    %4622 = vmatprep.subr.mxu0 0.0
    %4623 = vmatpush2.msra.mxu0 0.0
    %4624 = vmatprep.subr.mxu0 0.0
    %4625 = vmatpush2.msra.mxu0 0.0
    %4626 = vmatprep.subr.mxu0 0.0
    %4627 = vmatpush2.msra.mxu0 0.0
    %4628 = vmatprep.subr.mxu0 0.0
    %4629 = vmatpush2.msra.mxu0 0.0
    %4630 = vmatprep.subr.mxu0 0.0
    %4631 = vmatpush2.msra.mxu0 0.0
    %4632 = vmatprep.subr.mxu0 0.0
    %4633 = vmatpush2.msra.mxu0 0.0
    %4634 = vmatprep.subr.mxu0 0.0
    %4635 = vmatpush2.msra.mxu0 0.0
    %4636 = vmatprep.subr.mxu0 0.0
    %4637 = vmatpush2.msra.mxu0 0.0
    %4638 = vmatprep.mubr.f32.mxu0 0.0
    %4639 = vmatmul.mubr.f32.gmra.mxu0 %v4422
    %v4640 = vpop.f32.mrf.mxu0
    %v4641 = vadd.f32 0.0, %v4640
    %v4642 = vpop.f32.mrf.mxu0
    %4643 = vdwg.mxu0
    %v4644 = vadd.f32 %v4573, %v4641
    %v4645 = vrot.slane %v3909, 2
    %v4646 = vsel %vm3924, %v4645, 0
    %4648 = vmatprep.subr.mxu0 0.0
    %4649 = vmatpush1.msra.mxu0 0.0
    %4650 = vmatprep.subr.mxu0 0.0
    %4651 = vmatpush1.msra.mxu0 0.0
    %4652 = vmatprep.subr.mxu0 0.0
    %4653 = vmatpush1.msra.mxu0 0.0
    %4654 = vmatprep.subr.mxu0 0.0
    %4655 = vmatpush1.msra.mxu0 0.0
    %4656 = vmatprep.subr.mxu0 0.0
    %4657 = vmatpush1.msra.mxu0 0.0
    %4658 = vmatprep.subr.mxu0 0.0
    %4659 = vmatpush1.msra.mxu0 0.0
    %4660 = vmatprep.subr.mxu0 0.0
    %4661 = vmatpush1.msra.mxu0 0.0
    %4662 = vmatprep.subr.mxu0 0.0
    %4663 = vmatpush1.msra.mxu0 0.0
    %4664 = vmatprep.subr.mxu0 0.0
    %4665 = vmatpush1.msra.mxu0 0.0
    %4666 = vmatprep.subr.mxu0 0.0
    %4667 = vmatpush1.msra.mxu0 0.0
    %4668 = vmatprep.subr.mxu0 0.0
    %4669 = vmatpush1.msra.mxu0 %v4258
    %4670 = vmatprep.subr.mxu0 0.0
    %4671 = vmatpush1.msra.mxu0 %v4257
    %4672 = vmatprep.subr.mxu0 0.0
    %4673 = vmatpush1.msra.mxu0 %v4256
    %4674 = vmatprep.subr.mxu0 0.0
    %4675 = vmatpush1.msra.mxu0 %v4255
    %4676 = vmatprep.subr.mxu0 0.0
    %4677 = vmatpush1.msra.mxu0 %v4254
    %4678 = vmatprep.subr.mxu0 0.0
    %4679 = vmatpush1.msra.mxu0 %v4253
    %4680 = vmatprep.subr.mxu0 0.0
    %4681 = vmatpush2.msra.mxu0 0.0
    %4682 = vmatprep.subr.mxu0 0.0
    %4683 = vmatpush2.msra.mxu0 0.0
    %4684 = vmatprep.subr.mxu0 0.0
    %4685 = vmatpush2.msra.mxu0 0.0
    %4686 = vmatprep.subr.mxu0 0.0
    %4687 = vmatpush2.msra.mxu0 0.0
    %4688 = vmatprep.subr.mxu0 0.0
    %4689 = vmatpush2.msra.mxu0 0.0
    %4690 = vmatprep.subr.mxu0 0.0
    %4691 = vmatpush2.msra.mxu0 0.0
    %4692 = vmatprep.subr.mxu0 0.0
    %4693 = vmatpush2.msra.mxu0 0.0
    %4694 = vmatprep.subr.mxu0 0.0
    %4695 = vmatpush2.msra.mxu0 0.0
    %4696 = vmatprep.subr.mxu0 0.0
    %4697 = vmatpush2.msra.mxu0 0.0
    %4698 = vmatprep.subr.mxu0 0.0
    %4699 = vmatpush2.msra.mxu0 0.0
    %4700 = vmatprep.subr.mxu0 0.0
    %4701 = vmatpush2.msra.mxu0 0.0
    %4702 = vmatprep.subr.mxu0 0.0
    %4703 = vmatpush2.msra.mxu0 0.0
    %4704 = vmatprep.subr.mxu0 0.0
    %4705 = vmatpush2.msra.mxu0 0.0
    %4706 = vmatprep.subr.mxu0 0.0
    %4707 = vmatpush2.msra.mxu0 0.0
    %4708 = vmatprep.subr.mxu0 0.0
    %4709 = vmatpush2.msra.mxu0 0.0
    %4710 = vmatprep.subr.mxu0 0.0
    %4711 = vmatpush2.msra.mxu0 0.0
    %4712 = vmatprep.mubr.f32.mxu0 0.0
    %4713 = vmatmul.mubr.f32.gmra.mxu0 %v4646
    %v4714 = vpop.f32.mrf.mxu0
    %v4715 = vadd.f32 0.0, %v4714
    %v4716 = vpop.f32.mrf.mxu0
    %4717 = vdwg.mxu0
    %v4718 = vadd.f32 %v4644, %v4715
    %v4719 = vmax.f32 %v4718, 0.0
    %v4720 = vsel %vm4334, %v4719, -inf
    %v4721 = vrot.slane %v4720, 4
    %v4722 = vmax.f32 %v4720, %v4721
    %v4723 = vrot.slane %v4722, 2
    %v4724 = vmax.f32 %v4722, %v4723
    %v4725 = vrot.slane %v4724, 1
    %v4726 = vmax.f32 %v4724, %v4725
    %4728 = vrot.lane.b32.xlu0 %v4726, 8
    %v4729 = vpop.permute.xlu0 %4728
    %v4731 = vsel %vm277, %v4502, %v4729
    %v4733 = vrot.slane %v4731, 7
    %vm4735 = vcmask 1040384
    %v4736 = vsel %vm4735, %v4346, %v4733
    %v4737 = vld [vmem:[%s45] sm:$0xff]
    %v4738 = vld [vmem:[%s45 + $0x8] sm:$0xff]
    %v4739 = vld [vmem:[%s47] sm:$0x1]
    %v4741 = vlaneseq
    %v4742 = vshrl.u32 %v4741, 7
    %v4743 = vsub.s32 0, %v4742
    %v4744 = vrot.slane %v4739, %v4743
    %v4747 = vsel %vm1643, %v4736, 0
    %4749 = vmatprep.subr.mxu0 0.0
    %4750 = vmatpush1.msra.mxu0 0.0
    %4751 = vmatprep.subr.mxu0 0.0
    %4752 = vmatpush1.msra.mxu0 0.0
    %4753 = vmatprep.subr.mxu0 0.0
    %4754 = vmatpush1.msra.mxu0 0.0
    %4755 = vmatprep.subr.mxu0 0.0
    %4756 = vmatpush1.msra.mxu0 0.0
    %4757 = vmatprep.subr.mxu0 0.0
    %4758 = vmatpush1.msra.mxu0 0.0
    %4759 = vmatprep.subr.mxu0 0.0
    %4760 = vmatpush1.msra.mxu0 0.0
    %4761 = vmatprep.subr.mxu0 0.0
    %4762 = vmatpush1.msra.mxu0 0.0
    %4763 = vmatprep.subr.mxu0 0.0
    %4764 = vmatpush1.msra.mxu0 0.0
    %4765 = vmatprep.subr.mxu0 0.0
    %4766 = vmatpush1.msra.mxu0 0.0
    %4767 = vmatprep.subr.mxu0 0.0
    %4768 = vmatpush1.msra.mxu0 0.0
    %4769 = vmatprep.subr.mxu0 0.0
    %4770 = vmatpush1.msra.mxu0 0.0
    %4771 = vmatprep.subr.mxu0 0.0
    %4772 = vmatpush1.msra.mxu0 0.0
    %4773 = vmatprep.subr.mxu0 0.0
    %4774 = vmatpush1.msra.mxu0 0.0
    %4775 = vmatprep.subr.mxu0 0.0
    %4776 = vmatpush1.msra.mxu0 0.0
    %4777 = vmatprep.subr.mxu0 0.0
    %4778 = vmatpush1.msra.mxu0 %v4738
    %4779 = vmatprep.subr.mxu0 0.0
    %4780 = vmatpush1.msra.mxu0 %v4737
    %4781 = vmatprep.subr.mxu0 0.0
    %4782 = vmatpush2.msra.mxu0 0.0
    %4783 = vmatprep.subr.mxu0 0.0
    %4784 = vmatpush2.msra.mxu0 0.0
    %4785 = vmatprep.subr.mxu0 0.0
    %4786 = vmatpush2.msra.mxu0 0.0
    %4787 = vmatprep.subr.mxu0 0.0
    %4788 = vmatpush2.msra.mxu0 0.0
    %4789 = vmatprep.subr.mxu0 0.0
    %4790 = vmatpush2.msra.mxu0 0.0
    %4791 = vmatprep.subr.mxu0 0.0
    %4792 = vmatpush2.msra.mxu0 0.0
    %4793 = vmatprep.subr.mxu0 0.0
    %4794 = vmatpush2.msra.mxu0 0.0
    %4795 = vmatprep.subr.mxu0 0.0
    %4796 = vmatpush2.msra.mxu0 0.0
    %4797 = vmatprep.subr.mxu0 0.0
    %4798 = vmatpush2.msra.mxu0 0.0
    %4799 = vmatprep.subr.mxu0 0.0
    %4800 = vmatpush2.msra.mxu0 0.0
    %4801 = vmatprep.subr.mxu0 0.0
    %4802 = vmatpush2.msra.mxu0 0.0
    %4803 = vmatprep.subr.mxu0 0.0
    %4804 = vmatpush2.msra.mxu0 0.0
    %4805 = vmatprep.subr.mxu0 0.0
    %4806 = vmatpush2.msra.mxu0 0.0
    %4807 = vmatprep.subr.mxu0 0.0
    %4808 = vmatpush2.msra.mxu0 0.0
    %4809 = vmatprep.subr.mxu0 0.0
    %4810 = vmatpush2.msra.mxu0 0.0
    %4811 = vmatprep.subr.mxu0 0.0
    %4812 = vmatpush2.msra.mxu0 0.0
    %4813 = vmatprep.mubr.f32.mxu0 0.0
    %4814 = vmatmul.mubr.f32.gmra.mxu0 %v4747
    %v4815 = vpop.f32.mrf.mxu0
    %v4816 = vadd.f32 %v4744, %v4815
    %v4817 = vpop.f32.mrf.mxu0
    %4818 = vdwg.mxu0
    %v4819 = vmax.f32 %v4816, 0.0
    %v4820 = vld [vmem:[%s49] sm:$0xff]
    %v4821 = vld [vmem:[%s49 + $0x8] sm:$0xff]
    %v4822 = vld [vmem:[%s49 + $0x10] sm:$0xff]
    %v4823 = vld [vmem:[%s49 + $0x18] sm:$0xff]
    %v4824 = vld [vmem:[%s49 + $0x20] sm:$0xff]
    %v4825 = vld [vmem:[%s49 + $0x28] sm:$0xff]
    %v4826 = vld [vmem:[%s51] sm:$0x1]
    %v4828 = vlaneseq
    %v4829 = vshrl.u32 %v4828, 7
    %v4830 = vsub.s32 0, %v4829
    %v4831 = vrot.slane %v4826, %v4830
    %4833 = vmatprep.subr.mxu0 0.0
    %4834 = vmatpush1.msra.mxu0 0.0
    %4835 = vmatprep.subr.mxu0 0.0
    %4836 = vmatpush1.msra.mxu0 0.0
    %4837 = vmatprep.subr.mxu0 0.0
    %4838 = vmatpush1.msra.mxu0 0.0
    %4839 = vmatprep.subr.mxu0 0.0
    %4840 = vmatpush1.msra.mxu0 0.0
    %4841 = vmatprep.subr.mxu0 0.0
    %4842 = vmatpush1.msra.mxu0 0.0
    %4843 = vmatprep.subr.mxu0 0.0
    %4844 = vmatpush1.msra.mxu0 0.0
    %4845 = vmatprep.subr.mxu0 0.0
    %4846 = vmatpush1.msra.mxu0 0.0
    %4847 = vmatprep.subr.mxu0 0.0
    %4848 = vmatpush1.msra.mxu0 0.0
    %4849 = vmatprep.subr.mxu0 0.0
    %4850 = vmatpush1.msra.mxu0 0.0
    %4851 = vmatprep.subr.mxu0 0.0
    %4852 = vmatpush1.msra.mxu0 0.0
    %4853 = vmatprep.subr.mxu0 0.0
    %4854 = vmatpush1.msra.mxu0 %v4825
    %4855 = vmatprep.subr.mxu0 0.0
    %4856 = vmatpush1.msra.mxu0 %v4824
    %4857 = vmatprep.subr.mxu0 0.0
    %4858 = vmatpush1.msra.mxu0 %v4823
    %4859 = vmatprep.subr.mxu0 0.0
    %4860 = vmatpush1.msra.mxu0 %v4822
    %4861 = vmatprep.subr.mxu0 0.0
    %4862 = vmatpush1.msra.mxu0 %v4821
    %4863 = vmatprep.subr.mxu0 0.0
    %4864 = vmatpush1.msra.mxu0 %v4820
    %4865 = vmatprep.subr.mxu0 0.0
    %4866 = vmatpush2.msra.mxu0 0.0
    %4867 = vmatprep.subr.mxu0 0.0
    %4868 = vmatpush2.msra.mxu0 0.0
    %4869 = vmatprep.subr.mxu0 0.0
    %4870 = vmatpush2.msra.mxu0 0.0
    %4871 = vmatprep.subr.mxu0 0.0
    %4872 = vmatpush2.msra.mxu0 0.0
    %4873 = vmatprep.subr.mxu0 0.0
    %4874 = vmatpush2.msra.mxu0 0.0
    %4875 = vmatprep.subr.mxu0 0.0
    %4876 = vmatpush2.msra.mxu0 0.0
    %4877 = vmatprep.subr.mxu0 0.0
    %4878 = vmatpush2.msra.mxu0 0.0
    %4879 = vmatprep.subr.mxu0 0.0
    %4880 = vmatpush2.msra.mxu0 0.0
    %4881 = vmatprep.subr.mxu0 0.0
    %4882 = vmatpush2.msra.mxu0 0.0
    %4883 = vmatprep.subr.mxu0 0.0
    %4884 = vmatpush2.msra.mxu0 0.0
    %4885 = vmatprep.subr.mxu0 0.0
    %4886 = vmatpush2.msra.mxu0 0.0
    %4887 = vmatprep.subr.mxu0 0.0
    %4888 = vmatpush2.msra.mxu0 0.0
    %4889 = vmatprep.subr.mxu0 0.0
    %4890 = vmatpush2.msra.mxu0 0.0
    %4891 = vmatprep.subr.mxu0 0.0
    %4892 = vmatpush2.msra.mxu0 0.0
    %4893 = vmatprep.subr.mxu0 0.0
    %4894 = vmatpush2.msra.mxu0 0.0
    %4895 = vmatprep.subr.mxu0 0.0
    %4896 = vmatpush2.msra.mxu0 0.0
    %4897 = vmatprep.mubr.f32.mxu0 0.0
    %4898 = vmatmul.mubr.f32.gmra.mxu0 %v3926
    %v4899 = vpop.f32.mrf.mxu0
    %v4900 = vadd.f32 %v4831, %v4899
    %v4901 = vpop.f32.mrf.mxu0
    %4902 = vmatprep.mubr.f32.mxu0 0.0
    %4903 = vmatmul.mubr.f32.gmra.mxu0 %v4348
    %v4904 = vpop.f32.mrf.mxu0
    %v4905 = vadd.f32 %v4831, %v4904
    %v4906 = vpop.f32.mrf.mxu0
    %4907 = vdwg.mxu0
    %v4908 = vld [vmem:[%s7] sm:$0x3]
    %vm4909 = vcmp.gt.s32.totalorder %v4908, 0
    %v4910 = vld [vmem:[%s53] sm:$0xff]
    %v4911 = vld [vmem:[%s53 + $0x8] sm:$0xff]
    %v4912 = vld [vmem:[%s53 + $0x10] sm:$0xff]
    %v4913 = vld [vmem:[%s53 + $0x18] sm:$0xff]
    %v4915 = vsel %vm135, 0.0, 0
    %4917 = vmatprep.subr.mxu0 0.0
    %4918 = vmatpush1.msra.mxu0 0.0
    %4919 = vmatprep.subr.mxu0 0.0
    %4920 = vmatpush1.msra.mxu0 0.0
    %4921 = vmatprep.subr.mxu0 0.0
    %4922 = vmatpush1.msra.mxu0 0.0
    %4923 = vmatprep.subr.mxu0 0.0
    %4924 = vmatpush1.msra.mxu0 0.0
    %4925 = vmatprep.subr.mxu0 0.0
    %4926 = vmatpush1.msra.mxu0 0.0
    %4927 = vmatprep.subr.mxu0 0.0
    %4928 = vmatpush1.msra.mxu0 0.0
    %4929 = vmatprep.subr.mxu0 0.0
    %4930 = vmatpush1.msra.mxu0 0.0
    %4931 = vmatprep.subr.mxu0 0.0
    %4932 = vmatpush1.msra.mxu0 0.0
    %4933 = vmatprep.subr.mxu0 0.0
    %4934 = vmatpush1.msra.mxu0 0.0
    %4935 = vmatprep.subr.mxu0 0.0
    %4936 = vmatpush1.msra.mxu0 0.0
    %4937 = vmatprep.subr.mxu0 0.0
    %4938 = vmatpush1.msra.mxu0 0.0
    %4939 = vmatprep.subr.mxu0 0.0
    %4940 = vmatpush1.msra.mxu0 0.0
    %4941 = vmatprep.subr.mxu0 0.0
    %4942 = vmatpush1.msra.mxu0 %v4913
    %4943 = vmatprep.subr.mxu0 0.0
    %4944 = vmatpush1.msra.mxu0 %v4912
    %4945 = vmatprep.subr.mxu0 0.0
    %4946 = vmatpush1.msra.mxu0 %v4911
    %4947 = vmatprep.subr.mxu0 0.0
    %4948 = vmatpush1.msra.mxu0 %v4910
    %4949 = vmatprep.subr.mxu0 0.0
    %4950 = vmatpush2.msra.mxu0 0.0
    %4951 = vmatprep.subr.mxu0 0.0
    %4952 = vmatpush2.msra.mxu0 0.0
    %4953 = vmatprep.subr.mxu0 0.0
    %4954 = vmatpush2.msra.mxu0 0.0
    %4955 = vmatprep.subr.mxu0 0.0
    %4956 = vmatpush2.msra.mxu0 0.0
    %4957 = vmatprep.subr.mxu0 0.0
    %4958 = vmatpush2.msra.mxu0 0.0
    %4959 = vmatprep.subr.mxu0 0.0
    %4960 = vmatpush2.msra.mxu0 0.0
    %4961 = vmatprep.subr.mxu0 0.0
    %4962 = vmatpush2.msra.mxu0 0.0
    %4963 = vmatprep.subr.mxu0 0.0
    %4964 = vmatpush2.msra.mxu0 0.0
    %4965 = vmatprep.subr.mxu0 0.0
    %4966 = vmatpush2.msra.mxu0 0.0
    %4967 = vmatprep.subr.mxu0 0.0
    %4968 = vmatpush2.msra.mxu0 0.0
    %4969 = vmatprep.subr.mxu0 0.0
    %4970 = vmatpush2.msra.mxu0 0.0
    %4971 = vmatprep.subr.mxu0 0.0
    %4972 = vmatpush2.msra.mxu0 0.0
    %4973 = vmatprep.subr.mxu0 0.0
    %4974 = vmatpush2.msra.mxu0 0.0
    %4975 = vmatprep.subr.mxu0 0.0
    %4976 = vmatpush2.msra.mxu0 0.0
    %4977 = vmatprep.subr.mxu0 0.0
    %4978 = vmatpush2.msra.mxu0 0.0
    %4979 = vmatprep.subr.mxu0 0.0
    %4980 = vmatpush2.msra.mxu0 0.0
    %4981 = vmatprep.mubr.f32.mxu0 0.0
    %4982 = vmatmul.mubr.f32.gmra.mxu0 %v4915
    %v4983 = vpop.f32.mrf.mxu0
    %v4984 = vadd.f32 0.0, %v4983
    %v4985 = vpop.f32.mrf.mxu0
    %4986 = vdwg.mxu0
    %v4988 = vrot.slane %v4984, 1
    %v4991 = vadd.f32 %v4900, %v4984
    %v4992 = vadd.f32 %v4905, %v4988
    %v4993 = vsub.f32 0.0, %v4991
    %v4994 = vsub.f32 0.0, %v4992
    %v4995 = vmul.f32 %v4993, 1.442695
    %v4996 = vpow.pop %v4995
    %v4997 = vmul.f32 %v4994, 1.442695
    %v4998 = vpow.pop %v4997
    %v4999 = vadd.f32 %v4996, 1.0
    %v5000 = vadd.f32 %v4998, 1.0
    %v5001 = vrcp.pop %v4999
    %v5002 = vmul.f32 1.0, %v5001
    %v5003 = vrcp.pop %v5000
    %v5004 = vmul.f32 1.0, %v5003
    %s5005 = scalar_lea.vmem %s53, 32
    %v5006 = vld [vmem:[%s5005] sm:$0xff]
    %v5007 = vld [vmem:[%s5005 + $0x8] sm:$0xff]
    %v5008 = vld [vmem:[%s5005 + $0x10] sm:$0xff]
    %v5009 = vld [vmem:[%s5005 + $0x18] sm:$0xff]
    %5010 = vmatprep.subr.mxu0 0.0
    %5011 = vmatpush1.msra.mxu0 0.0
    %5012 = vmatprep.subr.mxu0 0.0
    %5013 = vmatpush1.msra.mxu0 0.0
    %5014 = vmatprep.subr.mxu0 0.0
    %5015 = vmatpush1.msra.mxu0 0.0
    %5016 = vmatprep.subr.mxu0 0.0
    %5017 = vmatpush1.msra.mxu0 0.0
    %5018 = vmatprep.subr.mxu0 0.0
    %5019 = vmatpush1.msra.mxu0 0.0
    %5020 = vmatprep.subr.mxu0 0.0
    %5021 = vmatpush1.msra.mxu0 0.0
    %5022 = vmatprep.subr.mxu0 0.0
    %5023 = vmatpush1.msra.mxu0 0.0
    %5024 = vmatprep.subr.mxu0 0.0
    %5025 = vmatpush1.msra.mxu0 0.0
    %5026 = vmatprep.subr.mxu0 0.0
    %5027 = vmatpush1.msra.mxu0 0.0
    %5028 = vmatprep.subr.mxu0 0.0
    %5029 = vmatpush1.msra.mxu0 0.0
    %5030 = vmatprep.subr.mxu0 0.0
    %5031 = vmatpush1.msra.mxu0 0.0
    %5032 = vmatprep.subr.mxu0 0.0
    %5033 = vmatpush1.msra.mxu0 0.0
    %5034 = vmatprep.subr.mxu0 0.0
    %5035 = vmatpush1.msra.mxu0 %v5009
    %5036 = vmatprep.subr.mxu0 0.0
    %5037 = vmatpush1.msra.mxu0 %v5008
    %5038 = vmatprep.subr.mxu0 0.0
    %5039 = vmatpush1.msra.mxu0 %v5007
    %5040 = vmatprep.subr.mxu0 0.0
    %5041 = vmatpush1.msra.mxu0 %v5006
    %5042 = vmatprep.subr.mxu0 0.0
    %5043 = vmatpush2.msra.mxu0 0.0
    %5044 = vmatprep.subr.mxu0 0.0
    %5045 = vmatpush2.msra.mxu0 0.0
    %5046 = vmatprep.subr.mxu0 0.0
    %5047 = vmatpush2.msra.mxu0 0.0
    %5048 = vmatprep.subr.mxu0 0.0
    %5049 = vmatpush2.msra.mxu0 0.0
    %5050 = vmatprep.subr.mxu0 0.0
    %5051 = vmatpush2.msra.mxu0 0.0
    %5052 = vmatprep.subr.mxu0 0.0
    %5053 = vmatpush2.msra.mxu0 0.0
    %5054 = vmatprep.subr.mxu0 0.0
    %5055 = vmatpush2.msra.mxu0 0.0
    %5056 = vmatprep.subr.mxu0 0.0
    %5057 = vmatpush2.msra.mxu0 0.0
    %5058 = vmatprep.subr.mxu0 0.0
    %5059 = vmatpush2.msra.mxu0 0.0
    %5060 = vmatprep.subr.mxu0 0.0
    %5061 = vmatpush2.msra.mxu0 0.0
    %5062 = vmatprep.subr.mxu0 0.0
    %5063 = vmatpush2.msra.mxu0 0.0
    %5064 = vmatprep.subr.mxu0 0.0
    %5065 = vmatpush2.msra.mxu0 0.0
    %5066 = vmatprep.subr.mxu0 0.0
    %5067 = vmatpush2.msra.mxu0 0.0
    %5068 = vmatprep.subr.mxu0 0.0
    %5069 = vmatpush2.msra.mxu0 0.0
    %5070 = vmatprep.subr.mxu0 0.0
    %5071 = vmatpush2.msra.mxu0 0.0
    %5072 = vmatprep.subr.mxu0 0.0
    %5073 = vmatpush2.msra.mxu0 0.0
    %5074 = vmatprep.mubr.f32.mxu0 0.0
    %5075 = vmatmul.mubr.f32.gmra.mxu0 %v4915
    %v5076 = vpop.f32.mrf.mxu0
    %v5077 = vadd.f32 0.0, %v5076
    %v5078 = vpop.f32.mrf.mxu0
    %5079 = vdwg.mxu0
    %v5081 = vrot.slane %v5077, 1
    %5082 = vrot.lane.b32.xlu0 %v5077, 32
    %v5083 = vpop.permute.xlu0 %5082
    %5084 = vrot.lane.b32.xlu0 %v5081, 32
    %v5085 = vpop.permute.xlu0 %5084
    %v5088 = vadd.f32 %v4900, %v5083
    %v5089 = vadd.f32 %v4905, %v5085
    %v5090 = vsub.f32 0.0, %v5088
    %v5091 = vsub.f32 0.0, %v5089
    %v5092 = vmul.f32 %v5090, 1.442695
    %v5093 = vpow.pop %v5092
    %v5094 = vmul.f32 %v5091, 1.442695
    %v5095 = vpow.pop %v5094
    %v5096 = vadd.f32 %v5093, 1.0
    %v5097 = vadd.f32 %v5095, 1.0
    %v5098 = vrcp.pop %v5096
    %v5099 = vmul.f32 1.0, %v5098
    %v5100 = vrcp.pop %v5097
    %v5101 = vmul.f32 1.0, %v5100
    %s5102 = scalar_lea.vmem %s53, 64
    %v5103 = vld [vmem:[%s5102] sm:$0xff]
    %v5104 = vld [vmem:[%s5102 + $0x8] sm:$0xff]
    %v5105 = vld [vmem:[%s5102 + $0x10] sm:$0xff]
    %v5106 = vld [vmem:[%s5102 + $0x18] sm:$0xff]
    %5107 = vmatprep.subr.mxu0 0.0
    %5108 = vmatpush1.msra.mxu0 0.0
    %5109 = vmatprep.subr.mxu0 0.0
    %5110 = vmatpush1.msra.mxu0 0.0
    %5111 = vmatprep.subr.mxu0 0.0
    %5112 = vmatpush1.msra.mxu0 0.0
    %5113 = vmatprep.subr.mxu0 0.0
    %5114 = vmatpush1.msra.mxu0 0.0
    %5115 = vmatprep.subr.mxu0 0.0
    %5116 = vmatpush1.msra.mxu0 0.0
    %5117 = vmatprep.subr.mxu0 0.0
    %5118 = vmatpush1.msra.mxu0 0.0
    %5119 = vmatprep.subr.mxu0 0.0
    %5120 = vmatpush1.msra.mxu0 0.0
    %5121 = vmatprep.subr.mxu0 0.0
    %5122 = vmatpush1.msra.mxu0 0.0
    %5123 = vmatprep.subr.mxu0 0.0
    %5124 = vmatpush1.msra.mxu0 0.0
    %5125 = vmatprep.subr.mxu0 0.0
    %5126 = vmatpush1.msra.mxu0 0.0
    %5127 = vmatprep.subr.mxu0 0.0
    %5128 = vmatpush1.msra.mxu0 0.0
    %5129 = vmatprep.subr.mxu0 0.0
    %5130 = vmatpush1.msra.mxu0 0.0
    %5131 = vmatprep.subr.mxu0 0.0
    %5132 = vmatpush1.msra.mxu0 %v5106
    %5133 = vmatprep.subr.mxu0 0.0
    %5134 = vmatpush1.msra.mxu0 %v5105
    %5135 = vmatprep.subr.mxu0 0.0
    %5136 = vmatpush1.msra.mxu0 %v5104
    %5137 = vmatprep.subr.mxu0 0.0
    %5138 = vmatpush1.msra.mxu0 %v5103
    %5139 = vmatprep.subr.mxu0 0.0
    %5140 = vmatpush2.msra.mxu0 0.0
    %5141 = vmatprep.subr.mxu0 0.0
    %5142 = vmatpush2.msra.mxu0 0.0
    %5143 = vmatprep.subr.mxu0 0.0
    %5144 = vmatpush2.msra.mxu0 0.0
    %5145 = vmatprep.subr.mxu0 0.0
    %5146 = vmatpush2.msra.mxu0 0.0
    %5147 = vmatprep.subr.mxu0 0.0
    %5148 = vmatpush2.msra.mxu0 0.0
    %5149 = vmatprep.subr.mxu0 0.0
    %5150 = vmatpush2.msra.mxu0 0.0
    %5151 = vmatprep.subr.mxu0 0.0
    %5152 = vmatpush2.msra.mxu0 0.0
    %5153 = vmatprep.subr.mxu0 0.0
    %5154 = vmatpush2.msra.mxu0 0.0
    %5155 = vmatprep.subr.mxu0 0.0
    %5156 = vmatpush2.msra.mxu0 0.0
    %5157 = vmatprep.subr.mxu0 0.0
    %5158 = vmatpush2.msra.mxu0 0.0
    %5159 = vmatprep.subr.mxu0 0.0
    %5160 = vmatpush2.msra.mxu0 0.0
    %5161 = vmatprep.subr.mxu0 0.0
    %5162 = vmatpush2.msra.mxu0 0.0
    %5163 = vmatprep.subr.mxu0 0.0
    %5164 = vmatpush2.msra.mxu0 0.0
    %5165 = vmatprep.subr.mxu0 0.0
    %5166 = vmatpush2.msra.mxu0 0.0
    %5167 = vmatprep.subr.mxu0 0.0
    %5168 = vmatpush2.msra.mxu0 0.0
    %5169 = vmatprep.subr.mxu0 0.0
    %5170 = vmatpush2.msra.mxu0 0.0
    %5171 = vmatprep.mubr.f32.mxu0 0.0
    %5172 = vmatmul.mubr.f32.gmra.mxu0 %v4915
    %v5173 = vpop.f32.mrf.mxu0
    %v5174 = vadd.f32 0.0, %v5173
    %v5175 = vpop.f32.mrf.mxu0
    %5176 = vdwg.mxu0
    %v5178 = vrot.slane %v5174, 1
    %5179 = vrot.lane.b32.xlu0 %v5174, 64
    %v5180 = vpop.permute.xlu0 %5179
    %5181 = vrot.lane.b32.xlu0 %v5178, 64
    %v5182 = vpop.permute.xlu0 %5181
    %v5185 = vadd.f32 %v4900, %v5180
    %v5186 = vadd.f32 %v4905, %v5182
    %v5187 = vtanh.pop %v5185
    %v5188 = vtanh.pop %v5186
    %s5189 = scalar_lea.vmem %s53, 96
    %v5190 = vld [vmem:[%s5189] sm:$0xff]
    %v5191 = vld [vmem:[%s5189 + $0x8] sm:$0xff]
    %v5192 = vld [vmem:[%s5189 + $0x10] sm:$0xff]
    %v5193 = vld [vmem:[%s5189 + $0x18] sm:$0xff]
    %5194 = vmatprep.subr.mxu0 0.0
    %5195 = vmatpush1.msra.mxu0 0.0
    %5196 = vmatprep.subr.mxu0 0.0
    %5197 = vmatpush1.msra.mxu0 0.0
    %5198 = vmatprep.subr.mxu0 0.0
    %5199 = vmatpush1.msra.mxu0 0.0
    %5200 = vmatprep.subr.mxu0 0.0
    %5201 = vmatpush1.msra.mxu0 0.0
    %5202 = vmatprep.subr.mxu0 0.0
    %5203 = vmatpush1.msra.mxu0 0.0
    %5204 = vmatprep.subr.mxu0 0.0
    %5205 = vmatpush1.msra.mxu0 0.0
    %5206 = vmatprep.subr.mxu0 0.0
    %5207 = vmatpush1.msra.mxu0 0.0
    %5208 = vmatprep.subr.mxu0 0.0
    %5209 = vmatpush1.msra.mxu0 0.0
    %5210 = vmatprep.subr.mxu0 0.0
    %5211 = vmatpush1.msra.mxu0 0.0
    %5212 = vmatprep.subr.mxu0 0.0
    %5213 = vmatpush1.msra.mxu0 0.0
    %5214 = vmatprep.subr.mxu0 0.0
    %5215 = vmatpush1.msra.mxu0 0.0
    %5216 = vmatprep.subr.mxu0 0.0
    %5217 = vmatpush1.msra.mxu0 0.0
    %5218 = vmatprep.subr.mxu0 0.0
    %5219 = vmatpush1.msra.mxu0 %v5193
    %5220 = vmatprep.subr.mxu0 0.0
    %5221 = vmatpush1.msra.mxu0 %v5192
    %5222 = vmatprep.subr.mxu0 0.0
    %5223 = vmatpush1.msra.mxu0 %v5191
    %5224 = vmatprep.subr.mxu0 0.0
    %5225 = vmatpush1.msra.mxu0 %v5190
    %5226 = vmatprep.subr.mxu0 0.0
    %5227 = vmatpush2.msra.mxu0 0.0
    %5228 = vmatprep.subr.mxu0 0.0
    %5229 = vmatpush2.msra.mxu0 0.0
    %5230 = vmatprep.subr.mxu0 0.0
    %5231 = vmatpush2.msra.mxu0 0.0
    %5232 = vmatprep.subr.mxu0 0.0
    %5233 = vmatpush2.msra.mxu0 0.0
    %5234 = vmatprep.subr.mxu0 0.0
    %5235 = vmatpush2.msra.mxu0 0.0
    %5236 = vmatprep.subr.mxu0 0.0
    %5237 = vmatpush2.msra.mxu0 0.0
    %5238 = vmatprep.subr.mxu0 0.0
    %5239 = vmatpush2.msra.mxu0 0.0
    %5240 = vmatprep.subr.mxu0 0.0
    %5241 = vmatpush2.msra.mxu0 0.0
    %5242 = vmatprep.subr.mxu0 0.0
    %5243 = vmatpush2.msra.mxu0 0.0
    %5244 = vmatprep.subr.mxu0 0.0
    %5245 = vmatpush2.msra.mxu0 0.0
    %5246 = vmatprep.subr.mxu0 0.0
    %5247 = vmatpush2.msra.mxu0 0.0
    %5248 = vmatprep.subr.mxu0 0.0
    %5249 = vmatpush2.msra.mxu0 0.0
    %5250 = vmatprep.subr.mxu0 0.0
    %5251 = vmatpush2.msra.mxu0 0.0
    %5252 = vmatprep.subr.mxu0 0.0
    %5253 = vmatpush2.msra.mxu0 0.0
    %5254 = vmatprep.subr.mxu0 0.0
    %5255 = vmatpush2.msra.mxu0 0.0
    %5256 = vmatprep.subr.mxu0 0.0
    %5257 = vmatpush2.msra.mxu0 0.0
    %5258 = vmatprep.mubr.f32.mxu0 0.0
    %5259 = vmatmul.mubr.f32.gmra.mxu0 %v4915
    %v5260 = vpop.f32.mrf.mxu0
    %v5261 = vadd.f32 0.0, %v5260
    %v5262 = vpop.f32.mrf.mxu0
    %5263 = vdwg.mxu0
    %v5265 = vrot.slane %v5261, 1
    %5266 = vrot.lane.b32.xlu0 %v5261, 96
    %v5267 = vpop.permute.xlu0 %5266
    %5268 = vrot.lane.b32.xlu0 %v5265, 96
    %v5269 = vpop.permute.xlu0 %5268
    %v5272 = vadd.f32 %v4900, %v5267
    %v5273 = vadd.f32 %v4905, %v5269
    %v5274 = vsub.f32 0.0, %v5272
    %v5275 = vsub.f32 0.0, %v5273
    %v5276 = vmul.f32 %v5274, 1.442695
    %v5277 = vpow.pop %v5276
    %v5278 = vmul.f32 %v5275, 1.442695
    %v5279 = vpow.pop %v5278
    %v5280 = vadd.f32 %v5277, 1.0
    %v5281 = vadd.f32 %v5279, 1.0
    %v5282 = vrcp.pop %v5280
    %v5283 = vmul.f32 1.0, %v5282
    %v5284 = vrcp.pop %v5281
    %v5285 = vmul.f32 1.0, %v5284
    %v5286 = vmul.f32 %v5099, 0.0
    %v5287 = vmul.f32 %v5101, 0.0
    %5290 = vrot.lane.b32.xlu0 %v5187, 64
    %v5291 = vpop.permute.xlu0 %5290
    %5292 = vrot.lane.b32.xlu0 %v5188, 64
    %v5293 = vpop.permute.xlu0 %5292
    %v5296 = vmul.f32 %v5002, %v5291
    %v5297 = vmul.f32 %v5004, %v5293
    %5300 = vrot.lane.b32.xlu0 %v5296, 32
    %v5301 = vpop.permute.xlu0 %5300
    %5302 = vrot.lane.b32.xlu0 %v5297, 32
    %v5303 = vpop.permute.xlu0 %5302
    %v5306 = vadd.f32 %v5286, %v5301
    %v5307 = vadd.f32 %v5287, %v5303
    %v5308 = vtanh.pop %v5306
    %v5309 = vtanh.pop %v5307
    %5312 = vrot.lane.b32.xlu0 %v5308, 64
    %v5313 = vpop.permute.xlu0 %5312
    %5314 = vrot.lane.b32.xlu0 %v5309, 64
    %v5315 = vpop.permute.xlu0 %5314
    %v5318 = vmul.f32 %v5283, %v5313
    %v5319 = vmul.f32 %v5285, %v5315
    %v5320 = vsel %vm4909, 1, 0
    %5321 = vset.pattern.permute.xlu0 0
    %5322 = vperm.xlu0 %5321, %v5320
    %v5323 = vpop.permute.xlu0 %5322
    %vm5324 = vcmp.eq.s32.totalorder %v5323, 1
    %v5327 = vrot.slane %v5319, 7
    %vm5328 = vcmask 1041409
    %v5329 = vsel %vm5328, %v5327, %v5318
    %5330 = vrot.lane.b32.xlu0 %v5329, 32
    %v5331 = vpop.permute.xlu0 %5330
    %v5333 = vsel %vm5324, %v5331, 0.0
    %v5336 = vrot.slane %v5307, 7
    %v5337 = vsel %vm5328, %v5336, %v5306
    %5338 = vrot.lane.b32.xlu0 %v5337, 96
    %v5339 = vpop.permute.xlu0 %5338
    %v5341 = vsel %vm5324, %v5339, 0.0
    %v5342 = vmax.f32 %v5318, -3e+38
    %v5343 = vmax.f32 %v5319, -3e+38
    %v5346 = vrot.slane %v5343, 7
    %v5347 = vsel %vm5328, %v5346, %v5342
    %5348 = vrot.lane.b32.xlu0 %v5347, 32
    %v5349 = vpop.permute.xlu0 %5348
    %v5351 = vsel %vm5324, %v5349, -3e+38
    %vm5352 = vcmp.gt.s32.totalorder %v4908, 1
    %v5354 = vsel %vm135, %v5333, 0
    %5356 = vmatprep.subr.mxu0 0.0
    %5357 = vmatpush1.msra.mxu0 0.0
    %5358 = vmatprep.subr.mxu0 0.0
    %5359 = vmatpush1.msra.mxu0 0.0
    %5360 = vmatprep.subr.mxu0 0.0
    %5361 = vmatpush1.msra.mxu0 0.0
    %5362 = vmatprep.subr.mxu0 0.0
    %5363 = vmatpush1.msra.mxu0 0.0
    %5364 = vmatprep.subr.mxu0 0.0
    %5365 = vmatpush1.msra.mxu0 0.0
    %5366 = vmatprep.subr.mxu0 0.0
    %5367 = vmatpush1.msra.mxu0 0.0
    %5368 = vmatprep.subr.mxu0 0.0
    %5369 = vmatpush1.msra.mxu0 0.0
    %5370 = vmatprep.subr.mxu0 0.0
    %5371 = vmatpush1.msra.mxu0 0.0
    %5372 = vmatprep.subr.mxu0 0.0
    %5373 = vmatpush1.msra.mxu0 0.0
    %5374 = vmatprep.subr.mxu0 0.0
    %5375 = vmatpush1.msra.mxu0 0.0
    %5376 = vmatprep.subr.mxu0 0.0
    %5377 = vmatpush1.msra.mxu0 0.0
    %5378 = vmatprep.subr.mxu0 0.0
    %5379 = vmatpush1.msra.mxu0 0.0
    %5380 = vmatprep.subr.mxu0 0.0
    %5381 = vmatpush1.msra.mxu0 %v4913
    %5382 = vmatprep.subr.mxu0 0.0
    %5383 = vmatpush1.msra.mxu0 %v4912
    %5384 = vmatprep.subr.mxu0 0.0
    %5385 = vmatpush1.msra.mxu0 %v4911
    %5386 = vmatprep.subr.mxu0 0.0
    %5387 = vmatpush1.msra.mxu0 %v4910
    %5388 = vmatprep.subr.mxu0 0.0
    %5389 = vmatpush2.msra.mxu0 0.0
    %5390 = vmatprep.subr.mxu0 0.0
    %5391 = vmatpush2.msra.mxu0 0.0
    %5392 = vmatprep.subr.mxu0 0.0
    %5393 = vmatpush2.msra.mxu0 0.0
    %5394 = vmatprep.subr.mxu0 0.0
    %5395 = vmatpush2.msra.mxu0 0.0
    %5396 = vmatprep.subr.mxu0 0.0
    %5397 = vmatpush2.msra.mxu0 0.0
    %5398 = vmatprep.subr.mxu0 0.0
    %5399 = vmatpush2.msra.mxu0 0.0
    %5400 = vmatprep.subr.mxu0 0.0
    %5401 = vmatpush2.msra.mxu0 0.0
    %5402 = vmatprep.subr.mxu0 0.0
    %5403 = vmatpush2.msra.mxu0 0.0
    %5404 = vmatprep.subr.mxu0 0.0
    %5405 = vmatpush2.msra.mxu0 0.0
    %5406 = vmatprep.subr.mxu0 0.0
    %5407 = vmatpush2.msra.mxu0 0.0
    %5408 = vmatprep.subr.mxu0 0.0
    %5409 = vmatpush2.msra.mxu0 0.0
    %5410 = vmatprep.subr.mxu0 0.0
    %5411 = vmatpush2.msra.mxu0 0.0
    %5412 = vmatprep.subr.mxu0 0.0
    %5413 = vmatpush2.msra.mxu0 0.0
    %5414 = vmatprep.subr.mxu0 0.0
    %5415 = vmatpush2.msra.mxu0 0.0
    %5416 = vmatprep.subr.mxu0 0.0
    %5417 = vmatpush2.msra.mxu0 0.0
    %5418 = vmatprep.subr.mxu0 0.0
    %5419 = vmatpush2.msra.mxu0 0.0
    %5420 = vmatprep.mubr.f32.mxu0 0.0
    %5421 = vmatmul.mubr.f32.gmra.mxu0 %v5354
    %v5422 = vpop.f32.mrf.mxu0
    %v5423 = vadd.f32 0.0, %v5422
    %v5424 = vpop.f32.mrf.mxu0
    %5425 = vdwg.mxu0
    %v5427 = vrot.slane %v5423, 7
    %v5430 = vadd.f32 %v4900, %v5427
    %v5431 = vadd.f32 %v4905, %v5423
    %v5432 = vsub.f32 0.0, %v5430
    %v5433 = vsub.f32 0.0, %v5431
    %v5434 = vmul.f32 %v5432, 1.442695
    %v5435 = vpow.pop %v5434
    %v5436 = vmul.f32 %v5433, 1.442695
    %v5437 = vpow.pop %v5436
    %v5438 = vadd.f32 %v5435, 1.0
    %v5439 = vadd.f32 %v5437, 1.0
    %v5440 = vrcp.pop %v5438
    %v5441 = vmul.f32 1.0, %v5440
    %v5442 = vrcp.pop %v5439
    %v5443 = vmul.f32 1.0, %v5442
    %5444 = vmatprep.subr.mxu0 0.0
    %5445 = vmatpush1.msra.mxu0 0.0
    %5446 = vmatprep.subr.mxu0 0.0
    %5447 = vmatpush1.msra.mxu0 0.0
    %5448 = vmatprep.subr.mxu0 0.0
    %5449 = vmatpush1.msra.mxu0 0.0
    %5450 = vmatprep.subr.mxu0 0.0
    %5451 = vmatpush1.msra.mxu0 0.0
    %5452 = vmatprep.subr.mxu0 0.0
    %5453 = vmatpush1.msra.mxu0 0.0
    %5454 = vmatprep.subr.mxu0 0.0
    %5455 = vmatpush1.msra.mxu0 0.0
    %5456 = vmatprep.subr.mxu0 0.0
    %5457 = vmatpush1.msra.mxu0 0.0
    %5458 = vmatprep.subr.mxu0 0.0
    %5459 = vmatpush1.msra.mxu0 0.0
    %5460 = vmatprep.subr.mxu0 0.0
    %5461 = vmatpush1.msra.mxu0 0.0
    %5462 = vmatprep.subr.mxu0 0.0
    %5463 = vmatpush1.msra.mxu0 0.0
    %5464 = vmatprep.subr.mxu0 0.0
    %5465 = vmatpush1.msra.mxu0 0.0
    %5466 = vmatprep.subr.mxu0 0.0
    %5467 = vmatpush1.msra.mxu0 0.0
    %5468 = vmatprep.subr.mxu0 0.0
    %5469 = vmatpush1.msra.mxu0 %v5009
    %5470 = vmatprep.subr.mxu0 0.0
    %5471 = vmatpush1.msra.mxu0 %v5008
    %5472 = vmatprep.subr.mxu0 0.0
    %5473 = vmatpush1.msra.mxu0 %v5007
    %5474 = vmatprep.subr.mxu0 0.0
    %5475 = vmatpush1.msra.mxu0 %v5006
    %5476 = vmatprep.subr.mxu0 0.0
    %5477 = vmatpush2.msra.mxu0 0.0
    %5478 = vmatprep.subr.mxu0 0.0
    %5479 = vmatpush2.msra.mxu0 0.0
    %5480 = vmatprep.subr.mxu0 0.0
    %5481 = vmatpush2.msra.mxu0 0.0
    %5482 = vmatprep.subr.mxu0 0.0
    %5483 = vmatpush2.msra.mxu0 0.0
    %5484 = vmatprep.subr.mxu0 0.0
    %5485 = vmatpush2.msra.mxu0 0.0
    %5486 = vmatprep.subr.mxu0 0.0
    %5487 = vmatpush2.msra.mxu0 0.0
    %5488 = vmatprep.subr.mxu0 0.0
    %5489 = vmatpush2.msra.mxu0 0.0
    %5490 = vmatprep.subr.mxu0 0.0
    %5491 = vmatpush2.msra.mxu0 0.0
    %5492 = vmatprep.subr.mxu0 0.0
    %5493 = vmatpush2.msra.mxu0 0.0
    %5494 = vmatprep.subr.mxu0 0.0
    %5495 = vmatpush2.msra.mxu0 0.0
    %5496 = vmatprep.subr.mxu0 0.0
    %5497 = vmatpush2.msra.mxu0 0.0
    %5498 = vmatprep.subr.mxu0 0.0
    %5499 = vmatpush2.msra.mxu0 0.0
    %5500 = vmatprep.subr.mxu0 0.0
    %5501 = vmatpush2.msra.mxu0 0.0
    %5502 = vmatprep.subr.mxu0 0.0
    %5503 = vmatpush2.msra.mxu0 0.0
    %5504 = vmatprep.subr.mxu0 0.0
    %5505 = vmatpush2.msra.mxu0 0.0
    %5506 = vmatprep.subr.mxu0 0.0
    %5507 = vmatpush2.msra.mxu0 0.0
    %5508 = vmatprep.mubr.f32.mxu0 0.0
    %5509 = vmatmul.mubr.f32.gmra.mxu0 %v5354
    %v5510 = vpop.f32.mrf.mxu0
    %v5511 = vadd.f32 0.0, %v5510
    %v5512 = vpop.f32.mrf.mxu0
    %5513 = vdwg.mxu0
    %v5515 = vrot.slane %v5511, 7
    %5516 = vrot.lane.b32.xlu0 %v5515, 32
    %v5517 = vpop.permute.xlu0 %5516
    %5518 = vrot.lane.b32.xlu0 %v5511, 32
    %v5519 = vpop.permute.xlu0 %5518
    %v5522 = vadd.f32 %v4900, %v5517
    %v5523 = vadd.f32 %v4905, %v5519
    %v5524 = vsub.f32 0.0, %v5522
    %v5525 = vsub.f32 0.0, %v5523
    %v5526 = vmul.f32 %v5524, 1.442695
    %v5527 = vpow.pop %v5526
    %v5528 = vmul.f32 %v5525, 1.442695
    %v5529 = vpow.pop %v5528
    %v5530 = vadd.f32 %v5527, 1.0
    %v5531 = vadd.f32 %v5529, 1.0
    %v5532 = vrcp.pop %v5530
    %v5533 = vmul.f32 1.0, %v5532
    %v5534 = vrcp.pop %v5531
    %v5535 = vmul.f32 1.0, %v5534
    %5536 = vmatprep.subr.mxu0 0.0
    %5537 = vmatpush1.msra.mxu0 0.0
    %5538 = vmatprep.subr.mxu0 0.0
    %5539 = vmatpush1.msra.mxu0 0.0
    %5540 = vmatprep.subr.mxu0 0.0
    %5541 = vmatpush1.msra.mxu0 0.0
    %5542 = vmatprep.subr.mxu0 0.0
    %5543 = vmatpush1.msra.mxu0 0.0
    %5544 = vmatprep.subr.mxu0 0.0
    %5545 = vmatpush1.msra.mxu0 0.0
    %5546 = vmatprep.subr.mxu0 0.0
    %5547 = vmatpush1.msra.mxu0 0.0
    %5548 = vmatprep.subr.mxu0 0.0
    %5549 = vmatpush1.msra.mxu0 0.0
    %5550 = vmatprep.subr.mxu0 0.0
    %5551 = vmatpush1.msra.mxu0 0.0
    %5552 = vmatprep.subr.mxu0 0.0
    %5553 = vmatpush1.msra.mxu0 0.0
    %5554 = vmatprep.subr.mxu0 0.0
    %5555 = vmatpush1.msra.mxu0 0.0
    %5556 = vmatprep.subr.mxu0 0.0
    %5557 = vmatpush1.msra.mxu0 0.0
    %5558 = vmatprep.subr.mxu0 0.0
    %5559 = vmatpush1.msra.mxu0 0.0
    %5560 = vmatprep.subr.mxu0 0.0
    %5561 = vmatpush1.msra.mxu0 %v5106
    %5562 = vmatprep.subr.mxu0 0.0
    %5563 = vmatpush1.msra.mxu0 %v5105
    %5564 = vmatprep.subr.mxu0 0.0
    %5565 = vmatpush1.msra.mxu0 %v5104
    %5566 = vmatprep.subr.mxu0 0.0
    %5567 = vmatpush1.msra.mxu0 %v5103
    %5568 = vmatprep.subr.mxu0 0.0
    %5569 = vmatpush2.msra.mxu0 0.0
    %5570 = vmatprep.subr.mxu0 0.0
    %5571 = vmatpush2.msra.mxu0 0.0
    %5572 = vmatprep.subr.mxu0 0.0
    %5573 = vmatpush2.msra.mxu0 0.0
    %5574 = vmatprep.subr.mxu0 0.0
    %5575 = vmatpush2.msra.mxu0 0.0
    %5576 = vmatprep.subr.mxu0 0.0
    %5577 = vmatpush2.msra.mxu0 0.0
    %5578 = vmatprep.subr.mxu0 0.0
    %5579 = vmatpush2.msra.mxu0 0.0
    %5580 = vmatprep.subr.mxu0 0.0
    %5581 = vmatpush2.msra.mxu0 0.0
    %5582 = vmatprep.subr.mxu0 0.0
    %5583 = vmatpush2.msra.mxu0 0.0
    %5584 = vmatprep.subr.mxu0 0.0
    %5585 = vmatpush2.msra.mxu0 0.0
    %5586 = vmatprep.subr.mxu0 0.0
    %5587 = vmatpush2.msra.mxu0 0.0
    %5588 = vmatprep.subr.mxu0 0.0
    %5589 = vmatpush2.msra.mxu0 0.0
    %5590 = vmatprep.subr.mxu0 0.0
    %5591 = vmatpush2.msra.mxu0 0.0
    %5592 = vmatprep.subr.mxu0 0.0
    %5593 = vmatpush2.msra.mxu0 0.0
    %5594 = vmatprep.subr.mxu0 0.0
    %5595 = vmatpush2.msra.mxu0 0.0
    %5596 = vmatprep.subr.mxu0 0.0
    %5597 = vmatpush2.msra.mxu0 0.0
    %5598 = vmatprep.subr.mxu0 0.0
    %5599 = vmatpush2.msra.mxu0 0.0
    %5600 = vmatprep.mubr.f32.mxu0 0.0
    %5601 = vmatmul.mubr.f32.gmra.mxu0 %v5354
    %v5602 = vpop.f32.mrf.mxu0
    %v5603 = vadd.f32 0.0, %v5602
    %v5604 = vpop.f32.mrf.mxu0
    %5605 = vdwg.mxu0
    %v5607 = vrot.slane %v5603, 7
    %5608 = vrot.lane.b32.xlu0 %v5607, 64
    %v5609 = vpop.permute.xlu0 %5608
    %5610 = vrot.lane.b32.xlu0 %v5603, 64
    %v5611 = vpop.permute.xlu0 %5610
    %v5614 = vadd.f32 %v4900, %v5609
    %v5615 = vadd.f32 %v4905, %v5611
    %v5616 = vtanh.pop %v5614
    %v5617 = vtanh.pop %v5615
    %5618 = vmatprep.subr.mxu0 0.0
    %5619 = vmatpush1.msra.mxu0 0.0
    %5620 = vmatprep.subr.mxu0 0.0
    %5621 = vmatpush1.msra.mxu0 0.0
    %5622 = vmatprep.subr.mxu0 0.0
    %5623 = vmatpush1.msra.mxu0 0.0
    %5624 = vmatprep.subr.mxu0 0.0
    %5625 = vmatpush1.msra.mxu0 0.0
    %5626 = vmatprep.subr.mxu0 0.0
    %5627 = vmatpush1.msra.mxu0 0.0
    %5628 = vmatprep.subr.mxu0 0.0
    %5629 = vmatpush1.msra.mxu0 0.0
    %5630 = vmatprep.subr.mxu0 0.0
    %5631 = vmatpush1.msra.mxu0 0.0
    %5632 = vmatprep.subr.mxu0 0.0
    %5633 = vmatpush1.msra.mxu0 0.0
    %5634 = vmatprep.subr.mxu0 0.0
    %5635 = vmatpush1.msra.mxu0 0.0
    %5636 = vmatprep.subr.mxu0 0.0
    %5637 = vmatpush1.msra.mxu0 0.0
    %5638 = vmatprep.subr.mxu0 0.0
    %5639 = vmatpush1.msra.mxu0 0.0
    %5640 = vmatprep.subr.mxu0 0.0
    %5641 = vmatpush1.msra.mxu0 0.0
    %5642 = vmatprep.subr.mxu0 0.0
    %5643 = vmatpush1.msra.mxu0 %v5193
    %5644 = vmatprep.subr.mxu0 0.0
    %5645 = vmatpush1.msra.mxu0 %v5192
    %5646 = vmatprep.subr.mxu0 0.0
    %5647 = vmatpush1.msra.mxu0 %v5191
    %5648 = vmatprep.subr.mxu0 0.0
    %5649 = vmatpush1.msra.mxu0 %v5190
    %5650 = vmatprep.subr.mxu0 0.0
    %5651 = vmatpush2.msra.mxu0 0.0
    %5652 = vmatprep.subr.mxu0 0.0
    %5653 = vmatpush2.msra.mxu0 0.0
    %5654 = vmatprep.subr.mxu0 0.0
    %5655 = vmatpush2.msra.mxu0 0.0
    %5656 = vmatprep.subr.mxu0 0.0
    %5657 = vmatpush2.msra.mxu0 0.0
    %5658 = vmatprep.subr.mxu0 0.0
    %5659 = vmatpush2.msra.mxu0 0.0
    %5660 = vmatprep.subr.mxu0 0.0
    %5661 = vmatpush2.msra.mxu0 0.0
    %5662 = vmatprep.subr.mxu0 0.0
    %5663 = vmatpush2.msra.mxu0 0.0
    %5664 = vmatprep.subr.mxu0 0.0
    %5665 = vmatpush2.msra.mxu0 0.0
    %5666 = vmatprep.subr.mxu0 0.0
    %5667 = vmatpush2.msra.mxu0 0.0
    %5668 = vmatprep.subr.mxu0 0.0
    %5669 = vmatpush2.msra.mxu0 0.0
    %5670 = vmatprep.subr.mxu0 0.0
    %5671 = vmatpush2.msra.mxu0 0.0
    %5672 = vmatprep.subr.mxu0 0.0
    %5673 = vmatpush2.msra.mxu0 0.0
    %5674 = vmatprep.subr.mxu0 0.0
    %5675 = vmatpush2.msra.mxu0 0.0
    %5676 = vmatprep.subr.mxu0 0.0
    %5677 = vmatpush2.msra.mxu0 0.0
    %5678 = vmatprep.subr.mxu0 0.0
    %5679 = vmatpush2.msra.mxu0 0.0
    %5680 = vmatprep.subr.mxu0 0.0
    %5681 = vmatpush2.msra.mxu0 0.0
    %5682 = vmatprep.mubr.f32.mxu0 0.0
    %5683 = vmatmul.mubr.f32.gmra.mxu0 %v5354
    %v5684 = vpop.f32.mrf.mxu0
    %v5685 = vadd.f32 0.0, %v5684
    %v5686 = vpop.f32.mrf.mxu0
    %5687 = vdwg.mxu0
    %v5689 = vrot.slane %v5685, 7
    %5690 = vrot.lane.b32.xlu0 %v5689, 96
    %v5691 = vpop.permute.xlu0 %5690
    %5692 = vrot.lane.b32.xlu0 %v5685, 96
    %v5693 = vpop.permute.xlu0 %5692
    %v5696 = vadd.f32 %v4900, %v5691
    %v5697 = vadd.f32 %v4905, %v5693
    %v5698 = vsub.f32 0.0, %v5696
    %v5699 = vsub.f32 0.0, %v5697
    %v5700 = vmul.f32 %v5698, 1.442695
    %v5701 = vpow.pop %v5700
    %v5702 = vmul.f32 %v5699, 1.442695
    %v5703 = vpow.pop %v5702
    %v5704 = vadd.f32 %v5701, 1.0
    %v5705 = vadd.f32 %v5703, 1.0
    %v5706 = vrcp.pop %v5704
    %v5707 = vmul.f32 1.0, %v5706
    %v5708 = vrcp.pop %v5705
    %v5709 = vmul.f32 1.0, %v5708
    %v5711 = vrot.slane %v5341, 7
    %5712 = vrot.lane.b32.xlu0 %v5711, 32
    %v5713 = vpop.permute.xlu0 %5712
    %5714 = vrot.lane.b32.xlu0 %v5341, 32
    %v5715 = vpop.permute.xlu0 %5714
    %v5718 = vmul.f32 %v5533, %v5713
    %v5719 = vmul.f32 %v5535, %v5715
    %5722 = vrot.lane.b32.xlu0 %v5616, 64
    %v5723 = vpop.permute.xlu0 %5722
    %5724 = vrot.lane.b32.xlu0 %v5617, 64
    %v5725 = vpop.permute.xlu0 %5724
    %v5728 = vmul.f32 %v5441, %v5723
    %v5729 = vmul.f32 %v5443, %v5725
    %5732 = vrot.lane.b32.xlu0 %v5728, 32
    %v5733 = vpop.permute.xlu0 %5732
    %5734 = vrot.lane.b32.xlu0 %v5729, 32
    %v5735 = vpop.permute.xlu0 %5734
    %v5738 = vadd.f32 %v5718, %v5733
    %v5739 = vadd.f32 %v5719, %v5735
    %v5740 = vtanh.pop %v5738
    %v5741 = vtanh.pop %v5739
    %5744 = vrot.lane.b32.xlu0 %v5740, 64
    %v5745 = vpop.permute.xlu0 %5744
    %5746 = vrot.lane.b32.xlu0 %v5741, 64
    %v5747 = vpop.permute.xlu0 %5746
    %v5750 = vmul.f32 %v5707, %v5745
    %v5751 = vmul.f32 %v5709, %v5747
    %v5752 = vsel %vm5352, 1, 0
    %5753 = vset.pattern.permute.xlu0 0
    %5754 = vperm.xlu0 %5753, %v5752
    %v5755 = vpop.permute.xlu0 %5754
    %vm5756 = vcmp.eq.s32.totalorder %v5755, 1
    %v5759 = vrot.slane %v5750, 1
    %v5760 = vsel %vm5328, %v5751, %v5759
    %5761 = vrot.lane.b32.xlu0 %v5760, 32
    %v5762 = vpop.permute.xlu0 %5761
    %v5764 = vsel %vm5756, %v5762, %v5333
    %v5767 = vrot.slane %v5738, 1
    %v5768 = vsel %vm5328, %v5739, %v5767
    %5769 = vrot.lane.b32.xlu0 %v5768, 96
    %v5770 = vpop.permute.xlu0 %5769
    %v5772 = vsel %vm5756, %v5770, %v5341
    %v5773 = vmax.f32 %v5351, %v5762
    %v5774 = vsel %vm5756, %v5773, %v5351
    %vm5775 = vcmp.gt.s32.totalorder %v4908, 2
    %v5777 = vsel %vm135, %v5764, 0
    %5779 = vmatprep.subr.mxu0 0.0
    %5780 = vmatpush1.msra.mxu0 0.0
    %5781 = vmatprep.subr.mxu0 0.0
    %5782 = vmatpush1.msra.mxu0 0.0
    %5783 = vmatprep.subr.mxu0 0.0
    %5784 = vmatpush1.msra.mxu0 0.0
    %5785 = vmatprep.subr.mxu0 0.0
    %5786 = vmatpush1.msra.mxu0 0.0
    %5787 = vmatprep.subr.mxu0 0.0
    %5788 = vmatpush1.msra.mxu0 0.0
    %5789 = vmatprep.subr.mxu0 0.0
    %5790 = vmatpush1.msra.mxu0 0.0
    %5791 = vmatprep.subr.mxu0 0.0
    %5792 = vmatpush1.msra.mxu0 0.0
    %5793 = vmatprep.subr.mxu0 0.0
    %5794 = vmatpush1.msra.mxu0 0.0
    %5795 = vmatprep.subr.mxu0 0.0
    %5796 = vmatpush1.msra.mxu0 0.0
    %5797 = vmatprep.subr.mxu0 0.0
    %5798 = vmatpush1.msra.mxu0 0.0
    %5799 = vmatprep.subr.mxu0 0.0
    %5800 = vmatpush1.msra.mxu0 0.0
    %5801 = vmatprep.subr.mxu0 0.0
    %5802 = vmatpush1.msra.mxu0 0.0
    %5803 = vmatprep.subr.mxu0 0.0
    %5804 = vmatpush1.msra.mxu0 %v4913
    %5805 = vmatprep.subr.mxu0 0.0
    %5806 = vmatpush1.msra.mxu0 %v4912
    %5807 = vmatprep.subr.mxu0 0.0
    %5808 = vmatpush1.msra.mxu0 %v4911
    %5809 = vmatprep.subr.mxu0 0.0
    %5810 = vmatpush1.msra.mxu0 %v4910
    %5811 = vmatprep.subr.mxu0 0.0
    %5812 = vmatpush2.msra.mxu0 0.0
    %5813 = vmatprep.subr.mxu0 0.0
    %5814 = vmatpush2.msra.mxu0 0.0
    %5815 = vmatprep.subr.mxu0 0.0
    %5816 = vmatpush2.msra.mxu0 0.0
    %5817 = vmatprep.subr.mxu0 0.0
    %5818 = vmatpush2.msra.mxu0 0.0
    %5819 = vmatprep.subr.mxu0 0.0
    %5820 = vmatpush2.msra.mxu0 0.0
    %5821 = vmatprep.subr.mxu0 0.0
    %5822 = vmatpush2.msra.mxu0 0.0
    %5823 = vmatprep.subr.mxu0 0.0
    %5824 = vmatpush2.msra.mxu0 0.0
    %5825 = vmatprep.subr.mxu0 0.0
    %5826 = vmatpush2.msra.mxu0 0.0
    %5827 = vmatprep.subr.mxu0 0.0
    %5828 = vmatpush2.msra.mxu0 0.0
    %5829 = vmatprep.subr.mxu0 0.0
    %5830 = vmatpush2.msra.mxu0 0.0
    %5831 = vmatprep.subr.mxu0 0.0
    %5832 = vmatpush2.msra.mxu0 0.0
    %5833 = vmatprep.subr.mxu0 0.0
    %5834 = vmatpush2.msra.mxu0 0.0
    %5835 = vmatprep.subr.mxu0 0.0
    %5836 = vmatpush2.msra.mxu0 0.0
    %5837 = vmatprep.subr.mxu0 0.0
    %5838 = vmatpush2.msra.mxu0 0.0
    %5839 = vmatprep.subr.mxu0 0.0
    %5840 = vmatpush2.msra.mxu0 0.0
    %5841 = vmatprep.subr.mxu0 0.0
    %5842 = vmatpush2.msra.mxu0 0.0
    %5843 = vmatprep.mubr.f32.mxu0 0.0
    %5844 = vmatmul.mubr.f32.gmra.mxu0 %v5777
    %v5845 = vpop.f32.mrf.mxu0
    %v5846 = vadd.f32 0.0, %v5845
    %v5847 = vpop.f32.mrf.mxu0
    %5848 = vdwg.mxu0
    %v5850 = vrot.slane %v5846, 6
    %v5851 = vrot.slane %v5846, 7
    %v5854 = vadd.f32 %v4900, %v5850
    %v5855 = vadd.f32 %v4905, %v5851
    %v5856 = vsub.f32 0.0, %v5854
    %v5857 = vsub.f32 0.0, %v5855
    %v5858 = vmul.f32 %v5856, 1.442695
    %v5859 = vpow.pop %v5858
    %v5860 = vmul.f32 %v5857, 1.442695
    %v5861 = vpow.pop %v5860
    %v5862 = vadd.f32 %v5859, 1.0
    %v5863 = vadd.f32 %v5861, 1.0
    %v5864 = vrcp.pop %v5862
    %v5865 = vmul.f32 1.0, %v5864
    %v5866 = vrcp.pop %v5863
    %v5867 = vmul.f32 1.0, %v5866
    %5868 = vmatprep.subr.mxu0 0.0
    %5869 = vmatpush1.msra.mxu0 0.0
    %5870 = vmatprep.subr.mxu0 0.0
    %5871 = vmatpush1.msra.mxu0 0.0
    %5872 = vmatprep.subr.mxu0 0.0
    %5873 = vmatpush1.msra.mxu0 0.0
    %5874 = vmatprep.subr.mxu0 0.0
    %5875 = vmatpush1.msra.mxu0 0.0
    %5876 = vmatprep.subr.mxu0 0.0
    %5877 = vmatpush1.msra.mxu0 0.0
    %5878 = vmatprep.subr.mxu0 0.0
    %5879 = vmatpush1.msra.mxu0 0.0
    %5880 = vmatprep.subr.mxu0 0.0
    %5881 = vmatpush1.msra.mxu0 0.0
    %5882 = vmatprep.subr.mxu0 0.0
    %5883 = vmatpush1.msra.mxu0 0.0
    %5884 = vmatprep.subr.mxu0 0.0
    %5885 = vmatpush1.msra.mxu0 0.0
    %5886 = vmatprep.subr.mxu0 0.0
    %5887 = vmatpush1.msra.mxu0 0.0
    %5888 = vmatprep.subr.mxu0 0.0
    %5889 = vmatpush1.msra.mxu0 0.0
    %5890 = vmatprep.subr.mxu0 0.0
    %5891 = vmatpush1.msra.mxu0 0.0
    %5892 = vmatprep.subr.mxu0 0.0
    %5893 = vmatpush1.msra.mxu0 %v5009
    %5894 = vmatprep.subr.mxu0 0.0
    %5895 = vmatpush1.msra.mxu0 %v5008
    %5896 = vmatprep.subr.mxu0 0.0
    %5897 = vmatpush1.msra.mxu0 %v5007
    %5898 = vmatprep.subr.mxu0 0.0
    %5899 = vmatpush1.msra.mxu0 %v5006
    %5900 = vmatprep.subr.mxu0 0.0
    %5901 = vmatpush2.msra.mxu0 0.0
    %5902 = vmatprep.subr.mxu0 0.0
    %5903 = vmatpush2.msra.mxu0 0.0
    %5904 = vmatprep.subr.mxu0 0.0
    %5905 = vmatpush2.msra.mxu0 0.0
    %5906 = vmatprep.subr.mxu0 0.0
    %5907 = vmatpush2.msra.mxu0 0.0
    %5908 = vmatprep.subr.mxu0 0.0
    %5909 = vmatpush2.msra.mxu0 0.0
    %5910 = vmatprep.subr.mxu0 0.0
    %5911 = vmatpush2.msra.mxu0 0.0
    %5912 = vmatprep.subr.mxu0 0.0
    %5913 = vmatpush2.msra.mxu0 0.0
    %5914 = vmatprep.subr.mxu0 0.0
    %5915 = vmatpush2.msra.mxu0 0.0
    %5916 = vmatprep.subr.mxu0 0.0
    %5917 = vmatpush2.msra.mxu0 0.0
    %5918 = vmatprep.subr.mxu0 0.0
    %5919 = vmatpush2.msra.mxu0 0.0
    %5920 = vmatprep.subr.mxu0 0.0
    %5921 = vmatpush2.msra.mxu0 0.0
    %5922 = vmatprep.subr.mxu0 0.0
    %5923 = vmatpush2.msra.mxu0 0.0
    %5924 = vmatprep.subr.mxu0 0.0
    %5925 = vmatpush2.msra.mxu0 0.0
    %5926 = vmatprep.subr.mxu0 0.0
    %5927 = vmatpush2.msra.mxu0 0.0
    %5928 = vmatprep.subr.mxu0 0.0
    %5929 = vmatpush2.msra.mxu0 0.0
    %5930 = vmatprep.subr.mxu0 0.0
    %5931 = vmatpush2.msra.mxu0 0.0
    %5932 = vmatprep.mubr.f32.mxu0 0.0
    %5933 = vmatmul.mubr.f32.gmra.mxu0 %v5777
    %v5934 = vpop.f32.mrf.mxu0
    %v5935 = vadd.f32 0.0, %v5934
    %v5936 = vpop.f32.mrf.mxu0
    %5937 = vdwg.mxu0
    %v5939 = vrot.slane %v5935, 6
    %v5940 = vrot.slane %v5935, 7
    %5941 = vrot.lane.b32.xlu0 %v5939, 32
    %v5942 = vpop.permute.xlu0 %5941
    %5943 = vrot.lane.b32.xlu0 %v5940, 32
    %v5944 = vpop.permute.xlu0 %5943
    %v5947 = vadd.f32 %v4900, %v5942
    %v5948 = vadd.f32 %v4905, %v5944
    %v5949 = vsub.f32 0.0, %v5947
    %v5950 = vsub.f32 0.0, %v5948
    %v5951 = vmul.f32 %v5949, 1.442695
    %v5952 = vpow.pop %v5951
    %v5953 = vmul.f32 %v5950, 1.442695
    %v5954 = vpow.pop %v5953
    %v5955 = vadd.f32 %v5952, 1.0
    %v5956 = vadd.f32 %v5954, 1.0
    %v5957 = vrcp.pop %v5955
    %v5958 = vmul.f32 1.0, %v5957
    %v5959 = vrcp.pop %v5956
    %v5960 = vmul.f32 1.0, %v5959
    %5961 = vmatprep.subr.mxu0 0.0
    %5962 = vmatpush1.msra.mxu0 0.0
    %5963 = vmatprep.subr.mxu0 0.0
    %5964 = vmatpush1.msra.mxu0 0.0
    %5965 = vmatprep.subr.mxu0 0.0
    %5966 = vmatpush1.msra.mxu0 0.0
    %5967 = vmatprep.subr.mxu0 0.0
    %5968 = vmatpush1.msra.mxu0 0.0
    %5969 = vmatprep.subr.mxu0 0.0
    %5970 = vmatpush1.msra.mxu0 0.0
    %5971 = vmatprep.subr.mxu0 0.0
    %5972 = vmatpush1.msra.mxu0 0.0
    %5973 = vmatprep.subr.mxu0 0.0
    %5974 = vmatpush1.msra.mxu0 0.0
    %5975 = vmatprep.subr.mxu0 0.0
    %5976 = vmatpush1.msra.mxu0 0.0
    %5977 = vmatprep.subr.mxu0 0.0
    %5978 = vmatpush1.msra.mxu0 0.0
    %5979 = vmatprep.subr.mxu0 0.0
    %5980 = vmatpush1.msra.mxu0 0.0
    %5981 = vmatprep.subr.mxu0 0.0
    %5982 = vmatpush1.msra.mxu0 0.0
    %5983 = vmatprep.subr.mxu0 0.0
    %5984 = vmatpush1.msra.mxu0 0.0
    %5985 = vmatprep.subr.mxu0 0.0
    %5986 = vmatpush1.msra.mxu0 %v5106
    %5987 = vmatprep.subr.mxu0 0.0
    %5988 = vmatpush1.msra.mxu0 %v5105
    %5989 = vmatprep.subr.mxu0 0.0
    %5990 = vmatpush1.msra.mxu0 %v5104
    %5991 = vmatprep.subr.mxu0 0.0
    %5992 = vmatpush1.msra.mxu0 %v5103
    %5993 = vmatprep.subr.mxu0 0.0
    %5994 = vmatpush2.msra.mxu0 0.0
    %5995 = vmatprep.subr.mxu0 0.0
    %5996 = vmatpush2.msra.mxu0 0.0
    %5997 = vmatprep.subr.mxu0 0.0
    %5998 = vmatpush2.msra.mxu0 0.0
    %5999 = vmatprep.subr.mxu0 0.0
    %6000 = vmatpush2.msra.mxu0 0.0
    %6001 = vmatprep.subr.mxu0 0.0
    %6002 = vmatpush2.msra.mxu0 0.0
    %6003 = vmatprep.subr.mxu0 0.0
    %6004 = vmatpush2.msra.mxu0 0.0
    %6005 = vmatprep.subr.mxu0 0.0
    %6006 = vmatpush2.msra.mxu0 0.0
    %6007 = vmatprep.subr.mxu0 0.0
    %6008 = vmatpush2.msra.mxu0 0.0
    %6009 = vmatprep.subr.mxu0 0.0
    %6010 = vmatpush2.msra.mxu0 0.0
    %6011 = vmatprep.subr.mxu0 0.0
    %6012 = vmatpush2.msra.mxu0 0.0
    %6013 = vmatprep.subr.mxu0 0.0
    %6014 = vmatpush2.msra.mxu0 0.0
    %6015 = vmatprep.subr.mxu0 0.0
    %6016 = vmatpush2.msra.mxu0 0.0
    %6017 = vmatprep.subr.mxu0 0.0
    %6018 = vmatpush2.msra.mxu0 0.0
    %6019 = vmatprep.subr.mxu0 0.0
    %6020 = vmatpush2.msra.mxu0 0.0
    %6021 = vmatprep.subr.mxu0 0.0
    %6022 = vmatpush2.msra.mxu0 0.0
    %6023 = vmatprep.subr.mxu0 0.0
    %6024 = vmatpush2.msra.mxu0 0.0
    %6025 = vmatprep.mubr.f32.mxu0 0.0
    %6026 = vmatmul.mubr.f32.gmra.mxu0 %v5777
    %v6027 = vpop.f32.mrf.mxu0
    %v6028 = vadd.f32 0.0, %v6027
    %v6029 = vpop.f32.mrf.mxu0
    %6030 = vdwg.mxu0
    %v6032 = vrot.slane %v6028, 6
    %v6033 = vrot.slane %v6028, 7
    %6034 = vrot.lane.b32.xlu0 %v6032, 64
    %v6035 = vpop.permute.xlu0 %6034
    %6036 = vrot.lane.b32.xlu0 %v6033, 64
    %v6037 = vpop.permute.xlu0 %6036
    %v6040 = vadd.f32 %v4900, %v6035
    %v6041 = vadd.f32 %v4905, %v6037
    %v6042 = vtanh.pop %v6040
    %v6043 = vtanh.pop %v6041
    %6044 = vmatprep.subr.mxu0 0.0
    %6045 = vmatpush1.msra.mxu0 0.0
    %6046 = vmatprep.subr.mxu0 0.0
    %6047 = vmatpush1.msra.mxu0 0.0
    %6048 = vmatprep.subr.mxu0 0.0
    %6049 = vmatpush1.msra.mxu0 0.0
    %6050 = vmatprep.subr.mxu0 0.0
    %6051 = vmatpush1.msra.mxu0 0.0
    %6052 = vmatprep.subr.mxu0 0.0
    %6053 = vmatpush1.msra.mxu0 0.0
    %6054 = vmatprep.subr.mxu0 0.0
    %6055 = vmatpush1.msra.mxu0 0.0
    %6056 = vmatprep.subr.mxu0 0.0
    %6057 = vmatpush1.msra.mxu0 0.0
    %6058 = vmatprep.subr.mxu0 0.0
    %6059 = vmatpush1.msra.mxu0 0.0
    %6060 = vmatprep.subr.mxu0 0.0
    %6061 = vmatpush1.msra.mxu0 0.0
    %6062 = vmatprep.subr.mxu0 0.0
    %6063 = vmatpush1.msra.mxu0 0.0
    %6064 = vmatprep.subr.mxu0 0.0
    %6065 = vmatpush1.msra.mxu0 0.0
    %6066 = vmatprep.subr.mxu0 0.0
    %6067 = vmatpush1.msra.mxu0 0.0
    %6068 = vmatprep.subr.mxu0 0.0
    %6069 = vmatpush1.msra.mxu0 %v5193
    %6070 = vmatprep.subr.mxu0 0.0
    %6071 = vmatpush1.msra.mxu0 %v5192
    %6072 = vmatprep.subr.mxu0 0.0
    %6073 = vmatpush1.msra.mxu0 %v5191
    %6074 = vmatprep.subr.mxu0 0.0
    %6075 = vmatpush1.msra.mxu0 %v5190
    %6076 = vmatprep.subr.mxu0 0.0
    %6077 = vmatpush2.msra.mxu0 0.0
    %6078 = vmatprep.subr.mxu0 0.0
    %6079 = vmatpush2.msra.mxu0 0.0
    %6080 = vmatprep.subr.mxu0 0.0
    %6081 = vmatpush2.msra.mxu0 0.0
    %6082 = vmatprep.subr.mxu0 0.0
    %6083 = vmatpush2.msra.mxu0 0.0
    %6084 = vmatprep.subr.mxu0 0.0
    %6085 = vmatpush2.msra.mxu0 0.0
    %6086 = vmatprep.subr.mxu0 0.0
    %6087 = vmatpush2.msra.mxu0 0.0
    %6088 = vmatprep.subr.mxu0 0.0
    %6089 = vmatpush2.msra.mxu0 0.0
    %6090 = vmatprep.subr.mxu0 0.0
    %6091 = vmatpush2.msra.mxu0 0.0
    %6092 = vmatprep.subr.mxu0 0.0
    %6093 = vmatpush2.msra.mxu0 0.0
    %6094 = vmatprep.subr.mxu0 0.0
    %6095 = vmatpush2.msra.mxu0 0.0
    %6096 = vmatprep.subr.mxu0 0.0
    %6097 = vmatpush2.msra.mxu0 0.0
    %6098 = vmatprep.subr.mxu0 0.0
    %6099 = vmatpush2.msra.mxu0 0.0
    %6100 = vmatprep.subr.mxu0 0.0
    %6101 = vmatpush2.msra.mxu0 0.0
    %6102 = vmatprep.subr.mxu0 0.0
    %6103 = vmatpush2.msra.mxu0 0.0
    %6104 = vmatprep.subr.mxu0 0.0
    %6105 = vmatpush2.msra.mxu0 0.0
    %6106 = vmatprep.subr.mxu0 0.0
    %6107 = vmatpush2.msra.mxu0 0.0
    %6108 = vmatprep.mubr.f32.mxu0 0.0
    %6109 = vmatmul.mubr.f32.gmra.mxu0 %v5777
    %v6110 = vpop.f32.mrf.mxu0
    %v6111 = vadd.f32 0.0, %v6110
    %v6112 = vpop.f32.mrf.mxu0
    %6113 = vdwg.mxu0
    %v6115 = vrot.slane %v6111, 6
    %v6116 = vrot.slane %v6111, 7
    %6117 = vrot.lane.b32.xlu0 %v6115, 96
    %v6118 = vpop.permute.xlu0 %6117
    %6119 = vrot.lane.b32.xlu0 %v6116, 96
    %v6120 = vpop.permute.xlu0 %6119
    %v6123 = vadd.f32 %v4900, %v6118
    %v6124 = vadd.f32 %v4905, %v6120
    %v6125 = vsub.f32 0.0, %v6123
    %v6126 = vsub.f32 0.0, %v6124
    %v6127 = vmul.f32 %v6125, 1.442695
    %v6128 = vpow.pop %v6127
    %v6129 = vmul.f32 %v6126, 1.442695
    %v6130 = vpow.pop %v6129
    %v6131 = vadd.f32 %v6128, 1.0
    %v6132 = vadd.f32 %v6130, 1.0
    %v6133 = vrcp.pop %v6131
    %v6134 = vmul.f32 1.0, %v6133
    %v6135 = vrcp.pop %v6132
    %v6136 = vmul.f32 1.0, %v6135
    %v6138 = vrot.slane %v5772, 6
    %v6139 = vrot.slane %v5772, 7
    %6140 = vrot.lane.b32.xlu0 %v6138, 32
    %v6141 = vpop.permute.xlu0 %6140
    %6142 = vrot.lane.b32.xlu0 %v6139, 32
    %v6143 = vpop.permute.xlu0 %6142
    %v6146 = vmul.f32 %v5958, %v6141
    %v6147 = vmul.f32 %v5960, %v6143
    %6150 = vrot.lane.b32.xlu0 %v6042, 64
    %v6151 = vpop.permute.xlu0 %6150
    %6152 = vrot.lane.b32.xlu0 %v6043, 64
    %v6153 = vpop.permute.xlu0 %6152
    %v6156 = vmul.f32 %v5865, %v6151
    %v6157 = vmul.f32 %v5867, %v6153
    %6160 = vrot.lane.b32.xlu0 %v6156, 32
    %v6161 = vpop.permute.xlu0 %6160
    %6162 = vrot.lane.b32.xlu0 %v6157, 32
    %v6163 = vpop.permute.xlu0 %6162
    %v6166 = vadd.f32 %v6146, %v6161
    %v6167 = vadd.f32 %v6147, %v6163
    %v6168 = vtanh.pop %v6166
    %v6169 = vtanh.pop %v6167
    %6172 = vrot.lane.b32.xlu0 %v6168, 64
    %v6173 = vpop.permute.xlu0 %6172
    %6174 = vrot.lane.b32.xlu0 %v6169, 64
    %v6175 = vpop.permute.xlu0 %6174
    %v6178 = vmul.f32 %v6134, %v6173
    %v6179 = vmul.f32 %v6136, %v6175
    %v6180 = vsel %vm5775, 1, 0
    %6181 = vset.pattern.permute.xlu0 0
    %6182 = vperm.xlu0 %6181, %v6180
    %v6183 = vpop.permute.xlu0 %6182
    %vm6184 = vcmp.eq.s32.totalorder %v6183, 1
    %v6187 = vrot.slane %v6178, 2
    %v6188 = vrot.slane %v6179, 1
    %v6189 = vsel %vm5328, %v6188, %v6187
    %6190 = vrot.lane.b32.xlu0 %v6189, 32
    %v6191 = vpop.permute.xlu0 %6190
    %v6193 = vsel %vm6184, %v6191, %v5764
    %v6196 = vrot.slane %v6166, 2
    %v6197 = vrot.slane %v6167, 1
    %v6198 = vsel %vm5328, %v6197, %v6196
    %6199 = vrot.lane.b32.xlu0 %v6198, 96
    %v6200 = vpop.permute.xlu0 %6199
    %v6202 = vsel %vm6184, %v6200, %v5772
    %v6203 = vmax.f32 %v5774, %v6191
    %v6204 = vsel %vm6184, %v6203, %v5774
    %vm6205 = vcmp.gt.s32.totalorder %v4908, 3
    %v6207 = vsel %vm135, %v6193, 0
    %6209 = vmatprep.subr.mxu0 0.0
    %6210 = vmatpush1.msra.mxu0 0.0
    %6211 = vmatprep.subr.mxu0 0.0
    %6212 = vmatpush1.msra.mxu0 0.0
    %6213 = vmatprep.subr.mxu0 0.0
    %6214 = vmatpush1.msra.mxu0 0.0
    %6215 = vmatprep.subr.mxu0 0.0
    %6216 = vmatpush1.msra.mxu0 0.0
    %6217 = vmatprep.subr.mxu0 0.0
    %6218 = vmatpush1.msra.mxu0 0.0
    %6219 = vmatprep.subr.mxu0 0.0
    %6220 = vmatpush1.msra.mxu0 0.0
    %6221 = vmatprep.subr.mxu0 0.0
    %6222 = vmatpush1.msra.mxu0 0.0
    %6223 = vmatprep.subr.mxu0 0.0
    %6224 = vmatpush1.msra.mxu0 0.0
    %6225 = vmatprep.subr.mxu0 0.0
    %6226 = vmatpush1.msra.mxu0 0.0
    %6227 = vmatprep.subr.mxu0 0.0
    %6228 = vmatpush1.msra.mxu0 0.0
    %6229 = vmatprep.subr.mxu0 0.0
    %6230 = vmatpush1.msra.mxu0 0.0
    %6231 = vmatprep.subr.mxu0 0.0
    %6232 = vmatpush1.msra.mxu0 0.0
    %6233 = vmatprep.subr.mxu0 0.0
    %6234 = vmatpush1.msra.mxu0 %v4913
    %6235 = vmatprep.subr.mxu0 0.0
    %6236 = vmatpush1.msra.mxu0 %v4912
    %6237 = vmatprep.subr.mxu0 0.0
    %6238 = vmatpush1.msra.mxu0 %v4911
    %6239 = vmatprep.subr.mxu0 0.0
    %6240 = vmatpush1.msra.mxu0 %v4910
    %6241 = vmatprep.subr.mxu0 0.0
    %6242 = vmatpush2.msra.mxu0 0.0
    %6243 = vmatprep.subr.mxu0 0.0
    %6244 = vmatpush2.msra.mxu0 0.0
    %6245 = vmatprep.subr.mxu0 0.0
    %6246 = vmatpush2.msra.mxu0 0.0
    %6247 = vmatprep.subr.mxu0 0.0
    %6248 = vmatpush2.msra.mxu0 0.0
    %6249 = vmatprep.subr.mxu0 0.0
    %6250 = vmatpush2.msra.mxu0 0.0
    %6251 = vmatprep.subr.mxu0 0.0
    %6252 = vmatpush2.msra.mxu0 0.0
    %6253 = vmatprep.subr.mxu0 0.0
    %6254 = vmatpush2.msra.mxu0 0.0
    %6255 = vmatprep.subr.mxu0 0.0
    %6256 = vmatpush2.msra.mxu0 0.0
    %6257 = vmatprep.subr.mxu0 0.0
    %6258 = vmatpush2.msra.mxu0 0.0
    %6259 = vmatprep.subr.mxu0 0.0
    %6260 = vmatpush2.msra.mxu0 0.0
    %6261 = vmatprep.subr.mxu0 0.0
    %6262 = vmatpush2.msra.mxu0 0.0
    %6263 = vmatprep.subr.mxu0 0.0
    %6264 = vmatpush2.msra.mxu0 0.0
    %6265 = vmatprep.subr.mxu0 0.0
    %6266 = vmatpush2.msra.mxu0 0.0
    %6267 = vmatprep.subr.mxu0 0.0
    %6268 = vmatpush2.msra.mxu0 0.0
    %6269 = vmatprep.subr.mxu0 0.0
    %6270 = vmatpush2.msra.mxu0 0.0
    %6271 = vmatprep.subr.mxu0 0.0
    %6272 = vmatpush2.msra.mxu0 0.0
    %6273 = vmatprep.mubr.f32.mxu0 0.0
    %6274 = vmatmul.mubr.f32.gmra.mxu0 %v6207
    %v6275 = vpop.f32.mrf.mxu0
    %v6276 = vadd.f32 0.0, %v6275
    %v6277 = vpop.f32.mrf.mxu0
    %6278 = vdwg.mxu0
    %v6280 = vrot.slane %v6276, 5
    %v6281 = vrot.slane %v6276, 6
    %v6284 = vadd.f32 %v4900, %v6280
    %v6285 = vadd.f32 %v4905, %v6281
    %v6286 = vsub.f32 0.0, %v6284
    %v6287 = vsub.f32 0.0, %v6285
    %v6288 = vmul.f32 %v6286, 1.442695
    %v6289 = vpow.pop %v6288
    %v6290 = vmul.f32 %v6287, 1.442695
    %v6291 = vpow.pop %v6290
    %v6292 = vadd.f32 %v6289, 1.0
    %v6293 = vadd.f32 %v6291, 1.0
    %v6294 = vrcp.pop %v6292
    %v6295 = vmul.f32 1.0, %v6294
    %v6296 = vrcp.pop %v6293
    %v6297 = vmul.f32 1.0, %v6296
    %6298 = vmatprep.subr.mxu0 0.0
    %6299 = vmatpush1.msra.mxu0 0.0
    %6300 = vmatprep.subr.mxu0 0.0
    %6301 = vmatpush1.msra.mxu0 0.0
    %6302 = vmatprep.subr.mxu0 0.0
    %6303 = vmatpush1.msra.mxu0 0.0
    %6304 = vmatprep.subr.mxu0 0.0
    %6305 = vmatpush1.msra.mxu0 0.0
    %6306 = vmatprep.subr.mxu0 0.0
    %6307 = vmatpush1.msra.mxu0 0.0
    %6308 = vmatprep.subr.mxu0 0.0
    %6309 = vmatpush1.msra.mxu0 0.0
    %6310 = vmatprep.subr.mxu0 0.0
    %6311 = vmatpush1.msra.mxu0 0.0
    %6312 = vmatprep.subr.mxu0 0.0
    %6313 = vmatpush1.msra.mxu0 0.0
    %6314 = vmatprep.subr.mxu0 0.0
    %6315 = vmatpush1.msra.mxu0 0.0
    %6316 = vmatprep.subr.mxu0 0.0
    %6317 = vmatpush1.msra.mxu0 0.0
    %6318 = vmatprep.subr.mxu0 0.0
    %6319 = vmatpush1.msra.mxu0 0.0
    %6320 = vmatprep.subr.mxu0 0.0
    %6321 = vmatpush1.msra.mxu0 0.0
    %6322 = vmatprep.subr.mxu0 0.0
    %6323 = vmatpush1.msra.mxu0 %v5009
    %6324 = vmatprep.subr.mxu0 0.0
    %6325 = vmatpush1.msra.mxu0 %v5008
    %6326 = vmatprep.subr.mxu0 0.0
    %6327 = vmatpush1.msra.mxu0 %v5007
    %6328 = vmatprep.subr.mxu0 0.0
    %6329 = vmatpush1.msra.mxu0 %v5006
    %6330 = vmatprep.subr.mxu0 0.0
    %6331 = vmatpush2.msra.mxu0 0.0
    %6332 = vmatprep.subr.mxu0 0.0
    %6333 = vmatpush2.msra.mxu0 0.0
    %6334 = vmatprep.subr.mxu0 0.0
    %6335 = vmatpush2.msra.mxu0 0.0
    %6336 = vmatprep.subr.mxu0 0.0
    %6337 = vmatpush2.msra.mxu0 0.0
    %6338 = vmatprep.subr.mxu0 0.0
    %6339 = vmatpush2.msra.mxu0 0.0
    %6340 = vmatprep.subr.mxu0 0.0
    %6341 = vmatpush2.msra.mxu0 0.0
    %6342 = vmatprep.subr.mxu0 0.0
    %6343 = vmatpush2.msra.mxu0 0.0
    %6344 = vmatprep.subr.mxu0 0.0
    %6345 = vmatpush2.msra.mxu0 0.0
    %6346 = vmatprep.subr.mxu0 0.0
    %6347 = vmatpush2.msra.mxu0 0.0
    %6348 = vmatprep.subr.mxu0 0.0
    %6349 = vmatpush2.msra.mxu0 0.0
    %6350 = vmatprep.subr.mxu0 0.0
    %6351 = vmatpush2.msra.mxu0 0.0
    %6352 = vmatprep.subr.mxu0 0.0
    %6353 = vmatpush2.msra.mxu0 0.0
    %6354 = vmatprep.subr.mxu0 0.0
    %6355 = vmatpush2.msra.mxu0 0.0
    %6356 = vmatprep.subr.mxu0 0.0
    %6357 = vmatpush2.msra.mxu0 0.0
    %6358 = vmatprep.subr.mxu0 0.0
    %6359 = vmatpush2.msra.mxu0 0.0
    %6360 = vmatprep.subr.mxu0 0.0
    %6361 = vmatpush2.msra.mxu0 0.0
    %6362 = vmatprep.mubr.f32.mxu0 0.0
    %6363 = vmatmul.mubr.f32.gmra.mxu0 %v6207
    %v6364 = vpop.f32.mrf.mxu0
    %v6365 = vadd.f32 0.0, %v6364
    %v6366 = vpop.f32.mrf.mxu0
    %6367 = vdwg.mxu0
    %v6369 = vrot.slane %v6365, 5
    %v6370 = vrot.slane %v6365, 6
    %6371 = vrot.lane.b32.xlu0 %v6369, 32
    %v6372 = vpop.permute.xlu0 %6371
    %6373 = vrot.lane.b32.xlu0 %v6370, 32
    %v6374 = vpop.permute.xlu0 %6373
    %v6377 = vadd.f32 %v4900, %v6372
    %v6378 = vadd.f32 %v4905, %v6374
    %v6379 = vsub.f32 0.0, %v6377
    %v6380 = vsub.f32 0.0, %v6378
    %v6381 = vmul.f32 %v6379, 1.442695
    %v6382 = vpow.pop %v6381
    %v6383 = vmul.f32 %v6380, 1.442695
    %v6384 = vpow.pop %v6383
    %v6385 = vadd.f32 %v6382, 1.0
    %v6386 = vadd.f32 %v6384, 1.0
    %v6387 = vrcp.pop %v6385
    %v6388 = vmul.f32 1.0, %v6387
    %v6389 = vrcp.pop %v6386
    %v6390 = vmul.f32 1.0, %v6389
    %6391 = vmatprep.subr.mxu0 0.0
    %6392 = vmatpush1.msra.mxu0 0.0
    %6393 = vmatprep.subr.mxu0 0.0
    %6394 = vmatpush1.msra.mxu0 0.0
    %6395 = vmatprep.subr.mxu0 0.0
    %6396 = vmatpush1.msra.mxu0 0.0
    %6397 = vmatprep.subr.mxu0 0.0
    %6398 = vmatpush1.msra.mxu0 0.0
    %6399 = vmatprep.subr.mxu0 0.0
    %6400 = vmatpush1.msra.mxu0 0.0
    %6401 = vmatprep.subr.mxu0 0.0
    %6402 = vmatpush1.msra.mxu0 0.0
    %6403 = vmatprep.subr.mxu0 0.0
    %6404 = vmatpush1.msra.mxu0 0.0
    %6405 = vmatprep.subr.mxu0 0.0
    %6406 = vmatpush1.msra.mxu0 0.0
    %6407 = vmatprep.subr.mxu0 0.0
    %6408 = vmatpush1.msra.mxu0 0.0
    %6409 = vmatprep.subr.mxu0 0.0
    %6410 = vmatpush1.msra.mxu0 0.0
    %6411 = vmatprep.subr.mxu0 0.0
    %6412 = vmatpush1.msra.mxu0 0.0
    %6413 = vmatprep.subr.mxu0 0.0
    %6414 = vmatpush1.msra.mxu0 0.0
    %6415 = vmatprep.subr.mxu0 0.0
    %6416 = vmatpush1.msra.mxu0 %v5106
    %6417 = vmatprep.subr.mxu0 0.0
    %6418 = vmatpush1.msra.mxu0 %v5105
    %6419 = vmatprep.subr.mxu0 0.0
    %6420 = vmatpush1.msra.mxu0 %v5104
    %6421 = vmatprep.subr.mxu0 0.0
    %6422 = vmatpush1.msra.mxu0 %v5103
    %6423 = vmatprep.subr.mxu0 0.0
    %6424 = vmatpush2.msra.mxu0 0.0
    %6425 = vmatprep.subr.mxu0 0.0
    %6426 = vmatpush2.msra.mxu0 0.0
    %6427 = vmatprep.subr.mxu0 0.0
    %6428 = vmatpush2.msra.mxu0 0.0
    %6429 = vmatprep.subr.mxu0 0.0
    %6430 = vmatpush2.msra.mxu0 0.0
    %6431 = vmatprep.subr.mxu0 0.0
    %6432 = vmatpush2.msra.mxu0 0.0
    %6433 = vmatprep.subr.mxu0 0.0
    %6434 = vmatpush2.msra.mxu0 0.0
    %6435 = vmatprep.subr.mxu0 0.0
    %6436 = vmatpush2.msra.mxu0 0.0
    %6437 = vmatprep.subr.mxu0 0.0
    %6438 = vmatpush2.msra.mxu0 0.0
    %6439 = vmatprep.subr.mxu0 0.0
    %6440 = vmatpush2.msra.mxu0 0.0
    %6441 = vmatprep.subr.mxu0 0.0
    %6442 = vmatpush2.msra.mxu0 0.0
    %6443 = vmatprep.subr.mxu0 0.0
    %6444 = vmatpush2.msra.mxu0 0.0
    %6445 = vmatprep.subr.mxu0 0.0
    %6446 = vmatpush2.msra.mxu0 0.0
    %6447 = vmatprep.subr.mxu0 0.0
    %6448 = vmatpush2.msra.mxu0 0.0
    %6449 = vmatprep.subr.mxu0 0.0
    %6450 = vmatpush2.msra.mxu0 0.0
    %6451 = vmatprep.subr.mxu0 0.0
    %6452 = vmatpush2.msra.mxu0 0.0
    %6453 = vmatprep.subr.mxu0 0.0
    %6454 = vmatpush2.msra.mxu0 0.0
    %6455 = vmatprep.mubr.f32.mxu0 0.0
    %6456 = vmatmul.mubr.f32.gmra.mxu0 %v6207
    %v6457 = vpop.f32.mrf.mxu0
    %v6458 = vadd.f32 0.0, %v6457
    %v6459 = vpop.f32.mrf.mxu0
    %6460 = vdwg.mxu0
    %v6462 = vrot.slane %v6458, 5
    %v6463 = vrot.slane %v6458, 6
    %6464 = vrot.lane.b32.xlu0 %v6462, 64
    %v6465 = vpop.permute.xlu0 %6464
    %6466 = vrot.lane.b32.xlu0 %v6463, 64
    %v6467 = vpop.permute.xlu0 %6466
    %v6470 = vadd.f32 %v4900, %v6465
    %v6471 = vadd.f32 %v4905, %v6467
    %v6472 = vtanh.pop %v6470
    %v6473 = vtanh.pop %v6471
    %6474 = vmatprep.subr.mxu0 0.0
    %6475 = vmatpush1.msra.mxu0 0.0
    %6476 = vmatprep.subr.mxu0 0.0
    %6477 = vmatpush1.msra.mxu0 0.0
    %6478 = vmatprep.subr.mxu0 0.0
    %6479 = vmatpush1.msra.mxu0 0.0
    %6480 = vmatprep.subr.mxu0 0.0
    %6481 = vmatpush1.msra.mxu0 0.0
    %6482 = vmatprep.subr.mxu0 0.0
    %6483 = vmatpush1.msra.mxu0 0.0
    %6484 = vmatprep.subr.mxu0 0.0
    %6485 = vmatpush1.msra.mxu0 0.0
    %6486 = vmatprep.subr.mxu0 0.0
    %6487 = vmatpush1.msra.mxu0 0.0
    %6488 = vmatprep.subr.mxu0 0.0
    %6489 = vmatpush1.msra.mxu0 0.0
    %6490 = vmatprep.subr.mxu0 0.0
    %6491 = vmatpush1.msra.mxu0 0.0
    %6492 = vmatprep.subr.mxu0 0.0
    %6493 = vmatpush1.msra.mxu0 0.0
    %6494 = vmatprep.subr.mxu0 0.0
    %6495 = vmatpush1.msra.mxu0 0.0
    %6496 = vmatprep.subr.mxu0 0.0
    %6497 = vmatpush1.msra.mxu0 0.0
    %6498 = vmatprep.subr.mxu0 0.0
    %6499 = vmatpush1.msra.mxu0 %v5193
    %6500 = vmatprep.subr.mxu0 0.0
    %6501 = vmatpush1.msra.mxu0 %v5192
    %6502 = vmatprep.subr.mxu0 0.0
    %6503 = vmatpush1.msra.mxu0 %v5191
    %6504 = vmatprep.subr.mxu0 0.0
    %6505 = vmatpush1.msra.mxu0 %v5190
    %6506 = vmatprep.subr.mxu0 0.0
    %6507 = vmatpush2.msra.mxu0 0.0
    %6508 = vmatprep.subr.mxu0 0.0
    %6509 = vmatpush2.msra.mxu0 0.0
    %6510 = vmatprep.subr.mxu0 0.0
    %6511 = vmatpush2.msra.mxu0 0.0
    %6512 = vmatprep.subr.mxu0 0.0
    %6513 = vmatpush2.msra.mxu0 0.0
    %6514 = vmatprep.subr.mxu0 0.0
    %6515 = vmatpush2.msra.mxu0 0.0
    %6516 = vmatprep.subr.mxu0 0.0
    %6517 = vmatpush2.msra.mxu0 0.0
    %6518 = vmatprep.subr.mxu0 0.0
    %6519 = vmatpush2.msra.mxu0 0.0
    %6520 = vmatprep.subr.mxu0 0.0
    %6521 = vmatpush2.msra.mxu0 0.0
    %6522 = vmatprep.subr.mxu0 0.0
    %6523 = vmatpush2.msra.mxu0 0.0
    %6524 = vmatprep.subr.mxu0 0.0
    %6525 = vmatpush2.msra.mxu0 0.0
    %6526 = vmatprep.subr.mxu0 0.0
    %6527 = vmatpush2.msra.mxu0 0.0
    %6528 = vmatprep.subr.mxu0 0.0
    %6529 = vmatpush2.msra.mxu0 0.0
    %6530 = vmatprep.subr.mxu0 0.0
    %6531 = vmatpush2.msra.mxu0 0.0
    %6532 = vmatprep.subr.mxu0 0.0
    %6533 = vmatpush2.msra.mxu0 0.0
    %6534 = vmatprep.subr.mxu0 0.0
    %6535 = vmatpush2.msra.mxu0 0.0
    %6536 = vmatprep.subr.mxu0 0.0
    %6537 = vmatpush2.msra.mxu0 0.0
    %6538 = vmatprep.mubr.f32.mxu0 0.0
    %6539 = vmatmul.mubr.f32.gmra.mxu0 %v6207
    %v6540 = vpop.f32.mrf.mxu0
    %v6541 = vadd.f32 0.0, %v6540
    %v6542 = vpop.f32.mrf.mxu0
    %6543 = vdwg.mxu0
    %v6545 = vrot.slane %v6541, 5
    %v6546 = vrot.slane %v6541, 6
    %6547 = vrot.lane.b32.xlu0 %v6545, 96
    %v6548 = vpop.permute.xlu0 %6547
    %6549 = vrot.lane.b32.xlu0 %v6546, 96
    %v6550 = vpop.permute.xlu0 %6549
    %v6553 = vadd.f32 %v4900, %v6548
    %v6554 = vadd.f32 %v4905, %v6550
    %v6555 = vsub.f32 0.0, %v6553
    %v6556 = vsub.f32 0.0, %v6554
    %v6557 = vmul.f32 %v6555, 1.442695
    %v6558 = vpow.pop %v6557
    %v6559 = vmul.f32 %v6556, 1.442695
    %v6560 = vpow.pop %v6559
    %v6561 = vadd.f32 %v6558, 1.0
    %v6562 = vadd.f32 %v6560, 1.0
    %v6563 = vrcp.pop %v6561
    %v6564 = vmul.f32 1.0, %v6563
    %v6565 = vrcp.pop %v6562
    %v6566 = vmul.f32 1.0, %v6565
    %v6568 = vrot.slane %v6202, 5
    %v6569 = vrot.slane %v6202, 6
    %6570 = vrot.lane.b32.xlu0 %v6568, 32
    %v6571 = vpop.permute.xlu0 %6570
    %6572 = vrot.lane.b32.xlu0 %v6569, 32
    %v6573 = vpop.permute.xlu0 %6572
    %v6576 = vmul.f32 %v6388, %v6571
    %v6577 = vmul.f32 %v6390, %v6573
    %6580 = vrot.lane.b32.xlu0 %v6472, 64
    %v6581 = vpop.permute.xlu0 %6580
    %6582 = vrot.lane.b32.xlu0 %v6473, 64
    %v6583 = vpop.permute.xlu0 %6582
    %v6586 = vmul.f32 %v6295, %v6581
    %v6587 = vmul.f32 %v6297, %v6583
    %6590 = vrot.lane.b32.xlu0 %v6586, 32
    %v6591 = vpop.permute.xlu0 %6590
    %6592 = vrot.lane.b32.xlu0 %v6587, 32
    %v6593 = vpop.permute.xlu0 %6592
    %v6596 = vadd.f32 %v6576, %v6591
    %v6597 = vadd.f32 %v6577, %v6593
    %v6598 = vtanh.pop %v6596
    %v6599 = vtanh.pop %v6597
    %6602 = vrot.lane.b32.xlu0 %v6598, 64
    %v6603 = vpop.permute.xlu0 %6602
    %6604 = vrot.lane.b32.xlu0 %v6599, 64
    %v6605 = vpop.permute.xlu0 %6604
    %v6608 = vmul.f32 %v6564, %v6603
    %v6609 = vmul.f32 %v6566, %v6605
    %v6610 = vsel %vm6205, 1, 0
    %6611 = vset.pattern.permute.xlu0 0
    %6612 = vperm.xlu0 %6611, %v6610
    %v6613 = vpop.permute.xlu0 %6612
    %vm6614 = vcmp.eq.s32.totalorder %v6613, 1
    %v6617 = vrot.slane %v6608, 3
    %v6618 = vrot.slane %v6609, 2
    %v6619 = vsel %vm5328, %v6618, %v6617
    %6620 = vrot.lane.b32.xlu0 %v6619, 32
    %v6621 = vpop.permute.xlu0 %6620
    %v6623 = vsel %vm6614, %v6621, %v6193
    %v6626 = vrot.slane %v6596, 3
    %v6627 = vrot.slane %v6597, 2
    %v6628 = vsel %vm5328, %v6627, %v6626
    %6629 = vrot.lane.b32.xlu0 %v6628, 96
    %v6630 = vpop.permute.xlu0 %6629
    %v6632 = vsel %vm6614, %v6630, %v6202
    %v6633 = vmax.f32 %v6204, %v6621
    %v6634 = vsel %vm6614, %v6633, %v6204
    %vm6635 = vcmp.gt.s32.totalorder %v4908, 4
    %v6637 = vsel %vm135, %v6623, 0
    %6639 = vmatprep.subr.mxu0 0.0
    %6640 = vmatpush1.msra.mxu0 0.0
    %6641 = vmatprep.subr.mxu0 0.0
    %6642 = vmatpush1.msra.mxu0 0.0
    %6643 = vmatprep.subr.mxu0 0.0
    %6644 = vmatpush1.msra.mxu0 0.0
    %6645 = vmatprep.subr.mxu0 0.0
    %6646 = vmatpush1.msra.mxu0 0.0
    %6647 = vmatprep.subr.mxu0 0.0
    %6648 = vmatpush1.msra.mxu0 0.0
    %6649 = vmatprep.subr.mxu0 0.0
    %6650 = vmatpush1.msra.mxu0 0.0
    %6651 = vmatprep.subr.mxu0 0.0
    %6652 = vmatpush1.msra.mxu0 0.0
    %6653 = vmatprep.subr.mxu0 0.0
    %6654 = vmatpush1.msra.mxu0 0.0
    %6655 = vmatprep.subr.mxu0 0.0
    %6656 = vmatpush1.msra.mxu0 0.0
    %6657 = vmatprep.subr.mxu0 0.0
    %6658 = vmatpush1.msra.mxu0 0.0
    %6659 = vmatprep.subr.mxu0 0.0
    %6660 = vmatpush1.msra.mxu0 0.0
    %6661 = vmatprep.subr.mxu0 0.0
    %6662 = vmatpush1.msra.mxu0 0.0
    %6663 = vmatprep.subr.mxu0 0.0
    %6664 = vmatpush1.msra.mxu0 %v4913
    %6665 = vmatprep.subr.mxu0 0.0
    %6666 = vmatpush1.msra.mxu0 %v4912
    %6667 = vmatprep.subr.mxu0 0.0
    %6668 = vmatpush1.msra.mxu0 %v4911
    %6669 = vmatprep.subr.mxu0 0.0
    %6670 = vmatpush1.msra.mxu0 %v4910
    %6671 = vmatprep.subr.mxu0 0.0
    %6672 = vmatpush2.msra.mxu0 0.0
    %6673 = vmatprep.subr.mxu0 0.0
    %6674 = vmatpush2.msra.mxu0 0.0
    %6675 = vmatprep.subr.mxu0 0.0
    %6676 = vmatpush2.msra.mxu0 0.0
    %6677 = vmatprep.subr.mxu0 0.0
    %6678 = vmatpush2.msra.mxu0 0.0
    %6679 = vmatprep.subr.mxu0 0.0
    %6680 = vmatpush2.msra.mxu0 0.0
    %6681 = vmatprep.subr.mxu0 0.0
    %6682 = vmatpush2.msra.mxu0 0.0
    %6683 = vmatprep.subr.mxu0 0.0
    %6684 = vmatpush2.msra.mxu0 0.0
    %6685 = vmatprep.subr.mxu0 0.0
    %6686 = vmatpush2.msra.mxu0 0.0
    %6687 = vmatprep.subr.mxu0 0.0
    %6688 = vmatpush2.msra.mxu0 0.0
    %6689 = vmatprep.subr.mxu0 0.0
    %6690 = vmatpush2.msra.mxu0 0.0
    %6691 = vmatprep.subr.mxu0 0.0
    %6692 = vmatpush2.msra.mxu0 0.0
    %6693 = vmatprep.subr.mxu0 0.0
    %6694 = vmatpush2.msra.mxu0 0.0
    %6695 = vmatprep.subr.mxu0 0.0
    %6696 = vmatpush2.msra.mxu0 0.0
    %6697 = vmatprep.subr.mxu0 0.0
    %6698 = vmatpush2.msra.mxu0 0.0
    %6699 = vmatprep.subr.mxu0 0.0
    %6700 = vmatpush2.msra.mxu0 0.0
    %6701 = vmatprep.subr.mxu0 0.0
    %6702 = vmatpush2.msra.mxu0 0.0
    %6703 = vmatprep.mubr.f32.mxu0 0.0
    %6704 = vmatmul.mubr.f32.gmra.mxu0 %v6637
    %v6705 = vpop.f32.mrf.mxu0
    %v6706 = vadd.f32 0.0, %v6705
    %v6707 = vpop.f32.mrf.mxu0
    %6708 = vdwg.mxu0
    %v6710 = vrot.slane %v6706, 4
    %v6711 = vrot.slane %v6706, 5
    %v6714 = vadd.f32 %v4900, %v6710
    %v6715 = vadd.f32 %v4905, %v6711
    %v6716 = vsub.f32 0.0, %v6714
    %v6717 = vsub.f32 0.0, %v6715
    %v6718 = vmul.f32 %v6716, 1.442695
    %v6719 = vpow.pop %v6718
    %v6720 = vmul.f32 %v6717, 1.442695
    %v6721 = vpow.pop %v6720
    %v6722 = vadd.f32 %v6719, 1.0
    %v6723 = vadd.f32 %v6721, 1.0
    %v6724 = vrcp.pop %v6722
    %v6725 = vmul.f32 1.0, %v6724
    %v6726 = vrcp.pop %v6723
    %v6727 = vmul.f32 1.0, %v6726
    %6728 = vmatprep.subr.mxu0 0.0
    %6729 = vmatpush1.msra.mxu0 0.0
    %6730 = vmatprep.subr.mxu0 0.0
    %6731 = vmatpush1.msra.mxu0 0.0
    %6732 = vmatprep.subr.mxu0 0.0
    %6733 = vmatpush1.msra.mxu0 0.0
    %6734 = vmatprep.subr.mxu0 0.0
    %6735 = vmatpush1.msra.mxu0 0.0
    %6736 = vmatprep.subr.mxu0 0.0
    %6737 = vmatpush1.msra.mxu0 0.0
    %6738 = vmatprep.subr.mxu0 0.0
    %6739 = vmatpush1.msra.mxu0 0.0
    %6740 = vmatprep.subr.mxu0 0.0
    %6741 = vmatpush1.msra.mxu0 0.0
    %6742 = vmatprep.subr.mxu0 0.0
    %6743 = vmatpush1.msra.mxu0 0.0
    %6744 = vmatprep.subr.mxu0 0.0
    %6745 = vmatpush1.msra.mxu0 0.0
    %6746 = vmatprep.subr.mxu0 0.0
    %6747 = vmatpush1.msra.mxu0 0.0
    %6748 = vmatprep.subr.mxu0 0.0
    %6749 = vmatpush1.msra.mxu0 0.0
    %6750 = vmatprep.subr.mxu0 0.0
    %6751 = vmatpush1.msra.mxu0 0.0
    %6752 = vmatprep.subr.mxu0 0.0
    %6753 = vmatpush1.msra.mxu0 %v5009
    %6754 = vmatprep.subr.mxu0 0.0
    %6755 = vmatpush1.msra.mxu0 %v5008
    %6756 = vmatprep.subr.mxu0 0.0
    %6757 = vmatpush1.msra.mxu0 %v5007
    %6758 = vmatprep.subr.mxu0 0.0
    %6759 = vmatpush1.msra.mxu0 %v5006
    %6760 = vmatprep.subr.mxu0 0.0
    %6761 = vmatpush2.msra.mxu0 0.0
    %6762 = vmatprep.subr.mxu0 0.0
    %6763 = vmatpush2.msra.mxu0 0.0
    %6764 = vmatprep.subr.mxu0 0.0
    %6765 = vmatpush2.msra.mxu0 0.0
    %6766 = vmatprep.subr.mxu0 0.0
    %6767 = vmatpush2.msra.mxu0 0.0
    %6768 = vmatprep.subr.mxu0 0.0
    %6769 = vmatpush2.msra.mxu0 0.0
    %6770 = vmatprep.subr.mxu0 0.0
    %6771 = vmatpush2.msra.mxu0 0.0
    %6772 = vmatprep.subr.mxu0 0.0
    %6773 = vmatpush2.msra.mxu0 0.0
    %6774 = vmatprep.subr.mxu0 0.0
    %6775 = vmatpush2.msra.mxu0 0.0
    %6776 = vmatprep.subr.mxu0 0.0
    %6777 = vmatpush2.msra.mxu0 0.0
    %6778 = vmatprep.subr.mxu0 0.0
    %6779 = vmatpush2.msra.mxu0 0.0
    %6780 = vmatprep.subr.mxu0 0.0
    %6781 = vmatpush2.msra.mxu0 0.0
    %6782 = vmatprep.subr.mxu0 0.0
    %6783 = vmatpush2.msra.mxu0 0.0
    %6784 = vmatprep.subr.mxu0 0.0
    %6785 = vmatpush2.msra.mxu0 0.0
    %6786 = vmatprep.subr.mxu0 0.0
    %6787 = vmatpush2.msra.mxu0 0.0
    %6788 = vmatprep.subr.mxu0 0.0
    %6789 = vmatpush2.msra.mxu0 0.0
    %6790 = vmatprep.subr.mxu0 0.0
    %6791 = vmatpush2.msra.mxu0 0.0
    %6792 = vmatprep.mubr.f32.mxu0 0.0
    %6793 = vmatmul.mubr.f32.gmra.mxu0 %v6637
    %v6794 = vpop.f32.mrf.mxu0
    %v6795 = vadd.f32 0.0, %v6794
    %v6796 = vpop.f32.mrf.mxu0
    %6797 = vdwg.mxu0
    %v6799 = vrot.slane %v6795, 4
    %v6800 = vrot.slane %v6795, 5
    %6801 = vrot.lane.b32.xlu0 %v6799, 32
    %v6802 = vpop.permute.xlu0 %6801
    %6803 = vrot.lane.b32.xlu0 %v6800, 32
    %v6804 = vpop.permute.xlu0 %6803
    %v6807 = vadd.f32 %v4900, %v6802
    %v6808 = vadd.f32 %v4905, %v6804
    %v6809 = vsub.f32 0.0, %v6807
    %v6810 = vsub.f32 0.0, %v6808
    %v6811 = vmul.f32 %v6809, 1.442695
    %v6812 = vpow.pop %v6811
    %v6813 = vmul.f32 %v6810, 1.442695
    %v6814 = vpow.pop %v6813
    %v6815 = vadd.f32 %v6812, 1.0
    %v6816 = vadd.f32 %v6814, 1.0
    %v6817 = vrcp.pop %v6815
    %v6818 = vmul.f32 1.0, %v6817
    %v6819 = vrcp.pop %v6816
    %v6820 = vmul.f32 1.0, %v6819
    %6821 = vmatprep.subr.mxu0 0.0
    %6822 = vmatpush1.msra.mxu0 0.0
    %6823 = vmatprep.subr.mxu0 0.0
    %6824 = vmatpush1.msra.mxu0 0.0
    %6825 = vmatprep.subr.mxu0 0.0
    %6826 = vmatpush1.msra.mxu0 0.0
    %6827 = vmatprep.subr.mxu0 0.0
    %6828 = vmatpush1.msra.mxu0 0.0
    %6829 = vmatprep.subr.mxu0 0.0
    %6830 = vmatpush1.msra.mxu0 0.0
    %6831 = vmatprep.subr.mxu0 0.0
    %6832 = vmatpush1.msra.mxu0 0.0
    %6833 = vmatprep.subr.mxu0 0.0
    %6834 = vmatpush1.msra.mxu0 0.0
    %6835 = vmatprep.subr.mxu0 0.0
    %6836 = vmatpush1.msra.mxu0 0.0
    %6837 = vmatprep.subr.mxu0 0.0
    %6838 = vmatpush1.msra.mxu0 0.0
    %6839 = vmatprep.subr.mxu0 0.0
    %6840 = vmatpush1.msra.mxu0 0.0
    %6841 = vmatprep.subr.mxu0 0.0
    %6842 = vmatpush1.msra.mxu0 0.0
    %6843 = vmatprep.subr.mxu0 0.0
    %6844 = vmatpush1.msra.mxu0 0.0
    %6845 = vmatprep.subr.mxu0 0.0
    %6846 = vmatpush1.msra.mxu0 %v5106
    %6847 = vmatprep.subr.mxu0 0.0
    %6848 = vmatpush1.msra.mxu0 %v5105
    %6849 = vmatprep.subr.mxu0 0.0
    %6850 = vmatpush1.msra.mxu0 %v5104
    %6851 = vmatprep.subr.mxu0 0.0
    %6852 = vmatpush1.msra.mxu0 %v5103
    %6853 = vmatprep.subr.mxu0 0.0
    %6854 = vmatpush2.msra.mxu0 0.0
    %6855 = vmatprep.subr.mxu0 0.0
    %6856 = vmatpush2.msra.mxu0 0.0
    %6857 = vmatprep.subr.mxu0 0.0
    %6858 = vmatpush2.msra.mxu0 0.0
    %6859 = vmatprep.subr.mxu0 0.0
    %6860 = vmatpush2.msra.mxu0 0.0
    %6861 = vmatprep.subr.mxu0 0.0
    %6862 = vmatpush2.msra.mxu0 0.0
    %6863 = vmatprep.subr.mxu0 0.0
    %6864 = vmatpush2.msra.mxu0 0.0
    %6865 = vmatprep.subr.mxu0 0.0
    %6866 = vmatpush2.msra.mxu0 0.0
    %6867 = vmatprep.subr.mxu0 0.0
    %6868 = vmatpush2.msra.mxu0 0.0
    %6869 = vmatprep.subr.mxu0 0.0
    %6870 = vmatpush2.msra.mxu0 0.0
    %6871 = vmatprep.subr.mxu0 0.0
    %6872 = vmatpush2.msra.mxu0 0.0
    %6873 = vmatprep.subr.mxu0 0.0
    %6874 = vmatpush2.msra.mxu0 0.0
    %6875 = vmatprep.subr.mxu0 0.0
    %6876 = vmatpush2.msra.mxu0 0.0
    %6877 = vmatprep.subr.mxu0 0.0
    %6878 = vmatpush2.msra.mxu0 0.0
    %6879 = vmatprep.subr.mxu0 0.0
    %6880 = vmatpush2.msra.mxu0 0.0
    %6881 = vmatprep.subr.mxu0 0.0
    %6882 = vmatpush2.msra.mxu0 0.0
    %6883 = vmatprep.subr.mxu0 0.0
    %6884 = vmatpush2.msra.mxu0 0.0
    %6885 = vmatprep.mubr.f32.mxu0 0.0
    %6886 = vmatmul.mubr.f32.gmra.mxu0 %v6637
    %v6887 = vpop.f32.mrf.mxu0
    %v6888 = vadd.f32 0.0, %v6887
    %v6889 = vpop.f32.mrf.mxu0
    %6890 = vdwg.mxu0
    %v6892 = vrot.slane %v6888, 4
    %v6893 = vrot.slane %v6888, 5
    %6894 = vrot.lane.b32.xlu0 %v6892, 64
    %v6895 = vpop.permute.xlu0 %6894
    %6896 = vrot.lane.b32.xlu0 %v6893, 64
    %v6897 = vpop.permute.xlu0 %6896
    %v6900 = vadd.f32 %v4900, %v6895
    %v6901 = vadd.f32 %v4905, %v6897
    %v6902 = vtanh.pop %v6900
    %v6903 = vtanh.pop %v6901
    %6904 = vmatprep.subr.mxu0 0.0
    %6905 = vmatpush1.msra.mxu0 0.0
    %6906 = vmatprep.subr.mxu0 0.0
    %6907 = vmatpush1.msra.mxu0 0.0
    %6908 = vmatprep.subr.mxu0 0.0
    %6909 = vmatpush1.msra.mxu0 0.0
    %6910 = vmatprep.subr.mxu0 0.0
    %6911 = vmatpush1.msra.mxu0 0.0
    %6912 = vmatprep.subr.mxu0 0.0
    %6913 = vmatpush1.msra.mxu0 0.0
    %6914 = vmatprep.subr.mxu0 0.0
    %6915 = vmatpush1.msra.mxu0 0.0
    %6916 = vmatprep.subr.mxu0 0.0
    %6917 = vmatpush1.msra.mxu0 0.0
    %6918 = vmatprep.subr.mxu0 0.0
    %6919 = vmatpush1.msra.mxu0 0.0
    %6920 = vmatprep.subr.mxu0 0.0
    %6921 = vmatpush1.msra.mxu0 0.0
    %6922 = vmatprep.subr.mxu0 0.0
    %6923 = vmatpush1.msra.mxu0 0.0
    %6924 = vmatprep.subr.mxu0 0.0
    %6925 = vmatpush1.msra.mxu0 0.0
    %6926 = vmatprep.subr.mxu0 0.0
    %6927 = vmatpush1.msra.mxu0 0.0
    %6928 = vmatprep.subr.mxu0 0.0
    %6929 = vmatpush1.msra.mxu0 %v5193
    %6930 = vmatprep.subr.mxu0 0.0
    %6931 = vmatpush1.msra.mxu0 %v5192
    %6932 = vmatprep.subr.mxu0 0.0
    %6933 = vmatpush1.msra.mxu0 %v5191
    %6934 = vmatprep.subr.mxu0 0.0
    %6935 = vmatpush1.msra.mxu0 %v5190
    %6936 = vmatprep.subr.mxu0 0.0
    %6937 = vmatpush2.msra.mxu0 0.0
    %6938 = vmatprep.subr.mxu0 0.0
    %6939 = vmatpush2.msra.mxu0 0.0
    %6940 = vmatprep.subr.mxu0 0.0
    %6941 = vmatpush2.msra.mxu0 0.0
    %6942 = vmatprep.subr.mxu0 0.0
    %6943 = vmatpush2.msra.mxu0 0.0
    %6944 = vmatprep.subr.mxu0 0.0
    %6945 = vmatpush2.msra.mxu0 0.0
    %6946 = vmatprep.subr.mxu0 0.0
    %6947 = vmatpush2.msra.mxu0 0.0
    %6948 = vmatprep.subr.mxu0 0.0
    %6949 = vmatpush2.msra.mxu0 0.0
    %6950 = vmatprep.subr.mxu0 0.0
    %6951 = vmatpush2.msra.mxu0 0.0
    %6952 = vmatprep.subr.mxu0 0.0
    %6953 = vmatpush2.msra.mxu0 0.0
    %6954 = vmatprep.subr.mxu0 0.0
    %6955 = vmatpush2.msra.mxu0 0.0
    %6956 = vmatprep.subr.mxu0 0.0
    %6957 = vmatpush2.msra.mxu0 0.0
    %6958 = vmatprep.subr.mxu0 0.0
    %6959 = vmatpush2.msra.mxu0 0.0
    %6960 = vmatprep.subr.mxu0 0.0
    %6961 = vmatpush2.msra.mxu0 0.0
    %6962 = vmatprep.subr.mxu0 0.0
    %6963 = vmatpush2.msra.mxu0 0.0
    %6964 = vmatprep.subr.mxu0 0.0
    %6965 = vmatpush2.msra.mxu0 0.0
    %6966 = vmatprep.subr.mxu0 0.0
    %6967 = vmatpush2.msra.mxu0 0.0
    %6968 = vmatprep.mubr.f32.mxu0 0.0
    %6969 = vmatmul.mubr.f32.gmra.mxu0 %v6637
    %v6970 = vpop.f32.mrf.mxu0
    %v6971 = vadd.f32 0.0, %v6970
    %v6972 = vpop.f32.mrf.mxu0
    %6973 = vdwg.mxu0
    %v6975 = vrot.slane %v6971, 4
    %v6976 = vrot.slane %v6971, 5
    %6977 = vrot.lane.b32.xlu0 %v6975, 96
    %v6978 = vpop.permute.xlu0 %6977
    %6979 = vrot.lane.b32.xlu0 %v6976, 96
    %v6980 = vpop.permute.xlu0 %6979
    %v6983 = vadd.f32 %v4900, %v6978
    %v6984 = vadd.f32 %v4905, %v6980
    %v6985 = vsub.f32 0.0, %v6983
    %v6986 = vsub.f32 0.0, %v6984
    %v6987 = vmul.f32 %v6985, 1.442695
    %v6988 = vpow.pop %v6987
    %v6989 = vmul.f32 %v6986, 1.442695
    %v6990 = vpow.pop %v6989
    %v6991 = vadd.f32 %v6988, 1.0
    %v6992 = vadd.f32 %v6990, 1.0
    %v6993 = vrcp.pop %v6991
    %v6994 = vmul.f32 1.0, %v6993
    %v6995 = vrcp.pop %v6992
    %v6996 = vmul.f32 1.0, %v6995
    %v6998 = vrot.slane %v6632, 4
    %v6999 = vrot.slane %v6632, 5
    %7000 = vrot.lane.b32.xlu0 %v6998, 32
    %v7001 = vpop.permute.xlu0 %7000
    %7002 = vrot.lane.b32.xlu0 %v6999, 32
    %v7003 = vpop.permute.xlu0 %7002
    %v7006 = vmul.f32 %v6818, %v7001
    %v7007 = vmul.f32 %v6820, %v7003
    %7010 = vrot.lane.b32.xlu0 %v6902, 64
    %v7011 = vpop.permute.xlu0 %7010
    %7012 = vrot.lane.b32.xlu0 %v6903, 64
    %v7013 = vpop.permute.xlu0 %7012
    %v7016 = vmul.f32 %v6725, %v7011
    %v7017 = vmul.f32 %v6727, %v7013
    %7020 = vrot.lane.b32.xlu0 %v7016, 32
    %v7021 = vpop.permute.xlu0 %7020
    %7022 = vrot.lane.b32.xlu0 %v7017, 32
    %v7023 = vpop.permute.xlu0 %7022
    %v7026 = vadd.f32 %v7006, %v7021
    %v7027 = vadd.f32 %v7007, %v7023
    %v7028 = vtanh.pop %v7026
    %v7029 = vtanh.pop %v7027
    %7032 = vrot.lane.b32.xlu0 %v7028, 64
    %v7033 = vpop.permute.xlu0 %7032
    %7034 = vrot.lane.b32.xlu0 %v7029, 64
    %v7035 = vpop.permute.xlu0 %7034
    %v7038 = vmul.f32 %v6994, %v7033
    %v7039 = vmul.f32 %v6996, %v7035
    %v7040 = vsel %vm6635, 1, 0
    %7041 = vset.pattern.permute.xlu0 0
    %7042 = vperm.xlu0 %7041, %v7040
    %v7043 = vpop.permute.xlu0 %7042
    %vm7044 = vcmp.eq.s32.totalorder %v7043, 1
    %v7047 = vrot.slane %v7038, 4
    %v7048 = vrot.slane %v7039, 3
    %v7049 = vsel %vm5328, %v7048, %v7047
    %7050 = vrot.lane.b32.xlu0 %v7049, 32
    %v7051 = vpop.permute.xlu0 %7050
    %v7053 = vsel %vm7044, %v7051, %v6623
    %v7056 = vrot.slane %v7026, 4
    %v7057 = vrot.slane %v7027, 3
    %v7058 = vsel %vm5328, %v7057, %v7056
    %7059 = vrot.lane.b32.xlu0 %v7058, 96
    %v7060 = vpop.permute.xlu0 %7059
    %v7062 = vsel %vm7044, %v7060, %v6632
    %v7063 = vmax.f32 %v6634, %v7051
    %v7064 = vsel %vm7044, %v7063, %v6634
    %vm7065 = vcmp.gt.s32.totalorder %v4908, 5
    %v7067 = vsel %vm135, %v7053, 0
    %7069 = vmatprep.subr.mxu0 0.0
    %7070 = vmatpush1.msra.mxu0 0.0
    %7071 = vmatprep.subr.mxu0 0.0
    %7072 = vmatpush1.msra.mxu0 0.0
    %7073 = vmatprep.subr.mxu0 0.0
    %7074 = vmatpush1.msra.mxu0 0.0
    %7075 = vmatprep.subr.mxu0 0.0
    %7076 = vmatpush1.msra.mxu0 0.0
    %7077 = vmatprep.subr.mxu0 0.0
    %7078 = vmatpush1.msra.mxu0 0.0
    %7079 = vmatprep.subr.mxu0 0.0
    %7080 = vmatpush1.msra.mxu0 0.0
    %7081 = vmatprep.subr.mxu0 0.0
    %7082 = vmatpush1.msra.mxu0 0.0
    %7083 = vmatprep.subr.mxu0 0.0
    %7084 = vmatpush1.msra.mxu0 0.0
    %7085 = vmatprep.subr.mxu0 0.0
    %7086 = vmatpush1.msra.mxu0 0.0
    %7087 = vmatprep.subr.mxu0 0.0
    %7088 = vmatpush1.msra.mxu0 0.0
    %7089 = vmatprep.subr.mxu0 0.0
    %7090 = vmatpush1.msra.mxu0 0.0
    %7091 = vmatprep.subr.mxu0 0.0
    %7092 = vmatpush1.msra.mxu0 0.0
    %7093 = vmatprep.subr.mxu0 0.0
    %7094 = vmatpush1.msra.mxu0 %v4913
    %7095 = vmatprep.subr.mxu0 0.0
    %7096 = vmatpush1.msra.mxu0 %v4912
    %7097 = vmatprep.subr.mxu0 0.0
    %7098 = vmatpush1.msra.mxu0 %v4911
    %7099 = vmatprep.subr.mxu0 0.0
    %7100 = vmatpush1.msra.mxu0 %v4910
    %7101 = vmatprep.subr.mxu0 0.0
    %7102 = vmatpush2.msra.mxu0 0.0
    %7103 = vmatprep.subr.mxu0 0.0
    %7104 = vmatpush2.msra.mxu0 0.0
    %7105 = vmatprep.subr.mxu0 0.0
    %7106 = vmatpush2.msra.mxu0 0.0
    %7107 = vmatprep.subr.mxu0 0.0
    %7108 = vmatpush2.msra.mxu0 0.0
    %7109 = vmatprep.subr.mxu0 0.0
    %7110 = vmatpush2.msra.mxu0 0.0
    %7111 = vmatprep.subr.mxu0 0.0
    %7112 = vmatpush2.msra.mxu0 0.0
    %7113 = vmatprep.subr.mxu0 0.0
    %7114 = vmatpush2.msra.mxu0 0.0
    %7115 = vmatprep.subr.mxu0 0.0
    %7116 = vmatpush2.msra.mxu0 0.0
    %7117 = vmatprep.subr.mxu0 0.0
    %7118 = vmatpush2.msra.mxu0 0.0
    %7119 = vmatprep.subr.mxu0 0.0
    %7120 = vmatpush2.msra.mxu0 0.0
    %7121 = vmatprep.subr.mxu0 0.0
    %7122 = vmatpush2.msra.mxu0 0.0
    %7123 = vmatprep.subr.mxu0 0.0
    %7124 = vmatpush2.msra.mxu0 0.0
    %7125 = vmatprep.subr.mxu0 0.0
    %7126 = vmatpush2.msra.mxu0 0.0
    %7127 = vmatprep.subr.mxu0 0.0
    %7128 = vmatpush2.msra.mxu0 0.0
    %7129 = vmatprep.subr.mxu0 0.0
    %7130 = vmatpush2.msra.mxu0 0.0
    %7131 = vmatprep.subr.mxu0 0.0
    %7132 = vmatpush2.msra.mxu0 0.0
    %7133 = vmatprep.mubr.f32.mxu0 0.0
    %7134 = vmatmul.mubr.f32.gmra.mxu0 %v7067
    %v7135 = vpop.f32.mrf.mxu0
    %v7136 = vadd.f32 0.0, %v7135
    %v7137 = vpop.f32.mrf.mxu0
    %7138 = vdwg.mxu0
    %v7140 = vrot.slane %v7136, 3
    %v7141 = vrot.slane %v7136, 4
    %v7144 = vadd.f32 %v4900, %v7140
    %v7145 = vadd.f32 %v4905, %v7141
    %v7146 = vsub.f32 0.0, %v7144
    %v7147 = vsub.f32 0.0, %v7145
    %v7148 = vmul.f32 %v7146, 1.442695
    %v7149 = vpow.pop %v7148
    %v7150 = vmul.f32 %v7147, 1.442695
    %v7151 = vpow.pop %v7150
    %v7152 = vadd.f32 %v7149, 1.0
    %v7153 = vadd.f32 %v7151, 1.0
    %v7154 = vrcp.pop %v7152
    %v7155 = vmul.f32 1.0, %v7154
    %v7156 = vrcp.pop %v7153
    %v7157 = vmul.f32 1.0, %v7156
    %7158 = vmatprep.subr.mxu0 0.0
    %7159 = vmatpush1.msra.mxu0 0.0
    %7160 = vmatprep.subr.mxu0 0.0
    %7161 = vmatpush1.msra.mxu0 0.0
    %7162 = vmatprep.subr.mxu0 0.0
    %7163 = vmatpush1.msra.mxu0 0.0
    %7164 = vmatprep.subr.mxu0 0.0
    %7165 = vmatpush1.msra.mxu0 0.0
    %7166 = vmatprep.subr.mxu0 0.0
    %7167 = vmatpush1.msra.mxu0 0.0
    %7168 = vmatprep.subr.mxu0 0.0
    %7169 = vmatpush1.msra.mxu0 0.0
    %7170 = vmatprep.subr.mxu0 0.0
    %7171 = vmatpush1.msra.mxu0 0.0
    %7172 = vmatprep.subr.mxu0 0.0
    %7173 = vmatpush1.msra.mxu0 0.0
    %7174 = vmatprep.subr.mxu0 0.0
    %7175 = vmatpush1.msra.mxu0 0.0
    %7176 = vmatprep.subr.mxu0 0.0
    %7177 = vmatpush1.msra.mxu0 0.0
    %7178 = vmatprep.subr.mxu0 0.0
    %7179 = vmatpush1.msra.mxu0 0.0
    %7180 = vmatprep.subr.mxu0 0.0
    %7181 = vmatpush1.msra.mxu0 0.0
    %7182 = vmatprep.subr.mxu0 0.0
    %7183 = vmatpush1.msra.mxu0 %v5009
    %7184 = vmatprep.subr.mxu0 0.0
    %7185 = vmatpush1.msra.mxu0 %v5008
    %7186 = vmatprep.subr.mxu0 0.0
    %7187 = vmatpush1.msra.mxu0 %v5007
    %7188 = vmatprep.subr.mxu0 0.0
    %7189 = vmatpush1.msra.mxu0 %v5006
    %7190 = vmatprep.subr.mxu0 0.0
    %7191 = vmatpush2.msra.mxu0 0.0
    %7192 = vmatprep.subr.mxu0 0.0
    %7193 = vmatpush2.msra.mxu0 0.0
    %7194 = vmatprep.subr.mxu0 0.0
    %7195 = vmatpush2.msra.mxu0 0.0
    %7196 = vmatprep.subr.mxu0 0.0
    %7197 = vmatpush2.msra.mxu0 0.0
    %7198 = vmatprep.subr.mxu0 0.0
    %7199 = vmatpush2.msra.mxu0 0.0
    %7200 = vmatprep.subr.mxu0 0.0
    %7201 = vmatpush2.msra.mxu0 0.0
    %7202 = vmatprep.subr.mxu0 0.0
    %7203 = vmatpush2.msra.mxu0 0.0
    %7204 = vmatprep.subr.mxu0 0.0
    %7205 = vmatpush2.msra.mxu0 0.0
    %7206 = vmatprep.subr.mxu0 0.0
    %7207 = vmatpush2.msra.mxu0 0.0
    %7208 = vmatprep.subr.mxu0 0.0
    %7209 = vmatpush2.msra.mxu0 0.0
    %7210 = vmatprep.subr.mxu0 0.0
    %7211 = vmatpush2.msra.mxu0 0.0
    %7212 = vmatprep.subr.mxu0 0.0
    %7213 = vmatpush2.msra.mxu0 0.0
    %7214 = vmatprep.subr.mxu0 0.0
    %7215 = vmatpush2.msra.mxu0 0.0
    %7216 = vmatprep.subr.mxu0 0.0
    %7217 = vmatpush2.msra.mxu0 0.0
    %7218 = vmatprep.subr.mxu0 0.0
    %7219 = vmatpush2.msra.mxu0 0.0
    %7220 = vmatprep.subr.mxu0 0.0
    %7221 = vmatpush2.msra.mxu0 0.0
    %7222 = vmatprep.mubr.f32.mxu0 0.0
    %7223 = vmatmul.mubr.f32.gmra.mxu0 %v7067
    %v7224 = vpop.f32.mrf.mxu0
    %v7225 = vadd.f32 0.0, %v7224
    %v7226 = vpop.f32.mrf.mxu0
    %7227 = vdwg.mxu0
    %v7229 = vrot.slane %v7225, 3
    %v7230 = vrot.slane %v7225, 4
    %7231 = vrot.lane.b32.xlu0 %v7229, 32
    %v7232 = vpop.permute.xlu0 %7231
    %7233 = vrot.lane.b32.xlu0 %v7230, 32
    %v7234 = vpop.permute.xlu0 %7233
    %v7237 = vadd.f32 %v4900, %v7232
    %v7238 = vadd.f32 %v4905, %v7234
    %v7239 = vsub.f32 0.0, %v7237
    %v7240 = vsub.f32 0.0, %v7238
    %v7241 = vmul.f32 %v7239, 1.442695
    %v7242 = vpow.pop %v7241
    %v7243 = vmul.f32 %v7240, 1.442695
    %v7244 = vpow.pop %v7243
    %v7245 = vadd.f32 %v7242, 1.0
    %v7246 = vadd.f32 %v7244, 1.0
    %v7247 = vrcp.pop %v7245
    %v7248 = vmul.f32 1.0, %v7247
    %v7249 = vrcp.pop %v7246
    %v7250 = vmul.f32 1.0, %v7249
    %7251 = vmatprep.subr.mxu0 0.0
    %7252 = vmatpush1.msra.mxu0 0.0
    %7253 = vmatprep.subr.mxu0 0.0
    %7254 = vmatpush1.msra.mxu0 0.0
    %7255 = vmatprep.subr.mxu0 0.0
    %7256 = vmatpush1.msra.mxu0 0.0
    %7257 = vmatprep.subr.mxu0 0.0
    %7258 = vmatpush1.msra.mxu0 0.0
    %7259 = vmatprep.subr.mxu0 0.0
    %7260 = vmatpush1.msra.mxu0 0.0
    %7261 = vmatprep.subr.mxu0 0.0
    %7262 = vmatpush1.msra.mxu0 0.0
    %7263 = vmatprep.subr.mxu0 0.0
    %7264 = vmatpush1.msra.mxu0 0.0
    %7265 = vmatprep.subr.mxu0 0.0
    %7266 = vmatpush1.msra.mxu0 0.0
    %7267 = vmatprep.subr.mxu0 0.0
    %7268 = vmatpush1.msra.mxu0 0.0
    %7269 = vmatprep.subr.mxu0 0.0
    %7270 = vmatpush1.msra.mxu0 0.0
    %7271 = vmatprep.subr.mxu0 0.0
    %7272 = vmatpush1.msra.mxu0 0.0
    %7273 = vmatprep.subr.mxu0 0.0
    %7274 = vmatpush1.msra.mxu0 0.0
    %7275 = vmatprep.subr.mxu0 0.0
    %7276 = vmatpush1.msra.mxu0 %v5106
    %7277 = vmatprep.subr.mxu0 0.0
    %7278 = vmatpush1.msra.mxu0 %v5105
    %7279 = vmatprep.subr.mxu0 0.0
    %7280 = vmatpush1.msra.mxu0 %v5104
    %7281 = vmatprep.subr.mxu0 0.0
    %7282 = vmatpush1.msra.mxu0 %v5103
    %7283 = vmatprep.subr.mxu0 0.0
    %7284 = vmatpush2.msra.mxu0 0.0
    %7285 = vmatprep.subr.mxu0 0.0
    %7286 = vmatpush2.msra.mxu0 0.0
    %7287 = vmatprep.subr.mxu0 0.0
    %7288 = vmatpush2.msra.mxu0 0.0
    %7289 = vmatprep.subr.mxu0 0.0
    %7290 = vmatpush2.msra.mxu0 0.0
    %7291 = vmatprep.subr.mxu0 0.0
    %7292 = vmatpush2.msra.mxu0 0.0
    %7293 = vmatprep.subr.mxu0 0.0
    %7294 = vmatpush2.msra.mxu0 0.0
    %7295 = vmatprep.subr.mxu0 0.0
    %7296 = vmatpush2.msra.mxu0 0.0
    %7297 = vmatprep.subr.mxu0 0.0
    %7298 = vmatpush2.msra.mxu0 0.0
    %7299 = vmatprep.subr.mxu0 0.0
    %7300 = vmatpush2.msra.mxu0 0.0
    %7301 = vmatprep.subr.mxu0 0.0
    %7302 = vmatpush2.msra.mxu0 0.0
    %7303 = vmatprep.subr.mxu0 0.0
    %7304 = vmatpush2.msra.mxu0 0.0
    %7305 = vmatprep.subr.mxu0 0.0
    %7306 = vmatpush2.msra.mxu0 0.0
    %7307 = vmatprep.subr.mxu0 0.0
    %7308 = vmatpush2.msra.mxu0 0.0
    %7309 = vmatprep.subr.mxu0 0.0
    %7310 = vmatpush2.msra.mxu0 0.0
    %7311 = vmatprep.subr.mxu0 0.0
    %7312 = vmatpush2.msra.mxu0 0.0
    %7313 = vmatprep.subr.mxu0 0.0
    %7314 = vmatpush2.msra.mxu0 0.0
    %7315 = vmatprep.mubr.f32.mxu0 0.0
    %7316 = vmatmul.mubr.f32.gmra.mxu0 %v7067
    %v7317 = vpop.f32.mrf.mxu0
    %v7318 = vadd.f32 0.0, %v7317
    %v7319 = vpop.f32.mrf.mxu0
    %7320 = vdwg.mxu0
    %v7322 = vrot.slane %v7318, 3
    %v7323 = vrot.slane %v7318, 4
    %7324 = vrot.lane.b32.xlu0 %v7322, 64
    %v7325 = vpop.permute.xlu0 %7324
    %7326 = vrot.lane.b32.xlu0 %v7323, 64
    %v7327 = vpop.permute.xlu0 %7326
    %v7330 = vadd.f32 %v4900, %v7325
    %v7331 = vadd.f32 %v4905, %v7327
    %v7332 = vtanh.pop %v7330
    %v7333 = vtanh.pop %v7331
    %7334 = vmatprep.subr.mxu0 0.0
    %7335 = vmatpush1.msra.mxu0 0.0
    %7336 = vmatprep.subr.mxu0 0.0
    %7337 = vmatpush1.msra.mxu0 0.0
    %7338 = vmatprep.subr.mxu0 0.0
    %7339 = vmatpush1.msra.mxu0 0.0
    %7340 = vmatprep.subr.mxu0 0.0
    %7341 = vmatpush1.msra.mxu0 0.0
    %7342 = vmatprep.subr.mxu0 0.0
    %7343 = vmatpush1.msra.mxu0 0.0
    %7344 = vmatprep.subr.mxu0 0.0
    %7345 = vmatpush1.msra.mxu0 0.0
    %7346 = vmatprep.subr.mxu0 0.0
    %7347 = vmatpush1.msra.mxu0 0.0
    %7348 = vmatprep.subr.mxu0 0.0
    %7349 = vmatpush1.msra.mxu0 0.0
    %7350 = vmatprep.subr.mxu0 0.0
    %7351 = vmatpush1.msra.mxu0 0.0
    %7352 = vmatprep.subr.mxu0 0.0
    %7353 = vmatpush1.msra.mxu0 0.0
    %7354 = vmatprep.subr.mxu0 0.0
    %7355 = vmatpush1.msra.mxu0 0.0
    %7356 = vmatprep.subr.mxu0 0.0
    %7357 = vmatpush1.msra.mxu0 0.0
    %7358 = vmatprep.subr.mxu0 0.0
    %7359 = vmatpush1.msra.mxu0 %v5193
    %7360 = vmatprep.subr.mxu0 0.0
    %7361 = vmatpush1.msra.mxu0 %v5192
    %7362 = vmatprep.subr.mxu0 0.0
    %7363 = vmatpush1.msra.mxu0 %v5191
    %7364 = vmatprep.subr.mxu0 0.0
    %7365 = vmatpush1.msra.mxu0 %v5190
    %7366 = vmatprep.subr.mxu0 0.0
    %7367 = vmatpush2.msra.mxu0 0.0
    %7368 = vmatprep.subr.mxu0 0.0
    %7369 = vmatpush2.msra.mxu0 0.0
    %7370 = vmatprep.subr.mxu0 0.0
    %7371 = vmatpush2.msra.mxu0 0.0
    %7372 = vmatprep.subr.mxu0 0.0
    %7373 = vmatpush2.msra.mxu0 0.0
    %7374 = vmatprep.subr.mxu0 0.0
    %7375 = vmatpush2.msra.mxu0 0.0
    %7376 = vmatprep.subr.mxu0 0.0
    %7377 = vmatpush2.msra.mxu0 0.0
    %7378 = vmatprep.subr.mxu0 0.0
    %7379 = vmatpush2.msra.mxu0 0.0
    %7380 = vmatprep.subr.mxu0 0.0
    %7381 = vmatpush2.msra.mxu0 0.0
    %7382 = vmatprep.subr.mxu0 0.0
    %7383 = vmatpush2.msra.mxu0 0.0
    %7384 = vmatprep.subr.mxu0 0.0
    %7385 = vmatpush2.msra.mxu0 0.0
    %7386 = vmatprep.subr.mxu0 0.0
    %7387 = vmatpush2.msra.mxu0 0.0
    %7388 = vmatprep.subr.mxu0 0.0
    %7389 = vmatpush2.msra.mxu0 0.0
    %7390 = vmatprep.subr.mxu0 0.0
    %7391 = vmatpush2.msra.mxu0 0.0
    %7392 = vmatprep.subr.mxu0 0.0
    %7393 = vmatpush2.msra.mxu0 0.0
    %7394 = vmatprep.subr.mxu0 0.0
    %7395 = vmatpush2.msra.mxu0 0.0
    %7396 = vmatprep.subr.mxu0 0.0
    %7397 = vmatpush2.msra.mxu0 0.0
    %7398 = vmatprep.mubr.f32.mxu0 0.0
    %7399 = vmatmul.mubr.f32.gmra.mxu0 %v7067
    %v7400 = vpop.f32.mrf.mxu0
    %v7401 = vadd.f32 0.0, %v7400
    %v7402 = vpop.f32.mrf.mxu0
    %7403 = vdwg.mxu0
    %v7405 = vrot.slane %v7401, 3
    %v7406 = vrot.slane %v7401, 4
    %7407 = vrot.lane.b32.xlu0 %v7405, 96
    %v7408 = vpop.permute.xlu0 %7407
    %7409 = vrot.lane.b32.xlu0 %v7406, 96
    %v7410 = vpop.permute.xlu0 %7409
    %v7413 = vadd.f32 %v4900, %v7408
    %v7414 = vadd.f32 %v4905, %v7410
    %v7415 = vsub.f32 0.0, %v7413
    %v7416 = vsub.f32 0.0, %v7414
    %v7417 = vmul.f32 %v7415, 1.442695
    %v7418 = vpow.pop %v7417
    %v7419 = vmul.f32 %v7416, 1.442695
    %v7420 = vpow.pop %v7419
    %v7421 = vadd.f32 %v7418, 1.0
    %v7422 = vadd.f32 %v7420, 1.0
    %v7423 = vrcp.pop %v7421
    %v7424 = vmul.f32 1.0, %v7423
    %v7425 = vrcp.pop %v7422
    %v7426 = vmul.f32 1.0, %v7425
    %v7428 = vrot.slane %v7062, 3
    %v7429 = vrot.slane %v7062, 4
    %7430 = vrot.lane.b32.xlu0 %v7428, 32
    %v7431 = vpop.permute.xlu0 %7430
    %7432 = vrot.lane.b32.xlu0 %v7429, 32
    %v7433 = vpop.permute.xlu0 %7432
    %v7436 = vmul.f32 %v7248, %v7431
    %v7437 = vmul.f32 %v7250, %v7433
    %7440 = vrot.lane.b32.xlu0 %v7332, 64
    %v7441 = vpop.permute.xlu0 %7440
    %7442 = vrot.lane.b32.xlu0 %v7333, 64
    %v7443 = vpop.permute.xlu0 %7442
    %v7446 = vmul.f32 %v7155, %v7441
    %v7447 = vmul.f32 %v7157, %v7443
    %7450 = vrot.lane.b32.xlu0 %v7446, 32
    %v7451 = vpop.permute.xlu0 %7450
    %7452 = vrot.lane.b32.xlu0 %v7447, 32
    %v7453 = vpop.permute.xlu0 %7452
    %v7456 = vadd.f32 %v7436, %v7451
    %v7457 = vadd.f32 %v7437, %v7453
    %v7458 = vtanh.pop %v7456
    %v7459 = vtanh.pop %v7457
    %7462 = vrot.lane.b32.xlu0 %v7458, 64
    %v7463 = vpop.permute.xlu0 %7462
    %7464 = vrot.lane.b32.xlu0 %v7459, 64
    %v7465 = vpop.permute.xlu0 %7464
    %v7468 = vmul.f32 %v7424, %v7463
    %v7469 = vmul.f32 %v7426, %v7465
    %v7470 = vsel %vm7065, 1, 0
    %7471 = vset.pattern.permute.xlu0 0
    %7472 = vperm.xlu0 %7471, %v7470
    %v7473 = vpop.permute.xlu0 %7472
    %vm7474 = vcmp.eq.s32.totalorder %v7473, 1
    %v7477 = vrot.slane %v7468, 5
    %v7478 = vrot.slane %v7469, 4
    %v7479 = vsel %vm5328, %v7478, %v7477
    %7480 = vrot.lane.b32.xlu0 %v7479, 32
    %v7481 = vpop.permute.xlu0 %7480
    %v7483 = vsel %vm7474, %v7481, %v7053
    %v7486 = vrot.slane %v7456, 5
    %v7487 = vrot.slane %v7457, 4
    %v7488 = vsel %vm5328, %v7487, %v7486
    %7489 = vrot.lane.b32.xlu0 %v7488, 96
    %v7490 = vpop.permute.xlu0 %7489
    %v7492 = vsel %vm7474, %v7490, %v7062
    %v7493 = vmax.f32 %v7064, %v7481
    %v7494 = vsel %vm7474, %v7493, %v7064
    %vm7495 = vcmp.gt.s32.totalorder %v4908, 6
    %v7497 = vsel %vm135, %v7483, 0
    %7499 = vmatprep.subr.mxu0 0.0
    %7500 = vmatpush1.msra.mxu0 0.0
    %7501 = vmatprep.subr.mxu0 0.0
    %7502 = vmatpush1.msra.mxu0 0.0
    %7503 = vmatprep.subr.mxu0 0.0
    %7504 = vmatpush1.msra.mxu0 0.0
    %7505 = vmatprep.subr.mxu0 0.0
    %7506 = vmatpush1.msra.mxu0 0.0
    %7507 = vmatprep.subr.mxu0 0.0
    %7508 = vmatpush1.msra.mxu0 0.0
    %7509 = vmatprep.subr.mxu0 0.0
    %7510 = vmatpush1.msra.mxu0 0.0
    %7511 = vmatprep.subr.mxu0 0.0
    %7512 = vmatpush1.msra.mxu0 0.0
    %7513 = vmatprep.subr.mxu0 0.0
    %7514 = vmatpush1.msra.mxu0 0.0
    %7515 = vmatprep.subr.mxu0 0.0
    %7516 = vmatpush1.msra.mxu0 0.0
    %7517 = vmatprep.subr.mxu0 0.0
    %7518 = vmatpush1.msra.mxu0 0.0
    %7519 = vmatprep.subr.mxu0 0.0
    %7520 = vmatpush1.msra.mxu0 0.0
    %7521 = vmatprep.subr.mxu0 0.0
    %7522 = vmatpush1.msra.mxu0 0.0
    %7523 = vmatprep.subr.mxu0 0.0
    %7524 = vmatpush1.msra.mxu0 %v4913
    %7525 = vmatprep.subr.mxu0 0.0
    %7526 = vmatpush1.msra.mxu0 %v4912
    %7527 = vmatprep.subr.mxu0 0.0
    %7528 = vmatpush1.msra.mxu0 %v4911
    %7529 = vmatprep.subr.mxu0 0.0
    %7530 = vmatpush1.msra.mxu0 %v4910
    %7531 = vmatprep.subr.mxu0 0.0
    %7532 = vmatpush2.msra.mxu0 0.0
    %7533 = vmatprep.subr.mxu0 0.0
    %7534 = vmatpush2.msra.mxu0 0.0
    %7535 = vmatprep.subr.mxu0 0.0
    %7536 = vmatpush2.msra.mxu0 0.0
    %7537 = vmatprep.subr.mxu0 0.0
    %7538 = vmatpush2.msra.mxu0 0.0
    %7539 = vmatprep.subr.mxu0 0.0
    %7540 = vmatpush2.msra.mxu0 0.0
    %7541 = vmatprep.subr.mxu0 0.0
    %7542 = vmatpush2.msra.mxu0 0.0
    %7543 = vmatprep.subr.mxu0 0.0
    %7544 = vmatpush2.msra.mxu0 0.0
    %7545 = vmatprep.subr.mxu0 0.0
    %7546 = vmatpush2.msra.mxu0 0.0
    %7547 = vmatprep.subr.mxu0 0.0
    %7548 = vmatpush2.msra.mxu0 0.0
    %7549 = vmatprep.subr.mxu0 0.0
    %7550 = vmatpush2.msra.mxu0 0.0
    %7551 = vmatprep.subr.mxu0 0.0
    %7552 = vmatpush2.msra.mxu0 0.0
    %7553 = vmatprep.subr.mxu0 0.0
    %7554 = vmatpush2.msra.mxu0 0.0
    %7555 = vmatprep.subr.mxu0 0.0
    %7556 = vmatpush2.msra.mxu0 0.0
    %7557 = vmatprep.subr.mxu0 0.0
    %7558 = vmatpush2.msra.mxu0 0.0
    %7559 = vmatprep.subr.mxu0 0.0
    %7560 = vmatpush2.msra.mxu0 0.0
    %7561 = vmatprep.subr.mxu0 0.0
    %7562 = vmatpush2.msra.mxu0 0.0
    %7563 = vmatprep.mubr.f32.mxu0 0.0
    %7564 = vmatmul.mubr.f32.gmra.mxu0 %v7497
    %v7565 = vpop.f32.mrf.mxu0
    %v7566 = vadd.f32 0.0, %v7565
    %v7567 = vpop.f32.mrf.mxu0
    %7568 = vdwg.mxu0
    %v7570 = vrot.slane %v7566, 2
    %v7571 = vrot.slane %v7566, 3
    %v7574 = vadd.f32 %v4900, %v7570
    %v7575 = vadd.f32 %v4905, %v7571
    %v7576 = vsub.f32 0.0, %v7574
    %v7577 = vsub.f32 0.0, %v7575
    %v7578 = vmul.f32 %v7576, 1.442695
    %v7579 = vpow.pop %v7578
    %v7580 = vmul.f32 %v7577, 1.442695
    %v7581 = vpow.pop %v7580
    %v7582 = vadd.f32 %v7579, 1.0
    %v7583 = vadd.f32 %v7581, 1.0
    %v7584 = vrcp.pop %v7582
    %v7585 = vmul.f32 1.0, %v7584
    %v7586 = vrcp.pop %v7583
    %v7587 = vmul.f32 1.0, %v7586
    %7588 = vmatprep.subr.mxu0 0.0
    %7589 = vmatpush1.msra.mxu0 0.0
    %7590 = vmatprep.subr.mxu0 0.0
    %7591 = vmatpush1.msra.mxu0 0.0
    %7592 = vmatprep.subr.mxu0 0.0
    %7593 = vmatpush1.msra.mxu0 0.0
    %7594 = vmatprep.subr.mxu0 0.0
    %7595 = vmatpush1.msra.mxu0 0.0
    %7596 = vmatprep.subr.mxu0 0.0
    %7597 = vmatpush1.msra.mxu0 0.0
    %7598 = vmatprep.subr.mxu0 0.0
    %7599 = vmatpush1.msra.mxu0 0.0
    %7600 = vmatprep.subr.mxu0 0.0
    %7601 = vmatpush1.msra.mxu0 0.0
    %7602 = vmatprep.subr.mxu0 0.0
    %7603 = vmatpush1.msra.mxu0 0.0
    %7604 = vmatprep.subr.mxu0 0.0
    %7605 = vmatpush1.msra.mxu0 0.0
    %7606 = vmatprep.subr.mxu0 0.0
    %7607 = vmatpush1.msra.mxu0 0.0
    %7608 = vmatprep.subr.mxu0 0.0
    %7609 = vmatpush1.msra.mxu0 0.0
    %7610 = vmatprep.subr.mxu0 0.0
    %7611 = vmatpush1.msra.mxu0 0.0
    %7612 = vmatprep.subr.mxu0 0.0
    %7613 = vmatpush1.msra.mxu0 %v5009
    %7614 = vmatprep.subr.mxu0 0.0
    %7615 = vmatpush1.msra.mxu0 %v5008
    %7616 = vmatprep.subr.mxu0 0.0
    %7617 = vmatpush1.msra.mxu0 %v5007
    %7618 = vmatprep.subr.mxu0 0.0
    %7619 = vmatpush1.msra.mxu0 %v5006
    %7620 = vmatprep.subr.mxu0 0.0
    %7621 = vmatpush2.msra.mxu0 0.0
    %7622 = vmatprep.subr.mxu0 0.0
    %7623 = vmatpush2.msra.mxu0 0.0
    %7624 = vmatprep.subr.mxu0 0.0
    %7625 = vmatpush2.msra.mxu0 0.0
    %7626 = vmatprep.subr.mxu0 0.0
    %7627 = vmatpush2.msra.mxu0 0.0
    %7628 = vmatprep.subr.mxu0 0.0
    %7629 = vmatpush2.msra.mxu0 0.0
    %7630 = vmatprep.subr.mxu0 0.0
    %7631 = vmatpush2.msra.mxu0 0.0
    %7632 = vmatprep.subr.mxu0 0.0
    %7633 = vmatpush2.msra.mxu0 0.0
    %7634 = vmatprep.subr.mxu0 0.0
    %7635 = vmatpush2.msra.mxu0 0.0
    %7636 = vmatprep.subr.mxu0 0.0
    %7637 = vmatpush2.msra.mxu0 0.0
    %7638 = vmatprep.subr.mxu0 0.0
    %7639 = vmatpush2.msra.mxu0 0.0
    %7640 = vmatprep.subr.mxu0 0.0
    %7641 = vmatpush2.msra.mxu0 0.0
    %7642 = vmatprep.subr.mxu0 0.0
    %7643 = vmatpush2.msra.mxu0 0.0
    %7644 = vmatprep.subr.mxu0 0.0
    %7645 = vmatpush2.msra.mxu0 0.0
    %7646 = vmatprep.subr.mxu0 0.0
    %7647 = vmatpush2.msra.mxu0 0.0
    %7648 = vmatprep.subr.mxu0 0.0
    %7649 = vmatpush2.msra.mxu0 0.0
    %7650 = vmatprep.subr.mxu0 0.0
    %7651 = vmatpush2.msra.mxu0 0.0
    %7652 = vmatprep.mubr.f32.mxu0 0.0
    %7653 = vmatmul.mubr.f32.gmra.mxu0 %v7497
    %v7654 = vpop.f32.mrf.mxu0
    %v7655 = vadd.f32 0.0, %v7654
    %v7656 = vpop.f32.mrf.mxu0
    %7657 = vdwg.mxu0
    %v7659 = vrot.slane %v7655, 2
    %v7660 = vrot.slane %v7655, 3
    %7661 = vrot.lane.b32.xlu0 %v7659, 32
    %v7662 = vpop.permute.xlu0 %7661
    %7663 = vrot.lane.b32.xlu0 %v7660, 32
    %v7664 = vpop.permute.xlu0 %7663
    %v7667 = vadd.f32 %v4900, %v7662
    %v7668 = vadd.f32 %v4905, %v7664
    %v7669 = vsub.f32 0.0, %v7667
    %v7670 = vsub.f32 0.0, %v7668
    %v7671 = vmul.f32 %v7669, 1.442695
    %v7672 = vpow.pop %v7671
    %v7673 = vmul.f32 %v7670, 1.442695
    %v7674 = vpow.pop %v7673
    %v7675 = vadd.f32 %v7672, 1.0
    %v7676 = vadd.f32 %v7674, 1.0
    %v7677 = vrcp.pop %v7675
    %v7678 = vmul.f32 1.0, %v7677
    %v7679 = vrcp.pop %v7676
    %v7680 = vmul.f32 1.0, %v7679
    %7681 = vmatprep.subr.mxu0 0.0
    %7682 = vmatpush1.msra.mxu0 0.0
    %7683 = vmatprep.subr.mxu0 0.0
    %7684 = vmatpush1.msra.mxu0 0.0
    %7685 = vmatprep.subr.mxu0 0.0
    %7686 = vmatpush1.msra.mxu0 0.0
    %7687 = vmatprep.subr.mxu0 0.0
    %7688 = vmatpush1.msra.mxu0 0.0
    %7689 = vmatprep.subr.mxu0 0.0
    %7690 = vmatpush1.msra.mxu0 0.0
    %7691 = vmatprep.subr.mxu0 0.0
    %7692 = vmatpush1.msra.mxu0 0.0
    %7693 = vmatprep.subr.mxu0 0.0
    %7694 = vmatpush1.msra.mxu0 0.0
    %7695 = vmatprep.subr.mxu0 0.0
    %7696 = vmatpush1.msra.mxu0 0.0
    %7697 = vmatprep.subr.mxu0 0.0
    %7698 = vmatpush1.msra.mxu0 0.0
    %7699 = vmatprep.subr.mxu0 0.0
    %7700 = vmatpush1.msra.mxu0 0.0
    %7701 = vmatprep.subr.mxu0 0.0
    %7702 = vmatpush1.msra.mxu0 0.0
    %7703 = vmatprep.subr.mxu0 0.0
    %7704 = vmatpush1.msra.mxu0 0.0
    %7705 = vmatprep.subr.mxu0 0.0
    %7706 = vmatpush1.msra.mxu0 %v5106
    %7707 = vmatprep.subr.mxu0 0.0
    %7708 = vmatpush1.msra.mxu0 %v5105
    %7709 = vmatprep.subr.mxu0 0.0
    %7710 = vmatpush1.msra.mxu0 %v5104
    %7711 = vmatprep.subr.mxu0 0.0
    %7712 = vmatpush1.msra.mxu0 %v5103
    %7713 = vmatprep.subr.mxu0 0.0
    %7714 = vmatpush2.msra.mxu0 0.0
    %7715 = vmatprep.subr.mxu0 0.0
    %7716 = vmatpush2.msra.mxu0 0.0
    %7717 = vmatprep.subr.mxu0 0.0
    %7718 = vmatpush2.msra.mxu0 0.0
    %7719 = vmatprep.subr.mxu0 0.0
    %7720 = vmatpush2.msra.mxu0 0.0
    %7721 = vmatprep.subr.mxu0 0.0
    %7722 = vmatpush2.msra.mxu0 0.0
    %7723 = vmatprep.subr.mxu0 0.0
    %7724 = vmatpush2.msra.mxu0 0.0
    %7725 = vmatprep.subr.mxu0 0.0
    %7726 = vmatpush2.msra.mxu0 0.0
    %7727 = vmatprep.subr.mxu0 0.0
    %7728 = vmatpush2.msra.mxu0 0.0
    %7729 = vmatprep.subr.mxu0 0.0
    %7730 = vmatpush2.msra.mxu0 0.0
    %7731 = vmatprep.subr.mxu0 0.0
    %7732 = vmatpush2.msra.mxu0 0.0
    %7733 = vmatprep.subr.mxu0 0.0
    %7734 = vmatpush2.msra.mxu0 0.0
    %7735 = vmatprep.subr.mxu0 0.0
    %7736 = vmatpush2.msra.mxu0 0.0
    %7737 = vmatprep.subr.mxu0 0.0
    %7738 = vmatpush2.msra.mxu0 0.0
    %7739 = vmatprep.subr.mxu0 0.0
    %7740 = vmatpush2.msra.mxu0 0.0
    %7741 = vmatprep.subr.mxu0 0.0
    %7742 = vmatpush2.msra.mxu0 0.0
    %7743 = vmatprep.subr.mxu0 0.0
    %7744 = vmatpush2.msra.mxu0 0.0
    %7745 = vmatprep.mubr.f32.mxu0 0.0
    %7746 = vmatmul.mubr.f32.gmra.mxu0 %v7497
    %v7747 = vpop.f32.mrf.mxu0
    %v7748 = vadd.f32 0.0, %v7747
    %v7749 = vpop.f32.mrf.mxu0
    %7750 = vdwg.mxu0
    %v7752 = vrot.slane %v7748, 2
    %v7753 = vrot.slane %v7748, 3
    %7754 = vrot.lane.b32.xlu0 %v7752, 64
    %v7755 = vpop.permute.xlu0 %7754
    %7756 = vrot.lane.b32.xlu0 %v7753, 64
    %v7757 = vpop.permute.xlu0 %7756
    %v7760 = vadd.f32 %v4900, %v7755
    %v7761 = vadd.f32 %v4905, %v7757
    %v7762 = vtanh.pop %v7760
    %v7763 = vtanh.pop %v7761
    %7764 = vmatprep.subr.mxu0 0.0
    %7765 = vmatpush1.msra.mxu0 0.0
    %7766 = vmatprep.subr.mxu0 0.0
    %7767 = vmatpush1.msra.mxu0 0.0
    %7768 = vmatprep.subr.mxu0 0.0
    %7769 = vmatpush1.msra.mxu0 0.0
    %7770 = vmatprep.subr.mxu0 0.0
    %7771 = vmatpush1.msra.mxu0 0.0
    %7772 = vmatprep.subr.mxu0 0.0
    %7773 = vmatpush1.msra.mxu0 0.0
    %7774 = vmatprep.subr.mxu0 0.0
    %7775 = vmatpush1.msra.mxu0 0.0
    %7776 = vmatprep.subr.mxu0 0.0
    %7777 = vmatpush1.msra.mxu0 0.0
    %7778 = vmatprep.subr.mxu0 0.0
    %7779 = vmatpush1.msra.mxu0 0.0
    %7780 = vmatprep.subr.mxu0 0.0
    %7781 = vmatpush1.msra.mxu0 0.0
    %7782 = vmatprep.subr.mxu0 0.0
    %7783 = vmatpush1.msra.mxu0 0.0
    %7784 = vmatprep.subr.mxu0 0.0
    %7785 = vmatpush1.msra.mxu0 0.0
    %7786 = vmatprep.subr.mxu0 0.0
    %7787 = vmatpush1.msra.mxu0 0.0
    %7788 = vmatprep.subr.mxu0 0.0
    %7789 = vmatpush1.msra.mxu0 %v5193
    %7790 = vmatprep.subr.mxu0 0.0
    %7791 = vmatpush1.msra.mxu0 %v5192
    %7792 = vmatprep.subr.mxu0 0.0
    %7793 = vmatpush1.msra.mxu0 %v5191
    %7794 = vmatprep.subr.mxu0 0.0
    %7795 = vmatpush1.msra.mxu0 %v5190
    %7796 = vmatprep.subr.mxu0 0.0
    %7797 = vmatpush2.msra.mxu0 0.0
    %7798 = vmatprep.subr.mxu0 0.0
    %7799 = vmatpush2.msra.mxu0 0.0
    %7800 = vmatprep.subr.mxu0 0.0
    %7801 = vmatpush2.msra.mxu0 0.0
    %7802 = vmatprep.subr.mxu0 0.0
    %7803 = vmatpush2.msra.mxu0 0.0
    %7804 = vmatprep.subr.mxu0 0.0
    %7805 = vmatpush2.msra.mxu0 0.0
    %7806 = vmatprep.subr.mxu0 0.0
    %7807 = vmatpush2.msra.mxu0 0.0
    %7808 = vmatprep.subr.mxu0 0.0
    %7809 = vmatpush2.msra.mxu0 0.0
    %7810 = vmatprep.subr.mxu0 0.0
    %7811 = vmatpush2.msra.mxu0 0.0
    %7812 = vmatprep.subr.mxu0 0.0
    %7813 = vmatpush2.msra.mxu0 0.0
    %7814 = vmatprep.subr.mxu0 0.0
    %7815 = vmatpush2.msra.mxu0 0.0
    %7816 = vmatprep.subr.mxu0 0.0
    %7817 = vmatpush2.msra.mxu0 0.0
    %7818 = vmatprep.subr.mxu0 0.0
    %7819 = vmatpush2.msra.mxu0 0.0
    %7820 = vmatprep.subr.mxu0 0.0
    %7821 = vmatpush2.msra.mxu0 0.0
    %7822 = vmatprep.subr.mxu0 0.0
    %7823 = vmatpush2.msra.mxu0 0.0
    %7824 = vmatprep.subr.mxu0 0.0
    %7825 = vmatpush2.msra.mxu0 0.0
    %7826 = vmatprep.subr.mxu0 0.0
    %7827 = vmatpush2.msra.mxu0 0.0
    %7828 = vmatprep.mubr.f32.mxu0 0.0
    %7829 = vmatmul.mubr.f32.gmra.mxu0 %v7497
    %v7830 = vpop.f32.mrf.mxu0
    %v7831 = vadd.f32 0.0, %v7830
    %v7832 = vpop.f32.mrf.mxu0
    %7833 = vdwg.mxu0
    %v7835 = vrot.slane %v7831, 2
    %v7836 = vrot.slane %v7831, 3
    %7837 = vrot.lane.b32.xlu0 %v7835, 96
    %v7838 = vpop.permute.xlu0 %7837
    %7839 = vrot.lane.b32.xlu0 %v7836, 96
    %v7840 = vpop.permute.xlu0 %7839
    %v7843 = vadd.f32 %v4900, %v7838
    %v7844 = vadd.f32 %v4905, %v7840
    %v7845 = vsub.f32 0.0, %v7843
    %v7846 = vsub.f32 0.0, %v7844
    %v7847 = vmul.f32 %v7845, 1.442695
    %v7848 = vpow.pop %v7847
    %v7849 = vmul.f32 %v7846, 1.442695
    %v7850 = vpow.pop %v7849
    %v7851 = vadd.f32 %v7848, 1.0
    %v7852 = vadd.f32 %v7850, 1.0
    %v7853 = vrcp.pop %v7851
    %v7854 = vmul.f32 1.0, %v7853
    %v7855 = vrcp.pop %v7852
    %v7856 = vmul.f32 1.0, %v7855
    %v7858 = vrot.slane %v7492, 2
    %v7859 = vrot.slane %v7492, 3
    %7860 = vrot.lane.b32.xlu0 %v7858, 32
    %v7861 = vpop.permute.xlu0 %7860
    %7862 = vrot.lane.b32.xlu0 %v7859, 32
    %v7863 = vpop.permute.xlu0 %7862
    %v7866 = vmul.f32 %v7678, %v7861
    %v7867 = vmul.f32 %v7680, %v7863
    %7870 = vrot.lane.b32.xlu0 %v7762, 64
    %v7871 = vpop.permute.xlu0 %7870
    %7872 = vrot.lane.b32.xlu0 %v7763, 64
    %v7873 = vpop.permute.xlu0 %7872
    %v7876 = vmul.f32 %v7585, %v7871
    %v7877 = vmul.f32 %v7587, %v7873
    %7880 = vrot.lane.b32.xlu0 %v7876, 32
    %v7881 = vpop.permute.xlu0 %7880
    %7882 = vrot.lane.b32.xlu0 %v7877, 32
    %v7883 = vpop.permute.xlu0 %7882
    %v7886 = vadd.f32 %v7866, %v7881
    %v7887 = vadd.f32 %v7867, %v7883
    %v7888 = vtanh.pop %v7886
    %v7889 = vtanh.pop %v7887
    %7892 = vrot.lane.b32.xlu0 %v7888, 64
    %v7893 = vpop.permute.xlu0 %7892
    %7894 = vrot.lane.b32.xlu0 %v7889, 64
    %v7895 = vpop.permute.xlu0 %7894
    %v7898 = vmul.f32 %v7854, %v7893
    %v7899 = vmul.f32 %v7856, %v7895
    %v7900 = vsel %vm7495, 1, 0
    %7901 = vset.pattern.permute.xlu0 0
    %7902 = vperm.xlu0 %7901, %v7900
    %v7903 = vpop.permute.xlu0 %7902
    %vm7904 = vcmp.eq.s32.totalorder %v7903, 1
    %v7907 = vrot.slane %v7898, 6
    %v7908 = vrot.slane %v7899, 5
    %v7909 = vsel %vm5328, %v7908, %v7907
    %7910 = vrot.lane.b32.xlu0 %v7909, 32
    %v7911 = vpop.permute.xlu0 %7910
    %v7913 = vsel %vm7904, %v7911, %v7483
    %v7916 = vrot.slane %v7886, 6
    %v7917 = vrot.slane %v7887, 5
    %v7918 = vsel %vm5328, %v7917, %v7916
    %7919 = vrot.lane.b32.xlu0 %v7918, 96
    %v7920 = vpop.permute.xlu0 %7919
    %v7922 = vsel %vm7904, %v7920, %v7492
    %v7923 = vmax.f32 %v7494, %v7911
    %v7924 = vsel %vm7904, %v7923, %v7494
    %vm7925 = vcmp.gt.s32.totalorder %v4908, 7
    %v7927 = vsel %vm135, %v7913, 0
    %7929 = vmatprep.subr.mxu0 0.0
    %7930 = vmatpush1.msra.mxu0 0.0
    %7931 = vmatprep.subr.mxu0 0.0
    %7932 = vmatpush1.msra.mxu0 0.0
    %7933 = vmatprep.subr.mxu0 0.0
    %7934 = vmatpush1.msra.mxu0 0.0
    %7935 = vmatprep.subr.mxu0 0.0
    %7936 = vmatpush1.msra.mxu0 0.0
    %7937 = vmatprep.subr.mxu0 0.0
    %7938 = vmatpush1.msra.mxu0 0.0
    %7939 = vmatprep.subr.mxu0 0.0
    %7940 = vmatpush1.msra.mxu0 0.0
    %7941 = vmatprep.subr.mxu0 0.0
    %7942 = vmatpush1.msra.mxu0 0.0
    %7943 = vmatprep.subr.mxu0 0.0
    %7944 = vmatpush1.msra.mxu0 0.0
    %7945 = vmatprep.subr.mxu0 0.0
    %7946 = vmatpush1.msra.mxu0 0.0
    %7947 = vmatprep.subr.mxu0 0.0
    %7948 = vmatpush1.msra.mxu0 0.0
    %7949 = vmatprep.subr.mxu0 0.0
    %7950 = vmatpush1.msra.mxu0 0.0
    %7951 = vmatprep.subr.mxu0 0.0
    %7952 = vmatpush1.msra.mxu0 0.0
    %7953 = vmatprep.subr.mxu0 0.0
    %7954 = vmatpush1.msra.mxu0 %v4913
    %7955 = vmatprep.subr.mxu0 0.0
    %7956 = vmatpush1.msra.mxu0 %v4912
    %7957 = vmatprep.subr.mxu0 0.0
    %7958 = vmatpush1.msra.mxu0 %v4911
    %7959 = vmatprep.subr.mxu0 0.0
    %7960 = vmatpush1.msra.mxu0 %v4910
    %7961 = vmatprep.subr.mxu0 0.0
    %7962 = vmatpush2.msra.mxu0 0.0
    %7963 = vmatprep.subr.mxu0 0.0
    %7964 = vmatpush2.msra.mxu0 0.0
    %7965 = vmatprep.subr.mxu0 0.0
    %7966 = vmatpush2.msra.mxu0 0.0
    %7967 = vmatprep.subr.mxu0 0.0
    %7968 = vmatpush2.msra.mxu0 0.0
    %7969 = vmatprep.subr.mxu0 0.0
    %7970 = vmatpush2.msra.mxu0 0.0
    %7971 = vmatprep.subr.mxu0 0.0
    %7972 = vmatpush2.msra.mxu0 0.0
    %7973 = vmatprep.subr.mxu0 0.0
    %7974 = vmatpush2.msra.mxu0 0.0
    %7975 = vmatprep.subr.mxu0 0.0
    %7976 = vmatpush2.msra.mxu0 0.0
    %7977 = vmatprep.subr.mxu0 0.0
    %7978 = vmatpush2.msra.mxu0 0.0
    %7979 = vmatprep.subr.mxu0 0.0
    %7980 = vmatpush2.msra.mxu0 0.0
    %7981 = vmatprep.subr.mxu0 0.0
    %7982 = vmatpush2.msra.mxu0 0.0
    %7983 = vmatprep.subr.mxu0 0.0
    %7984 = vmatpush2.msra.mxu0 0.0
    %7985 = vmatprep.subr.mxu0 0.0
    %7986 = vmatpush2.msra.mxu0 0.0
    %7987 = vmatprep.subr.mxu0 0.0
    %7988 = vmatpush2.msra.mxu0 0.0
    %7989 = vmatprep.subr.mxu0 0.0
    %7990 = vmatpush2.msra.mxu0 0.0
    %7991 = vmatprep.subr.mxu0 0.0
    %7992 = vmatpush2.msra.mxu0 0.0
    %7993 = vmatprep.mubr.f32.mxu0 0.0
    %7994 = vmatmul.mubr.f32.gmra.mxu0 %v7927
    %v7995 = vpop.f32.mrf.mxu0
    %v7996 = vadd.f32 0.0, %v7995
    %v7997 = vpop.f32.mrf.mxu0
    %7998 = vdwg.mxu0
    %v8000 = vrot.slane %v7996, 1
    %v8001 = vrot.slane %v7996, 2
    %v8004 = vadd.f32 %v4900, %v8000
    %v8005 = vadd.f32 %v4905, %v8001
    %v8006 = vsub.f32 0.0, %v8004
    %v8007 = vsub.f32 0.0, %v8005
    %v8008 = vmul.f32 %v8006, 1.442695
    %v8009 = vpow.pop %v8008
    %v8010 = vmul.f32 %v8007, 1.442695
    %v8011 = vpow.pop %v8010
    %v8012 = vadd.f32 %v8009, 1.0
    %v8013 = vadd.f32 %v8011, 1.0
    %v8014 = vrcp.pop %v8012
    %v8015 = vmul.f32 1.0, %v8014
    %v8016 = vrcp.pop %v8013
    %v8017 = vmul.f32 1.0, %v8016
    %8018 = vmatprep.subr.mxu0 0.0
    %8019 = vmatpush1.msra.mxu0 0.0
    %8020 = vmatprep.subr.mxu0 0.0
    %8021 = vmatpush1.msra.mxu0 0.0
    %8022 = vmatprep.subr.mxu0 0.0
    %8023 = vmatpush1.msra.mxu0 0.0
    %8024 = vmatprep.subr.mxu0 0.0
    %8025 = vmatpush1.msra.mxu0 0.0
    %8026 = vmatprep.subr.mxu0 0.0
    %8027 = vmatpush1.msra.mxu0 0.0
    %8028 = vmatprep.subr.mxu0 0.0
    %8029 = vmatpush1.msra.mxu0 0.0
    %8030 = vmatprep.subr.mxu0 0.0
    %8031 = vmatpush1.msra.mxu0 0.0
    %8032 = vmatprep.subr.mxu0 0.0
    %8033 = vmatpush1.msra.mxu0 0.0
    %8034 = vmatprep.subr.mxu0 0.0
    %8035 = vmatpush1.msra.mxu0 0.0
    %8036 = vmatprep.subr.mxu0 0.0
    %8037 = vmatpush1.msra.mxu0 0.0
    %8038 = vmatprep.subr.mxu0 0.0
    %8039 = vmatpush1.msra.mxu0 0.0
    %8040 = vmatprep.subr.mxu0 0.0
    %8041 = vmatpush1.msra.mxu0 0.0
    %8042 = vmatprep.subr.mxu0 0.0
    %8043 = vmatpush1.msra.mxu0 %v5009
    %8044 = vmatprep.subr.mxu0 0.0
    %8045 = vmatpush1.msra.mxu0 %v5008
    %8046 = vmatprep.subr.mxu0 0.0
    %8047 = vmatpush1.msra.mxu0 %v5007
    %8048 = vmatprep.subr.mxu0 0.0
    %8049 = vmatpush1.msra.mxu0 %v5006
    %8050 = vmatprep.subr.mxu0 0.0
    %8051 = vmatpush2.msra.mxu0 0.0
    %8052 = vmatprep.subr.mxu0 0.0
    %8053 = vmatpush2.msra.mxu0 0.0
    %8054 = vmatprep.subr.mxu0 0.0
    %8055 = vmatpush2.msra.mxu0 0.0
    %8056 = vmatprep.subr.mxu0 0.0
    %8057 = vmatpush2.msra.mxu0 0.0
    %8058 = vmatprep.subr.mxu0 0.0
    %8059 = vmatpush2.msra.mxu0 0.0
    %8060 = vmatprep.subr.mxu0 0.0
    %8061 = vmatpush2.msra.mxu0 0.0
    %8062 = vmatprep.subr.mxu0 0.0
    %8063 = vmatpush2.msra.mxu0 0.0
    %8064 = vmatprep.subr.mxu0 0.0
    %8065 = vmatpush2.msra.mxu0 0.0
    %8066 = vmatprep.subr.mxu0 0.0
    %8067 = vmatpush2.msra.mxu0 0.0
    %8068 = vmatprep.subr.mxu0 0.0
    %8069 = vmatpush2.msra.mxu0 0.0
    %8070 = vmatprep.subr.mxu0 0.0
    %8071 = vmatpush2.msra.mxu0 0.0
    %8072 = vmatprep.subr.mxu0 0.0
    %8073 = vmatpush2.msra.mxu0 0.0
    %8074 = vmatprep.subr.mxu0 0.0
    %8075 = vmatpush2.msra.mxu0 0.0
    %8076 = vmatprep.subr.mxu0 0.0
    %8077 = vmatpush2.msra.mxu0 0.0
    %8078 = vmatprep.subr.mxu0 0.0
    %8079 = vmatpush2.msra.mxu0 0.0
    %8080 = vmatprep.subr.mxu0 0.0
    %8081 = vmatpush2.msra.mxu0 0.0
    %8082 = vmatprep.mubr.f32.mxu0 0.0
    %8083 = vmatmul.mubr.f32.gmra.mxu0 %v7927
    %v8084 = vpop.f32.mrf.mxu0
    %v8085 = vadd.f32 0.0, %v8084
    %v8086 = vpop.f32.mrf.mxu0
    %8087 = vdwg.mxu0
    %v8089 = vrot.slane %v8085, 1
    %v8090 = vrot.slane %v8085, 2
    %8091 = vrot.lane.b32.xlu0 %v8089, 32
    %v8092 = vpop.permute.xlu0 %8091
    %8093 = vrot.lane.b32.xlu0 %v8090, 32
    %v8094 = vpop.permute.xlu0 %8093
    %v8097 = vadd.f32 %v4900, %v8092
    %v8098 = vadd.f32 %v4905, %v8094
    %v8099 = vsub.f32 0.0, %v8097
    %v8100 = vsub.f32 0.0, %v8098
    %v8101 = vmul.f32 %v8099, 1.442695
    %v8102 = vpow.pop %v8101
    %v8103 = vmul.f32 %v8100, 1.442695
    %v8104 = vpow.pop %v8103
    %v8105 = vadd.f32 %v8102, 1.0
    %v8106 = vadd.f32 %v8104, 1.0
    %v8107 = vrcp.pop %v8105
    %v8108 = vmul.f32 1.0, %v8107
    %v8109 = vrcp.pop %v8106
    %v8110 = vmul.f32 1.0, %v8109
    %8111 = vmatprep.subr.mxu0 0.0
    %8112 = vmatpush1.msra.mxu0 0.0
    %8113 = vmatprep.subr.mxu0 0.0
    %8114 = vmatpush1.msra.mxu0 0.0
    %8115 = vmatprep.subr.mxu0 0.0
    %8116 = vmatpush1.msra.mxu0 0.0
    %8117 = vmatprep.subr.mxu0 0.0
    %8118 = vmatpush1.msra.mxu0 0.0
    %8119 = vmatprep.subr.mxu0 0.0
    %8120 = vmatpush1.msra.mxu0 0.0
    %8121 = vmatprep.subr.mxu0 0.0
    %8122 = vmatpush1.msra.mxu0 0.0
    %8123 = vmatprep.subr.mxu0 0.0
    %8124 = vmatpush1.msra.mxu0 0.0
    %8125 = vmatprep.subr.mxu0 0.0
    %8126 = vmatpush1.msra.mxu0 0.0
    %8127 = vmatprep.subr.mxu0 0.0
    %8128 = vmatpush1.msra.mxu0 0.0
    %8129 = vmatprep.subr.mxu0 0.0
    %8130 = vmatpush1.msra.mxu0 0.0
    %8131 = vmatprep.subr.mxu0 0.0
    %8132 = vmatpush1.msra.mxu0 0.0
    %8133 = vmatprep.subr.mxu0 0.0
    %8134 = vmatpush1.msra.mxu0 0.0
    %8135 = vmatprep.subr.mxu0 0.0
    %8136 = vmatpush1.msra.mxu0 %v5106
    %8137 = vmatprep.subr.mxu0 0.0
    %8138 = vmatpush1.msra.mxu0 %v5105
    %8139 = vmatprep.subr.mxu0 0.0
    %8140 = vmatpush1.msra.mxu0 %v5104
    %8141 = vmatprep.subr.mxu0 0.0
    %8142 = vmatpush1.msra.mxu0 %v5103
    %8143 = vmatprep.subr.mxu0 0.0
    %8144 = vmatpush2.msra.mxu0 0.0
    %8145 = vmatprep.subr.mxu0 0.0
    %8146 = vmatpush2.msra.mxu0 0.0
    %8147 = vmatprep.subr.mxu0 0.0
    %8148 = vmatpush2.msra.mxu0 0.0
    %8149 = vmatprep.subr.mxu0 0.0
    %8150 = vmatpush2.msra.mxu0 0.0
    %8151 = vmatprep.subr.mxu0 0.0
    %8152 = vmatpush2.msra.mxu0 0.0
    %8153 = vmatprep.subr.mxu0 0.0
    %8154 = vmatpush2.msra.mxu0 0.0
    %8155 = vmatprep.subr.mxu0 0.0
    %8156 = vmatpush2.msra.mxu0 0.0
    %8157 = vmatprep.subr.mxu0 0.0
    %8158 = vmatpush2.msra.mxu0 0.0
    %8159 = vmatprep.subr.mxu0 0.0
    %8160 = vmatpush2.msra.mxu0 0.0
    %8161 = vmatprep.subr.mxu0 0.0
    %8162 = vmatpush2.msra.mxu0 0.0
    %8163 = vmatprep.subr.mxu0 0.0
    %8164 = vmatpush2.msra.mxu0 0.0
    %8165 = vmatprep.subr.mxu0 0.0
    %8166 = vmatpush2.msra.mxu0 0.0
    %8167 = vmatprep.subr.mxu0 0.0
    %8168 = vmatpush2.msra.mxu0 0.0
    %8169 = vmatprep.subr.mxu0 0.0
    %8170 = vmatpush2.msra.mxu0 0.0
    %8171 = vmatprep.subr.mxu0 0.0
    %8172 = vmatpush2.msra.mxu0 0.0
    %8173 = vmatprep.subr.mxu0 0.0
    %8174 = vmatpush2.msra.mxu0 0.0
    %8175 = vmatprep.mubr.f32.mxu0 0.0
    %8176 = vmatmul.mubr.f32.gmra.mxu0 %v7927
    %v8177 = vpop.f32.mrf.mxu0
    %v8178 = vadd.f32 0.0, %v8177
    %v8179 = vpop.f32.mrf.mxu0
    %8180 = vdwg.mxu0
    %v8182 = vrot.slane %v8178, 1
    %v8183 = vrot.slane %v8178, 2
    %8184 = vrot.lane.b32.xlu0 %v8182, 64
    %v8185 = vpop.permute.xlu0 %8184
    %8186 = vrot.lane.b32.xlu0 %v8183, 64
    %v8187 = vpop.permute.xlu0 %8186
    %v8190 = vadd.f32 %v4900, %v8185
    %v8191 = vadd.f32 %v4905, %v8187
    %v8192 = vtanh.pop %v8190
    %v8193 = vtanh.pop %v8191
    %8194 = vmatprep.subr.mxu0 0.0
    %8195 = vmatpush1.msra.mxu0 0.0
    %8196 = vmatprep.subr.mxu0 0.0
    %8197 = vmatpush1.msra.mxu0 0.0
    %8198 = vmatprep.subr.mxu0 0.0
    %8199 = vmatpush1.msra.mxu0 0.0
    %8200 = vmatprep.subr.mxu0 0.0
    %8201 = vmatpush1.msra.mxu0 0.0
    %8202 = vmatprep.subr.mxu0 0.0
    %8203 = vmatpush1.msra.mxu0 0.0
    %8204 = vmatprep.subr.mxu0 0.0
    %8205 = vmatpush1.msra.mxu0 0.0
    %8206 = vmatprep.subr.mxu0 0.0
    %8207 = vmatpush1.msra.mxu0 0.0
    %8208 = vmatprep.subr.mxu0 0.0
    %8209 = vmatpush1.msra.mxu0 0.0
    %8210 = vmatprep.subr.mxu0 0.0
    %8211 = vmatpush1.msra.mxu0 0.0
    %8212 = vmatprep.subr.mxu0 0.0
    %8213 = vmatpush1.msra.mxu0 0.0
    %8214 = vmatprep.subr.mxu0 0.0
    %8215 = vmatpush1.msra.mxu0 0.0
    %8216 = vmatprep.subr.mxu0 0.0
    %8217 = vmatpush1.msra.mxu0 0.0
    %8218 = vmatprep.subr.mxu0 0.0
    %8219 = vmatpush1.msra.mxu0 %v5193
    %8220 = vmatprep.subr.mxu0 0.0
    %8221 = vmatpush1.msra.mxu0 %v5192
    %8222 = vmatprep.subr.mxu0 0.0
    %8223 = vmatpush1.msra.mxu0 %v5191
    %8224 = vmatprep.subr.mxu0 0.0
    %8225 = vmatpush1.msra.mxu0 %v5190
    %8226 = vmatprep.subr.mxu0 0.0
    %8227 = vmatpush2.msra.mxu0 0.0
    %8228 = vmatprep.subr.mxu0 0.0
    %8229 = vmatpush2.msra.mxu0 0.0
    %8230 = vmatprep.subr.mxu0 0.0
    %8231 = vmatpush2.msra.mxu0 0.0
    %8232 = vmatprep.subr.mxu0 0.0
    %8233 = vmatpush2.msra.mxu0 0.0
    %8234 = vmatprep.subr.mxu0 0.0
    %8235 = vmatpush2.msra.mxu0 0.0
    %8236 = vmatprep.subr.mxu0 0.0
    %8237 = vmatpush2.msra.mxu0 0.0
    %8238 = vmatprep.subr.mxu0 0.0
    %8239 = vmatpush2.msra.mxu0 0.0
    %8240 = vmatprep.subr.mxu0 0.0
    %8241 = vmatpush2.msra.mxu0 0.0
    %8242 = vmatprep.subr.mxu0 0.0
    %8243 = vmatpush2.msra.mxu0 0.0
    %8244 = vmatprep.subr.mxu0 0.0
    %8245 = vmatpush2.msra.mxu0 0.0
    %8246 = vmatprep.subr.mxu0 0.0
    %8247 = vmatpush2.msra.mxu0 0.0
    %8248 = vmatprep.subr.mxu0 0.0
    %8249 = vmatpush2.msra.mxu0 0.0
    %8250 = vmatprep.subr.mxu0 0.0
    %8251 = vmatpush2.msra.mxu0 0.0
    %8252 = vmatprep.subr.mxu0 0.0
    %8253 = vmatpush2.msra.mxu0 0.0
    %8254 = vmatprep.subr.mxu0 0.0
    %8255 = vmatpush2.msra.mxu0 0.0
    %8256 = vmatprep.subr.mxu0 0.0
    %8257 = vmatpush2.msra.mxu0 0.0
    %8258 = vmatprep.mubr.f32.mxu0 0.0
    %8259 = vmatmul.mubr.f32.gmra.mxu0 %v7927
    %v8260 = vpop.f32.mrf.mxu0
    %v8261 = vadd.f32 0.0, %v8260
    %v8262 = vpop.f32.mrf.mxu0
    %8263 = vdwg.mxu0
    %v8265 = vrot.slane %v8261, 1
    %v8266 = vrot.slane %v8261, 2
    %8267 = vrot.lane.b32.xlu0 %v8265, 96
    %v8268 = vpop.permute.xlu0 %8267
    %8269 = vrot.lane.b32.xlu0 %v8266, 96
    %v8270 = vpop.permute.xlu0 %8269
    %v8273 = vadd.f32 %v4900, %v8268
    %v8274 = vadd.f32 %v4905, %v8270
    %v8275 = vsub.f32 0.0, %v8273
    %v8276 = vsub.f32 0.0, %v8274
    %v8277 = vmul.f32 %v8275, 1.442695
    %v8278 = vpow.pop %v8277
    %v8279 = vmul.f32 %v8276, 1.442695
    %v8280 = vpow.pop %v8279
    %v8281 = vadd.f32 %v8278, 1.0
    %v8282 = vadd.f32 %v8280, 1.0
    %v8283 = vrcp.pop %v8281
    %v8284 = vmul.f32 1.0, %v8283
    %v8285 = vrcp.pop %v8282
    %v8286 = vmul.f32 1.0, %v8285
    %v8288 = vrot.slane %v7922, 1
    %v8289 = vrot.slane %v7922, 2
    %8290 = vrot.lane.b32.xlu0 %v8288, 32
    %v8291 = vpop.permute.xlu0 %8290
    %8292 = vrot.lane.b32.xlu0 %v8289, 32
    %v8293 = vpop.permute.xlu0 %8292
    %v8296 = vmul.f32 %v8108, %v8291
    %v8297 = vmul.f32 %v8110, %v8293
    %8300 = vrot.lane.b32.xlu0 %v8192, 64
    %v8301 = vpop.permute.xlu0 %8300
    %8302 = vrot.lane.b32.xlu0 %v8193, 64
    %v8303 = vpop.permute.xlu0 %8302
    %v8306 = vmul.f32 %v8015, %v8301
    %v8307 = vmul.f32 %v8017, %v8303
    %8310 = vrot.lane.b32.xlu0 %v8306, 32
    %v8311 = vpop.permute.xlu0 %8310
    %8312 = vrot.lane.b32.xlu0 %v8307, 32
    %v8313 = vpop.permute.xlu0 %8312
    %v8316 = vadd.f32 %v8296, %v8311
    %v8317 = vadd.f32 %v8297, %v8313
    %v8318 = vtanh.pop %v8316
    %v8319 = vtanh.pop %v8317
    %8322 = vrot.lane.b32.xlu0 %v8318, 64
    %v8323 = vpop.permute.xlu0 %8322
    %8324 = vrot.lane.b32.xlu0 %v8319, 64
    %v8325 = vpop.permute.xlu0 %8324
    %v8328 = vmul.f32 %v8284, %v8323
    %v8329 = vmul.f32 %v8286, %v8325
    %v8332 = vrot.slane %v8328, 7
    %v8333 = vrot.slane %v8329, 6
    %v8334 = vsel %vm5328, %v8333, %v8332
    %8335 = vrot.lane.b32.xlu0 %v8334, 32
    %v8336 = vpop.permute.xlu0 %8335
    %v8338 = vmax.f32 %v7924, %v8336
    %v8339 = vsel %vm7925, 1, 0
    %8340 = vset.pattern.permute.xlu0 0
    %8341 = vperm.xlu0 %8340, %v8339
    %v8342 = vpop.permute.xlu0 %8341
    %vm8343 = vcmp.eq.s32.totalorder %v8342, 1
    %v8344 = vsel %vm8343, %v8338, %v7924
    %v8345 = vld [vmem:[%s55] sm:$0xff]
    %v8346 = vld [vmem:[%s55 + $0x8] sm:$0xff]
    %v8347 = vld [vmem:[%s55 + $0x10] sm:$0xff]
    %v8348 = vld [vmem:[%s55 + $0x18] sm:$0xff]
    %v8349 = vld [vmem:[%s57] sm:$0x1]
    %v8351 = vlaneseq
    %v8352 = vshrl.u32 %v8351, 7
    %v8353 = vsub.s32 0, %v8352
    %v8354 = vrot.slane %v8349, %v8353
    %v8357 = vsel %vm135, %v8344, 0
    %8359 = vmatprep.subr.mxu0 0.0
    %8360 = vmatpush1.msra.mxu0 0.0
    %8361 = vmatprep.subr.mxu0 0.0
    %8362 = vmatpush1.msra.mxu0 0.0
    %8363 = vmatprep.subr.mxu0 0.0
    %8364 = vmatpush1.msra.mxu0 0.0
    %8365 = vmatprep.subr.mxu0 0.0
    %8366 = vmatpush1.msra.mxu0 0.0
    %8367 = vmatprep.subr.mxu0 0.0
    %8368 = vmatpush1.msra.mxu0 0.0
    %8369 = vmatprep.subr.mxu0 0.0
    %8370 = vmatpush1.msra.mxu0 0.0
    %8371 = vmatprep.subr.mxu0 0.0
    %8372 = vmatpush1.msra.mxu0 0.0
    %8373 = vmatprep.subr.mxu0 0.0
    %8374 = vmatpush1.msra.mxu0 0.0
    %8375 = vmatprep.subr.mxu0 0.0
    %8376 = vmatpush1.msra.mxu0 0.0
    %8377 = vmatprep.subr.mxu0 0.0
    %8378 = vmatpush1.msra.mxu0 0.0
    %8379 = vmatprep.subr.mxu0 0.0
    %8380 = vmatpush1.msra.mxu0 0.0
    %8381 = vmatprep.subr.mxu0 0.0
    %8382 = vmatpush1.msra.mxu0 0.0
    %8383 = vmatprep.subr.mxu0 0.0
    %8384 = vmatpush1.msra.mxu0 %v8348
    %8385 = vmatprep.subr.mxu0 0.0
    %8386 = vmatpush1.msra.mxu0 %v8347
    %8387 = vmatprep.subr.mxu0 0.0
    %8388 = vmatpush1.msra.mxu0 %v8346
    %8389 = vmatprep.subr.mxu0 0.0
    %8390 = vmatpush1.msra.mxu0 %v8345
    %8391 = vmatprep.subr.mxu0 0.0
    %8392 = vmatpush2.msra.mxu0 0.0
    %8393 = vmatprep.subr.mxu0 0.0
    %8394 = vmatpush2.msra.mxu0 0.0
    %8395 = vmatprep.subr.mxu0 0.0
    %8396 = vmatpush2.msra.mxu0 0.0
    %8397 = vmatprep.subr.mxu0 0.0
    %8398 = vmatpush2.msra.mxu0 0.0
    %8399 = vmatprep.subr.mxu0 0.0
    %8400 = vmatpush2.msra.mxu0 0.0
    %8401 = vmatprep.subr.mxu0 0.0
    %8402 = vmatpush2.msra.mxu0 0.0
    %8403 = vmatprep.subr.mxu0 0.0
    %8404 = vmatpush2.msra.mxu0 0.0
    %8405 = vmatprep.subr.mxu0 0.0
    %8406 = vmatpush2.msra.mxu0 0.0
    %8407 = vmatprep.subr.mxu0 0.0
    %8408 = vmatpush2.msra.mxu0 0.0
    %8409 = vmatprep.subr.mxu0 0.0
    %8410 = vmatpush2.msra.mxu0 0.0
    %8411 = vmatprep.subr.mxu0 0.0
    %8412 = vmatpush2.msra.mxu0 0.0
    %8413 = vmatprep.subr.mxu0 0.0
    %8414 = vmatpush2.msra.mxu0 0.0
    %8415 = vmatprep.subr.mxu0 0.0
    %8416 = vmatpush2.msra.mxu0 0.0
    %8417 = vmatprep.subr.mxu0 0.0
    %8418 = vmatpush2.msra.mxu0 0.0
    %8419 = vmatprep.subr.mxu0 0.0
    %8420 = vmatpush2.msra.mxu0 0.0
    %8421 = vmatprep.subr.mxu0 0.0
    %8422 = vmatpush2.msra.mxu0 0.0
    %8423 = vmatprep.mubr.f32.mxu0 0.0
    %8424 = vmatmul.mubr.f32.gmra.mxu0 %v8357
    %v8425 = vpop.f32.mrf.mxu0
    %v8426 = vadd.f32 %v8354, %v8425
    %v8427 = vpop.f32.mrf.mxu0
    %8428 = vdwg.mxu0
    %v8429 = vmax.f32 %v8426, 0.0
    %8431 = vrot.lane.b32.xlu0 %v4819, 16
    %v8432 = vpop.permute.xlu0 %8431
    %v8434 = vsel %vm1643, %v8429, %v8432
    %v8435 = vld [vmem:[%s59] sm:$0xff]
    %v8436 = vld [vmem:[%s59 + $0x8] sm:$0xff]
    %v8437 = vld [vmem:[%s59 + $0x10] sm:$0xff]
    %v8438 = vld [vmem:[%s59 + $0x18] sm:$0xff]
    %v8439 = vld [vmem:[%s59 + $0x20] sm:$0xff]
    %v8440 = vld [vmem:[%s59 + $0x28] sm:$0xff]
    %v8441 = vld [vmem:[%s59 + $0x30] sm:$0xff]
    %v8442 = vld [vmem:[%s59 + $0x38] sm:$0xff]
    %v8443 = vld [vmem:[%s61] sm:$0x1]
    %v8445 = vlaneseq
    %v8446 = vshrl.u32 %v8445, 7
    %v8447 = vsub.s32 0, %v8446
    %v8448 = vrot.slane %v8443, %v8447
    %v8451 = vsel %vm1912, %v8434, 0
    %8453 = vmatprep.subr.mxu0 0.0
    %8454 = vmatpush1.msra.mxu0 0.0
    %8455 = vmatprep.subr.mxu0 0.0
    %8456 = vmatpush1.msra.mxu0 0.0
    %8457 = vmatprep.subr.mxu0 0.0
    %8458 = vmatpush1.msra.mxu0 0.0
    %8459 = vmatprep.subr.mxu0 0.0
    %8460 = vmatpush1.msra.mxu0 0.0
    %8461 = vmatprep.subr.mxu0 0.0
    %8462 = vmatpush1.msra.mxu0 0.0
    %8463 = vmatprep.subr.mxu0 0.0
    %8464 = vmatpush1.msra.mxu0 0.0
    %8465 = vmatprep.subr.mxu0 0.0
    %8466 = vmatpush1.msra.mxu0 0.0
    %8467 = vmatprep.subr.mxu0 0.0
    %8468 = vmatpush1.msra.mxu0 0.0
    %8469 = vmatprep.subr.mxu0 0.0
    %8470 = vmatpush1.msra.mxu0 %v8442
    %8471 = vmatprep.subr.mxu0 0.0
    %8472 = vmatpush1.msra.mxu0 %v8441
    %8473 = vmatprep.subr.mxu0 0.0
    %8474 = vmatpush1.msra.mxu0 %v8440
    %8475 = vmatprep.subr.mxu0 0.0
    %8476 = vmatpush1.msra.mxu0 %v8439
    %8477 = vmatprep.subr.mxu0 0.0
    %8478 = vmatpush1.msra.mxu0 %v8438
    %8479 = vmatprep.subr.mxu0 0.0
    %8480 = vmatpush1.msra.mxu0 %v8437
    %8481 = vmatprep.subr.mxu0 0.0
    %8482 = vmatpush1.msra.mxu0 %v8436
    %8483 = vmatprep.subr.mxu0 0.0
    %8484 = vmatpush1.msra.mxu0 %v8435
    %8485 = vmatprep.subr.mxu0 0.0
    %8486 = vmatpush2.msra.mxu0 0.0
    %8487 = vmatprep.subr.mxu0 0.0
    %8488 = vmatpush2.msra.mxu0 0.0
    %8489 = vmatprep.subr.mxu0 0.0
    %8490 = vmatpush2.msra.mxu0 0.0
    %8491 = vmatprep.subr.mxu0 0.0
    %8492 = vmatpush2.msra.mxu0 0.0
    %8493 = vmatprep.subr.mxu0 0.0
    %8494 = vmatpush2.msra.mxu0 0.0
    %8495 = vmatprep.subr.mxu0 0.0
    %8496 = vmatpush2.msra.mxu0 0.0
    %8497 = vmatprep.subr.mxu0 0.0
    %8498 = vmatpush2.msra.mxu0 0.0
    %8499 = vmatprep.subr.mxu0 0.0
    %8500 = vmatpush2.msra.mxu0 0.0
    %8501 = vmatprep.subr.mxu0 0.0
    %8502 = vmatpush2.msra.mxu0 0.0
    %8503 = vmatprep.subr.mxu0 0.0
    %8504 = vmatpush2.msra.mxu0 0.0
    %8505 = vmatprep.subr.mxu0 0.0
    %8506 = vmatpush2.msra.mxu0 0.0
    %8507 = vmatprep.subr.mxu0 0.0
    %8508 = vmatpush2.msra.mxu0 0.0
    %8509 = vmatprep.subr.mxu0 0.0
    %8510 = vmatpush2.msra.mxu0 0.0
    %8511 = vmatprep.subr.mxu0 0.0
    %8512 = vmatpush2.msra.mxu0 0.0
    %8513 = vmatprep.subr.mxu0 0.0
    %8514 = vmatpush2.msra.mxu0 0.0
    %8515 = vmatprep.subr.mxu0 0.0
    %8516 = vmatpush2.msra.mxu0 0.0
    %8517 = vmatprep.mubr.f32.mxu0 0.0
    %8518 = vmatmul.mubr.f32.gmra.mxu0 %v8451
    %v8519 = vpop.f32.mrf.mxu0
    %v8520 = vadd.f32 %v8448, %v8519
    %v8521 = vpop.f32.mrf.mxu0
    %8522 = vdwg.mxu0
    %vm8523 = vcmask 1041408
    %v8524 = vsel %vm8523, %v8520, -inf
    %8525 = vmax.xlane.f32.xlu0 %v8524
    %v8526 = vpop.xlane.xlu0 %8525
    %v8527 = vsub.f32 %v8520, %v8526
    %v8528 = vmul.f32 %v8527, 1.442695
    %v8529 = vpow.pop %v8528
    %v8530 = vsel %vm8523, %v8529, 0.0
    %8531 = vadd.xlane.f32.xlu0 %v8530
    %v8532 = vpop.xlane.xlu0 %8531
    %v8533 = vrcp.pop %v8532
    %v8534 = vmul.f32 %v8529, %v8533
    %8535 = vst [vmem:[#allocation2] sm:$0x3] %v8534
    // Predicated region
    $region126: #{ie_forward.1} parent=1 // pred_check
      _
    $region127: #{ie_forward.1} parent=1 // pred_check_branch
      %8537 = sbr.rel (0) target = $region129
    $region128: #{ie_forward.1} parent=1 // pred_region
      %s8539 = ssub.s32 32, 32
      %8540 = vsyncadd [#allocation3], %s8539
      %s8542 = sshll.u32 [#allocation2], 4
      %s8543 = int_to_ptr.vmem [resolvable:$true] %s8542
      %8545 = dma.vmem_to_hbm [thread:$0]  %s8543, 32, %s63, [#allocation3]
    $region129: #{ie_forward.1} parent=1 // pred_fallthru
      _
    // Predicated region
    $region130: #{ie_forward.1} parent=1 // pred_check
      _
    $region131: #{ie_forward.1} parent=1 // pred_check_branch
      %8547 = sbr.rel (0) target = $region133
    $region132: #{ie_forward.1} parent=1 // pred_region
      %8548 = dma.done [#allocation3], 32
    $region133: #{ie_forward.1} parent=1 // pred_fallthru
      _
    %8549 = vsyncpa [#allocation3], 1

</llo_original>
